<compile_context>
chip_gen: v7x
topology: tpu7x:2x2x1
jax: 0.10.0
libtpu: 0.0.40
codegen_flags: <defaults>
</compile_context>

<pallas_src>
from functools import partial

import jax
import jax.numpy as jnp
from jax.experimental import pallas as pl
from jax.experimental.pallas import tpu as pltpu

IN_DIM = 4096
H1 = 512
H2 = 32
OUT_DIM = 2
PAD_OUT = 128          # lane-dense padded output width
NEG_BIG = -1.0e30      # padding-column bias so softmax ignores padded lanes


def _round_up(a, b):
    return ((a + b - 1) // b) * b


def _cdiv(a, b):
    return (a + b - 1) // b


def _choose_tile(n_rows, tm_max):
    """Equalized (8-aligned) row tiles; >=2 tiles when possible so v7x uses both TCs."""
    tm_max = max(8, _round_up(tm_max, 8))
    n_tiles = _cdiv(n_rows, tm_max)
    if n_rows >= 16:
        n_tiles = max(n_tiles, 2)          # shard the "parallel" axis across v7x's 2 TCs
    tm_eff = _round_up(_cdiv(n_rows, n_tiles), 8)   # equalized -> padding < 8 rows/tile
    n_pad = n_tiles * tm_eff
    return tm_eff, n_pad, n_tiles


def _make_kernel(apply_softmax):
    def kernel(x_ref, w1_ref, b1_ref, w23_ref, b23_ref, o_ref):
        # Cast the f32 row tile to bf16 in-kernel (avoids a separate HBM convert pass).
        x_bf = x_ref[...].astype(jnp.bfloat16)

        # Layer 1: (tm, 4096) bf16 @ (4096, 512) bf16 -> f32 accumulate, + b1, ReLU.
        h1 = jnp.dot(x_bf, w1_ref[...], preferred_element_type=jnp.float32)
        h1 = jnp.maximum(h1 + b1_ref[...], 0.0)

        # Fused layers 2+3 (eval-mode dropout == identity), padded to 128 output lanes:
        # (tm, 512) bf16 @ (512, 128) bf16 -> f32 accumulate, + b23.
        logits = jnp.dot(h1.astype(jnp.bfloat16), w23_ref[...],
                         preferred_element_type=jnp.float32) + b23_ref[...]

        if apply_softmax:
            # Numerically stable softmax over the 128-lane padded axis; padded columns
            # carry a -1e30 bias so exp() underflows to exactly 0 and they drop out.
            m = jnp.max(logits, axis=-1, keepdims=True)
            e = jnp.exp(logits - m)
            denom = jnp.sum(e, axis=-1, keepdims=True)
            o_ref[...] = (e * pl.reciprocal(denom)).astype(o_ref.dtype)  # exact recip (EUP)
        else:
            o_ref[...] = logits.astype(o_ref.dtype)

    return kernel


@partial(jax.jit, static_argnames=("act", "tm"))
def temporal_i3d_sga_std_forward(x, params, *, act=True, tm=1024):
    """x: (N, 4096) float32.  Returns (N, 2) softmax probabilities (logits if act=False)."""
    w1, b1, w2, b2, w3, b3 = params
    N, F = x.shape
    assert F == IN_DIM

    # ---- inference-path algebraic fusion of Linear(512,32) -> Linear(32,2) ----
    w23 = w2 @ w3                       # (512, 2)  f32
    b23 = b2 @ w3 + b3                  # (1, 2)    f32

    # Pad fused output to 128 lanes; padded bias = -1e30 kills those lanes under softmax.
    w23_pad = jnp.zeros((H1, PAD_OUT), jnp.float32).at[:, :OUT_DIM].set(w23)
    b23_pad = jnp.full((1, PAD_OUT), NEG_BIG, jnp.float32).at[:, :OUT_DIM].set(b23)

    # bf16 weights for the MXU (f32 accumulation in the kernel); x stays f32 and is cast
    # inside the kernel.
    w1_bf = w1.astype(jnp.bfloat16)
    w23_bf = w23_pad.astype(jnp.bfloat16)
    b1_f = b1.astype(jnp.float32)

    # ---- row tiling: equalized tiles, bounded padding, >=2 tiles for v7x megacore ----
    tm_eff, n_pad, n_tiles = _choose_tile(N, tm)
    x_p = x if n_pad == N else jnp.pad(x, ((0, n_pad - N), (0, 0)))

    # Grid-invariant weights/biases: constant index_map (DMA once) + single buffer.
    wspec = lambda shp: pl.BlockSpec(shp, lambda i: (0, 0), pipeline_mode=pl.Buffered(1))

    out = pl.pallas_call(
        _make_kernel(bool(act)),
        out_shape=jax.ShapeDtypeStruct((n_pad, PAD_OUT), jnp.float32),
        grid_spec=pltpu.PrefetchScalarGridSpec(
            num_scalar_prefetch=0,
            grid=(n_tiles,),
            in_specs=[
                pl.BlockSpec((tm_eff, IN_DIM), lambda i: (i, 0)),  # x row tile (f32)
                wspec((IN_DIM, H1)),                               # W1 (bf16)
                wspec((1, H1)),                                    # b1 (f32)
                wspec((H1, PAD_OUT)),                              # fused W23, lane-padded (bf16)
                wspec((1, PAD_OUT)),                               # fused b23, lane-padded (f32)
            ],
            out_specs=pl.BlockSpec((tm_eff, PAD_OUT), lambda i: (i, 0)),
        ),
        compiler_params=pltpu.CompilerParams(
            dimension_semantics=("parallel",),     # batch axis shards across v7x's 2 TCs
            vmem_limit_bytes=56 << 20,             # fits v7x's 64 MiB VMEM with headroom
        ),
    )(x_p, w1_bf, b1_f, w23_bf, b23_pad)

    return out[:N, :OUT_DIM]


def init_params(key):
    """Deterministic init mimicking nn.Linear (uniform +/-1/sqrt(fan_in)), weights stored (in, out)."""
    ks = jax.random.split(key, 6)

    def lin(kw, kb, fan_in, fan_out):
        bound = 1.0 / jnp.sqrt(jnp.float32(fan_in))
        w = jax.random.uniform(kw, (fan_in, fan_out), jnp.float32, -bound, bound)
        b = jax.random.uniform(kb, (1, fan_out), jnp.float32, -bound, bound)
        return w, b

    w1, b1 = lin(ks[0], ks[1], IN_DIM, H1)
    w2, b2 = lin(ks[2], ks[3], H1, H2)
    w3, b3 = lin(ks[4], ks[5], H2, OUT_DIM)
    return (w1, b1, w2, b2, w3, b3)


if __name__ == "__main__":
    key = jax.random.PRNGKey(0)
    kx, kp = jax.random.split(key)

    N = 16  # small batch of 4096-dim I3D feature vectors
    x = jax.random.normal(kx, (N, IN_DIM), jnp.float32)
    params = init_params(kp)

    probs = jax.block_until_ready(temporal_i3d_sga_std_forward(x, params, act=True))
    logits_out = jax.block_until_ready(temporal_i3d_sga_std_forward(x, params, act=False))

    # Plain-JAX f32 reference (eval mode: dropout == identity, unfused layers).
    w1, b1, w2, b2, w3, b3 = params
    h1 = jnp.maximum(x @ w1 + b1, 0.0)
    h2 = h1 @ w2 + b2
    ref_logits = h2 @ w3 + b3
    ref_probs = jax.nn.softmax(ref_logits, axis=-1)

    assert probs.shape == (N, OUT_DIM)
    assert logits_out.shape == (N, OUT_DIM)
    # bf16 matmul inputs + fused W2@W3 -> compare with a bf16-appropriate tolerance.
    assert jnp.allclose(probs, ref_probs, atol=2e-2), float(jnp.max(jnp.abs(probs - ref_probs)))
    assert jnp.allclose(logits_out, ref_logits, atol=2e-2), float(jnp.max(jnp.abs(logits_out - ref_logits)))
    assert jnp.allclose(jnp.sum(probs, axis=-1), 1.0, atol=1e-3)

    print("KERNEL_OK")
</pallas_src>

<mosaic_0001>
module attributes {stable_mosaic.version = 11 : i64} {
  func.func @kernel(%arg0: i32, %arg1: memref<8x4096xf32, #tpu.memory_space<vmem>>, %arg2: memref<4096x512xbf16, #tpu.memory_space<vmem>>, %arg3: memref<1x512xf32, #tpu.memory_space<vmem>>, %arg4: memref<512x128xbf16, #tpu.memory_space<vmem>>, %arg5: memref<1x128xf32, #tpu.memory_space<vmem>>, %arg6: memref<8x128xf32, #tpu.memory_space<vmem>>) attributes {dimension_semantics = [#tpu.dimension_semantics<parallel>], iteration_bounds = array<i64: 2>, scalar_prefetch = 0 : i64, scratch_operands = 0 : i64, tpu.core_type = #tpu.core_type<tc>, window_params = [{transform_indices = @transform_0, window_bounds = array<i64: 8, 4096>}, {pipeline_mode = #tpu.pipeline_mode<synchronous>, transform_indices = @transform_1, window_bounds = array<i64: 4096, 512>}, {pipeline_mode = #tpu.pipeline_mode<synchronous>, transform_indices = @transform_2, window_bounds = array<i64: 1, 512>}, {pipeline_mode = #tpu.pipeline_mode<synchronous>, transform_indices = @transform_3, window_bounds = array<i64: 512, 128>}, {pipeline_mode = #tpu.pipeline_mode<synchronous>, transform_indices = @transform_4, window_bounds = array<i64: 1, 128>}, {transform_indices = @transform_5, window_bounds = array<i64: 8, 128>}]} {
    %c0 = arith.constant 0 : index
    %c0_0 = arith.constant 0 : index
    %0 = vector.load %arg1[%c0, %c0_0] : memref<8x4096xf32, #tpu.memory_space<vmem>>, vector<8x4096xf32>
    %1 = arith.truncf %0 : vector<8x4096xf32> to vector<8x4096xbf16>
    %c0_1 = arith.constant 0 : index
    %c0_2 = arith.constant 0 : index
    %2 = vector.load %arg2[%c0_1, %c0_2] : memref<4096x512xbf16, #tpu.memory_space<vmem>>, vector<4096x512xbf16>
    %cst = arith.constant dense<0.000000e+00> : vector<8x512xf32>
    %3 = tpu.matmul %1, %2, %cst {dimension_numbers = #tpu.dot_dimension_numbers<[1], [0], [0], [1], [0, 0, 1, 1], [], []>} : vector<8x4096xbf16>, vector<4096x512xbf16>, vector<8x512xf32> -> vector<8x512xf32>
    %c0_3 = arith.constant 0 : index
    %c0_4 = arith.constant 0 : index
    %4 = vector.load %arg3[%c0_3, %c0_4] : memref<1x512xf32, #tpu.memory_space<vmem>>, vector<1x512xf32>
    %5 = vector.broadcast %4 : vector<1x512xf32> to vector<8x512xf32>
    %6 = arith.addf %3, %5 : vector<8x512xf32>
    %cst_5 = arith.constant 0.000000e+00 : f32
    %7 = vector.broadcast %cst_5 : f32 to vector<8x512xf32>
    %8 = arith.maximumf %6, %7 : vector<8x512xf32>
    %9 = arith.truncf %8 : vector<8x512xf32> to vector<8x512xbf16>
    %c0_6 = arith.constant 0 : index
    %c0_7 = arith.constant 0 : index
    %10 = vector.load %arg4[%c0_6, %c0_7] : memref<512x128xbf16, #tpu.memory_space<vmem>>, vector<512x128xbf16>
    %cst_8 = arith.constant dense<0.000000e+00> : vector<8x128xf32>
    %11 = tpu.matmul %9, %10, %cst_8 {dimension_numbers = #tpu.dot_dimension_numbers<[1], [0], [0], [1], [0, 0, 1, 1], [], []>} : vector<8x512xbf16>, vector<512x128xbf16>, vector<8x128xf32> -> vector<8x128xf32>
    %c0_9 = arith.constant 0 : index
    %c0_10 = arith.constant 0 : index
    %12 = vector.load %arg5[%c0_9, %c0_10] : memref<1x128xf32, #tpu.memory_space<vmem>>, vector<1x128xf32>
    %13 = vector.broadcast %12 : vector<1x128xf32> to vector<8x128xf32>
    %14 = arith.addf %11, %13 : vector<8x128xf32>
    %cst_11 = arith.constant dense<0xFF800000> : vector<8xf32>
    %15 = vector.multi_reduction <maximumf>, %14, %cst_11 [1] : vector<8x128xf32> to vector<8xf32>
    %16 = vector.shape_cast %15 : vector<8xf32> to vector<8x1xf32>
    %17 = vector.broadcast %16 : vector<8x1xf32> to vector<8x128xf32>
    %18 = arith.subf %14, %17 : vector<8x128xf32>
    %19 = math.exp %18 : vector<8x128xf32>
    %cst_12 = arith.constant dense<0.000000e+00> : vector<8xf32>
    %20 = vector.multi_reduction <add>, %19, %cst_12 [1] : vector<8x128xf32> to vector<8xf32>
    %21 = vector.shape_cast %20 : vector<8xf32> to vector<8x1xf32>
    %22 = tpu.reciprocal %21 : vector<8x1xf32> -> vector<8x1xf32>
    %23 = vector.broadcast %22 : vector<8x1xf32> to vector<8x128xf32>
    %24 = arith.mulf %19, %23 : vector<8x128xf32>
    %c0_13 = arith.constant 0 : index
    %c0_14 = arith.constant 0 : index
    %25 = vector.load %arg6[%c0_13, %c0_14] : memref<8x128xf32, #tpu.memory_space<vmem>>, vector<8x128xf32>
    tpu.vector_store %arg6[%c0_13, %c0_14], %24 {strides = array<i32>} : memref<8x128xf32, #tpu.memory_space<vmem>>, vector<8x128xf32>,
    return
  }
  func.func @transform_0(%arg0: i32) -> (i32, i32) {
    %c0_i32 = arith.constant 0 : i32
    %c0_i32_0 = arith.constant 0 : i32
    return %arg0, %c0_i32 : i32, i32
  }
  func.func @transform_1(%arg0: i32) -> (i32, i32) {
    %c0_i32 = arith.constant 0 : i32
    %c0_i32_0 = arith.constant 0 : i32
    %c0_i32_1 = arith.constant 0 : i32
    return %c0_i32, %c0_i32_0 : i32, i32
  }
  func.func @transform_2(%arg0: i32) -> (i32, i32) {
    %c0_i32 = arith.constant 0 : i32
    %c0_i32_0 = arith.constant 0 : i32
    %c0_i32_1 = arith.constant 0 : i32
    return %c0_i32, %c0_i32_0 : i32, i32
  }
  func.func @transform_3(%arg0: i32) -> (i32, i32) {
    %c0_i32 = arith.constant 0 : i32
    %c0_i32_0 = arith.constant 0 : i32
    %c0_i32_1 = arith.constant 0 : i32
    return %c0_i32, %c0_i32_0 : i32, i32
  }
  func.func @transform_4(%arg0: i32) -> (i32, i32) {
    %c0_i32 = arith.constant 0 : i32
    %c0_i32_0 = arith.constant 0 : i32
    %c0_i32_1 = arith.constant 0 : i32
    return %c0_i32, %c0_i32_0 : i32, i32
  }
  func.func @transform_5(%arg0: i32) -> (i32, i32) {
    %c0_i32 = arith.constant 0 : i32
    %c0_i32_0 = arith.constant 0 : i32
    return %arg0, %c0_i32 : i32, i32
  }
}

</mosaic_0001>

<llo_original>
// kernel: temporal_i3d_sga_std_forward.1
$region0: #{temporal_i3d_sga_std_forward.1}
  #allocation0 [shape = 'u32[]', space=smem, size = 0x4, offset = 0x4, fixed_abs, tag = 'smem constant byte address 0x4 - core index']
  #allocation1 [shape = 'u32[144,128]{1,0:T(1,128)}', space=vmem, size = 0x12000, scoped, tag = 'internal scratch']
  %s0 = inlined_call_operand.vmem [shape: f32[16,4096], index: 0, kind: input, shape index: {}]
  %s1 = inlined_call_operand.vmem [shape: bf16[4096,512], index: 1, kind: input, shape index: {}]
  %s2 = inlined_call_operand.vmem [shape: f32[1,512], index: 2, kind: input, shape index: {}]
  %s3 = inlined_call_operand.vmem [shape: bf16[512,128], index: 3, kind: input, shape index: {}]
  %s4 = inlined_call_operand.vmem [shape: f32[1,128], index: 4, kind: input, shape index: {}]
  %s5 = inlined_call_operand.vmem [shape: f32[16,128], index: 5, kind: output, shape index: {}]
  %s6 = sld [smem:[#allocation0]]
  $region53: #{temporal_i3d_sga_std_forward.1} parent=0
    _
  %s8 = ssub.s32 1, %s6
  %s9 = scalar_select 0, %s8, %s6
  loop: start=0, step=1, limit=4
  $region2: #{temporal_i3d_sga_std_forward.1} parent=0 // loop_pre_header
    _
  $region3: #{temporal_i3d_sga_std_forward.1} parent=0 // loop_header
    %s11 = sphi 0, %s15
    %p12 = scmp.ge.s32.totalorder %s11, 4
    %s21 = sphi 0, %s23
    %s24 = sphi 0, %s21
    %s25 = sphi 0, %s24
    %s41 = sphi 0, %s25
    %s45 = sphi 0, %s45
    %s47 = sphi 0, %s45
    %s48 = sphi 0, %s47
    %s62 = sphi 0, %s48
    %s66 = sphi 0, %s66
    %s68 = sphi 0, %s66
    %s69 = sphi 0, %s68
    %s83 = sphi 0, %s69
    %s87 = sphi 0, %s87
    %s89 = sphi 0, %s87
    %s90 = sphi 0, %s89
    %s104 = sphi 0, %s90
    %s108 = sphi 0, %s108
    %s110 = sphi 0, %s108
    %s111 = sphi 0, %s110
    %s125 = sphi 0, %s111
    %s131 = sphi 0, %s133
    %s134 = sphi 0, %s131
    %s135 = sphi 0, %s134
    %s151 = sphi 0, %s135
  $region4: #{temporal_i3d_sga_std_forward.1} parent=0 // loop_header_branch
    %14 = sbr.rel (%p12) target = $region8
  $region5: #{temporal_i3d_sga_std_forward.1} parent=0 // loop_body
    %s16 = ssub.s32 %s11, 1
    %s17 = ssub.s32 %s11, 2
    %s18 = sadd.s32 %s11, 1
    %s19 = ssub.s32 %s11, %s18
    %p20 = scmp.eq.s32.totalorder %s19, 0
    %s22 = sadd.s32 %s21, 1
    %s23 = scalar_select %p20, %s21, %s22
    %p26 = pneg %p20
    %p27 = scmp.eq.s32.totalorder %s11, 1
    %p28 = por %p26, %p27
    %p29 = scmp.ne.s32.totalorder %s21, %s24
    %p30 = scmp.eq.s32.totalorder %s11, 0
    %p31 = por %p29, %p30
    %p32 = scmp.ne.s32.totalorder %s21, %s24
    %p33 = scmp.eq.s32.totalorder %s16, 1
    %p34 = por %p32, %p33
    %p35 = scmp.ne.s32.totalorder %s24, %s25
    %p36 = scmp.eq.s32.totalorder %s16, 0
    %p37 = por %p35, %p36
    %p38 = scmp.ne.s32.totalorder %s24, %s25
    %p39 = scmp.eq.s32.totalorder %s17, 1
    %p40 = por %p38, %p39
    %p42 = scmp.ne.s32.totalorder %s25, %s41
    %p43 = scmp.eq.s32.totalorder %s17, 0
    %p44 = por %p42, %p43
    %s46 = sadd.s32 %s45, 1
    %p49 = scmp.eq.s32.totalorder %s11, 1
    %p50 = scmp.ne.s32.totalorder %s45, %s47
    %p51 = scmp.eq.s32.totalorder %s11, 0
    %p52 = por %p50, %p51
    %p53 = scmp.ne.s32.totalorder %s45, %s47
    %p54 = scmp.eq.s32.totalorder %s16, 1
    %p55 = por %p53, %p54
    %p56 = scmp.ne.s32.totalorder %s47, %s48
    %p57 = scmp.eq.s32.totalorder %s16, 0
    %p58 = por %p56, %p57
    %p59 = scmp.ne.s32.totalorder %s47, %s48
    %p60 = scmp.eq.s32.totalorder %s17, 1
    %p61 = por %p59, %p60
    %p63 = scmp.ne.s32.totalorder %s48, %s62
    %p64 = scmp.eq.s32.totalorder %s17, 0
    %p65 = por %p63, %p64
    %s67 = sadd.s32 %s66, 1
    %p70 = scmp.eq.s32.totalorder %s11, 1
    %p71 = scmp.ne.s32.totalorder %s66, %s68
    %p72 = scmp.eq.s32.totalorder %s11, 0
    %p73 = por %p71, %p72
    %p74 = scmp.ne.s32.totalorder %s66, %s68
    %p75 = scmp.eq.s32.totalorder %s16, 1
    %p76 = por %p74, %p75
    %p77 = scmp.ne.s32.totalorder %s68, %s69
    %p78 = scmp.eq.s32.totalorder %s16, 0
    %p79 = por %p77, %p78
    %p80 = scmp.ne.s32.totalorder %s68, %s69
    %p81 = scmp.eq.s32.totalorder %s17, 1
    %p82 = por %p80, %p81
    %p84 = scmp.ne.s32.totalorder %s69, %s83
    %p85 = scmp.eq.s32.totalorder %s17, 0
    %p86 = por %p84, %p85
    %s88 = sadd.s32 %s87, 1
    %p91 = scmp.eq.s32.totalorder %s11, 1
    %p92 = scmp.ne.s32.totalorder %s87, %s89
    %p93 = scmp.eq.s32.totalorder %s11, 0
    %p94 = por %p92, %p93
    %p95 = scmp.ne.s32.totalorder %s87, %s89
    %p96 = scmp.eq.s32.totalorder %s16, 1
    %p97 = por %p95, %p96
    %p98 = scmp.ne.s32.totalorder %s89, %s90
    %p99 = scmp.eq.s32.totalorder %s16, 0
    %p100 = por %p98, %p99
    %p101 = scmp.ne.s32.totalorder %s89, %s90
    %p102 = scmp.eq.s32.totalorder %s17, 1
    %p103 = por %p101, %p102
    %p105 = scmp.ne.s32.totalorder %s90, %s104
    %p106 = scmp.eq.s32.totalorder %s17, 0
    %p107 = por %p105, %p106
    %s109 = sadd.s32 %s108, 1
    %p112 = scmp.eq.s32.totalorder %s11, 1
    %p113 = scmp.ne.s32.totalorder %s108, %s110
    %p114 = scmp.eq.s32.totalorder %s11, 0
    %p115 = por %p113, %p114
    %p116 = scmp.ne.s32.totalorder %s108, %s110
    %p117 = scmp.eq.s32.totalorder %s16, 1
    %p118 = por %p116, %p117
    %p119 = scmp.ne.s32.totalorder %s110, %s111
    %p120 = scmp.eq.s32.totalorder %s16, 0
    %p121 = por %p119, %p120
    %p122 = scmp.ne.s32.totalorder %s110, %s111
    %p123 = scmp.eq.s32.totalorder %s17, 1
    %p124 = por %p122, %p123
    %p126 = scmp.ne.s32.totalorder %s111, %s125
    %p127 = scmp.eq.s32.totalorder %s17, 0
    %p128 = por %p126, %p127
    %s129 = ssub.s32 %s11, %s18
    %p130 = scmp.eq.s32.totalorder %s129, 0
    %s132 = sadd.s32 %s131, 1
    %s133 = scalar_select %p130, %s131, %s132
    %p136 = pneg %p130
    %p137 = scmp.eq.s32.totalorder %s11, 1
    %p138 = por %p136, %p137
    %p139 = scmp.ne.s32.totalorder %s131, %s134
    %p140 = scmp.eq.s32.totalorder %s11, 0
    %p141 = por %p139, %p140
    %p142 = scmp.ne.s32.totalorder %s131, %s134
    %p143 = scmp.eq.s32.totalorder %s16, 1
    %p144 = por %p142, %p143
    %p145 = scmp.ne.s32.totalorder %s134, %s135
    %p146 = scmp.eq.s32.totalorder %s16, 0
    %p147 = por %p145, %p146
    %p148 = scmp.ne.s32.totalorder %s134, %s135
    %p149 = scmp.eq.s32.totalorder %s17, 1
    %p150 = por %p148, %p149
    %p152 = scmp.ne.s32.totalorder %s135, %s151
    %p153 = scmp.eq.s32.totalorder %s17, 0
    %p154 = por %p152, %p153
    %p155 = scmp.le.s32.totalorder 1, %s11
    %p156 = scmp.lt.s32.totalorder %s11, 3
    %p157 = pnand %p155, %p156
    %p158 = pneg %p157
    // Predicated region
    $region9: #{temporal_i3d_sga_std_forward.1} parent=5 // pred_check
      _
    $region10: #{temporal_i3d_sga_std_forward.1} parent=5 // pred_check_branch
      %160 = sbr.rel (%p157) target = $region12
    $region11: #{temporal_i3d_sga_std_forward.1} parent=5 // pred_region
      %s161 = ssub.s32 %s11, 1
      // Predicated region
      $region13: #{temporal_i3d_sga_std_forward.1} parent=11 // pred_check
        %p162 = pneg %p58
      $region14: #{temporal_i3d_sga_std_forward.1} parent=11 // pred_check_branch
        %164 = sbr.rel (%p162) target = $region16
      $region15: #{temporal_i3d_sga_std_forward.1} parent=11 // pred_region
        _
      $region16: #{temporal_i3d_sga_std_forward.1} parent=11 // pred_fallthru
        _
      // Predicated region
      $region17: #{temporal_i3d_sga_std_forward.1} parent=11 // pred_check
        %p165 = pneg %p79
      $region18: #{temporal_i3d_sga_std_forward.1} parent=11 // pred_check_branch
        %167 = sbr.rel (%p165) target = $region20
      $region19: #{temporal_i3d_sga_std_forward.1} parent=11 // pred_region
        _
      $region20: #{temporal_i3d_sga_std_forward.1} parent=11 // pred_fallthru
        _
      // Predicated region
      $region21: #{temporal_i3d_sga_std_forward.1} parent=11 // pred_check
        %p168 = pneg %p100
      $region22: #{temporal_i3d_sga_std_forward.1} parent=11 // pred_check_branch
        %170 = sbr.rel (%p168) target = $region24
      $region23: #{temporal_i3d_sga_std_forward.1} parent=11 // pred_region
        _
      $region24: #{temporal_i3d_sga_std_forward.1} parent=11 // pred_fallthru
        _
      // Predicated region
      $region25: #{temporal_i3d_sga_std_forward.1} parent=11 // pred_check
        %p171 = pneg %p121
      $region26: #{temporal_i3d_sga_std_forward.1} parent=11 // pred_check_branch
        %173 = sbr.rel (%p171) target = $region28
      $region27: #{temporal_i3d_sga_std_forward.1} parent=11 // pred_region
        _
      $region28: #{temporal_i3d_sga_std_forward.1} parent=11 // pred_fallthru
        _
    $region12: #{temporal_i3d_sga_std_forward.1} parent=5 // pred_fallthru
      _
    %p174 = scmp.lt.s32.totalorder %s11, 2
    // Predicated region
    $region29: #{temporal_i3d_sga_std_forward.1} parent=5 // pred_check
      %p175 = pneg %p174
    $region30: #{temporal_i3d_sga_std_forward.1} parent=5 // pred_check_branch
      %177 = sbr.rel (%p175) target = $region32
    $region31: #{temporal_i3d_sga_std_forward.1} parent=5 // pred_region
      // Predicated region
      $region33: #{temporal_i3d_sga_std_forward.1} parent=31 // pred_check
        %p178 = pneg %p31
      $region34: #{temporal_i3d_sga_std_forward.1} parent=31 // pred_check_branch
        %180 = sbr.rel (%p178) target = $region36
      $region35: #{temporal_i3d_sga_std_forward.1} parent=31 // pred_region
        %p181 = scmp.lt.s32.totalorder %s11, 1
        %s182 = scalar_select %p181, %s11, 1
        %s183 = smul.addr %s182, 32
        %s184 = smul.addr %s183, 8
        %s185 = scalar_lea.vmem %s0, %s184
      $region36: #{temporal_i3d_sga_std_forward.1} parent=31 // pred_fallthru
        _
    $region32: #{temporal_i3d_sga_std_forward.1} parent=5 // pred_fallthru
      _
    %p186 = scmp.le.s32.totalorder 1, %s11
    %p187 = scmp.lt.s32.totalorder %s11, 3
    %p188 = pnand %p186, %p187
    %p189 = pneg %p188
    // Predicated region
    $region37: #{temporal_i3d_sga_std_forward.1} parent=5 // pred_check
      _
    $region38: #{temporal_i3d_sga_std_forward.1} parent=5 // pred_check_branch
      %191 = sbr.rel (%p188) target = $region40
    $region39: #{temporal_i3d_sga_std_forward.1} parent=5 // pred_region
      %s192 = ssub.s32 %s11, 1
      %p193 = scmp.lt.s32.totalorder %s16, 1
      %s194 = scalar_select %p193, %s16, 1
      %s195 = smul.addr %s194, 32
      %s196 = smul.addr %s195, 8
      %s197 = scalar_lea.vmem %s0, %s196
      %p198 = pneg %p37
      %p199 = pneg %p34
      %p200 = pneg %p58
      %p201 = pneg %p55
      %p202 = pneg %p79
      %p203 = pneg %p76
      %p204 = pneg %p100
      %p205 = pneg %p97
      %p206 = pneg %p121
      %p207 = pneg %p118
      %p208 = pneg %p147
      %p209 = pneg %p144
      %p210 = scmp.lt.s32.totalorder %s16, 1
      %s211 = scalar_select %p210, %s16, 1
      %s212 = smul.addr %s211, 8
      %s213 = scalar_lea.vmem %s5, %s212
      %p214 = scmp.lt.s32.totalorder %s16, 1
      %s215 = scalar_select %p214, %s16, 1
      %s216 = smul.addr %s215, 32
      %s217 = smul.addr %s216, 8
      %s218 = scalar_lea.vmem %s0, %s217
      %p219 = scmp.lt.s32.totalorder %s16, 1
      %s220 = scalar_select %p219, %s16, 1
      %s221 = smul.addr %s220, 8
      %s222 = scalar_lea.vmem %s5, %s221
      %v224 = vld [vmem:[%s218] sm:$0xff]
      %v225 = vld [vmem:[%s218 + $0x8] sm:$0xff]
      %v226 = vld [vmem:[%s218 + $0x10] sm:$0xff]
      %v227 = vld [vmem:[%s218 + $0x18] sm:$0xff]
      %v228 = vld [vmem:[%s218 + $0x20] sm:$0xff]
      %v229 = vld [vmem:[%s218 + $0x28] sm:$0xff]
      %v230 = vld [vmem:[%s218 + $0x30] sm:$0xff]
      %v231 = vld [vmem:[%s218 + $0x38] sm:$0xff]
      %v232 = vld [vmem:[%s218 + $0x40] sm:$0xff]
      %v233 = vld [vmem:[%s218 + $0x48] sm:$0xff]
      %v234 = vld [vmem:[%s218 + $0x50] sm:$0xff]
      %v235 = vld [vmem:[%s218 + $0x58] sm:$0xff]
      %v236 = vld [vmem:[%s218 + $0x60] sm:$0xff]
      %v237 = vld [vmem:[%s218 + $0x68] sm:$0xff]
      %v238 = vld [vmem:[%s218 + $0x70] sm:$0xff]
      %v239 = vld [vmem:[%s218 + $0x78] sm:$0xff]
      %v240 = vld [vmem:[%s218 + $0x80] sm:$0xff]
      %v241 = vld [vmem:[%s218 + $0x88] sm:$0xff]
      %v242 = vld [vmem:[%s218 + $0x90] sm:$0xff]
      %v243 = vld [vmem:[%s218 + $0x98] sm:$0xff]
      %v244 = vld [vmem:[%s218 + $0xa0] sm:$0xff]
      %v245 = vld [vmem:[%s218 + $0xa8] sm:$0xff]
      %v246 = vld [vmem:[%s218 + $0xb0] sm:$0xff]
      %v247 = vld [vmem:[%s218 + $0xb8] sm:$0xff]
      %v248 = vld [vmem:[%s218 + $0xc0] sm:$0xff]
      %v249 = vld [vmem:[%s218 + $0xc8] sm:$0xff]
      %v250 = vld [vmem:[%s218 + $0xd0] sm:$0xff]
      %v251 = vld [vmem:[%s218 + $0xd8] sm:$0xff]
      %v252 = vld [vmem:[%s218 + $0xe0] sm:$0xff]
      %v253 = vld [vmem:[%s218 + $0xe8] sm:$0xff]
      %v254 = vld [vmem:[%s218 + $0xf0] sm:$0xff]
      %v255 = vld [vmem:[%s218 + $0xf8] sm:$0xff]
      %v256 = vpack.c.bf16 %v224, %v224
      %v257 = vpack.c.bf16 %v225, %v225
      %v258 = vpack.c.bf16 %v226, %v226
      %v259 = vpack.c.bf16 %v227, %v227
      %v260 = vpack.c.bf16 %v228, %v228
      %v261 = vpack.c.bf16 %v229, %v229
      %v262 = vpack.c.bf16 %v230, %v230
      %v263 = vpack.c.bf16 %v231, %v231
      %v264 = vpack.c.bf16 %v232, %v232
      %v265 = vpack.c.bf16 %v233, %v233
      %v266 = vpack.c.bf16 %v234, %v234
      %v267 = vpack.c.bf16 %v235, %v235
      %v268 = vpack.c.bf16 %v236, %v236
      %v269 = vpack.c.bf16 %v237, %v237
      %v270 = vpack.c.bf16 %v238, %v238
      %v271 = vpack.c.bf16 %v239, %v239
      %v272 = vpack.c.bf16 %v240, %v240
      %v273 = vpack.c.bf16 %v241, %v241
      %v274 = vpack.c.bf16 %v242, %v242
      %v275 = vpack.c.bf16 %v243, %v243
      %v276 = vpack.c.bf16 %v244, %v244
      %v277 = vpack.c.bf16 %v245, %v245
      %v278 = vpack.c.bf16 %v246, %v246
      %v279 = vpack.c.bf16 %v247, %v247
      %v280 = vpack.c.bf16 %v248, %v248
      %v281 = vpack.c.bf16 %v249, %v249
      %v282 = vpack.c.bf16 %v250, %v250
      %v283 = vpack.c.bf16 %v251, %v251
      %v284 = vpack.c.bf16 %v252, %v252
      %v285 = vpack.c.bf16 %v253, %v253
      %v286 = vpack.c.bf16 %v254, %v254
      %v287 = vpack.c.bf16 %v255, %v255
      %v288 = vld [vmem:[%s1] sm:$0xff]
      %v289 = vld [vmem:[%s1 + $0x8] sm:$0xff]
      %v290 = vld [vmem:[%s1 + $0x10] sm:$0xff]
      %v291 = vld [vmem:[%s1 + $0x18] sm:$0xff]
      %v292 = vld [vmem:[%s1 + $0x20] sm:$0xff]
      %v293 = vld [vmem:[%s1 + $0x28] sm:$0xff]
      %v294 = vld [vmem:[%s1 + $0x30] sm:$0xff]
      %v295 = vld [vmem:[%s1 + $0x38] sm:$0xff]
      %v296 = vld [vmem:[%s1 + $0x40] sm:$0xff]
      %v297 = vld [vmem:[%s1 + $0x48] sm:$0xff]
      %v298 = vld [vmem:[%s1 + $0x50] sm:$0xff]
      %v299 = vld [vmem:[%s1 + $0x58] sm:$0xff]
      %v300 = vld [vmem:[%s1 + $0x60] sm:$0xff]
      %v301 = vld [vmem:[%s1 + $0x68] sm:$0xff]
      %v302 = vld [vmem:[%s1 + $0x70] sm:$0xff]
      %v303 = vld [vmem:[%s1 + $0x78] sm:$0xff]
      %v304 = vld [vmem:[%s1 + $0x80] sm:$0xff]
      %v305 = vld [vmem:[%s1 + $0x88] sm:$0xff]
      %v306 = vld [vmem:[%s1 + $0x90] sm:$0xff]
      %v307 = vld [vmem:[%s1 + $0x98] sm:$0xff]
      %v308 = vld [vmem:[%s1 + $0xa0] sm:$0xff]
      %v309 = vld [vmem:[%s1 + $0xa8] sm:$0xff]
      %v310 = vld [vmem:[%s1 + $0xb0] sm:$0xff]
      %v311 = vld [vmem:[%s1 + $0xb8] sm:$0xff]
      %v312 = vld [vmem:[%s1 + $0xc0] sm:$0xff]
      %v313 = vld [vmem:[%s1 + $0xc8] sm:$0xff]
      %v314 = vld [vmem:[%s1 + $0xd0] sm:$0xff]
      %v315 = vld [vmem:[%s1 + $0xd8] sm:$0xff]
      %v316 = vld [vmem:[%s1 + $0xe0] sm:$0xff]
      %v317 = vld [vmem:[%s1 + $0xe8] sm:$0xff]
      %v318 = vld [vmem:[%s1 + $0xf0] sm:$0xff]
      %v319 = vld [vmem:[%s1 + $0xf8] sm:$0xff]
      %v320 = vld [vmem:[%s1 + $0x100] sm:$0xff]
      %v321 = vld [vmem:[%s1 + $0x108] sm:$0xff]
      %v322 = vld [vmem:[%s1 + $0x110] sm:$0xff]
      %v323 = vld [vmem:[%s1 + $0x118] sm:$0xff]
      %v324 = vld [vmem:[%s1 + $0x120] sm:$0xff]
      %v325 = vld [vmem:[%s1 + $0x128] sm:$0xff]
      %v326 = vld [vmem:[%s1 + $0x130] sm:$0xff]
      %v327 = vld [vmem:[%s1 + $0x138] sm:$0xff]
      %v328 = vld [vmem:[%s1 + $0x140] sm:$0xff]
      %v329 = vld [vmem:[%s1 + $0x148] sm:$0xff]
      %v330 = vld [vmem:[%s1 + $0x150] sm:$0xff]
      %v331 = vld [vmem:[%s1 + $0x158] sm:$0xff]
      %v332 = vld [vmem:[%s1 + $0x160] sm:$0xff]
      %v333 = vld [vmem:[%s1 + $0x168] sm:$0xff]
      %v334 = vld [vmem:[%s1 + $0x170] sm:$0xff]
      %v335 = vld [vmem:[%s1 + $0x178] sm:$0xff]
      %v336 = vld [vmem:[%s1 + $0x180] sm:$0xff]
      %v337 = vld [vmem:[%s1 + $0x188] sm:$0xff]
      %v338 = vld [vmem:[%s1 + $0x190] sm:$0xff]
      %v339 = vld [vmem:[%s1 + $0x198] sm:$0xff]
      %v340 = vld [vmem:[%s1 + $0x1a0] sm:$0xff]
      %v341 = vld [vmem:[%s1 + $0x1a8] sm:$0xff]
      %v342 = vld [vmem:[%s1 + $0x1b0] sm:$0xff]
      %v343 = vld [vmem:[%s1 + $0x1b8] sm:$0xff]
      %v344 = vld [vmem:[%s1 + $0x1c0] sm:$0xff]
      %v345 = vld [vmem:[%s1 + $0x1c8] sm:$0xff]
      %v346 = vld [vmem:[%s1 + $0x1d0] sm:$0xff]
      %v347 = vld [vmem:[%s1 + $0x1d8] sm:$0xff]
      %v348 = vld [vmem:[%s1 + $0x1e0] sm:$0xff]
      %v349 = vld [vmem:[%s1 + $0x1e8] sm:$0xff]
      %v350 = vld [vmem:[%s1 + $0x1f0] sm:$0xff]
      %v351 = vld [vmem:[%s1 + $0x1f8] sm:$0xff]
      %v352 = vld [vmem:[%s1 + $0x200] sm:$0xff]
      %v353 = vld [vmem:[%s1 + $0x208] sm:$0xff]
      %v354 = vld [vmem:[%s1 + $0x210] sm:$0xff]
      %v355 = vld [vmem:[%s1 + $0x218] sm:$0xff]
      %v356 = vld [vmem:[%s1 + $0x220] sm:$0xff]
      %v357 = vld [vmem:[%s1 + $0x228] sm:$0xff]
      %v358 = vld [vmem:[%s1 + $0x230] sm:$0xff]
      %v359 = vld [vmem:[%s1 + $0x238] sm:$0xff]
      %v360 = vld [vmem:[%s1 + $0x240] sm:$0xff]
      %v361 = vld [vmem:[%s1 + $0x248] sm:$0xff]
      %v362 = vld [vmem:[%s1 + $0x250] sm:$0xff]
      %v363 = vld [vmem:[%s1 + $0x258] sm:$0xff]
      %v364 = vld [vmem:[%s1 + $0x260] sm:$0xff]
      %v365 = vld [vmem:[%s1 + $0x268] sm:$0xff]
      %v366 = vld [vmem:[%s1 + $0x270] sm:$0xff]
      %v367 = vld [vmem:[%s1 + $0x278] sm:$0xff]
      %v368 = vld [vmem:[%s1 + $0x280] sm:$0xff]
      %v369 = vld [vmem:[%s1 + $0x288] sm:$0xff]
      %v370 = vld [vmem:[%s1 + $0x290] sm:$0xff]
      %v371 = vld [vmem:[%s1 + $0x298] sm:$0xff]
      %v372 = vld [vmem:[%s1 + $0x2a0] sm:$0xff]
      %v373 = vld [vmem:[%s1 + $0x2a8] sm:$0xff]
      %v374 = vld [vmem:[%s1 + $0x2b0] sm:$0xff]
      %v375 = vld [vmem:[%s1 + $0x2b8] sm:$0xff]
      %v376 = vld [vmem:[%s1 + $0x2c0] sm:$0xff]
      %v377 = vld [vmem:[%s1 + $0x2c8] sm:$0xff]
      %v378 = vld [vmem:[%s1 + $0x2d0] sm:$0xff]
      %v379 = vld [vmem:[%s1 + $0x2d8] sm:$0xff]
      %v380 = vld [vmem:[%s1 + $0x2e0] sm:$0xff]
      %v381 = vld [vmem:[%s1 + $0x2e8] sm:$0xff]
      %v382 = vld [vmem:[%s1 + $0x2f0] sm:$0xff]
      %v383 = vld [vmem:[%s1 + $0x2f8] sm:$0xff]
      %v384 = vld [vmem:[%s1 + $0x300] sm:$0xff]
      %v385 = vld [vmem:[%s1 + $0x308] sm:$0xff]
      %v386 = vld [vmem:[%s1 + $0x310] sm:$0xff]
      %v387 = vld [vmem:[%s1 + $0x318] sm:$0xff]
      %v388 = vld [vmem:[%s1 + $0x320] sm:$0xff]
      %v389 = vld [vmem:[%s1 + $0x328] sm:$0xff]
      %v390 = vld [vmem:[%s1 + $0x330] sm:$0xff]
      %v391 = vld [vmem:[%s1 + $0x338] sm:$0xff]
      %v392 = vld [vmem:[%s1 + $0x340] sm:$0xff]
      %v393 = vld [vmem:[%s1 + $0x348] sm:$0xff]
      %v394 = vld [vmem:[%s1 + $0x350] sm:$0xff]
      %v395 = vld [vmem:[%s1 + $0x358] sm:$0xff]
      %v396 = vld [vmem:[%s1 + $0x360] sm:$0xff]
      %v397 = vld [vmem:[%s1 + $0x368] sm:$0xff]
      %v398 = vld [vmem:[%s1 + $0x370] sm:$0xff]
      %v399 = vld [vmem:[%s1 + $0x378] sm:$0xff]
      %v400 = vld [vmem:[%s1 + $0x380] sm:$0xff]
      %v401 = vld [vmem:[%s1 + $0x388] sm:$0xff]
      %v402 = vld [vmem:[%s1 + $0x390] sm:$0xff]
      %v403 = vld [vmem:[%s1 + $0x398] sm:$0xff]
      %v404 = vld [vmem:[%s1 + $0x3a0] sm:$0xff]
      %v405 = vld [vmem:[%s1 + $0x3a8] sm:$0xff]
      %v406 = vld [vmem:[%s1 + $0x3b0] sm:$0xff]
      %v407 = vld [vmem:[%s1 + $0x3b8] sm:$0xff]
      %v408 = vld [vmem:[%s1 + $0x3c0] sm:$0xff]
      %v409 = vld [vmem:[%s1 + $0x3c8] sm:$0xff]
      %v410 = vld [vmem:[%s1 + $0x3d0] sm:$0xff]
      %v411 = vld [vmem:[%s1 + $0x3d8] sm:$0xff]
      %v412 = vld [vmem:[%s1 + $0x3e0] sm:$0xff]
      %v413 = vld [vmem:[%s1 + $0x3e8] sm:$0xff]
      %v414 = vld [vmem:[%s1 + $0x3f0] sm:$0xff]
      %v415 = vld [vmem:[%s1 + $0x3f8] sm:$0xff]
      %v416 = vld [vmem:[%s1 + $0x400] sm:$0xff]
      %v417 = vld [vmem:[%s1 + $0x408] sm:$0xff]
      %v418 = vld [vmem:[%s1 + $0x410] sm:$0xff]
      %v419 = vld [vmem:[%s1 + $0x418] sm:$0xff]
      %v420 = vld [vmem:[%s1 + $0x420] sm:$0xff]
      %v421 = vld [vmem:[%s1 + $0x428] sm:$0xff]
      %v422 = vld [vmem:[%s1 + $0x430] sm:$0xff]
      %v423 = vld [vmem:[%s1 + $0x438] sm:$0xff]
      %v424 = vld [vmem:[%s1 + $0x440] sm:$0xff]
      %v425 = vld [vmem:[%s1 + $0x448] sm:$0xff]
      %v426 = vld [vmem:[%s1 + $0x450] sm:$0xff]
      %v427 = vld [vmem:[%s1 + $0x458] sm:$0xff]
      %v428 = vld [vmem:[%s1 + $0x460] sm:$0xff]
      %v429 = vld [vmem:[%s1 + $0x468] sm:$0xff]
      %v430 = vld [vmem:[%s1 + $0x470] sm:$0xff]
      %v431 = vld [vmem:[%s1 + $0x478] sm:$0xff]
      %v432 = vld [vmem:[%s1 + $0x480] sm:$0xff]
      %v433 = vld [vmem:[%s1 + $0x488] sm:$0xff]
      %v434 = vld [vmem:[%s1 + $0x490] sm:$0xff]
      %v435 = vld [vmem:[%s1 + $0x498] sm:$0xff]
      %v436 = vld [vmem:[%s1 + $0x4a0] sm:$0xff]
      %v437 = vld [vmem:[%s1 + $0x4a8] sm:$0xff]
      %v438 = vld [vmem:[%s1 + $0x4b0] sm:$0xff]
      %v439 = vld [vmem:[%s1 + $0x4b8] sm:$0xff]
      %v440 = vld [vmem:[%s1 + $0x4c0] sm:$0xff]
      %v441 = vld [vmem:[%s1 + $0x4c8] sm:$0xff]
      %v442 = vld [vmem:[%s1 + $0x4d0] sm:$0xff]
      %v443 = vld [vmem:[%s1 + $0x4d8] sm:$0xff]
      %v444 = vld [vmem:[%s1 + $0x4e0] sm:$0xff]
      %v445 = vld [vmem:[%s1 + $0x4e8] sm:$0xff]
      %v446 = vld [vmem:[%s1 + $0x4f0] sm:$0xff]
      %v447 = vld [vmem:[%s1 + $0x4f8] sm:$0xff]
      %v448 = vld [vmem:[%s1 + $0x500] sm:$0xff]
      %v449 = vld [vmem:[%s1 + $0x508] sm:$0xff]
      %v450 = vld [vmem:[%s1 + $0x510] sm:$0xff]
      %v451 = vld [vmem:[%s1 + $0x518] sm:$0xff]
      %v452 = vld [vmem:[%s1 + $0x520] sm:$0xff]
      %v453 = vld [vmem:[%s1 + $0x528] sm:$0xff]
      %v454 = vld [vmem:[%s1 + $0x530] sm:$0xff]
      %v455 = vld [vmem:[%s1 + $0x538] sm:$0xff]
      %v456 = vld [vmem:[%s1 + $0x540] sm:$0xff]
      %v457 = vld [vmem:[%s1 + $0x548] sm:$0xff]
      %v458 = vld [vmem:[%s1 + $0x550] sm:$0xff]
      %v459 = vld [vmem:[%s1 + $0x558] sm:$0xff]
      %v460 = vld [vmem:[%s1 + $0x560] sm:$0xff]
      %v461 = vld [vmem:[%s1 + $0x568] sm:$0xff]
      %v462 = vld [vmem:[%s1 + $0x570] sm:$0xff]
      %v463 = vld [vmem:[%s1 + $0x578] sm:$0xff]
      %v464 = vld [vmem:[%s1 + $0x580] sm:$0xff]
      %v465 = vld [vmem:[%s1 + $0x588] sm:$0xff]
      %v466 = vld [vmem:[%s1 + $0x590] sm:$0xff]
      %v467 = vld [vmem:[%s1 + $0x598] sm:$0xff]
      %v468 = vld [vmem:[%s1 + $0x5a0] sm:$0xff]
      %v469 = vld [vmem:[%s1 + $0x5a8] sm:$0xff]
      %v470 = vld [vmem:[%s1 + $0x5b0] sm:$0xff]
      %v471 = vld [vmem:[%s1 + $0x5b8] sm:$0xff]
      %v472 = vld [vmem:[%s1 + $0x5c0] sm:$0xff]
      %v473 = vld [vmem:[%s1 + $0x5c8] sm:$0xff]
      %v474 = vld [vmem:[%s1 + $0x5d0] sm:$0xff]
      %v475 = vld [vmem:[%s1 + $0x5d8] sm:$0xff]
      %v476 = vld [vmem:[%s1 + $0x5e0] sm:$0xff]
      %v477 = vld [vmem:[%s1 + $0x5e8] sm:$0xff]
      %v478 = vld [vmem:[%s1 + $0x5f0] sm:$0xff]
      %v479 = vld [vmem:[%s1 + $0x5f8] sm:$0xff]
      %v480 = vld [vmem:[%s1 + $0x600] sm:$0xff]
      %v481 = vld [vmem:[%s1 + $0x608] sm:$0xff]
      %v482 = vld [vmem:[%s1 + $0x610] sm:$0xff]
      %v483 = vld [vmem:[%s1 + $0x618] sm:$0xff]
      %v484 = vld [vmem:[%s1 + $0x620] sm:$0xff]
      %v485 = vld [vmem:[%s1 + $0x628] sm:$0xff]
      %v486 = vld [vmem:[%s1 + $0x630] sm:$0xff]
      %v487 = vld [vmem:[%s1 + $0x638] sm:$0xff]
      %v488 = vld [vmem:[%s1 + $0x640] sm:$0xff]
      %v489 = vld [vmem:[%s1 + $0x648] sm:$0xff]
      %v490 = vld [vmem:[%s1 + $0x650] sm:$0xff]
      %v491 = vld [vmem:[%s1 + $0x658] sm:$0xff]
      %v492 = vld [vmem:[%s1 + $0x660] sm:$0xff]
      %v493 = vld [vmem:[%s1 + $0x668] sm:$0xff]
      %v494 = vld [vmem:[%s1 + $0x670] sm:$0xff]
      %v495 = vld [vmem:[%s1 + $0x678] sm:$0xff]
      %v496 = vld [vmem:[%s1 + $0x680] sm:$0xff]
      %v497 = vld [vmem:[%s1 + $0x688] sm:$0xff]
      %v498 = vld [vmem:[%s1 + $0x690] sm:$0xff]
      %v499 = vld [vmem:[%s1 + $0x698] sm:$0xff]
      %v500 = vld [vmem:[%s1 + $0x6a0] sm:$0xff]
      %v501 = vld [vmem:[%s1 + $0x6a8] sm:$0xff]
      %v502 = vld [vmem:[%s1 + $0x6b0] sm:$0xff]
      %v503 = vld [vmem:[%s1 + $0x6b8] sm:$0xff]
      %v504 = vld [vmem:[%s1 + $0x6c0] sm:$0xff]
      %v505 = vld [vmem:[%s1 + $0x6c8] sm:$0xff]
      %v506 = vld [vmem:[%s1 + $0x6d0] sm:$0xff]
      %v507 = vld [vmem:[%s1 + $0x6d8] sm:$0xff]
      %v508 = vld [vmem:[%s1 + $0x6e0] sm:$0xff]
      %v509 = vld [vmem:[%s1 + $0x6e8] sm:$0xff]
      %v510 = vld [vmem:[%s1 + $0x6f0] sm:$0xff]
      %v511 = vld [vmem:[%s1 + $0x6f8] sm:$0xff]
      %v512 = vld [vmem:[%s1 + $0x700] sm:$0xff]
      %v513 = vld [vmem:[%s1 + $0x708] sm:$0xff]
      %v514 = vld [vmem:[%s1 + $0x710] sm:$0xff]
      %v515 = vld [vmem:[%s1 + $0x718] sm:$0xff]
      %v516 = vld [vmem:[%s1 + $0x720] sm:$0xff]
      %v517 = vld [vmem:[%s1 + $0x728] sm:$0xff]
      %v518 = vld [vmem:[%s1 + $0x730] sm:$0xff]
      %v519 = vld [vmem:[%s1 + $0x738] sm:$0xff]
      %v520 = vld [vmem:[%s1 + $0x740] sm:$0xff]
      %v521 = vld [vmem:[%s1 + $0x748] sm:$0xff]
      %v522 = vld [vmem:[%s1 + $0x750] sm:$0xff]
      %v523 = vld [vmem:[%s1 + $0x758] sm:$0xff]
      %v524 = vld [vmem:[%s1 + $0x760] sm:$0xff]
      %v525 = vld [vmem:[%s1 + $0x768] sm:$0xff]
      %v526 = vld [vmem:[%s1 + $0x770] sm:$0xff]
      %v527 = vld [vmem:[%s1 + $0x778] sm:$0xff]
      %v528 = vld [vmem:[%s1 + $0x780] sm:$0xff]
      %v529 = vld [vmem:[%s1 + $0x788] sm:$0xff]
      %v530 = vld [vmem:[%s1 + $0x790] sm:$0xff]
      %v531 = vld [vmem:[%s1 + $0x798] sm:$0xff]
      %v532 = vld [vmem:[%s1 + $0x7a0] sm:$0xff]
      %v533 = vld [vmem:[%s1 + $0x7a8] sm:$0xff]
      %v534 = vld [vmem:[%s1 + $0x7b0] sm:$0xff]
      %v535 = vld [vmem:[%s1 + $0x7b8] sm:$0xff]
      %v536 = vld [vmem:[%s1 + $0x7c0] sm:$0xff]
      %v537 = vld [vmem:[%s1 + $0x7c8] sm:$0xff]
      %v538 = vld [vmem:[%s1 + $0x7d0] sm:$0xff]
      %v539 = vld [vmem:[%s1 + $0x7d8] sm:$0xff]
      %v540 = vld [vmem:[%s1 + $0x7e0] sm:$0xff]
      %v541 = vld [vmem:[%s1 + $0x7e8] sm:$0xff]
      %v542 = vld [vmem:[%s1 + $0x7f0] sm:$0xff]
      %v543 = vld [vmem:[%s1 + $0x7f8] sm:$0xff]
      %v544 = vld [vmem:[%s1 + $0x800] sm:$0xff]
      %v545 = vld [vmem:[%s1 + $0x808] sm:$0xff]
      %v546 = vld [vmem:[%s1 + $0x810] sm:$0xff]
      %v547 = vld [vmem:[%s1 + $0x818] sm:$0xff]
      %v548 = vld [vmem:[%s1 + $0x820] sm:$0xff]
      %v549 = vld [vmem:[%s1 + $0x828] sm:$0xff]
      %v550 = vld [vmem:[%s1 + $0x830] sm:$0xff]
      %v551 = vld [vmem:[%s1 + $0x838] sm:$0xff]
      %v552 = vld [vmem:[%s1 + $0x840] sm:$0xff]
      %v553 = vld [vmem:[%s1 + $0x848] sm:$0xff]
      %v554 = vld [vmem:[%s1 + $0x850] sm:$0xff]
      %v555 = vld [vmem:[%s1 + $0x858] sm:$0xff]
      %v556 = vld [vmem:[%s1 + $0x860] sm:$0xff]
      %v557 = vld [vmem:[%s1 + $0x868] sm:$0xff]
      %v558 = vld [vmem:[%s1 + $0x870] sm:$0xff]
      %v559 = vld [vmem:[%s1 + $0x878] sm:$0xff]
      %v560 = vld [vmem:[%s1 + $0x880] sm:$0xff]
      %v561 = vld [vmem:[%s1 + $0x888] sm:$0xff]
      %v562 = vld [vmem:[%s1 + $0x890] sm:$0xff]
      %v563 = vld [vmem:[%s1 + $0x898] sm:$0xff]
      %v564 = vld [vmem:[%s1 + $0x8a0] sm:$0xff]
      %v565 = vld [vmem:[%s1 + $0x8a8] sm:$0xff]
      %v566 = vld [vmem:[%s1 + $0x8b0] sm:$0xff]
      %v567 = vld [vmem:[%s1 + $0x8b8] sm:$0xff]
      %v568 = vld [vmem:[%s1 + $0x8c0] sm:$0xff]
      %v569 = vld [vmem:[%s1 + $0x8c8] sm:$0xff]
      %v570 = vld [vmem:[%s1 + $0x8d0] sm:$0xff]
      %v571 = vld [vmem:[%s1 + $0x8d8] sm:$0xff]
      %v572 = vld [vmem:[%s1 + $0x8e0] sm:$0xff]
      %v573 = vld [vmem:[%s1 + $0x8e8] sm:$0xff]
      %v574 = vld [vmem:[%s1 + $0x8f0] sm:$0xff]
      %v575 = vld [vmem:[%s1 + $0x8f8] sm:$0xff]
      %v576 = vld [vmem:[%s1 + $0x900] sm:$0xff]
      %v577 = vld [vmem:[%s1 + $0x908] sm:$0xff]
      %v578 = vld [vmem:[%s1 + $0x910] sm:$0xff]
      %v579 = vld [vmem:[%s1 + $0x918] sm:$0xff]
      %v580 = vld [vmem:[%s1 + $0x920] sm:$0xff]
      %v581 = vld [vmem:[%s1 + $0x928] sm:$0xff]
      %v582 = vld [vmem:[%s1 + $0x930] sm:$0xff]
      %v583 = vld [vmem:[%s1 + $0x938] sm:$0xff]
      %v584 = vld [vmem:[%s1 + $0x940] sm:$0xff]
      %v585 = vld [vmem:[%s1 + $0x948] sm:$0xff]
      %v586 = vld [vmem:[%s1 + $0x950] sm:$0xff]
      %v587 = vld [vmem:[%s1 + $0x958] sm:$0xff]
      %v588 = vld [vmem:[%s1 + $0x960] sm:$0xff]
      %v589 = vld [vmem:[%s1 + $0x968] sm:$0xff]
      %v590 = vld [vmem:[%s1 + $0x970] sm:$0xff]
      %v591 = vld [vmem:[%s1 + $0x978] sm:$0xff]
      %v592 = vld [vmem:[%s1 + $0x980] sm:$0xff]
      %v593 = vld [vmem:[%s1 + $0x988] sm:$0xff]
      %v594 = vld [vmem:[%s1 + $0x990] sm:$0xff]
      %v595 = vld [vmem:[%s1 + $0x998] sm:$0xff]
      %v596 = vld [vmem:[%s1 + $0x9a0] sm:$0xff]
      %v597 = vld [vmem:[%s1 + $0x9a8] sm:$0xff]
      %v598 = vld [vmem:[%s1 + $0x9b0] sm:$0xff]
      %v599 = vld [vmem:[%s1 + $0x9b8] sm:$0xff]
      %v600 = vld [vmem:[%s1 + $0x9c0] sm:$0xff]
      %v601 = vld [vmem:[%s1 + $0x9c8] sm:$0xff]
      %v602 = vld [vmem:[%s1 + $0x9d0] sm:$0xff]
      %v603 = vld [vmem:[%s1 + $0x9d8] sm:$0xff]
      %v604 = vld [vmem:[%s1 + $0x9e0] sm:$0xff]
      %v605 = vld [vmem:[%s1 + $0x9e8] sm:$0xff]
      %v606 = vld [vmem:[%s1 + $0x9f0] sm:$0xff]
      %v607 = vld [vmem:[%s1 + $0x9f8] sm:$0xff]
      %v608 = vld [vmem:[%s1 + $0xa00] sm:$0xff]
      %v609 = vld [vmem:[%s1 + $0xa08] sm:$0xff]
      %v610 = vld [vmem:[%s1 + $0xa10] sm:$0xff]
      %v611 = vld [vmem:[%s1 + $0xa18] sm:$0xff]
      %v612 = vld [vmem:[%s1 + $0xa20] sm:$0xff]
      %v613 = vld [vmem:[%s1 + $0xa28] sm:$0xff]
      %v614 = vld [vmem:[%s1 + $0xa30] sm:$0xff]
      %v615 = vld [vmem:[%s1 + $0xa38] sm:$0xff]
      %v616 = vld [vmem:[%s1 + $0xa40] sm:$0xff]
      %v617 = vld [vmem:[%s1 + $0xa48] sm:$0xff]
      %v618 = vld [vmem:[%s1 + $0xa50] sm:$0xff]
      %v619 = vld [vmem:[%s1 + $0xa58] sm:$0xff]
      %v620 = vld [vmem:[%s1 + $0xa60] sm:$0xff]
      %v621 = vld [vmem:[%s1 + $0xa68] sm:$0xff]
      %v622 = vld [vmem:[%s1 + $0xa70] sm:$0xff]
      %v623 = vld [vmem:[%s1 + $0xa78] sm:$0xff]
      %v624 = vld [vmem:[%s1 + $0xa80] sm:$0xff]
      %v625 = vld [vmem:[%s1 + $0xa88] sm:$0xff]
      %v626 = vld [vmem:[%s1 + $0xa90] sm:$0xff]
      %v627 = vld [vmem:[%s1 + $0xa98] sm:$0xff]
      %v628 = vld [vmem:[%s1 + $0xaa0] sm:$0xff]
      %v629 = vld [vmem:[%s1 + $0xaa8] sm:$0xff]
      %v630 = vld [vmem:[%s1 + $0xab0] sm:$0xff]
      %v631 = vld [vmem:[%s1 + $0xab8] sm:$0xff]
      %v632 = vld [vmem:[%s1 + $0xac0] sm:$0xff]
      %v633 = vld [vmem:[%s1 + $0xac8] sm:$0xff]
      %v634 = vld [vmem:[%s1 + $0xad0] sm:$0xff]
      %v635 = vld [vmem:[%s1 + $0xad8] sm:$0xff]
      %v636 = vld [vmem:[%s1 + $0xae0] sm:$0xff]
      %v637 = vld [vmem:[%s1 + $0xae8] sm:$0xff]
      %v638 = vld [vmem:[%s1 + $0xaf0] sm:$0xff]
      %v639 = vld [vmem:[%s1 + $0xaf8] sm:$0xff]
      %v640 = vld [vmem:[%s1 + $0xb00] sm:$0xff]
      %v641 = vld [vmem:[%s1 + $0xb08] sm:$0xff]
      %v642 = vld [vmem:[%s1 + $0xb10] sm:$0xff]
      %v643 = vld [vmem:[%s1 + $0xb18] sm:$0xff]
      %v644 = vld [vmem:[%s1 + $0xb20] sm:$0xff]
      %v645 = vld [vmem:[%s1 + $0xb28] sm:$0xff]
      %v646 = vld [vmem:[%s1 + $0xb30] sm:$0xff]
      %v647 = vld [vmem:[%s1 + $0xb38] sm:$0xff]
      %v648 = vld [vmem:[%s1 + $0xb40] sm:$0xff]
      %v649 = vld [vmem:[%s1 + $0xb48] sm:$0xff]
      %v650 = vld [vmem:[%s1 + $0xb50] sm:$0xff]
      %v651 = vld [vmem:[%s1 + $0xb58] sm:$0xff]
      %v652 = vld [vmem:[%s1 + $0xb60] sm:$0xff]
      %v653 = vld [vmem:[%s1 + $0xb68] sm:$0xff]
      %v654 = vld [vmem:[%s1 + $0xb70] sm:$0xff]
      %v655 = vld [vmem:[%s1 + $0xb78] sm:$0xff]
      %v656 = vld [vmem:[%s1 + $0xb80] sm:$0xff]
      %v657 = vld [vmem:[%s1 + $0xb88] sm:$0xff]
      %v658 = vld [vmem:[%s1 + $0xb90] sm:$0xff]
      %v659 = vld [vmem:[%s1 + $0xb98] sm:$0xff]
      %v660 = vld [vmem:[%s1 + $0xba0] sm:$0xff]
      %v661 = vld [vmem:[%s1 + $0xba8] sm:$0xff]
      %v662 = vld [vmem:[%s1 + $0xbb0] sm:$0xff]
      %v663 = vld [vmem:[%s1 + $0xbb8] sm:$0xff]
      %v664 = vld [vmem:[%s1 + $0xbc0] sm:$0xff]
      %v665 = vld [vmem:[%s1 + $0xbc8] sm:$0xff]
      %v666 = vld [vmem:[%s1 + $0xbd0] sm:$0xff]
      %v667 = vld [vmem:[%s1 + $0xbd8] sm:$0xff]
      %v668 = vld [vmem:[%s1 + $0xbe0] sm:$0xff]
      %v669 = vld [vmem:[%s1 + $0xbe8] sm:$0xff]
      %v670 = vld [vmem:[%s1 + $0xbf0] sm:$0xff]
      %v671 = vld [vmem:[%s1 + $0xbf8] sm:$0xff]
      %v672 = vld [vmem:[%s1 + $0xc00] sm:$0xff]
      %v673 = vld [vmem:[%s1 + $0xc08] sm:$0xff]
      %v674 = vld [vmem:[%s1 + $0xc10] sm:$0xff]
      %v675 = vld [vmem:[%s1 + $0xc18] sm:$0xff]
      %v676 = vld [vmem:[%s1 + $0xc20] sm:$0xff]
      %v677 = vld [vmem:[%s1 + $0xc28] sm:$0xff]
      %v678 = vld [vmem:[%s1 + $0xc30] sm:$0xff]
      %v679 = vld [vmem:[%s1 + $0xc38] sm:$0xff]
      %v680 = vld [vmem:[%s1 + $0xc40] sm:$0xff]
      %v681 = vld [vmem:[%s1 + $0xc48] sm:$0xff]
      %v682 = vld [vmem:[%s1 + $0xc50] sm:$0xff]
      %v683 = vld [vmem:[%s1 + $0xc58] sm:$0xff]
      %v684 = vld [vmem:[%s1 + $0xc60] sm:$0xff]
      %v685 = vld [vmem:[%s1 + $0xc68] sm:$0xff]
      %v686 = vld [vmem:[%s1 + $0xc70] sm:$0xff]
      %v687 = vld [vmem:[%s1 + $0xc78] sm:$0xff]
      %v688 = vld [vmem:[%s1 + $0xc80] sm:$0xff]
      %v689 = vld [vmem:[%s1 + $0xc88] sm:$0xff]
      %v690 = vld [vmem:[%s1 + $0xc90] sm:$0xff]
      %v691 = vld [vmem:[%s1 + $0xc98] sm:$0xff]
      %v692 = vld [vmem:[%s1 + $0xca0] sm:$0xff]
      %v693 = vld [vmem:[%s1 + $0xca8] sm:$0xff]
      %v694 = vld [vmem:[%s1 + $0xcb0] sm:$0xff]
      %v695 = vld [vmem:[%s1 + $0xcb8] sm:$0xff]
      %v696 = vld [vmem:[%s1 + $0xcc0] sm:$0xff]
      %v697 = vld [vmem:[%s1 + $0xcc8] sm:$0xff]
      %v698 = vld [vmem:[%s1 + $0xcd0] sm:$0xff]
      %v699 = vld [vmem:[%s1 + $0xcd8] sm:$0xff]
      %v700 = vld [vmem:[%s1 + $0xce0] sm:$0xff]
      %v701 = vld [vmem:[%s1 + $0xce8] sm:$0xff]
      %v702 = vld [vmem:[%s1 + $0xcf0] sm:$0xff]
      %v703 = vld [vmem:[%s1 + $0xcf8] sm:$0xff]
      %v704 = vld [vmem:[%s1 + $0xd00] sm:$0xff]
      %v705 = vld [vmem:[%s1 + $0xd08] sm:$0xff]
      %v706 = vld [vmem:[%s1 + $0xd10] sm:$0xff]
      %v707 = vld [vmem:[%s1 + $0xd18] sm:$0xff]
      %v708 = vld [vmem:[%s1 + $0xd20] sm:$0xff]
      %v709 = vld [vmem:[%s1 + $0xd28] sm:$0xff]
      %v710 = vld [vmem:[%s1 + $0xd30] sm:$0xff]
      %v711 = vld [vmem:[%s1 + $0xd38] sm:$0xff]
      %v712 = vld [vmem:[%s1 + $0xd40] sm:$0xff]
      %v713 = vld [vmem:[%s1 + $0xd48] sm:$0xff]
      %v714 = vld [vmem:[%s1 + $0xd50] sm:$0xff]
      %v715 = vld [vmem:[%s1 + $0xd58] sm:$0xff]
      %v716 = vld [vmem:[%s1 + $0xd60] sm:$0xff]
      %v717 = vld [vmem:[%s1 + $0xd68] sm:$0xff]
      %v718 = vld [vmem:[%s1 + $0xd70] sm:$0xff]
      %v719 = vld [vmem:[%s1 + $0xd78] sm:$0xff]
      %v720 = vld [vmem:[%s1 + $0xd80] sm:$0xff]
      %v721 = vld [vmem:[%s1 + $0xd88] sm:$0xff]
      %v722 = vld [vmem:[%s1 + $0xd90] sm:$0xff]
      %v723 = vld [vmem:[%s1 + $0xd98] sm:$0xff]
      %v724 = vld [vmem:[%s1 + $0xda0] sm:$0xff]
      %v725 = vld [vmem:[%s1 + $0xda8] sm:$0xff]
      %v726 = vld [vmem:[%s1 + $0xdb0] sm:$0xff]
      %v727 = vld [vmem:[%s1 + $0xdb8] sm:$0xff]
      %v728 = vld [vmem:[%s1 + $0xdc0] sm:$0xff]
      %v729 = vld [vmem:[%s1 + $0xdc8] sm:$0xff]
      %v730 = vld [vmem:[%s1 + $0xdd0] sm:$0xff]
      %v731 = vld [vmem:[%s1 + $0xdd8] sm:$0xff]
      %v732 = vld [vmem:[%s1 + $0xde0] sm:$0xff]
      %v733 = vld [vmem:[%s1 + $0xde8] sm:$0xff]
      %v734 = vld [vmem:[%s1 + $0xdf0] sm:$0xff]
      %v735 = vld [vmem:[%s1 + $0xdf8] sm:$0xff]
      %v736 = vld [vmem:[%s1 + $0xe00] sm:$0xff]
      %v737 = vld [vmem:[%s1 + $0xe08] sm:$0xff]
      %v738 = vld [vmem:[%s1 + $0xe10] sm:$0xff]
      %v739 = vld [vmem:[%s1 + $0xe18] sm:$0xff]
      %v740 = vld [vmem:[%s1 + $0xe20] sm:$0xff]
      %v741 = vld [vmem:[%s1 + $0xe28] sm:$0xff]
      %v742 = vld [vmem:[%s1 + $0xe30] sm:$0xff]
      %v743 = vld [vmem:[%s1 + $0xe38] sm:$0xff]
      %v744 = vld [vmem:[%s1 + $0xe40] sm:$0xff]
      %v745 = vld [vmem:[%s1 + $0xe48] sm:$0xff]
      %v746 = vld [vmem:[%s1 + $0xe50] sm:$0xff]
      %v747 = vld [vmem:[%s1 + $0xe58] sm:$0xff]
      %v748 = vld [vmem:[%s1 + $0xe60] sm:$0xff]
      %v749 = vld [vmem:[%s1 + $0xe68] sm:$0xff]
      %v750 = vld [vmem:[%s1 + $0xe70] sm:$0xff]
      %v751 = vld [vmem:[%s1 + $0xe78] sm:$0xff]
      %v752 = vld [vmem:[%s1 + $0xe80] sm:$0xff]
      %v753 = vld [vmem:[%s1 + $0xe88] sm:$0xff]
      %v754 = vld [vmem:[%s1 + $0xe90] sm:$0xff]
      %v755 = vld [vmem:[%s1 + $0xe98] sm:$0xff]
      %v756 = vld [vmem:[%s1 + $0xea0] sm:$0xff]
      %v757 = vld [vmem:[%s1 + $0xea8] sm:$0xff]
      %v758 = vld [vmem:[%s1 + $0xeb0] sm:$0xff]
      %v759 = vld [vmem:[%s1 + $0xeb8] sm:$0xff]
      %v760 = vld [vmem:[%s1 + $0xec0] sm:$0xff]
      %v761 = vld [vmem:[%s1 + $0xec8] sm:$0xff]
      %v762 = vld [vmem:[%s1 + $0xed0] sm:$0xff]
      %v763 = vld [vmem:[%s1 + $0xed8] sm:$0xff]
      %v764 = vld [vmem:[%s1 + $0xee0] sm:$0xff]
      %v765 = vld [vmem:[%s1 + $0xee8] sm:$0xff]
      %v766 = vld [vmem:[%s1 + $0xef0] sm:$0xff]
      %v767 = vld [vmem:[%s1 + $0xef8] sm:$0xff]
      %v768 = vld [vmem:[%s1 + $0xf00] sm:$0xff]
      %v769 = vld [vmem:[%s1 + $0xf08] sm:$0xff]
      %v770 = vld [vmem:[%s1 + $0xf10] sm:$0xff]
      %v771 = vld [vmem:[%s1 + $0xf18] sm:$0xff]
      %v772 = vld [vmem:[%s1 + $0xf20] sm:$0xff]
      %v773 = vld [vmem:[%s1 + $0xf28] sm:$0xff]
      %v774 = vld [vmem:[%s1 + $0xf30] sm:$0xff]
      %v775 = vld [vmem:[%s1 + $0xf38] sm:$0xff]
      %v776 = vld [vmem:[%s1 + $0xf40] sm:$0xff]
      %v777 = vld [vmem:[%s1 + $0xf48] sm:$0xff]
      %v778 = vld [vmem:[%s1 + $0xf50] sm:$0xff]
      %v779 = vld [vmem:[%s1 + $0xf58] sm:$0xff]
      %v780 = vld [vmem:[%s1 + $0xf60] sm:$0xff]
      %v781 = vld [vmem:[%s1 + $0xf68] sm:$0xff]
      %v782 = vld [vmem:[%s1 + $0xf70] sm:$0xff]
      %v783 = vld [vmem:[%s1 + $0xf78] sm:$0xff]
      %v784 = vld [vmem:[%s1 + $0xf80] sm:$0xff]
      %v785 = vld [vmem:[%s1 + $0xf88] sm:$0xff]
      %v786 = vld [vmem:[%s1 + $0xf90] sm:$0xff]
      %v787 = vld [vmem:[%s1 + $0xf98] sm:$0xff]
      %v788 = vld [vmem:[%s1 + $0xfa0] sm:$0xff]
      %v789 = vld [vmem:[%s1 + $0xfa8] sm:$0xff]
      %v790 = vld [vmem:[%s1 + $0xfb0] sm:$0xff]
      %v791 = vld [vmem:[%s1 + $0xfb8] sm:$0xff]
      %v792 = vld [vmem:[%s1 + $0xfc0] sm:$0xff]
      %v793 = vld [vmem:[%s1 + $0xfc8] sm:$0xff]
      %v794 = vld [vmem:[%s1 + $0xfd0] sm:$0xff]
      %v795 = vld [vmem:[%s1 + $0xfd8] sm:$0xff]
      %v796 = vld [vmem:[%s1 + $0xfe0] sm:$0xff]
      %v797 = vld [vmem:[%s1 + $0xfe8] sm:$0xff]
      %v798 = vld [vmem:[%s1 + $0xff0] sm:$0xff]
      %v799 = vld [vmem:[%s1 + $0xff8] sm:$0xff]
      %v800 = vld [vmem:[%s1 + $0x1000] sm:$0xff]
      %v801 = vld [vmem:[%s1 + $0x1008] sm:$0xff]
      %v802 = vld [vmem:[%s1 + $0x1010] sm:$0xff]
      %v803 = vld [vmem:[%s1 + $0x1018] sm:$0xff]
      %v804 = vld [vmem:[%s1 + $0x1020] sm:$0xff]
      %v805 = vld [vmem:[%s1 + $0x1028] sm:$0xff]
      %v806 = vld [vmem:[%s1 + $0x1030] sm:$0xff]
      %v807 = vld [vmem:[%s1 + $0x1038] sm:$0xff]
      %v808 = vld [vmem:[%s1 + $0x1040] sm:$0xff]
      %v809 = vld [vmem:[%s1 + $0x1048] sm:$0xff]
      %v810 = vld [vmem:[%s1 + $0x1050] sm:$0xff]
      %v811 = vld [vmem:[%s1 + $0x1058] sm:$0xff]
      %v812 = vld [vmem:[%s1 + $0x1060] sm:$0xff]
      %v813 = vld [vmem:[%s1 + $0x1068] sm:$0xff]
      %v814 = vld [vmem:[%s1 + $0x1070] sm:$0xff]
      %v815 = vld [vmem:[%s1 + $0x1078] sm:$0xff]
      %v816 = vld [vmem:[%s1 + $0x1080] sm:$0xff]
      %v817 = vld [vmem:[%s1 + $0x1088] sm:$0xff]
      %v818 = vld [vmem:[%s1 + $0x1090] sm:$0xff]
      %v819 = vld [vmem:[%s1 + $0x1098] sm:$0xff]
      %v820 = vld [vmem:[%s1 + $0x10a0] sm:$0xff]
      %v821 = vld [vmem:[%s1 + $0x10a8] sm:$0xff]
      %v822 = vld [vmem:[%s1 + $0x10b0] sm:$0xff]
      %v823 = vld [vmem:[%s1 + $0x10b8] sm:$0xff]
      %v824 = vld [vmem:[%s1 + $0x10c0] sm:$0xff]
      %v825 = vld [vmem:[%s1 + $0x10c8] sm:$0xff]
      %v826 = vld [vmem:[%s1 + $0x10d0] sm:$0xff]
      %v827 = vld [vmem:[%s1 + $0x10d8] sm:$0xff]
      %v828 = vld [vmem:[%s1 + $0x10e0] sm:$0xff]
      %v829 = vld [vmem:[%s1 + $0x10e8] sm:$0xff]
      %v830 = vld [vmem:[%s1 + $0x10f0] sm:$0xff]
      %v831 = vld [vmem:[%s1 + $0x10f8] sm:$0xff]
      %v832 = vld [vmem:[%s1 + $0x1100] sm:$0xff]
      %v833 = vld [vmem:[%s1 + $0x1108] sm:$0xff]
      %v834 = vld [vmem:[%s1 + $0x1110] sm:$0xff]
      %v835 = vld [vmem:[%s1 + $0x1118] sm:$0xff]
      %v836 = vld [vmem:[%s1 + $0x1120] sm:$0xff]
      %v837 = vld [vmem:[%s1 + $0x1128] sm:$0xff]
      %v838 = vld [vmem:[%s1 + $0x1130] sm:$0xff]
      %v839 = vld [vmem:[%s1 + $0x1138] sm:$0xff]
      %v840 = vld [vmem:[%s1 + $0x1140] sm:$0xff]
      %v841 = vld [vmem:[%s1 + $0x1148] sm:$0xff]
      %v842 = vld [vmem:[%s1 + $0x1150] sm:$0xff]
      %v843 = vld [vmem:[%s1 + $0x1158] sm:$0xff]
      %v844 = vld [vmem:[%s1 + $0x1160] sm:$0xff]
      %v845 = vld [vmem:[%s1 + $0x1168] sm:$0xff]
      %v846 = vld [vmem:[%s1 + $0x1170] sm:$0xff]
      %v847 = vld [vmem:[%s1 + $0x1178] sm:$0xff]
      %v848 = vld [vmem:[%s1 + $0x1180] sm:$0xff]
      %v849 = vld [vmem:[%s1 + $0x1188] sm:$0xff]
      %v850 = vld [vmem:[%s1 + $0x1190] sm:$0xff]
      %v851 = vld [vmem:[%s1 + $0x1198] sm:$0xff]
      %v852 = vld [vmem:[%s1 + $0x11a0] sm:$0xff]
      %v853 = vld [vmem:[%s1 + $0x11a8] sm:$0xff]
      %v854 = vld [vmem:[%s1 + $0x11b0] sm:$0xff]
      %v855 = vld [vmem:[%s1 + $0x11b8] sm:$0xff]
      %v856 = vld [vmem:[%s1 + $0x11c0] sm:$0xff]
      %v857 = vld [vmem:[%s1 + $0x11c8] sm:$0xff]
      %v858 = vld [vmem:[%s1 + $0x11d0] sm:$0xff]
      %v859 = vld [vmem:[%s1 + $0x11d8] sm:$0xff]
      %v860 = vld [vmem:[%s1 + $0x11e0] sm:$0xff]
      %v861 = vld [vmem:[%s1 + $0x11e8] sm:$0xff]
      %v862 = vld [vmem:[%s1 + $0x11f0] sm:$0xff]
      %v863 = vld [vmem:[%s1 + $0x11f8] sm:$0xff]
      %v864 = vld [vmem:[%s1 + $0x1200] sm:$0xff]
      %v865 = vld [vmem:[%s1 + $0x1208] sm:$0xff]
      %v866 = vld [vmem:[%s1 + $0x1210] sm:$0xff]
      %v867 = vld [vmem:[%s1 + $0x1218] sm:$0xff]
      %v868 = vld [vmem:[%s1 + $0x1220] sm:$0xff]
      %v869 = vld [vmem:[%s1 + $0x1228] sm:$0xff]
      %v870 = vld [vmem:[%s1 + $0x1230] sm:$0xff]
      %v871 = vld [vmem:[%s1 + $0x1238] sm:$0xff]
      %v872 = vld [vmem:[%s1 + $0x1240] sm:$0xff]
      %v873 = vld [vmem:[%s1 + $0x1248] sm:$0xff]
      %v874 = vld [vmem:[%s1 + $0x1250] sm:$0xff]
      %v875 = vld [vmem:[%s1 + $0x1258] sm:$0xff]
      %v876 = vld [vmem:[%s1 + $0x1260] sm:$0xff]
      %v877 = vld [vmem:[%s1 + $0x1268] sm:$0xff]
      %v878 = vld [vmem:[%s1 + $0x1270] sm:$0xff]
      %v879 = vld [vmem:[%s1 + $0x1278] sm:$0xff]
      %v880 = vld [vmem:[%s1 + $0x1280] sm:$0xff]
      %v881 = vld [vmem:[%s1 + $0x1288] sm:$0xff]
      %v882 = vld [vmem:[%s1 + $0x1290] sm:$0xff]
      %v883 = vld [vmem:[%s1 + $0x1298] sm:$0xff]
      %v884 = vld [vmem:[%s1 + $0x12a0] sm:$0xff]
      %v885 = vld [vmem:[%s1 + $0x12a8] sm:$0xff]
      %v886 = vld [vmem:[%s1 + $0x12b0] sm:$0xff]
      %v887 = vld [vmem:[%s1 + $0x12b8] sm:$0xff]
      %v888 = vld [vmem:[%s1 + $0x12c0] sm:$0xff]
      %v889 = vld [vmem:[%s1 + $0x12c8] sm:$0xff]
      %v890 = vld [vmem:[%s1 + $0x12d0] sm:$0xff]
      %v891 = vld [vmem:[%s1 + $0x12d8] sm:$0xff]
      %v892 = vld [vmem:[%s1 + $0x12e0] sm:$0xff]
      %v893 = vld [vmem:[%s1 + $0x12e8] sm:$0xff]
      %v894 = vld [vmem:[%s1 + $0x12f0] sm:$0xff]
      %v895 = vld [vmem:[%s1 + $0x12f8] sm:$0xff]
      %v896 = vld [vmem:[%s1 + $0x1300] sm:$0xff]
      %v897 = vld [vmem:[%s1 + $0x1308] sm:$0xff]
      %v898 = vld [vmem:[%s1 + $0x1310] sm:$0xff]
      %v899 = vld [vmem:[%s1 + $0x1318] sm:$0xff]
      %v900 = vld [vmem:[%s1 + $0x1320] sm:$0xff]
      %v901 = vld [vmem:[%s1 + $0x1328] sm:$0xff]
      %v902 = vld [vmem:[%s1 + $0x1330] sm:$0xff]
      %v903 = vld [vmem:[%s1 + $0x1338] sm:$0xff]
      %v904 = vld [vmem:[%s1 + $0x1340] sm:$0xff]
      %v905 = vld [vmem:[%s1 + $0x1348] sm:$0xff]
      %v906 = vld [vmem:[%s1 + $0x1350] sm:$0xff]
      %v907 = vld [vmem:[%s1 + $0x1358] sm:$0xff]
      %v908 = vld [vmem:[%s1 + $0x1360] sm:$0xff]
      %v909 = vld [vmem:[%s1 + $0x1368] sm:$0xff]
      %v910 = vld [vmem:[%s1 + $0x1370] sm:$0xff]
      %v911 = vld [vmem:[%s1 + $0x1378] sm:$0xff]
      %v912 = vld [vmem:[%s1 + $0x1380] sm:$0xff]
      %v913 = vld [vmem:[%s1 + $0x1388] sm:$0xff]
      %v914 = vld [vmem:[%s1 + $0x1390] sm:$0xff]
      %v915 = vld [vmem:[%s1 + $0x1398] sm:$0xff]
      %v916 = vld [vmem:[%s1 + $0x13a0] sm:$0xff]
      %v917 = vld [vmem:[%s1 + $0x13a8] sm:$0xff]
      %v918 = vld [vmem:[%s1 + $0x13b0] sm:$0xff]
      %v919 = vld [vmem:[%s1 + $0x13b8] sm:$0xff]
      %v920 = vld [vmem:[%s1 + $0x13c0] sm:$0xff]
      %v921 = vld [vmem:[%s1 + $0x13c8] sm:$0xff]
      %v922 = vld [vmem:[%s1 + $0x13d0] sm:$0xff]
      %v923 = vld [vmem:[%s1 + $0x13d8] sm:$0xff]
      %v924 = vld [vmem:[%s1 + $0x13e0] sm:$0xff]
      %v925 = vld [vmem:[%s1 + $0x13e8] sm:$0xff]
      %v926 = vld [vmem:[%s1 + $0x13f0] sm:$0xff]
      %v927 = vld [vmem:[%s1 + $0x13f8] sm:$0xff]
      %v928 = vld [vmem:[%s1 + $0x1400] sm:$0xff]
      %v929 = vld [vmem:[%s1 + $0x1408] sm:$0xff]
      %v930 = vld [vmem:[%s1 + $0x1410] sm:$0xff]
      %v931 = vld [vmem:[%s1 + $0x1418] sm:$0xff]
      %v932 = vld [vmem:[%s1 + $0x1420] sm:$0xff]
      %v933 = vld [vmem:[%s1 + $0x1428] sm:$0xff]
      %v934 = vld [vmem:[%s1 + $0x1430] sm:$0xff]
      %v935 = vld [vmem:[%s1 + $0x1438] sm:$0xff]
      %v936 = vld [vmem:[%s1 + $0x1440] sm:$0xff]
      %v937 = vld [vmem:[%s1 + $0x1448] sm:$0xff]
      %v938 = vld [vmem:[%s1 + $0x1450] sm:$0xff]
      %v939 = vld [vmem:[%s1 + $0x1458] sm:$0xff]
      %v940 = vld [vmem:[%s1 + $0x1460] sm:$0xff]
      %v941 = vld [vmem:[%s1 + $0x1468] sm:$0xff]
      %v942 = vld [vmem:[%s1 + $0x1470] sm:$0xff]
      %v943 = vld [vmem:[%s1 + $0x1478] sm:$0xff]
      %v944 = vld [vmem:[%s1 + $0x1480] sm:$0xff]
      %v945 = vld [vmem:[%s1 + $0x1488] sm:$0xff]
      %v946 = vld [vmem:[%s1 + $0x1490] sm:$0xff]
      %v947 = vld [vmem:[%s1 + $0x1498] sm:$0xff]
      %v948 = vld [vmem:[%s1 + $0x14a0] sm:$0xff]
      %v949 = vld [vmem:[%s1 + $0x14a8] sm:$0xff]
      %v950 = vld [vmem:[%s1 + $0x14b0] sm:$0xff]
      %v951 = vld [vmem:[%s1 + $0x14b8] sm:$0xff]
      %v952 = vld [vmem:[%s1 + $0x14c0] sm:$0xff]
      %v953 = vld [vmem:[%s1 + $0x14c8] sm:$0xff]
      %v954 = vld [vmem:[%s1 + $0x14d0] sm:$0xff]
      %v955 = vld [vmem:[%s1 + $0x14d8] sm:$0xff]
      %v956 = vld [vmem:[%s1 + $0x14e0] sm:$0xff]
      %v957 = vld [vmem:[%s1 + $0x14e8] sm:$0xff]
      %v958 = vld [vmem:[%s1 + $0x14f0] sm:$0xff]
      %v959 = vld [vmem:[%s1 + $0x14f8] sm:$0xff]
      %v960 = vld [vmem:[%s1 + $0x1500] sm:$0xff]
      %v961 = vld [vmem:[%s1 + $0x1508] sm:$0xff]
      %v962 = vld [vmem:[%s1 + $0x1510] sm:$0xff]
      %v963 = vld [vmem:[%s1 + $0x1518] sm:$0xff]
      %v964 = vld [vmem:[%s1 + $0x1520] sm:$0xff]
      %v965 = vld [vmem:[%s1 + $0x1528] sm:$0xff]
      %v966 = vld [vmem:[%s1 + $0x1530] sm:$0xff]
      %v967 = vld [vmem:[%s1 + $0x1538] sm:$0xff]
      %v968 = vld [vmem:[%s1 + $0x1540] sm:$0xff]
      %v969 = vld [vmem:[%s1 + $0x1548] sm:$0xff]
      %v970 = vld [vmem:[%s1 + $0x1550] sm:$0xff]
      %v971 = vld [vmem:[%s1 + $0x1558] sm:$0xff]
      %v972 = vld [vmem:[%s1 + $0x1560] sm:$0xff]
      %v973 = vld [vmem:[%s1 + $0x1568] sm:$0xff]
      %v974 = vld [vmem:[%s1 + $0x1570] sm:$0xff]
      %v975 = vld [vmem:[%s1 + $0x1578] sm:$0xff]
      %v976 = vld [vmem:[%s1 + $0x1580] sm:$0xff]
      %v977 = vld [vmem:[%s1 + $0x1588] sm:$0xff]
      %v978 = vld [vmem:[%s1 + $0x1590] sm:$0xff]
      %v979 = vld [vmem:[%s1 + $0x1598] sm:$0xff]
      %v980 = vld [vmem:[%s1 + $0x15a0] sm:$0xff]
      %v981 = vld [vmem:[%s1 + $0x15a8] sm:$0xff]
      %v982 = vld [vmem:[%s1 + $0x15b0] sm:$0xff]
      %v983 = vld [vmem:[%s1 + $0x15b8] sm:$0xff]
      %v984 = vld [vmem:[%s1 + $0x15c0] sm:$0xff]
      %v985 = vld [vmem:[%s1 + $0x15c8] sm:$0xff]
      %v986 = vld [vmem:[%s1 + $0x15d0] sm:$0xff]
      %v987 = vld [vmem:[%s1 + $0x15d8] sm:$0xff]
      %v988 = vld [vmem:[%s1 + $0x15e0] sm:$0xff]
      %v989 = vld [vmem:[%s1 + $0x15e8] sm:$0xff]
      %v990 = vld [vmem:[%s1 + $0x15f0] sm:$0xff]
      %v991 = vld [vmem:[%s1 + $0x15f8] sm:$0xff]
      %v992 = vld [vmem:[%s1 + $0x1600] sm:$0xff]
      %v993 = vld [vmem:[%s1 + $0x1608] sm:$0xff]
      %v994 = vld [vmem:[%s1 + $0x1610] sm:$0xff]
      %v995 = vld [vmem:[%s1 + $0x1618] sm:$0xff]
      %v996 = vld [vmem:[%s1 + $0x1620] sm:$0xff]
      %v997 = vld [vmem:[%s1 + $0x1628] sm:$0xff]
      %v998 = vld [vmem:[%s1 + $0x1630] sm:$0xff]
      %v999 = vld [vmem:[%s1 + $0x1638] sm:$0xff]
      %v1000 = vld [vmem:[%s1 + $0x1640] sm:$0xff]
      %v1001 = vld [vmem:[%s1 + $0x1648] sm:$0xff]
      %v1002 = vld [vmem:[%s1 + $0x1650] sm:$0xff]
      %v1003 = vld [vmem:[%s1 + $0x1658] sm:$0xff]
      %v1004 = vld [vmem:[%s1 + $0x1660] sm:$0xff]
      %v1005 = vld [vmem:[%s1 + $0x1668] sm:$0xff]
      %v1006 = vld [vmem:[%s1 + $0x1670] sm:$0xff]
      %v1007 = vld [vmem:[%s1 + $0x1678] sm:$0xff]
      %v1008 = vld [vmem:[%s1 + $0x1680] sm:$0xff]
      %v1009 = vld [vmem:[%s1 + $0x1688] sm:$0xff]
      %v1010 = vld [vmem:[%s1 + $0x1690] sm:$0xff]
      %v1011 = vld [vmem:[%s1 + $0x1698] sm:$0xff]
      %v1012 = vld [vmem:[%s1 + $0x16a0] sm:$0xff]
      %v1013 = vld [vmem:[%s1 + $0x16a8] sm:$0xff]
      %v1014 = vld [vmem:[%s1 + $0x16b0] sm:$0xff]
      %v1015 = vld [vmem:[%s1 + $0x16b8] sm:$0xff]
      %v1016 = vld [vmem:[%s1 + $0x16c0] sm:$0xff]
      %v1017 = vld [vmem:[%s1 + $0x16c8] sm:$0xff]
      %v1018 = vld [vmem:[%s1 + $0x16d0] sm:$0xff]
      %v1019 = vld [vmem:[%s1 + $0x16d8] sm:$0xff]
      %v1020 = vld [vmem:[%s1 + $0x16e0] sm:$0xff]
      %v1021 = vld [vmem:[%s1 + $0x16e8] sm:$0xff]
      %v1022 = vld [vmem:[%s1 + $0x16f0] sm:$0xff]
      %v1023 = vld [vmem:[%s1 + $0x16f8] sm:$0xff]
      %v1024 = vld [vmem:[%s1 + $0x1700] sm:$0xff]
      %v1025 = vld [vmem:[%s1 + $0x1708] sm:$0xff]
      %v1026 = vld [vmem:[%s1 + $0x1710] sm:$0xff]
      %v1027 = vld [vmem:[%s1 + $0x1718] sm:$0xff]
      %v1028 = vld [vmem:[%s1 + $0x1720] sm:$0xff]
      %v1029 = vld [vmem:[%s1 + $0x1728] sm:$0xff]
      %v1030 = vld [vmem:[%s1 + $0x1730] sm:$0xff]
      %v1031 = vld [vmem:[%s1 + $0x1738] sm:$0xff]
      %v1032 = vld [vmem:[%s1 + $0x1740] sm:$0xff]
      %v1033 = vld [vmem:[%s1 + $0x1748] sm:$0xff]
      %v1034 = vld [vmem:[%s1 + $0x1750] sm:$0xff]
      %v1035 = vld [vmem:[%s1 + $0x1758] sm:$0xff]
      %v1036 = vld [vmem:[%s1 + $0x1760] sm:$0xff]
      %v1037 = vld [vmem:[%s1 + $0x1768] sm:$0xff]
      %v1038 = vld [vmem:[%s1 + $0x1770] sm:$0xff]
      %v1039 = vld [vmem:[%s1 + $0x1778] sm:$0xff]
      %v1040 = vld [vmem:[%s1 + $0x1780] sm:$0xff]
      %v1041 = vld [vmem:[%s1 + $0x1788] sm:$0xff]
      %v1042 = vld [vmem:[%s1 + $0x1790] sm:$0xff]
      %v1043 = vld [vmem:[%s1 + $0x1798] sm:$0xff]
      %v1044 = vld [vmem:[%s1 + $0x17a0] sm:$0xff]
      %v1045 = vld [vmem:[%s1 + $0x17a8] sm:$0xff]
      %v1046 = vld [vmem:[%s1 + $0x17b0] sm:$0xff]
      %v1047 = vld [vmem:[%s1 + $0x17b8] sm:$0xff]
      %v1048 = vld [vmem:[%s1 + $0x17c0] sm:$0xff]
      %v1049 = vld [vmem:[%s1 + $0x17c8] sm:$0xff]
      %v1050 = vld [vmem:[%s1 + $0x17d0] sm:$0xff]
      %v1051 = vld [vmem:[%s1 + $0x17d8] sm:$0xff]
      %v1052 = vld [vmem:[%s1 + $0x17e0] sm:$0xff]
      %v1053 = vld [vmem:[%s1 + $0x17e8] sm:$0xff]
      %v1054 = vld [vmem:[%s1 + $0x17f0] sm:$0xff]
      %v1055 = vld [vmem:[%s1 + $0x17f8] sm:$0xff]
      %v1056 = vld [vmem:[%s1 + $0x1800] sm:$0xff]
      %v1057 = vld [vmem:[%s1 + $0x1808] sm:$0xff]
      %v1058 = vld [vmem:[%s1 + $0x1810] sm:$0xff]
      %v1059 = vld [vmem:[%s1 + $0x1818] sm:$0xff]
      %v1060 = vld [vmem:[%s1 + $0x1820] sm:$0xff]
      %v1061 = vld [vmem:[%s1 + $0x1828] sm:$0xff]
      %v1062 = vld [vmem:[%s1 + $0x1830] sm:$0xff]
      %v1063 = vld [vmem:[%s1 + $0x1838] sm:$0xff]
      %v1064 = vld [vmem:[%s1 + $0x1840] sm:$0xff]
      %v1065 = vld [vmem:[%s1 + $0x1848] sm:$0xff]
      %v1066 = vld [vmem:[%s1 + $0x1850] sm:$0xff]
      %v1067 = vld [vmem:[%s1 + $0x1858] sm:$0xff]
      %v1068 = vld [vmem:[%s1 + $0x1860] sm:$0xff]
      %v1069 = vld [vmem:[%s1 + $0x1868] sm:$0xff]
      %v1070 = vld [vmem:[%s1 + $0x1870] sm:$0xff]
      %v1071 = vld [vmem:[%s1 + $0x1878] sm:$0xff]
      %v1072 = vld [vmem:[%s1 + $0x1880] sm:$0xff]
      %v1073 = vld [vmem:[%s1 + $0x1888] sm:$0xff]
      %v1074 = vld [vmem:[%s1 + $0x1890] sm:$0xff]
      %v1075 = vld [vmem:[%s1 + $0x1898] sm:$0xff]
      %v1076 = vld [vmem:[%s1 + $0x18a0] sm:$0xff]
      %v1077 = vld [vmem:[%s1 + $0x18a8] sm:$0xff]
      %v1078 = vld [vmem:[%s1 + $0x18b0] sm:$0xff]
      %v1079 = vld [vmem:[%s1 + $0x18b8] sm:$0xff]
      %v1080 = vld [vmem:[%s1 + $0x18c0] sm:$0xff]
      %v1081 = vld [vmem:[%s1 + $0x18c8] sm:$0xff]
      %v1082 = vld [vmem:[%s1 + $0x18d0] sm:$0xff]
      %v1083 = vld [vmem:[%s1 + $0x18d8] sm:$0xff]
      %v1084 = vld [vmem:[%s1 + $0x18e0] sm:$0xff]
      %v1085 = vld [vmem:[%s1 + $0x18e8] sm:$0xff]
      %v1086 = vld [vmem:[%s1 + $0x18f0] sm:$0xff]
      %v1087 = vld [vmem:[%s1 + $0x18f8] sm:$0xff]
      %v1088 = vld [vmem:[%s1 + $0x1900] sm:$0xff]
      %v1089 = vld [vmem:[%s1 + $0x1908] sm:$0xff]
      %v1090 = vld [vmem:[%s1 + $0x1910] sm:$0xff]
      %v1091 = vld [vmem:[%s1 + $0x1918] sm:$0xff]
      %v1092 = vld [vmem:[%s1 + $0x1920] sm:$0xff]
      %v1093 = vld [vmem:[%s1 + $0x1928] sm:$0xff]
      %v1094 = vld [vmem:[%s1 + $0x1930] sm:$0xff]
      %v1095 = vld [vmem:[%s1 + $0x1938] sm:$0xff]
      %v1096 = vld [vmem:[%s1 + $0x1940] sm:$0xff]
      %v1097 = vld [vmem:[%s1 + $0x1948] sm:$0xff]
      %v1098 = vld [vmem:[%s1 + $0x1950] sm:$0xff]
      %v1099 = vld [vmem:[%s1 + $0x1958] sm:$0xff]
      %v1100 = vld [vmem:[%s1 + $0x1960] sm:$0xff]
      %v1101 = vld [vmem:[%s1 + $0x1968] sm:$0xff]
      %v1102 = vld [vmem:[%s1 + $0x1970] sm:$0xff]
      %v1103 = vld [vmem:[%s1 + $0x1978] sm:$0xff]
      %v1104 = vld [vmem:[%s1 + $0x1980] sm:$0xff]
      %v1105 = vld [vmem:[%s1 + $0x1988] sm:$0xff]
      %v1106 = vld [vmem:[%s1 + $0x1990] sm:$0xff]
      %v1107 = vld [vmem:[%s1 + $0x1998] sm:$0xff]
      %v1108 = vld [vmem:[%s1 + $0x19a0] sm:$0xff]
      %v1109 = vld [vmem:[%s1 + $0x19a8] sm:$0xff]
      %v1110 = vld [vmem:[%s1 + $0x19b0] sm:$0xff]
      %v1111 = vld [vmem:[%s1 + $0x19b8] sm:$0xff]
      %v1112 = vld [vmem:[%s1 + $0x19c0] sm:$0xff]
      %v1113 = vld [vmem:[%s1 + $0x19c8] sm:$0xff]
      %v1114 = vld [vmem:[%s1 + $0x19d0] sm:$0xff]
      %v1115 = vld [vmem:[%s1 + $0x19d8] sm:$0xff]
      %v1116 = vld [vmem:[%s1 + $0x19e0] sm:$0xff]
      %v1117 = vld [vmem:[%s1 + $0x19e8] sm:$0xff]
      %v1118 = vld [vmem:[%s1 + $0x19f0] sm:$0xff]
      %v1119 = vld [vmem:[%s1 + $0x19f8] sm:$0xff]
      %v1120 = vld [vmem:[%s1 + $0x1a00] sm:$0xff]
      %v1121 = vld [vmem:[%s1 + $0x1a08] sm:$0xff]
      %v1122 = vld [vmem:[%s1 + $0x1a10] sm:$0xff]
      %v1123 = vld [vmem:[%s1 + $0x1a18] sm:$0xff]
      %v1124 = vld [vmem:[%s1 + $0x1a20] sm:$0xff]
      %v1125 = vld [vmem:[%s1 + $0x1a28] sm:$0xff]
      %v1126 = vld [vmem:[%s1 + $0x1a30] sm:$0xff]
      %v1127 = vld [vmem:[%s1 + $0x1a38] sm:$0xff]
      %v1128 = vld [vmem:[%s1 + $0x1a40] sm:$0xff]
      %v1129 = vld [vmem:[%s1 + $0x1a48] sm:$0xff]
      %v1130 = vld [vmem:[%s1 + $0x1a50] sm:$0xff]
      %v1131 = vld [vmem:[%s1 + $0x1a58] sm:$0xff]
      %v1132 = vld [vmem:[%s1 + $0x1a60] sm:$0xff]
      %v1133 = vld [vmem:[%s1 + $0x1a68] sm:$0xff]
      %v1134 = vld [vmem:[%s1 + $0x1a70] sm:$0xff]
      %v1135 = vld [vmem:[%s1 + $0x1a78] sm:$0xff]
      %v1136 = vld [vmem:[%s1 + $0x1a80] sm:$0xff]
      %v1137 = vld [vmem:[%s1 + $0x1a88] sm:$0xff]
      %v1138 = vld [vmem:[%s1 + $0x1a90] sm:$0xff]
      %v1139 = vld [vmem:[%s1 + $0x1a98] sm:$0xff]
      %v1140 = vld [vmem:[%s1 + $0x1aa0] sm:$0xff]
      %v1141 = vld [vmem:[%s1 + $0x1aa8] sm:$0xff]
      %v1142 = vld [vmem:[%s1 + $0x1ab0] sm:$0xff]
      %v1143 = vld [vmem:[%s1 + $0x1ab8] sm:$0xff]
      %v1144 = vld [vmem:[%s1 + $0x1ac0] sm:$0xff]
      %v1145 = vld [vmem:[%s1 + $0x1ac8] sm:$0xff]
      %v1146 = vld [vmem:[%s1 + $0x1ad0] sm:$0xff]
      %v1147 = vld [vmem:[%s1 + $0x1ad8] sm:$0xff]
      %v1148 = vld [vmem:[%s1 + $0x1ae0] sm:$0xff]
      %v1149 = vld [vmem:[%s1 + $0x1ae8] sm:$0xff]
      %v1150 = vld [vmem:[%s1 + $0x1af0] sm:$0xff]
      %v1151 = vld [vmem:[%s1 + $0x1af8] sm:$0xff]
      %v1152 = vld [vmem:[%s1 + $0x1b00] sm:$0xff]
      %v1153 = vld [vmem:[%s1 + $0x1b08] sm:$0xff]
      %v1154 = vld [vmem:[%s1 + $0x1b10] sm:$0xff]
      %v1155 = vld [vmem:[%s1 + $0x1b18] sm:$0xff]
      %v1156 = vld [vmem:[%s1 + $0x1b20] sm:$0xff]
      %v1157 = vld [vmem:[%s1 + $0x1b28] sm:$0xff]
      %v1158 = vld [vmem:[%s1 + $0x1b30] sm:$0xff]
      %v1159 = vld [vmem:[%s1 + $0x1b38] sm:$0xff]
      %v1160 = vld [vmem:[%s1 + $0x1b40] sm:$0xff]
      %v1161 = vld [vmem:[%s1 + $0x1b48] sm:$0xff]
      %v1162 = vld [vmem:[%s1 + $0x1b50] sm:$0xff]
      %v1163 = vld [vmem:[%s1 + $0x1b58] sm:$0xff]
      %v1164 = vld [vmem:[%s1 + $0x1b60] sm:$0xff]
      %v1165 = vld [vmem:[%s1 + $0x1b68] sm:$0xff]
      %v1166 = vld [vmem:[%s1 + $0x1b70] sm:$0xff]
      %v1167 = vld [vmem:[%s1 + $0x1b78] sm:$0xff]
      %v1168 = vld [vmem:[%s1 + $0x1b80] sm:$0xff]
      %v1169 = vld [vmem:[%s1 + $0x1b88] sm:$0xff]
      %v1170 = vld [vmem:[%s1 + $0x1b90] sm:$0xff]
      %v1171 = vld [vmem:[%s1 + $0x1b98] sm:$0xff]
      %v1172 = vld [vmem:[%s1 + $0x1ba0] sm:$0xff]
      %v1173 = vld [vmem:[%s1 + $0x1ba8] sm:$0xff]
      %v1174 = vld [vmem:[%s1 + $0x1bb0] sm:$0xff]
      %v1175 = vld [vmem:[%s1 + $0x1bb8] sm:$0xff]
      %v1176 = vld [vmem:[%s1 + $0x1bc0] sm:$0xff]
      %v1177 = vld [vmem:[%s1 + $0x1bc8] sm:$0xff]
      %v1178 = vld [vmem:[%s1 + $0x1bd0] sm:$0xff]
      %v1179 = vld [vmem:[%s1 + $0x1bd8] sm:$0xff]
      %v1180 = vld [vmem:[%s1 + $0x1be0] sm:$0xff]
      %v1181 = vld [vmem:[%s1 + $0x1be8] sm:$0xff]
      %v1182 = vld [vmem:[%s1 + $0x1bf0] sm:$0xff]
      %v1183 = vld [vmem:[%s1 + $0x1bf8] sm:$0xff]
      %v1184 = vld [vmem:[%s1 + $0x1c00] sm:$0xff]
      %v1185 = vld [vmem:[%s1 + $0x1c08] sm:$0xff]
      %v1186 = vld [vmem:[%s1 + $0x1c10] sm:$0xff]
      %v1187 = vld [vmem:[%s1 + $0x1c18] sm:$0xff]
      %v1188 = vld [vmem:[%s1 + $0x1c20] sm:$0xff]
      %v1189 = vld [vmem:[%s1 + $0x1c28] sm:$0xff]
      %v1190 = vld [vmem:[%s1 + $0x1c30] sm:$0xff]
      %v1191 = vld [vmem:[%s1 + $0x1c38] sm:$0xff]
      %v1192 = vld [vmem:[%s1 + $0x1c40] sm:$0xff]
      %v1193 = vld [vmem:[%s1 + $0x1c48] sm:$0xff]
      %v1194 = vld [vmem:[%s1 + $0x1c50] sm:$0xff]
      %v1195 = vld [vmem:[%s1 + $0x1c58] sm:$0xff]
      %v1196 = vld [vmem:[%s1 + $0x1c60] sm:$0xff]
      %v1197 = vld [vmem:[%s1 + $0x1c68] sm:$0xff]
      %v1198 = vld [vmem:[%s1 + $0x1c70] sm:$0xff]
      %v1199 = vld [vmem:[%s1 + $0x1c78] sm:$0xff]
      %v1200 = vld [vmem:[%s1 + $0x1c80] sm:$0xff]
      %v1201 = vld [vmem:[%s1 + $0x1c88] sm:$0xff]
      %v1202 = vld [vmem:[%s1 + $0x1c90] sm:$0xff]
      %v1203 = vld [vmem:[%s1 + $0x1c98] sm:$0xff]
      %v1204 = vld [vmem:[%s1 + $0x1ca0] sm:$0xff]
      %v1205 = vld [vmem:[%s1 + $0x1ca8] sm:$0xff]
      %v1206 = vld [vmem:[%s1 + $0x1cb0] sm:$0xff]
      %v1207 = vld [vmem:[%s1 + $0x1cb8] sm:$0xff]
      %v1208 = vld [vmem:[%s1 + $0x1cc0] sm:$0xff]
      %v1209 = vld [vmem:[%s1 + $0x1cc8] sm:$0xff]
      %v1210 = vld [vmem:[%s1 + $0x1cd0] sm:$0xff]
      %v1211 = vld [vmem:[%s1 + $0x1cd8] sm:$0xff]
      %v1212 = vld [vmem:[%s1 + $0x1ce0] sm:$0xff]
      %v1213 = vld [vmem:[%s1 + $0x1ce8] sm:$0xff]
      %v1214 = vld [vmem:[%s1 + $0x1cf0] sm:$0xff]
      %v1215 = vld [vmem:[%s1 + $0x1cf8] sm:$0xff]
      %v1216 = vld [vmem:[%s1 + $0x1d00] sm:$0xff]
      %v1217 = vld [vmem:[%s1 + $0x1d08] sm:$0xff]
      %v1218 = vld [vmem:[%s1 + $0x1d10] sm:$0xff]
      %v1219 = vld [vmem:[%s1 + $0x1d18] sm:$0xff]
      %v1220 = vld [vmem:[%s1 + $0x1d20] sm:$0xff]
      %v1221 = vld [vmem:[%s1 + $0x1d28] sm:$0xff]
      %v1222 = vld [vmem:[%s1 + $0x1d30] sm:$0xff]
      %v1223 = vld [vmem:[%s1 + $0x1d38] sm:$0xff]
      %v1224 = vld [vmem:[%s1 + $0x1d40] sm:$0xff]
      %v1225 = vld [vmem:[%s1 + $0x1d48] sm:$0xff]
      %v1226 = vld [vmem:[%s1 + $0x1d50] sm:$0xff]
      %v1227 = vld [vmem:[%s1 + $0x1d58] sm:$0xff]
      %v1228 = vld [vmem:[%s1 + $0x1d60] sm:$0xff]
      %v1229 = vld [vmem:[%s1 + $0x1d68] sm:$0xff]
      %v1230 = vld [vmem:[%s1 + $0x1d70] sm:$0xff]
      %v1231 = vld [vmem:[%s1 + $0x1d78] sm:$0xff]
      %v1232 = vld [vmem:[%s1 + $0x1d80] sm:$0xff]
      %v1233 = vld [vmem:[%s1 + $0x1d88] sm:$0xff]
      %v1234 = vld [vmem:[%s1 + $0x1d90] sm:$0xff]
      %v1235 = vld [vmem:[%s1 + $0x1d98] sm:$0xff]
      %v1236 = vld [vmem:[%s1 + $0x1da0] sm:$0xff]
      %v1237 = vld [vmem:[%s1 + $0x1da8] sm:$0xff]
      %v1238 = vld [vmem:[%s1 + $0x1db0] sm:$0xff]
      %v1239 = vld [vmem:[%s1 + $0x1db8] sm:$0xff]
      %v1240 = vld [vmem:[%s1 + $0x1dc0] sm:$0xff]
      %v1241 = vld [vmem:[%s1 + $0x1dc8] sm:$0xff]
      %v1242 = vld [vmem:[%s1 + $0x1dd0] sm:$0xff]
      %v1243 = vld [vmem:[%s1 + $0x1dd8] sm:$0xff]
      %v1244 = vld [vmem:[%s1 + $0x1de0] sm:$0xff]
      %v1245 = vld [vmem:[%s1 + $0x1de8] sm:$0xff]
      %v1246 = vld [vmem:[%s1 + $0x1df0] sm:$0xff]
      %v1247 = vld [vmem:[%s1 + $0x1df8] sm:$0xff]
      %v1248 = vld [vmem:[%s1 + $0x1e00] sm:$0xff]
      %v1249 = vld [vmem:[%s1 + $0x1e08] sm:$0xff]
      %v1250 = vld [vmem:[%s1 + $0x1e10] sm:$0xff]
      %v1251 = vld [vmem:[%s1 + $0x1e18] sm:$0xff]
      %v1252 = vld [vmem:[%s1 + $0x1e20] sm:$0xff]
      %v1253 = vld [vmem:[%s1 + $0x1e28] sm:$0xff]
      %v1254 = vld [vmem:[%s1 + $0x1e30] sm:$0xff]
      %v1255 = vld [vmem:[%s1 + $0x1e38] sm:$0xff]
      %v1256 = vld [vmem:[%s1 + $0x1e40] sm:$0xff]
      %v1257 = vld [vmem:[%s1 + $0x1e48] sm:$0xff]
      %v1258 = vld [vmem:[%s1 + $0x1e50] sm:$0xff]
      %v1259 = vld [vmem:[%s1 + $0x1e58] sm:$0xff]
      %v1260 = vld [vmem:[%s1 + $0x1e60] sm:$0xff]
      %v1261 = vld [vmem:[%s1 + $0x1e68] sm:$0xff]
      %v1262 = vld [vmem:[%s1 + $0x1e70] sm:$0xff]
      %v1263 = vld [vmem:[%s1 + $0x1e78] sm:$0xff]
      %v1264 = vld [vmem:[%s1 + $0x1e80] sm:$0xff]
      %v1265 = vld [vmem:[%s1 + $0x1e88] sm:$0xff]
      %v1266 = vld [vmem:[%s1 + $0x1e90] sm:$0xff]
      %v1267 = vld [vmem:[%s1 + $0x1e98] sm:$0xff]
      %v1268 = vld [vmem:[%s1 + $0x1ea0] sm:$0xff]
      %v1269 = vld [vmem:[%s1 + $0x1ea8] sm:$0xff]
      %v1270 = vld [vmem:[%s1 + $0x1eb0] sm:$0xff]
      %v1271 = vld [vmem:[%s1 + $0x1eb8] sm:$0xff]
      %v1272 = vld [vmem:[%s1 + $0x1ec0] sm:$0xff]
      %v1273 = vld [vmem:[%s1 + $0x1ec8] sm:$0xff]
      %v1274 = vld [vmem:[%s1 + $0x1ed0] sm:$0xff]
      %v1275 = vld [vmem:[%s1 + $0x1ed8] sm:$0xff]
      %v1276 = vld [vmem:[%s1 + $0x1ee0] sm:$0xff]
      %v1277 = vld [vmem:[%s1 + $0x1ee8] sm:$0xff]
      %v1278 = vld [vmem:[%s1 + $0x1ef0] sm:$0xff]
      %v1279 = vld [vmem:[%s1 + $0x1ef8] sm:$0xff]
      %v1280 = vld [vmem:[%s1 + $0x1f00] sm:$0xff]
      %v1281 = vld [vmem:[%s1 + $0x1f08] sm:$0xff]
      %v1282 = vld [vmem:[%s1 + $0x1f10] sm:$0xff]
      %v1283 = vld [vmem:[%s1 + $0x1f18] sm:$0xff]
      %v1284 = vld [vmem:[%s1 + $0x1f20] sm:$0xff]
      %v1285 = vld [vmem:[%s1 + $0x1f28] sm:$0xff]
      %v1286 = vld [vmem:[%s1 + $0x1f30] sm:$0xff]
      %v1287 = vld [vmem:[%s1 + $0x1f38] sm:$0xff]
      %v1288 = vld [vmem:[%s1 + $0x1f40] sm:$0xff]
      %v1289 = vld [vmem:[%s1 + $0x1f48] sm:$0xff]
      %v1290 = vld [vmem:[%s1 + $0x1f50] sm:$0xff]
      %v1291 = vld [vmem:[%s1 + $0x1f58] sm:$0xff]
      %v1292 = vld [vmem:[%s1 + $0x1f60] sm:$0xff]
      %v1293 = vld [vmem:[%s1 + $0x1f68] sm:$0xff]
      %v1294 = vld [vmem:[%s1 + $0x1f70] sm:$0xff]
      %v1295 = vld [vmem:[%s1 + $0x1f78] sm:$0xff]
      %v1296 = vld [vmem:[%s1 + $0x1f80] sm:$0xff]
      %v1297 = vld [vmem:[%s1 + $0x1f88] sm:$0xff]
      %v1298 = vld [vmem:[%s1 + $0x1f90] sm:$0xff]
      %v1299 = vld [vmem:[%s1 + $0x1f98] sm:$0xff]
      %v1300 = vld [vmem:[%s1 + $0x1fa0] sm:$0xff]
      %v1301 = vld [vmem:[%s1 + $0x1fa8] sm:$0xff]
      %v1302 = vld [vmem:[%s1 + $0x1fb0] sm:$0xff]
      %v1303 = vld [vmem:[%s1 + $0x1fb8] sm:$0xff]
      %v1304 = vld [vmem:[%s1 + $0x1fc0] sm:$0xff]
      %v1305 = vld [vmem:[%s1 + $0x1fc8] sm:$0xff]
      %v1306 = vld [vmem:[%s1 + $0x1fd0] sm:$0xff]
      %v1307 = vld [vmem:[%s1 + $0x1fd8] sm:$0xff]
      %v1308 = vld [vmem:[%s1 + $0x1fe0] sm:$0xff]
      %v1309 = vld [vmem:[%s1 + $0x1fe8] sm:$0xff]
      %v1310 = vld [vmem:[%s1 + $0x1ff0] sm:$0xff]
      %v1311 = vld [vmem:[%s1 + $0x1ff8] sm:$0xff]
      %v1312 = vld [vmem:[%s2] sm:$0xf]
      %v1314 = vlaneseq
      %v1315 = vshrl.u32 %v1314, 7
      %v1316 = vsub.s32 0, %v1315
      %v1317 = vrot.slane %v1312, %v1316
      %v1318 = vlaneseq
      %v1319 = vshrl.u32 %v1318, 7
      %v1320 = vsub.s32 1, %v1319
      %v1321 = vrot.slane %v1312, %v1320
      %v1322 = vlaneseq
      %v1323 = vshrl.u32 %v1322, 7
      %v1324 = vsub.s32 2, %v1323
      %v1325 = vrot.slane %v1312, %v1324
      %v1326 = vlaneseq
      %v1327 = vshrl.u32 %v1326, 7
      %v1328 = vsub.s32 3, %v1327
      %v1329 = vrot.slane %v1312, %v1328
      %v2358 = vunpack.c.l.b16 %v288
      %v2359 = vunpack.c.h.b16 %v288
      %v2360 = vunpack.c.l.b16 %v289
      %v2361 = vunpack.c.h.b16 %v289
      %v2362 = vunpack.c.l.b16 %v290
      %v2363 = vunpack.c.h.b16 %v290
      %v2364 = vunpack.c.l.b16 %v291
      %v2365 = vunpack.c.h.b16 %v291
      %v2366 = vunpack.c.l.b16 %v292
      %v2367 = vunpack.c.h.b16 %v292
      %v2368 = vunpack.c.l.b16 %v293
      %v2369 = vunpack.c.h.b16 %v293
      %v2370 = vunpack.c.l.b16 %v294
      %v2371 = vunpack.c.h.b16 %v294
      %v2372 = vunpack.c.l.b16 %v295
      %v2373 = vunpack.c.h.b16 %v295
      %v2374 = vunpack.c.l.b16 %v296
      %v2375 = vunpack.c.h.b16 %v296
      %v2376 = vunpack.c.l.b16 %v297
      %v2377 = vunpack.c.h.b16 %v297
      %v2378 = vunpack.c.l.b16 %v298
      %v2379 = vunpack.c.h.b16 %v298
      %v2380 = vunpack.c.l.b16 %v299
      %v2381 = vunpack.c.h.b16 %v299
      %v2382 = vunpack.c.l.b16 %v300
      %v2383 = vunpack.c.h.b16 %v300
      %v2384 = vunpack.c.l.b16 %v301
      %v2385 = vunpack.c.h.b16 %v301
      %v2386 = vunpack.c.l.b16 %v302
      %v2387 = vunpack.c.h.b16 %v302
      %v2388 = vunpack.c.l.b16 %v303
      %v2389 = vunpack.c.h.b16 %v303
      %v2390 = vunpack.c.l.b16 %v304
      %v2391 = vunpack.c.h.b16 %v304
      %v2392 = vunpack.c.l.b16 %v305
      %v2393 = vunpack.c.h.b16 %v305
      %v2394 = vunpack.c.l.b16 %v306
      %v2395 = vunpack.c.h.b16 %v306
      %v2396 = vunpack.c.l.b16 %v307
      %v2397 = vunpack.c.h.b16 %v307
      %v2398 = vunpack.c.l.b16 %v308
      %v2399 = vunpack.c.h.b16 %v308
      %v2400 = vunpack.c.l.b16 %v309
      %v2401 = vunpack.c.h.b16 %v309
      %v2402 = vunpack.c.l.b16 %v310
      %v2403 = vunpack.c.h.b16 %v310
      %v2404 = vunpack.c.l.b16 %v311
      %v2405 = vunpack.c.h.b16 %v311
      %v2406 = vunpack.c.l.b16 %v312
      %v2407 = vunpack.c.h.b16 %v312
      %v2408 = vunpack.c.l.b16 %v313
      %v2409 = vunpack.c.h.b16 %v313
      %v2410 = vunpack.c.l.b16 %v314
      %v2411 = vunpack.c.h.b16 %v314
      %v2412 = vunpack.c.l.b16 %v315
      %v2413 = vunpack.c.h.b16 %v315
      %v2414 = vunpack.c.l.b16 %v316
      %v2415 = vunpack.c.h.b16 %v316
      %v2416 = vunpack.c.l.b16 %v317
      %v2417 = vunpack.c.h.b16 %v317
      %v2418 = vunpack.c.l.b16 %v318
      %v2419 = vunpack.c.h.b16 %v318
      %v2420 = vunpack.c.l.b16 %v319
      %v2421 = vunpack.c.h.b16 %v319
      %v2422 = vunpack.c.l.b16 %v320
      %v2423 = vunpack.c.h.b16 %v320
      %v2424 = vunpack.c.l.b16 %v321
      %v2425 = vunpack.c.h.b16 %v321
      %v2426 = vunpack.c.l.b16 %v322
      %v2427 = vunpack.c.h.b16 %v322
      %v2428 = vunpack.c.l.b16 %v323
      %v2429 = vunpack.c.h.b16 %v323
      %v2430 = vunpack.c.l.b16 %v324
      %v2431 = vunpack.c.h.b16 %v324
      %v2432 = vunpack.c.l.b16 %v325
      %v2433 = vunpack.c.h.b16 %v325
      %v2434 = vunpack.c.l.b16 %v326
      %v2435 = vunpack.c.h.b16 %v326
      %v2436 = vunpack.c.l.b16 %v327
      %v2437 = vunpack.c.h.b16 %v327
      %v2438 = vunpack.c.l.b16 %v328
      %v2439 = vunpack.c.h.b16 %v328
      %v2440 = vunpack.c.l.b16 %v329
      %v2441 = vunpack.c.h.b16 %v329
      %v2442 = vunpack.c.l.b16 %v330
      %v2443 = vunpack.c.h.b16 %v330
      %v2444 = vunpack.c.l.b16 %v331
      %v2445 = vunpack.c.h.b16 %v331
      %v2446 = vunpack.c.l.b16 %v332
      %v2447 = vunpack.c.h.b16 %v332
      %v2448 = vunpack.c.l.b16 %v333
      %v2449 = vunpack.c.h.b16 %v333
      %v2450 = vunpack.c.l.b16 %v334
      %v2451 = vunpack.c.h.b16 %v334
      %v2452 = vunpack.c.l.b16 %v335
      %v2453 = vunpack.c.h.b16 %v335
      %v2454 = vunpack.c.l.b16 %v336
      %v2455 = vunpack.c.h.b16 %v336
      %v2456 = vunpack.c.l.b16 %v337
      %v2457 = vunpack.c.h.b16 %v337
      %v2458 = vunpack.c.l.b16 %v338
      %v2459 = vunpack.c.h.b16 %v338
      %v2460 = vunpack.c.l.b16 %v339
      %v2461 = vunpack.c.h.b16 %v339
      %v2462 = vunpack.c.l.b16 %v340
      %v2463 = vunpack.c.h.b16 %v340
      %v2464 = vunpack.c.l.b16 %v341
      %v2465 = vunpack.c.h.b16 %v341
      %v2466 = vunpack.c.l.b16 %v342
      %v2467 = vunpack.c.h.b16 %v342
      %v2468 = vunpack.c.l.b16 %v343
      %v2469 = vunpack.c.h.b16 %v343
      %v2470 = vunpack.c.l.b16 %v344
      %v2471 = vunpack.c.h.b16 %v344
      %v2472 = vunpack.c.l.b16 %v345
      %v2473 = vunpack.c.h.b16 %v345
      %v2474 = vunpack.c.l.b16 %v346
      %v2475 = vunpack.c.h.b16 %v346
      %v2476 = vunpack.c.l.b16 %v347
      %v2477 = vunpack.c.h.b16 %v347
      %v2478 = vunpack.c.l.b16 %v348
      %v2479 = vunpack.c.h.b16 %v348
      %v2480 = vunpack.c.l.b16 %v349
      %v2481 = vunpack.c.h.b16 %v349
      %v2482 = vunpack.c.l.b16 %v350
      %v2483 = vunpack.c.h.b16 %v350
      %v2484 = vunpack.c.l.b16 %v351
      %v2485 = vunpack.c.h.b16 %v351
      %v2486 = vunpack.c.l.b16 %v352
      %v2487 = vunpack.c.h.b16 %v352
      %v2488 = vunpack.c.l.b16 %v353
      %v2489 = vunpack.c.h.b16 %v353
      %v2490 = vunpack.c.l.b16 %v354
      %v2491 = vunpack.c.h.b16 %v354
      %v2492 = vunpack.c.l.b16 %v355
      %v2493 = vunpack.c.h.b16 %v355
      %v2494 = vunpack.c.l.b16 %v356
      %v2495 = vunpack.c.h.b16 %v356
      %v2496 = vunpack.c.l.b16 %v357
      %v2497 = vunpack.c.h.b16 %v357
      %v2498 = vunpack.c.l.b16 %v358
      %v2499 = vunpack.c.h.b16 %v358
      %v2500 = vunpack.c.l.b16 %v359
      %v2501 = vunpack.c.h.b16 %v359
      %v2502 = vunpack.c.l.b16 %v360
      %v2503 = vunpack.c.h.b16 %v360
      %v2504 = vunpack.c.l.b16 %v361
      %v2505 = vunpack.c.h.b16 %v361
      %v2506 = vunpack.c.l.b16 %v362
      %v2507 = vunpack.c.h.b16 %v362
      %v2508 = vunpack.c.l.b16 %v363
      %v2509 = vunpack.c.h.b16 %v363
      %v2510 = vunpack.c.l.b16 %v364
      %v2511 = vunpack.c.h.b16 %v364
      %v2512 = vunpack.c.l.b16 %v365
      %v2513 = vunpack.c.h.b16 %v365
      %v2514 = vunpack.c.l.b16 %v366
      %v2515 = vunpack.c.h.b16 %v366
      %v2516 = vunpack.c.l.b16 %v367
      %v2517 = vunpack.c.h.b16 %v367
      %v2518 = vunpack.c.l.b16 %v368
      %v2519 = vunpack.c.h.b16 %v368
      %v2520 = vunpack.c.l.b16 %v369
      %v2521 = vunpack.c.h.b16 %v369
      %v2522 = vunpack.c.l.b16 %v370
      %v2523 = vunpack.c.h.b16 %v370
      %v2524 = vunpack.c.l.b16 %v371
      %v2525 = vunpack.c.h.b16 %v371
      %v2526 = vunpack.c.l.b16 %v372
      %v2527 = vunpack.c.h.b16 %v372
      %v2528 = vunpack.c.l.b16 %v373
      %v2529 = vunpack.c.h.b16 %v373
      %v2530 = vunpack.c.l.b16 %v374
      %v2531 = vunpack.c.h.b16 %v374
      %v2532 = vunpack.c.l.b16 %v375
      %v2533 = vunpack.c.h.b16 %v375
      %v2534 = vunpack.c.l.b16 %v376
      %v2535 = vunpack.c.h.b16 %v376
      %v2536 = vunpack.c.l.b16 %v377
      %v2537 = vunpack.c.h.b16 %v377
      %v2538 = vunpack.c.l.b16 %v378
      %v2539 = vunpack.c.h.b16 %v378
      %v2540 = vunpack.c.l.b16 %v379
      %v2541 = vunpack.c.h.b16 %v379
      %v2542 = vunpack.c.l.b16 %v380
      %v2543 = vunpack.c.h.b16 %v380
      %v2544 = vunpack.c.l.b16 %v381
      %v2545 = vunpack.c.h.b16 %v381
      %v2546 = vunpack.c.l.b16 %v382
      %v2547 = vunpack.c.h.b16 %v382
      %v2548 = vunpack.c.l.b16 %v383
      %v2549 = vunpack.c.h.b16 %v383
      %v2550 = vunpack.c.l.b16 %v384
      %v2551 = vunpack.c.h.b16 %v384
      %v2552 = vunpack.c.l.b16 %v385
      %v2553 = vunpack.c.h.b16 %v385
      %v2554 = vunpack.c.l.b16 %v386
      %v2555 = vunpack.c.h.b16 %v386
      %v2556 = vunpack.c.l.b16 %v387
      %v2557 = vunpack.c.h.b16 %v387
      %v2558 = vunpack.c.l.b16 %v388
      %v2559 = vunpack.c.h.b16 %v388
      %v2560 = vunpack.c.l.b16 %v389
      %v2561 = vunpack.c.h.b16 %v389
      %v2562 = vunpack.c.l.b16 %v390
      %v2563 = vunpack.c.h.b16 %v390
      %v2564 = vunpack.c.l.b16 %v391
      %v2565 = vunpack.c.h.b16 %v391
      %v2566 = vunpack.c.l.b16 %v392
      %v2567 = vunpack.c.h.b16 %v392
      %v2568 = vunpack.c.l.b16 %v393
      %v2569 = vunpack.c.h.b16 %v393
      %v2570 = vunpack.c.l.b16 %v394
      %v2571 = vunpack.c.h.b16 %v394
      %v2572 = vunpack.c.l.b16 %v395
      %v2573 = vunpack.c.h.b16 %v395
      %v2574 = vunpack.c.l.b16 %v396
      %v2575 = vunpack.c.h.b16 %v396
      %v2576 = vunpack.c.l.b16 %v397
      %v2577 = vunpack.c.h.b16 %v397
      %v2578 = vunpack.c.l.b16 %v398
      %v2579 = vunpack.c.h.b16 %v398
      %v2580 = vunpack.c.l.b16 %v399
      %v2581 = vunpack.c.h.b16 %v399
      %v2582 = vunpack.c.l.b16 %v400
      %v2583 = vunpack.c.h.b16 %v400
      %v2584 = vunpack.c.l.b16 %v401
      %v2585 = vunpack.c.h.b16 %v401
      %v2586 = vunpack.c.l.b16 %v402
      %v2587 = vunpack.c.h.b16 %v402
      %v2588 = vunpack.c.l.b16 %v403
      %v2589 = vunpack.c.h.b16 %v403
      %v2590 = vunpack.c.l.b16 %v404
      %v2591 = vunpack.c.h.b16 %v404
      %v2592 = vunpack.c.l.b16 %v405
      %v2593 = vunpack.c.h.b16 %v405
      %v2594 = vunpack.c.l.b16 %v406
      %v2595 = vunpack.c.h.b16 %v406
      %v2596 = vunpack.c.l.b16 %v407
      %v2597 = vunpack.c.h.b16 %v407
      %v2598 = vunpack.c.l.b16 %v408
      %v2599 = vunpack.c.h.b16 %v408
      %v2600 = vunpack.c.l.b16 %v409
      %v2601 = vunpack.c.h.b16 %v409
      %v2602 = vunpack.c.l.b16 %v410
      %v2603 = vunpack.c.h.b16 %v410
      %v2604 = vunpack.c.l.b16 %v411
      %v2605 = vunpack.c.h.b16 %v411
      %v2606 = vunpack.c.l.b16 %v412
      %v2607 = vunpack.c.h.b16 %v412
      %v2608 = vunpack.c.l.b16 %v413
      %v2609 = vunpack.c.h.b16 %v413
      %v2610 = vunpack.c.l.b16 %v414
      %v2611 = vunpack.c.h.b16 %v414
      %v2612 = vunpack.c.l.b16 %v415
      %v2613 = vunpack.c.h.b16 %v415
      %v2614 = vunpack.c.l.b16 %v416
      %v2615 = vunpack.c.h.b16 %v416
      %v2616 = vunpack.c.l.b16 %v417
      %v2617 = vunpack.c.h.b16 %v417
      %v2618 = vunpack.c.l.b16 %v418
      %v2619 = vunpack.c.h.b16 %v418
      %v2620 = vunpack.c.l.b16 %v419
      %v2621 = vunpack.c.h.b16 %v419
      %v2622 = vunpack.c.l.b16 %v420
      %v2623 = vunpack.c.h.b16 %v420
      %v2624 = vunpack.c.l.b16 %v421
      %v2625 = vunpack.c.h.b16 %v421
      %v2626 = vunpack.c.l.b16 %v422
      %v2627 = vunpack.c.h.b16 %v422
      %v2628 = vunpack.c.l.b16 %v423
      %v2629 = vunpack.c.h.b16 %v423
      %v2630 = vunpack.c.l.b16 %v424
      %v2631 = vunpack.c.h.b16 %v424
      %v2632 = vunpack.c.l.b16 %v425
      %v2633 = vunpack.c.h.b16 %v425
      %v2634 = vunpack.c.l.b16 %v426
      %v2635 = vunpack.c.h.b16 %v426
      %v2636 = vunpack.c.l.b16 %v427
      %v2637 = vunpack.c.h.b16 %v427
      %v2638 = vunpack.c.l.b16 %v428
      %v2639 = vunpack.c.h.b16 %v428
      %v2640 = vunpack.c.l.b16 %v429
      %v2641 = vunpack.c.h.b16 %v429
      %v2642 = vunpack.c.l.b16 %v430
      %v2643 = vunpack.c.h.b16 %v430
      %v2644 = vunpack.c.l.b16 %v431
      %v2645 = vunpack.c.h.b16 %v431
      %v2646 = vunpack.c.l.b16 %v432
      %v2647 = vunpack.c.h.b16 %v432
      %v2648 = vunpack.c.l.b16 %v433
      %v2649 = vunpack.c.h.b16 %v433
      %v2650 = vunpack.c.l.b16 %v434
      %v2651 = vunpack.c.h.b16 %v434
      %v2652 = vunpack.c.l.b16 %v435
      %v2653 = vunpack.c.h.b16 %v435
      %v2654 = vunpack.c.l.b16 %v436
      %v2655 = vunpack.c.h.b16 %v436
      %v2656 = vunpack.c.l.b16 %v437
      %v2657 = vunpack.c.h.b16 %v437
      %v2658 = vunpack.c.l.b16 %v438
      %v2659 = vunpack.c.h.b16 %v438
      %v2660 = vunpack.c.l.b16 %v439
      %v2661 = vunpack.c.h.b16 %v439
      %v2662 = vunpack.c.l.b16 %v440
      %v2663 = vunpack.c.h.b16 %v440
      %v2664 = vunpack.c.l.b16 %v441
      %v2665 = vunpack.c.h.b16 %v441
      %v2666 = vunpack.c.l.b16 %v442
      %v2667 = vunpack.c.h.b16 %v442
      %v2668 = vunpack.c.l.b16 %v443
      %v2669 = vunpack.c.h.b16 %v443
      %v2670 = vunpack.c.l.b16 %v444
      %v2671 = vunpack.c.h.b16 %v444
      %v2672 = vunpack.c.l.b16 %v445
      %v2673 = vunpack.c.h.b16 %v445
      %v2674 = vunpack.c.l.b16 %v446
      %v2675 = vunpack.c.h.b16 %v446
      %v2676 = vunpack.c.l.b16 %v447
      %v2677 = vunpack.c.h.b16 %v447
      %v2678 = vunpack.c.l.b16 %v448
      %v2679 = vunpack.c.h.b16 %v448
      %v2680 = vunpack.c.l.b16 %v449
      %v2681 = vunpack.c.h.b16 %v449
      %v2682 = vunpack.c.l.b16 %v450
      %v2683 = vunpack.c.h.b16 %v450
      %v2684 = vunpack.c.l.b16 %v451
      %v2685 = vunpack.c.h.b16 %v451
      %v2686 = vunpack.c.l.b16 %v452
      %v2687 = vunpack.c.h.b16 %v452
      %v2688 = vunpack.c.l.b16 %v453
      %v2689 = vunpack.c.h.b16 %v453
      %v2690 = vunpack.c.l.b16 %v454
      %v2691 = vunpack.c.h.b16 %v454
      %v2692 = vunpack.c.l.b16 %v455
      %v2693 = vunpack.c.h.b16 %v455
      %v2694 = vunpack.c.l.b16 %v456
      %v2695 = vunpack.c.h.b16 %v456
      %v2696 = vunpack.c.l.b16 %v457
      %v2697 = vunpack.c.h.b16 %v457
      %v2698 = vunpack.c.l.b16 %v458
      %v2699 = vunpack.c.h.b16 %v458
      %v2700 = vunpack.c.l.b16 %v459
      %v2701 = vunpack.c.h.b16 %v459
      %v2702 = vunpack.c.l.b16 %v460
      %v2703 = vunpack.c.h.b16 %v460
      %v2704 = vunpack.c.l.b16 %v461
      %v2705 = vunpack.c.h.b16 %v461
      %v2706 = vunpack.c.l.b16 %v462
      %v2707 = vunpack.c.h.b16 %v462
      %v2708 = vunpack.c.l.b16 %v463
      %v2709 = vunpack.c.h.b16 %v463
      %v2710 = vunpack.c.l.b16 %v464
      %v2711 = vunpack.c.h.b16 %v464
      %v2712 = vunpack.c.l.b16 %v465
      %v2713 = vunpack.c.h.b16 %v465
      %v2714 = vunpack.c.l.b16 %v466
      %v2715 = vunpack.c.h.b16 %v466
      %v2716 = vunpack.c.l.b16 %v467
      %v2717 = vunpack.c.h.b16 %v467
      %v2718 = vunpack.c.l.b16 %v468
      %v2719 = vunpack.c.h.b16 %v468
      %v2720 = vunpack.c.l.b16 %v469
      %v2721 = vunpack.c.h.b16 %v469
      %v2722 = vunpack.c.l.b16 %v470
      %v2723 = vunpack.c.h.b16 %v470
      %v2724 = vunpack.c.l.b16 %v471
      %v2725 = vunpack.c.h.b16 %v471
      %v2726 = vunpack.c.l.b16 %v472
      %v2727 = vunpack.c.h.b16 %v472
      %v2728 = vunpack.c.l.b16 %v473
      %v2729 = vunpack.c.h.b16 %v473
      %v2730 = vunpack.c.l.b16 %v474
      %v2731 = vunpack.c.h.b16 %v474
      %v2732 = vunpack.c.l.b16 %v475
      %v2733 = vunpack.c.h.b16 %v475
      %v2734 = vunpack.c.l.b16 %v476
      %v2735 = vunpack.c.h.b16 %v476
      %v2736 = vunpack.c.l.b16 %v477
      %v2737 = vunpack.c.h.b16 %v477
      %v2738 = vunpack.c.l.b16 %v478
      %v2739 = vunpack.c.h.b16 %v478
      %v2740 = vunpack.c.l.b16 %v479
      %v2741 = vunpack.c.h.b16 %v479
      %v2742 = vunpack.c.l.b16 %v480
      %v2743 = vunpack.c.h.b16 %v480
      %v2744 = vunpack.c.l.b16 %v481
      %v2745 = vunpack.c.h.b16 %v481
      %v2746 = vunpack.c.l.b16 %v482
      %v2747 = vunpack.c.h.b16 %v482
      %v2748 = vunpack.c.l.b16 %v483
      %v2749 = vunpack.c.h.b16 %v483
      %v2750 = vunpack.c.l.b16 %v484
      %v2751 = vunpack.c.h.b16 %v484
      %v2752 = vunpack.c.l.b16 %v485
      %v2753 = vunpack.c.h.b16 %v485
      %v2754 = vunpack.c.l.b16 %v486
      %v2755 = vunpack.c.h.b16 %v486
      %v2756 = vunpack.c.l.b16 %v487
      %v2757 = vunpack.c.h.b16 %v487
      %v2758 = vunpack.c.l.b16 %v488
      %v2759 = vunpack.c.h.b16 %v488
      %v2760 = vunpack.c.l.b16 %v489
      %v2761 = vunpack.c.h.b16 %v489
      %v2762 = vunpack.c.l.b16 %v490
      %v2763 = vunpack.c.h.b16 %v490
      %v2764 = vunpack.c.l.b16 %v491
      %v2765 = vunpack.c.h.b16 %v491
      %v2766 = vunpack.c.l.b16 %v492
      %v2767 = vunpack.c.h.b16 %v492
      %v2768 = vunpack.c.l.b16 %v493
      %v2769 = vunpack.c.h.b16 %v493
      %v2770 = vunpack.c.l.b16 %v494
      %v2771 = vunpack.c.h.b16 %v494
      %v2772 = vunpack.c.l.b16 %v495
      %v2773 = vunpack.c.h.b16 %v495
      %v2774 = vunpack.c.l.b16 %v496
      %v2775 = vunpack.c.h.b16 %v496
      %v2776 = vunpack.c.l.b16 %v497
      %v2777 = vunpack.c.h.b16 %v497
      %v2778 = vunpack.c.l.b16 %v498
      %v2779 = vunpack.c.h.b16 %v498
      %v2780 = vunpack.c.l.b16 %v499
      %v2781 = vunpack.c.h.b16 %v499
      %v2782 = vunpack.c.l.b16 %v500
      %v2783 = vunpack.c.h.b16 %v500
      %v2784 = vunpack.c.l.b16 %v501
      %v2785 = vunpack.c.h.b16 %v501
      %v2786 = vunpack.c.l.b16 %v502
      %v2787 = vunpack.c.h.b16 %v502
      %v2788 = vunpack.c.l.b16 %v503
      %v2789 = vunpack.c.h.b16 %v503
      %v2790 = vunpack.c.l.b16 %v504
      %v2791 = vunpack.c.h.b16 %v504
      %v2792 = vunpack.c.l.b16 %v505
      %v2793 = vunpack.c.h.b16 %v505
      %v2794 = vunpack.c.l.b16 %v506
      %v2795 = vunpack.c.h.b16 %v506
      %v2796 = vunpack.c.l.b16 %v507
      %v2797 = vunpack.c.h.b16 %v507
      %v2798 = vunpack.c.l.b16 %v508
      %v2799 = vunpack.c.h.b16 %v508
      %v2800 = vunpack.c.l.b16 %v509
      %v2801 = vunpack.c.h.b16 %v509
      %v2802 = vunpack.c.l.b16 %v510
      %v2803 = vunpack.c.h.b16 %v510
      %v2804 = vunpack.c.l.b16 %v511
      %v2805 = vunpack.c.h.b16 %v511
      %v2806 = vunpack.c.l.b16 %v512
      %v2807 = vunpack.c.h.b16 %v512
      %v2808 = vunpack.c.l.b16 %v513
      %v2809 = vunpack.c.h.b16 %v513
      %v2810 = vunpack.c.l.b16 %v514
      %v2811 = vunpack.c.h.b16 %v514
      %v2812 = vunpack.c.l.b16 %v515
      %v2813 = vunpack.c.h.b16 %v515
      %v2814 = vunpack.c.l.b16 %v516
      %v2815 = vunpack.c.h.b16 %v516
      %v2816 = vunpack.c.l.b16 %v517
      %v2817 = vunpack.c.h.b16 %v517
      %v2818 = vunpack.c.l.b16 %v518
      %v2819 = vunpack.c.h.b16 %v518
      %v2820 = vunpack.c.l.b16 %v519
      %v2821 = vunpack.c.h.b16 %v519
      %v2822 = vunpack.c.l.b16 %v520
      %v2823 = vunpack.c.h.b16 %v520
      %v2824 = vunpack.c.l.b16 %v521
      %v2825 = vunpack.c.h.b16 %v521
      %v2826 = vunpack.c.l.b16 %v522
      %v2827 = vunpack.c.h.b16 %v522
      %v2828 = vunpack.c.l.b16 %v523
      %v2829 = vunpack.c.h.b16 %v523
      %v2830 = vunpack.c.l.b16 %v524
      %v2831 = vunpack.c.h.b16 %v524
      %v2832 = vunpack.c.l.b16 %v525
      %v2833 = vunpack.c.h.b16 %v525
      %v2834 = vunpack.c.l.b16 %v526
      %v2835 = vunpack.c.h.b16 %v526
      %v2836 = vunpack.c.l.b16 %v527
      %v2837 = vunpack.c.h.b16 %v527
      %v2838 = vunpack.c.l.b16 %v528
      %v2839 = vunpack.c.h.b16 %v528
      %v2840 = vunpack.c.l.b16 %v529
      %v2841 = vunpack.c.h.b16 %v529
      %v2842 = vunpack.c.l.b16 %v530
      %v2843 = vunpack.c.h.b16 %v530
      %v2844 = vunpack.c.l.b16 %v531
      %v2845 = vunpack.c.h.b16 %v531
      %v2846 = vunpack.c.l.b16 %v532
      %v2847 = vunpack.c.h.b16 %v532
      %v2848 = vunpack.c.l.b16 %v533
      %v2849 = vunpack.c.h.b16 %v533
      %v2850 = vunpack.c.l.b16 %v534
      %v2851 = vunpack.c.h.b16 %v534
      %v2852 = vunpack.c.l.b16 %v535
      %v2853 = vunpack.c.h.b16 %v535
      %v2854 = vunpack.c.l.b16 %v536
      %v2855 = vunpack.c.h.b16 %v536
      %v2856 = vunpack.c.l.b16 %v537
      %v2857 = vunpack.c.h.b16 %v537
      %v2858 = vunpack.c.l.b16 %v538
      %v2859 = vunpack.c.h.b16 %v538
      %v2860 = vunpack.c.l.b16 %v539
      %v2861 = vunpack.c.h.b16 %v539
      %v2862 = vunpack.c.l.b16 %v540
      %v2863 = vunpack.c.h.b16 %v540
      %v2864 = vunpack.c.l.b16 %v541
      %v2865 = vunpack.c.h.b16 %v541
      %v2866 = vunpack.c.l.b16 %v542
      %v2867 = vunpack.c.h.b16 %v542
      %v2868 = vunpack.c.l.b16 %v543
      %v2869 = vunpack.c.h.b16 %v543
      %v2870 = vunpack.c.l.b16 %v544
      %v2871 = vunpack.c.h.b16 %v544
      %v2872 = vunpack.c.l.b16 %v545
      %v2873 = vunpack.c.h.b16 %v545
      %v2874 = vunpack.c.l.b16 %v546
      %v2875 = vunpack.c.h.b16 %v546
      %v2876 = vunpack.c.l.b16 %v547
      %v2877 = vunpack.c.h.b16 %v547
      %v2878 = vunpack.c.l.b16 %v548
      %v2879 = vunpack.c.h.b16 %v548
      %v2880 = vunpack.c.l.b16 %v549
      %v2881 = vunpack.c.h.b16 %v549
      %v2882 = vunpack.c.l.b16 %v550
      %v2883 = vunpack.c.h.b16 %v550
      %v2884 = vunpack.c.l.b16 %v551
      %v2885 = vunpack.c.h.b16 %v551
      %v2886 = vunpack.c.l.b16 %v552
      %v2887 = vunpack.c.h.b16 %v552
      %v2888 = vunpack.c.l.b16 %v553
      %v2889 = vunpack.c.h.b16 %v553
      %v2890 = vunpack.c.l.b16 %v554
      %v2891 = vunpack.c.h.b16 %v554
      %v2892 = vunpack.c.l.b16 %v555
      %v2893 = vunpack.c.h.b16 %v555
      %v2894 = vunpack.c.l.b16 %v556
      %v2895 = vunpack.c.h.b16 %v556
      %v2896 = vunpack.c.l.b16 %v557
      %v2897 = vunpack.c.h.b16 %v557
      %v2898 = vunpack.c.l.b16 %v558
      %v2899 = vunpack.c.h.b16 %v558
      %v2900 = vunpack.c.l.b16 %v559
      %v2901 = vunpack.c.h.b16 %v559
      %v2902 = vunpack.c.l.b16 %v560
      %v2903 = vunpack.c.h.b16 %v560
      %v2904 = vunpack.c.l.b16 %v561
      %v2905 = vunpack.c.h.b16 %v561
      %v2906 = vunpack.c.l.b16 %v562
      %v2907 = vunpack.c.h.b16 %v562
      %v2908 = vunpack.c.l.b16 %v563
      %v2909 = vunpack.c.h.b16 %v563
      %v2910 = vunpack.c.l.b16 %v564
      %v2911 = vunpack.c.h.b16 %v564
      %v2912 = vunpack.c.l.b16 %v565
      %v2913 = vunpack.c.h.b16 %v565
      %v2914 = vunpack.c.l.b16 %v566
      %v2915 = vunpack.c.h.b16 %v566
      %v2916 = vunpack.c.l.b16 %v567
      %v2917 = vunpack.c.h.b16 %v567
      %v2918 = vunpack.c.l.b16 %v568
      %v2919 = vunpack.c.h.b16 %v568
      %v2920 = vunpack.c.l.b16 %v569
      %v2921 = vunpack.c.h.b16 %v569
      %v2922 = vunpack.c.l.b16 %v570
      %v2923 = vunpack.c.h.b16 %v570
      %v2924 = vunpack.c.l.b16 %v571
      %v2925 = vunpack.c.h.b16 %v571
      %v2926 = vunpack.c.l.b16 %v572
      %v2927 = vunpack.c.h.b16 %v572
      %v2928 = vunpack.c.l.b16 %v573
      %v2929 = vunpack.c.h.b16 %v573
      %v2930 = vunpack.c.l.b16 %v574
      %v2931 = vunpack.c.h.b16 %v574
      %v2932 = vunpack.c.l.b16 %v575
      %v2933 = vunpack.c.h.b16 %v575
      %v2934 = vunpack.c.l.b16 %v576
      %v2935 = vunpack.c.h.b16 %v576
      %v2936 = vunpack.c.l.b16 %v577
      %v2937 = vunpack.c.h.b16 %v577
      %v2938 = vunpack.c.l.b16 %v578
      %v2939 = vunpack.c.h.b16 %v578
      %v2940 = vunpack.c.l.b16 %v579
      %v2941 = vunpack.c.h.b16 %v579
      %v2942 = vunpack.c.l.b16 %v580
      %v2943 = vunpack.c.h.b16 %v580
      %v2944 = vunpack.c.l.b16 %v581
      %v2945 = vunpack.c.h.b16 %v581
      %v2946 = vunpack.c.l.b16 %v582
      %v2947 = vunpack.c.h.b16 %v582
      %v2948 = vunpack.c.l.b16 %v583
      %v2949 = vunpack.c.h.b16 %v583
      %v2950 = vunpack.c.l.b16 %v584
      %v2951 = vunpack.c.h.b16 %v584
      %v2952 = vunpack.c.l.b16 %v585
      %v2953 = vunpack.c.h.b16 %v585
      %v2954 = vunpack.c.l.b16 %v586
      %v2955 = vunpack.c.h.b16 %v586
      %v2956 = vunpack.c.l.b16 %v587
      %v2957 = vunpack.c.h.b16 %v587
      %v2958 = vunpack.c.l.b16 %v588
      %v2959 = vunpack.c.h.b16 %v588
      %v2960 = vunpack.c.l.b16 %v589
      %v2961 = vunpack.c.h.b16 %v589
      %v2962 = vunpack.c.l.b16 %v590
      %v2963 = vunpack.c.h.b16 %v590
      %v2964 = vunpack.c.l.b16 %v591
      %v2965 = vunpack.c.h.b16 %v591
      %v2966 = vunpack.c.l.b16 %v592
      %v2967 = vunpack.c.h.b16 %v592
      %v2968 = vunpack.c.l.b16 %v593
      %v2969 = vunpack.c.h.b16 %v593
      %v2970 = vunpack.c.l.b16 %v594
      %v2971 = vunpack.c.h.b16 %v594
      %v2972 = vunpack.c.l.b16 %v595
      %v2973 = vunpack.c.h.b16 %v595
      %v2974 = vunpack.c.l.b16 %v596
      %v2975 = vunpack.c.h.b16 %v596
      %v2976 = vunpack.c.l.b16 %v597
      %v2977 = vunpack.c.h.b16 %v597
      %v2978 = vunpack.c.l.b16 %v598
      %v2979 = vunpack.c.h.b16 %v598
      %v2980 = vunpack.c.l.b16 %v599
      %v2981 = vunpack.c.h.b16 %v599
      %v2982 = vunpack.c.l.b16 %v600
      %v2983 = vunpack.c.h.b16 %v600
      %v2984 = vunpack.c.l.b16 %v601
      %v2985 = vunpack.c.h.b16 %v601
      %v2986 = vunpack.c.l.b16 %v602
      %v2987 = vunpack.c.h.b16 %v602
      %v2988 = vunpack.c.l.b16 %v603
      %v2989 = vunpack.c.h.b16 %v603
      %v2990 = vunpack.c.l.b16 %v604
      %v2991 = vunpack.c.h.b16 %v604
      %v2992 = vunpack.c.l.b16 %v605
      %v2993 = vunpack.c.h.b16 %v605
      %v2994 = vunpack.c.l.b16 %v606
      %v2995 = vunpack.c.h.b16 %v606
      %v2996 = vunpack.c.l.b16 %v607
      %v2997 = vunpack.c.h.b16 %v607
      %v2998 = vunpack.c.l.b16 %v608
      %v2999 = vunpack.c.h.b16 %v608
      %v3000 = vunpack.c.l.b16 %v609
      %v3001 = vunpack.c.h.b16 %v609
      %v3002 = vunpack.c.l.b16 %v610
      %v3003 = vunpack.c.h.b16 %v610
      %v3004 = vunpack.c.l.b16 %v611
      %v3005 = vunpack.c.h.b16 %v611
      %v3006 = vunpack.c.l.b16 %v612
      %v3007 = vunpack.c.h.b16 %v612
      %v3008 = vunpack.c.l.b16 %v613
      %v3009 = vunpack.c.h.b16 %v613
      %v3010 = vunpack.c.l.b16 %v614
      %v3011 = vunpack.c.h.b16 %v614
      %v3012 = vunpack.c.l.b16 %v615
      %v3013 = vunpack.c.h.b16 %v615
      %v3014 = vunpack.c.l.b16 %v616
      %v3015 = vunpack.c.h.b16 %v616
      %v3016 = vunpack.c.l.b16 %v617
      %v3017 = vunpack.c.h.b16 %v617
      %v3018 = vunpack.c.l.b16 %v618
      %v3019 = vunpack.c.h.b16 %v618
      %v3020 = vunpack.c.l.b16 %v619
      %v3021 = vunpack.c.h.b16 %v619
      %v3022 = vunpack.c.l.b16 %v620
      %v3023 = vunpack.c.h.b16 %v620
      %v3024 = vunpack.c.l.b16 %v621
      %v3025 = vunpack.c.h.b16 %v621
      %v3026 = vunpack.c.l.b16 %v622
      %v3027 = vunpack.c.h.b16 %v622
      %v3028 = vunpack.c.l.b16 %v623
      %v3029 = vunpack.c.h.b16 %v623
      %v3030 = vunpack.c.l.b16 %v624
      %v3031 = vunpack.c.h.b16 %v624
      %v3032 = vunpack.c.l.b16 %v625
      %v3033 = vunpack.c.h.b16 %v625
      %v3034 = vunpack.c.l.b16 %v626
      %v3035 = vunpack.c.h.b16 %v626
      %v3036 = vunpack.c.l.b16 %v627
      %v3037 = vunpack.c.h.b16 %v627
      %v3038 = vunpack.c.l.b16 %v628
      %v3039 = vunpack.c.h.b16 %v628
      %v3040 = vunpack.c.l.b16 %v629
      %v3041 = vunpack.c.h.b16 %v629
      %v3042 = vunpack.c.l.b16 %v630
      %v3043 = vunpack.c.h.b16 %v630
      %v3044 = vunpack.c.l.b16 %v631
      %v3045 = vunpack.c.h.b16 %v631
      %v3046 = vunpack.c.l.b16 %v632
      %v3047 = vunpack.c.h.b16 %v632
      %v3048 = vunpack.c.l.b16 %v633
      %v3049 = vunpack.c.h.b16 %v633
      %v3050 = vunpack.c.l.b16 %v634
      %v3051 = vunpack.c.h.b16 %v634
      %v3052 = vunpack.c.l.b16 %v635
      %v3053 = vunpack.c.h.b16 %v635
      %v3054 = vunpack.c.l.b16 %v636
      %v3055 = vunpack.c.h.b16 %v636
      %v3056 = vunpack.c.l.b16 %v637
      %v3057 = vunpack.c.h.b16 %v637
      %v3058 = vunpack.c.l.b16 %v638
      %v3059 = vunpack.c.h.b16 %v638
      %v3060 = vunpack.c.l.b16 %v639
      %v3061 = vunpack.c.h.b16 %v639
      %v3062 = vunpack.c.l.b16 %v640
      %v3063 = vunpack.c.h.b16 %v640
      %v3064 = vunpack.c.l.b16 %v641
      %v3065 = vunpack.c.h.b16 %v641
      %v3066 = vunpack.c.l.b16 %v642
      %v3067 = vunpack.c.h.b16 %v642
      %v3068 = vunpack.c.l.b16 %v643
      %v3069 = vunpack.c.h.b16 %v643
      %v3070 = vunpack.c.l.b16 %v644
      %v3071 = vunpack.c.h.b16 %v644
      %v3072 = vunpack.c.l.b16 %v645
      %v3073 = vunpack.c.h.b16 %v645
      %v3074 = vunpack.c.l.b16 %v646
      %v3075 = vunpack.c.h.b16 %v646
      %v3076 = vunpack.c.l.b16 %v647
      %v3077 = vunpack.c.h.b16 %v647
      %v3078 = vunpack.c.l.b16 %v648
      %v3079 = vunpack.c.h.b16 %v648
      %v3080 = vunpack.c.l.b16 %v649
      %v3081 = vunpack.c.h.b16 %v649
      %v3082 = vunpack.c.l.b16 %v650
      %v3083 = vunpack.c.h.b16 %v650
      %v3084 = vunpack.c.l.b16 %v651
      %v3085 = vunpack.c.h.b16 %v651
      %v3086 = vunpack.c.l.b16 %v652
      %v3087 = vunpack.c.h.b16 %v652
      %v3088 = vunpack.c.l.b16 %v653
      %v3089 = vunpack.c.h.b16 %v653
      %v3090 = vunpack.c.l.b16 %v654
      %v3091 = vunpack.c.h.b16 %v654
      %v3092 = vunpack.c.l.b16 %v655
      %v3093 = vunpack.c.h.b16 %v655
      %v3094 = vunpack.c.l.b16 %v656
      %v3095 = vunpack.c.h.b16 %v656
      %v3096 = vunpack.c.l.b16 %v657
      %v3097 = vunpack.c.h.b16 %v657
      %v3098 = vunpack.c.l.b16 %v658
      %v3099 = vunpack.c.h.b16 %v658
      %v3100 = vunpack.c.l.b16 %v659
      %v3101 = vunpack.c.h.b16 %v659
      %v3102 = vunpack.c.l.b16 %v660
      %v3103 = vunpack.c.h.b16 %v660
      %v3104 = vunpack.c.l.b16 %v661
      %v3105 = vunpack.c.h.b16 %v661
      %v3106 = vunpack.c.l.b16 %v662
      %v3107 = vunpack.c.h.b16 %v662
      %v3108 = vunpack.c.l.b16 %v663
      %v3109 = vunpack.c.h.b16 %v663
      %v3110 = vunpack.c.l.b16 %v664
      %v3111 = vunpack.c.h.b16 %v664
      %v3112 = vunpack.c.l.b16 %v665
      %v3113 = vunpack.c.h.b16 %v665
      %v3114 = vunpack.c.l.b16 %v666
      %v3115 = vunpack.c.h.b16 %v666
      %v3116 = vunpack.c.l.b16 %v667
      %v3117 = vunpack.c.h.b16 %v667
      %v3118 = vunpack.c.l.b16 %v668
      %v3119 = vunpack.c.h.b16 %v668
      %v3120 = vunpack.c.l.b16 %v669
      %v3121 = vunpack.c.h.b16 %v669
      %v3122 = vunpack.c.l.b16 %v670
      %v3123 = vunpack.c.h.b16 %v670
      %v3124 = vunpack.c.l.b16 %v671
      %v3125 = vunpack.c.h.b16 %v671
      %v3126 = vunpack.c.l.b16 %v672
      %v3127 = vunpack.c.h.b16 %v672
      %v3128 = vunpack.c.l.b16 %v673
      %v3129 = vunpack.c.h.b16 %v673
      %v3130 = vunpack.c.l.b16 %v674
      %v3131 = vunpack.c.h.b16 %v674
      %v3132 = vunpack.c.l.b16 %v675
      %v3133 = vunpack.c.h.b16 %v675
      %v3134 = vunpack.c.l.b16 %v676
      %v3135 = vunpack.c.h.b16 %v676
      %v3136 = vunpack.c.l.b16 %v677
      %v3137 = vunpack.c.h.b16 %v677
      %v3138 = vunpack.c.l.b16 %v678
      %v3139 = vunpack.c.h.b16 %v678
      %v3140 = vunpack.c.l.b16 %v679
      %v3141 = vunpack.c.h.b16 %v679
      %v3142 = vunpack.c.l.b16 %v680
      %v3143 = vunpack.c.h.b16 %v680
      %v3144 = vunpack.c.l.b16 %v681
      %v3145 = vunpack.c.h.b16 %v681
      %v3146 = vunpack.c.l.b16 %v682
      %v3147 = vunpack.c.h.b16 %v682
      %v3148 = vunpack.c.l.b16 %v683
      %v3149 = vunpack.c.h.b16 %v683
      %v3150 = vunpack.c.l.b16 %v684
      %v3151 = vunpack.c.h.b16 %v684
      %v3152 = vunpack.c.l.b16 %v685
      %v3153 = vunpack.c.h.b16 %v685
      %v3154 = vunpack.c.l.b16 %v686
      %v3155 = vunpack.c.h.b16 %v686
      %v3156 = vunpack.c.l.b16 %v687
      %v3157 = vunpack.c.h.b16 %v687
      %v3158 = vunpack.c.l.b16 %v688
      %v3159 = vunpack.c.h.b16 %v688
      %v3160 = vunpack.c.l.b16 %v689
      %v3161 = vunpack.c.h.b16 %v689
      %v3162 = vunpack.c.l.b16 %v690
      %v3163 = vunpack.c.h.b16 %v690
      %v3164 = vunpack.c.l.b16 %v691
      %v3165 = vunpack.c.h.b16 %v691
      %v3166 = vunpack.c.l.b16 %v692
      %v3167 = vunpack.c.h.b16 %v692
      %v3168 = vunpack.c.l.b16 %v693
      %v3169 = vunpack.c.h.b16 %v693
      %v3170 = vunpack.c.l.b16 %v694
      %v3171 = vunpack.c.h.b16 %v694
      %v3172 = vunpack.c.l.b16 %v695
      %v3173 = vunpack.c.h.b16 %v695
      %v3174 = vunpack.c.l.b16 %v696
      %v3175 = vunpack.c.h.b16 %v696
      %v3176 = vunpack.c.l.b16 %v697
      %v3177 = vunpack.c.h.b16 %v697
      %v3178 = vunpack.c.l.b16 %v698
      %v3179 = vunpack.c.h.b16 %v698
      %v3180 = vunpack.c.l.b16 %v699
      %v3181 = vunpack.c.h.b16 %v699
      %v3182 = vunpack.c.l.b16 %v700
      %v3183 = vunpack.c.h.b16 %v700
      %v3184 = vunpack.c.l.b16 %v701
      %v3185 = vunpack.c.h.b16 %v701
      %v3186 = vunpack.c.l.b16 %v702
      %v3187 = vunpack.c.h.b16 %v702
      %v3188 = vunpack.c.l.b16 %v703
      %v3189 = vunpack.c.h.b16 %v703
      %v3190 = vunpack.c.l.b16 %v704
      %v3191 = vunpack.c.h.b16 %v704
      %v3192 = vunpack.c.l.b16 %v705
      %v3193 = vunpack.c.h.b16 %v705
      %v3194 = vunpack.c.l.b16 %v706
      %v3195 = vunpack.c.h.b16 %v706
      %v3196 = vunpack.c.l.b16 %v707
      %v3197 = vunpack.c.h.b16 %v707
      %v3198 = vunpack.c.l.b16 %v708
      %v3199 = vunpack.c.h.b16 %v708
      %v3200 = vunpack.c.l.b16 %v709
      %v3201 = vunpack.c.h.b16 %v709
      %v3202 = vunpack.c.l.b16 %v710
      %v3203 = vunpack.c.h.b16 %v710
      %v3204 = vunpack.c.l.b16 %v711
      %v3205 = vunpack.c.h.b16 %v711
      %v3206 = vunpack.c.l.b16 %v712
      %v3207 = vunpack.c.h.b16 %v712
      %v3208 = vunpack.c.l.b16 %v713
      %v3209 = vunpack.c.h.b16 %v713
      %v3210 = vunpack.c.l.b16 %v714
      %v3211 = vunpack.c.h.b16 %v714
      %v3212 = vunpack.c.l.b16 %v715
      %v3213 = vunpack.c.h.b16 %v715
      %v3214 = vunpack.c.l.b16 %v716
      %v3215 = vunpack.c.h.b16 %v716
      %v3216 = vunpack.c.l.b16 %v717
      %v3217 = vunpack.c.h.b16 %v717
      %v3218 = vunpack.c.l.b16 %v718
      %v3219 = vunpack.c.h.b16 %v718
      %v3220 = vunpack.c.l.b16 %v719
      %v3221 = vunpack.c.h.b16 %v719
      %v3222 = vunpack.c.l.b16 %v720
      %v3223 = vunpack.c.h.b16 %v720
      %v3224 = vunpack.c.l.b16 %v721
      %v3225 = vunpack.c.h.b16 %v721
      %v3226 = vunpack.c.l.b16 %v722
      %v3227 = vunpack.c.h.b16 %v722
      %v3228 = vunpack.c.l.b16 %v723
      %v3229 = vunpack.c.h.b16 %v723
      %v3230 = vunpack.c.l.b16 %v724
      %v3231 = vunpack.c.h.b16 %v724
      %v3232 = vunpack.c.l.b16 %v725
      %v3233 = vunpack.c.h.b16 %v725
      %v3234 = vunpack.c.l.b16 %v726
      %v3235 = vunpack.c.h.b16 %v726
      %v3236 = vunpack.c.l.b16 %v727
      %v3237 = vunpack.c.h.b16 %v727
      %v3238 = vunpack.c.l.b16 %v728
      %v3239 = vunpack.c.h.b16 %v728
      %v3240 = vunpack.c.l.b16 %v729
      %v3241 = vunpack.c.h.b16 %v729
      %v3242 = vunpack.c.l.b16 %v730
      %v3243 = vunpack.c.h.b16 %v730
      %v3244 = vunpack.c.l.b16 %v731
      %v3245 = vunpack.c.h.b16 %v731
      %v3246 = vunpack.c.l.b16 %v732
      %v3247 = vunpack.c.h.b16 %v732
      %v3248 = vunpack.c.l.b16 %v733
      %v3249 = vunpack.c.h.b16 %v733
      %v3250 = vunpack.c.l.b16 %v734
      %v3251 = vunpack.c.h.b16 %v734
      %v3252 = vunpack.c.l.b16 %v735
      %v3253 = vunpack.c.h.b16 %v735
      %v3254 = vunpack.c.l.b16 %v736
      %v3255 = vunpack.c.h.b16 %v736
      %v3256 = vunpack.c.l.b16 %v737
      %v3257 = vunpack.c.h.b16 %v737
      %v3258 = vunpack.c.l.b16 %v738
      %v3259 = vunpack.c.h.b16 %v738
      %v3260 = vunpack.c.l.b16 %v739
      %v3261 = vunpack.c.h.b16 %v739
      %v3262 = vunpack.c.l.b16 %v740
      %v3263 = vunpack.c.h.b16 %v740
      %v3264 = vunpack.c.l.b16 %v741
      %v3265 = vunpack.c.h.b16 %v741
      %v3266 = vunpack.c.l.b16 %v742
      %v3267 = vunpack.c.h.b16 %v742
      %v3268 = vunpack.c.l.b16 %v743
      %v3269 = vunpack.c.h.b16 %v743
      %v3270 = vunpack.c.l.b16 %v744
      %v3271 = vunpack.c.h.b16 %v744
      %v3272 = vunpack.c.l.b16 %v745
      %v3273 = vunpack.c.h.b16 %v745
      %v3274 = vunpack.c.l.b16 %v746
      %v3275 = vunpack.c.h.b16 %v746
      %v3276 = vunpack.c.l.b16 %v747
      %v3277 = vunpack.c.h.b16 %v747
      %v3278 = vunpack.c.l.b16 %v748
      %v3279 = vunpack.c.h.b16 %v748
      %v3280 = vunpack.c.l.b16 %v749
      %v3281 = vunpack.c.h.b16 %v749
      %v3282 = vunpack.c.l.b16 %v750
      %v3283 = vunpack.c.h.b16 %v750
      %v3284 = vunpack.c.l.b16 %v751
      %v3285 = vunpack.c.h.b16 %v751
      %v3286 = vunpack.c.l.b16 %v752
      %v3287 = vunpack.c.h.b16 %v752
      %v3288 = vunpack.c.l.b16 %v753
      %v3289 = vunpack.c.h.b16 %v753
      %v3290 = vunpack.c.l.b16 %v754
      %v3291 = vunpack.c.h.b16 %v754
      %v3292 = vunpack.c.l.b16 %v755
      %v3293 = vunpack.c.h.b16 %v755
      %v3294 = vunpack.c.l.b16 %v756
      %v3295 = vunpack.c.h.b16 %v756
      %v3296 = vunpack.c.l.b16 %v757
      %v3297 = vunpack.c.h.b16 %v757
      %v3298 = vunpack.c.l.b16 %v758
      %v3299 = vunpack.c.h.b16 %v758
      %v3300 = vunpack.c.l.b16 %v759
      %v3301 = vunpack.c.h.b16 %v759
      %v3302 = vunpack.c.l.b16 %v760
      %v3303 = vunpack.c.h.b16 %v760
      %v3304 = vunpack.c.l.b16 %v761
      %v3305 = vunpack.c.h.b16 %v761
      %v3306 = vunpack.c.l.b16 %v762
      %v3307 = vunpack.c.h.b16 %v762
      %v3308 = vunpack.c.l.b16 %v763
      %v3309 = vunpack.c.h.b16 %v763
      %v3310 = vunpack.c.l.b16 %v764
      %v3311 = vunpack.c.h.b16 %v764
      %v3312 = vunpack.c.l.b16 %v765
      %v3313 = vunpack.c.h.b16 %v765
      %v3314 = vunpack.c.l.b16 %v766
      %v3315 = vunpack.c.h.b16 %v766
      %v3316 = vunpack.c.l.b16 %v767
      %v3317 = vunpack.c.h.b16 %v767
      %v3318 = vunpack.c.l.b16 %v768
      %v3319 = vunpack.c.h.b16 %v768
      %v3320 = vunpack.c.l.b16 %v769
      %v3321 = vunpack.c.h.b16 %v769
      %v3322 = vunpack.c.l.b16 %v770
      %v3323 = vunpack.c.h.b16 %v770
      %v3324 = vunpack.c.l.b16 %v771
      %v3325 = vunpack.c.h.b16 %v771
      %v3326 = vunpack.c.l.b16 %v772
      %v3327 = vunpack.c.h.b16 %v772
      %v3328 = vunpack.c.l.b16 %v773
      %v3329 = vunpack.c.h.b16 %v773
      %v3330 = vunpack.c.l.b16 %v774
      %v3331 = vunpack.c.h.b16 %v774
      %v3332 = vunpack.c.l.b16 %v775
      %v3333 = vunpack.c.h.b16 %v775
      %v3334 = vunpack.c.l.b16 %v776
      %v3335 = vunpack.c.h.b16 %v776
      %v3336 = vunpack.c.l.b16 %v777
      %v3337 = vunpack.c.h.b16 %v777
      %v3338 = vunpack.c.l.b16 %v778
      %v3339 = vunpack.c.h.b16 %v778
      %v3340 = vunpack.c.l.b16 %v779
      %v3341 = vunpack.c.h.b16 %v779
      %v3342 = vunpack.c.l.b16 %v780
      %v3343 = vunpack.c.h.b16 %v780
      %v3344 = vunpack.c.l.b16 %v781
      %v3345 = vunpack.c.h.b16 %v781
      %v3346 = vunpack.c.l.b16 %v782
      %v3347 = vunpack.c.h.b16 %v782
      %v3348 = vunpack.c.l.b16 %v783
      %v3349 = vunpack.c.h.b16 %v783
      %v3350 = vunpack.c.l.b16 %v784
      %v3351 = vunpack.c.h.b16 %v784
      %v3352 = vunpack.c.l.b16 %v785
      %v3353 = vunpack.c.h.b16 %v785
      %v3354 = vunpack.c.l.b16 %v786
      %v3355 = vunpack.c.h.b16 %v786
      %v3356 = vunpack.c.l.b16 %v787
      %v3357 = vunpack.c.h.b16 %v787
      %v3358 = vunpack.c.l.b16 %v788
      %v3359 = vunpack.c.h.b16 %v788
      %v3360 = vunpack.c.l.b16 %v789
      %v3361 = vunpack.c.h.b16 %v789
      %v3362 = vunpack.c.l.b16 %v790
      %v3363 = vunpack.c.h.b16 %v790
      %v3364 = vunpack.c.l.b16 %v791
      %v3365 = vunpack.c.h.b16 %v791
      %v3366 = vunpack.c.l.b16 %v792
      %v3367 = vunpack.c.h.b16 %v792
      %v3368 = vunpack.c.l.b16 %v793
      %v3369 = vunpack.c.h.b16 %v793
      %v3370 = vunpack.c.l.b16 %v794
      %v3371 = vunpack.c.h.b16 %v794
      %v3372 = vunpack.c.l.b16 %v795
      %v3373 = vunpack.c.h.b16 %v795
      %v3374 = vunpack.c.l.b16 %v796
      %v3375 = vunpack.c.h.b16 %v796
      %v3376 = vunpack.c.l.b16 %v797
      %v3377 = vunpack.c.h.b16 %v797
      %v3378 = vunpack.c.l.b16 %v798
      %v3379 = vunpack.c.h.b16 %v798
      %v3380 = vunpack.c.l.b16 %v799
      %v3381 = vunpack.c.h.b16 %v799
      %v3382 = vunpack.c.l.b16 %v800
      %v3383 = vunpack.c.h.b16 %v800
      %v3384 = vunpack.c.l.b16 %v801
      %v3385 = vunpack.c.h.b16 %v801
      %v3386 = vunpack.c.l.b16 %v802
      %v3387 = vunpack.c.h.b16 %v802
      %v3388 = vunpack.c.l.b16 %v803
      %v3389 = vunpack.c.h.b16 %v803
      %v3390 = vunpack.c.l.b16 %v804
      %v3391 = vunpack.c.h.b16 %v804
      %v3392 = vunpack.c.l.b16 %v805
      %v3393 = vunpack.c.h.b16 %v805
      %v3394 = vunpack.c.l.b16 %v806
      %v3395 = vunpack.c.h.b16 %v806
      %v3396 = vunpack.c.l.b16 %v807
      %v3397 = vunpack.c.h.b16 %v807
      %v3398 = vunpack.c.l.b16 %v808
      %v3399 = vunpack.c.h.b16 %v808
      %v3400 = vunpack.c.l.b16 %v809
      %v3401 = vunpack.c.h.b16 %v809
      %v3402 = vunpack.c.l.b16 %v810
      %v3403 = vunpack.c.h.b16 %v810
      %v3404 = vunpack.c.l.b16 %v811
      %v3405 = vunpack.c.h.b16 %v811
      %v3406 = vunpack.c.l.b16 %v812
      %v3407 = vunpack.c.h.b16 %v812
      %v3408 = vunpack.c.l.b16 %v813
      %v3409 = vunpack.c.h.b16 %v813
      %v3410 = vunpack.c.l.b16 %v814
      %v3411 = vunpack.c.h.b16 %v814
      %v3412 = vunpack.c.l.b16 %v815
      %v3413 = vunpack.c.h.b16 %v815
      %v3414 = vunpack.c.l.b16 %v816
      %v3415 = vunpack.c.h.b16 %v816
      %v3416 = vunpack.c.l.b16 %v817
      %v3417 = vunpack.c.h.b16 %v817
      %v3418 = vunpack.c.l.b16 %v818
      %v3419 = vunpack.c.h.b16 %v818
      %v3420 = vunpack.c.l.b16 %v819
      %v3421 = vunpack.c.h.b16 %v819
      %v3422 = vunpack.c.l.b16 %v820
      %v3423 = vunpack.c.h.b16 %v820
      %v3424 = vunpack.c.l.b16 %v821
      %v3425 = vunpack.c.h.b16 %v821
      %v3426 = vunpack.c.l.b16 %v822
      %v3427 = vunpack.c.h.b16 %v822
      %v3428 = vunpack.c.l.b16 %v823
      %v3429 = vunpack.c.h.b16 %v823
      %v3430 = vunpack.c.l.b16 %v824
      %v3431 = vunpack.c.h.b16 %v824
      %v3432 = vunpack.c.l.b16 %v825
      %v3433 = vunpack.c.h.b16 %v825
      %v3434 = vunpack.c.l.b16 %v826
      %v3435 = vunpack.c.h.b16 %v826
      %v3436 = vunpack.c.l.b16 %v827
      %v3437 = vunpack.c.h.b16 %v827
      %v3438 = vunpack.c.l.b16 %v828
      %v3439 = vunpack.c.h.b16 %v828
      %v3440 = vunpack.c.l.b16 %v829
      %v3441 = vunpack.c.h.b16 %v829
      %v3442 = vunpack.c.l.b16 %v830
      %v3443 = vunpack.c.h.b16 %v830
      %v3444 = vunpack.c.l.b16 %v831
      %v3445 = vunpack.c.h.b16 %v831
      %v3446 = vunpack.c.l.b16 %v832
      %v3447 = vunpack.c.h.b16 %v832
      %v3448 = vunpack.c.l.b16 %v833
      %v3449 = vunpack.c.h.b16 %v833
      %v3450 = vunpack.c.l.b16 %v834
      %v3451 = vunpack.c.h.b16 %v834
      %v3452 = vunpack.c.l.b16 %v835
      %v3453 = vunpack.c.h.b16 %v835
      %v3454 = vunpack.c.l.b16 %v836
      %v3455 = vunpack.c.h.b16 %v836
      %v3456 = vunpack.c.l.b16 %v837
      %v3457 = vunpack.c.h.b16 %v837
      %v3458 = vunpack.c.l.b16 %v838
      %v3459 = vunpack.c.h.b16 %v838
      %v3460 = vunpack.c.l.b16 %v839
      %v3461 = vunpack.c.h.b16 %v839
      %v3462 = vunpack.c.l.b16 %v840
      %v3463 = vunpack.c.h.b16 %v840
      %v3464 = vunpack.c.l.b16 %v841
      %v3465 = vunpack.c.h.b16 %v841
      %v3466 = vunpack.c.l.b16 %v842
      %v3467 = vunpack.c.h.b16 %v842
      %v3468 = vunpack.c.l.b16 %v843
      %v3469 = vunpack.c.h.b16 %v843
      %v3470 = vunpack.c.l.b16 %v844
      %v3471 = vunpack.c.h.b16 %v844
      %v3472 = vunpack.c.l.b16 %v845
      %v3473 = vunpack.c.h.b16 %v845
      %v3474 = vunpack.c.l.b16 %v846
      %v3475 = vunpack.c.h.b16 %v846
      %v3476 = vunpack.c.l.b16 %v847
      %v3477 = vunpack.c.h.b16 %v847
      %v3478 = vunpack.c.l.b16 %v848
      %v3479 = vunpack.c.h.b16 %v848
      %v3480 = vunpack.c.l.b16 %v849
      %v3481 = vunpack.c.h.b16 %v849
      %v3482 = vunpack.c.l.b16 %v850
      %v3483 = vunpack.c.h.b16 %v850
      %v3484 = vunpack.c.l.b16 %v851
      %v3485 = vunpack.c.h.b16 %v851
      %v3486 = vunpack.c.l.b16 %v852
      %v3487 = vunpack.c.h.b16 %v852
      %v3488 = vunpack.c.l.b16 %v853
      %v3489 = vunpack.c.h.b16 %v853
      %v3490 = vunpack.c.l.b16 %v854
      %v3491 = vunpack.c.h.b16 %v854
      %v3492 = vunpack.c.l.b16 %v855
      %v3493 = vunpack.c.h.b16 %v855
      %v3494 = vunpack.c.l.b16 %v856
      %v3495 = vunpack.c.h.b16 %v856
      %v3496 = vunpack.c.l.b16 %v857
      %v3497 = vunpack.c.h.b16 %v857
      %v3498 = vunpack.c.l.b16 %v858
      %v3499 = vunpack.c.h.b16 %v858
      %v3500 = vunpack.c.l.b16 %v859
      %v3501 = vunpack.c.h.b16 %v859
      %v3502 = vunpack.c.l.b16 %v860
      %v3503 = vunpack.c.h.b16 %v860
      %v3504 = vunpack.c.l.b16 %v861
      %v3505 = vunpack.c.h.b16 %v861
      %v3506 = vunpack.c.l.b16 %v862
      %v3507 = vunpack.c.h.b16 %v862
      %v3508 = vunpack.c.l.b16 %v863
      %v3509 = vunpack.c.h.b16 %v863
      %v3510 = vunpack.c.l.b16 %v864
      %v3511 = vunpack.c.h.b16 %v864
      %v3512 = vunpack.c.l.b16 %v865
      %v3513 = vunpack.c.h.b16 %v865
      %v3514 = vunpack.c.l.b16 %v866
      %v3515 = vunpack.c.h.b16 %v866
      %v3516 = vunpack.c.l.b16 %v867
      %v3517 = vunpack.c.h.b16 %v867
      %v3518 = vunpack.c.l.b16 %v868
      %v3519 = vunpack.c.h.b16 %v868
      %v3520 = vunpack.c.l.b16 %v869
      %v3521 = vunpack.c.h.b16 %v869
      %v3522 = vunpack.c.l.b16 %v870
      %v3523 = vunpack.c.h.b16 %v870
      %v3524 = vunpack.c.l.b16 %v871
      %v3525 = vunpack.c.h.b16 %v871
      %v3526 = vunpack.c.l.b16 %v872
      %v3527 = vunpack.c.h.b16 %v872
      %v3528 = vunpack.c.l.b16 %v873
      %v3529 = vunpack.c.h.b16 %v873
      %v3530 = vunpack.c.l.b16 %v874
      %v3531 = vunpack.c.h.b16 %v874
      %v3532 = vunpack.c.l.b16 %v875
      %v3533 = vunpack.c.h.b16 %v875
      %v3534 = vunpack.c.l.b16 %v876
      %v3535 = vunpack.c.h.b16 %v876
      %v3536 = vunpack.c.l.b16 %v877
      %v3537 = vunpack.c.h.b16 %v877
      %v3538 = vunpack.c.l.b16 %v878
      %v3539 = vunpack.c.h.b16 %v878
      %v3540 = vunpack.c.l.b16 %v879
      %v3541 = vunpack.c.h.b16 %v879
      %v3542 = vunpack.c.l.b16 %v880
      %v3543 = vunpack.c.h.b16 %v880
      %v3544 = vunpack.c.l.b16 %v881
      %v3545 = vunpack.c.h.b16 %v881
      %v3546 = vunpack.c.l.b16 %v882
      %v3547 = vunpack.c.h.b16 %v882
      %v3548 = vunpack.c.l.b16 %v883
      %v3549 = vunpack.c.h.b16 %v883
      %v3550 = vunpack.c.l.b16 %v884
      %v3551 = vunpack.c.h.b16 %v884
      %v3552 = vunpack.c.l.b16 %v885
      %v3553 = vunpack.c.h.b16 %v885
      %v3554 = vunpack.c.l.b16 %v886
      %v3555 = vunpack.c.h.b16 %v886
      %v3556 = vunpack.c.l.b16 %v887
      %v3557 = vunpack.c.h.b16 %v887
      %v3558 = vunpack.c.l.b16 %v888
      %v3559 = vunpack.c.h.b16 %v888
      %v3560 = vunpack.c.l.b16 %v889
      %v3561 = vunpack.c.h.b16 %v889
      %v3562 = vunpack.c.l.b16 %v890
      %v3563 = vunpack.c.h.b16 %v890
      %v3564 = vunpack.c.l.b16 %v891
      %v3565 = vunpack.c.h.b16 %v891
      %v3566 = vunpack.c.l.b16 %v892
      %v3567 = vunpack.c.h.b16 %v892
      %v3568 = vunpack.c.l.b16 %v893
      %v3569 = vunpack.c.h.b16 %v893
      %v3570 = vunpack.c.l.b16 %v894
      %v3571 = vunpack.c.h.b16 %v894
      %v3572 = vunpack.c.l.b16 %v895
      %v3573 = vunpack.c.h.b16 %v895
      %v3574 = vunpack.c.l.b16 %v896
      %v3575 = vunpack.c.h.b16 %v896
      %v3576 = vunpack.c.l.b16 %v897
      %v3577 = vunpack.c.h.b16 %v897
      %v3578 = vunpack.c.l.b16 %v898
      %v3579 = vunpack.c.h.b16 %v898
      %v3580 = vunpack.c.l.b16 %v899
      %v3581 = vunpack.c.h.b16 %v899
      %v3582 = vunpack.c.l.b16 %v900
      %v3583 = vunpack.c.h.b16 %v900
      %v3584 = vunpack.c.l.b16 %v901
      %v3585 = vunpack.c.h.b16 %v901
      %v3586 = vunpack.c.l.b16 %v902
      %v3587 = vunpack.c.h.b16 %v902
      %v3588 = vunpack.c.l.b16 %v903
      %v3589 = vunpack.c.h.b16 %v903
      %v3590 = vunpack.c.l.b16 %v904
      %v3591 = vunpack.c.h.b16 %v904
      %v3592 = vunpack.c.l.b16 %v905
      %v3593 = vunpack.c.h.b16 %v905
      %v3594 = vunpack.c.l.b16 %v906
      %v3595 = vunpack.c.h.b16 %v906
      %v3596 = vunpack.c.l.b16 %v907
      %v3597 = vunpack.c.h.b16 %v907
      %v3598 = vunpack.c.l.b16 %v908
      %v3599 = vunpack.c.h.b16 %v908
      %v3600 = vunpack.c.l.b16 %v909
      %v3601 = vunpack.c.h.b16 %v909
      %v3602 = vunpack.c.l.b16 %v910
      %v3603 = vunpack.c.h.b16 %v910
      %v3604 = vunpack.c.l.b16 %v911
      %v3605 = vunpack.c.h.b16 %v911
      %v3606 = vunpack.c.l.b16 %v912
      %v3607 = vunpack.c.h.b16 %v912
      %v3608 = vunpack.c.l.b16 %v913
      %v3609 = vunpack.c.h.b16 %v913
      %v3610 = vunpack.c.l.b16 %v914
      %v3611 = vunpack.c.h.b16 %v914
      %v3612 = vunpack.c.l.b16 %v915
      %v3613 = vunpack.c.h.b16 %v915
      %v3614 = vunpack.c.l.b16 %v916
      %v3615 = vunpack.c.h.b16 %v916
      %v3616 = vunpack.c.l.b16 %v917
      %v3617 = vunpack.c.h.b16 %v917
      %v3618 = vunpack.c.l.b16 %v918
      %v3619 = vunpack.c.h.b16 %v918
      %v3620 = vunpack.c.l.b16 %v919
      %v3621 = vunpack.c.h.b16 %v919
      %v3622 = vunpack.c.l.b16 %v920
      %v3623 = vunpack.c.h.b16 %v920
      %v3624 = vunpack.c.l.b16 %v921
      %v3625 = vunpack.c.h.b16 %v921
      %v3626 = vunpack.c.l.b16 %v922
      %v3627 = vunpack.c.h.b16 %v922
      %v3628 = vunpack.c.l.b16 %v923
      %v3629 = vunpack.c.h.b16 %v923
      %v3630 = vunpack.c.l.b16 %v924
      %v3631 = vunpack.c.h.b16 %v924
      %v3632 = vunpack.c.l.b16 %v925
      %v3633 = vunpack.c.h.b16 %v925
      %v3634 = vunpack.c.l.b16 %v926
      %v3635 = vunpack.c.h.b16 %v926
      %v3636 = vunpack.c.l.b16 %v927
      %v3637 = vunpack.c.h.b16 %v927
      %v3638 = vunpack.c.l.b16 %v928
      %v3639 = vunpack.c.h.b16 %v928
      %v3640 = vunpack.c.l.b16 %v929
      %v3641 = vunpack.c.h.b16 %v929
      %v3642 = vunpack.c.l.b16 %v930
      %v3643 = vunpack.c.h.b16 %v930
      %v3644 = vunpack.c.l.b16 %v931
      %v3645 = vunpack.c.h.b16 %v931
      %v3646 = vunpack.c.l.b16 %v932
      %v3647 = vunpack.c.h.b16 %v932
      %v3648 = vunpack.c.l.b16 %v933
      %v3649 = vunpack.c.h.b16 %v933
      %v3650 = vunpack.c.l.b16 %v934
      %v3651 = vunpack.c.h.b16 %v934
      %v3652 = vunpack.c.l.b16 %v935
      %v3653 = vunpack.c.h.b16 %v935
      %v3654 = vunpack.c.l.b16 %v936
      %v3655 = vunpack.c.h.b16 %v936
      %v3656 = vunpack.c.l.b16 %v937
      %v3657 = vunpack.c.h.b16 %v937
      %v3658 = vunpack.c.l.b16 %v938
      %v3659 = vunpack.c.h.b16 %v938
      %v3660 = vunpack.c.l.b16 %v939
      %v3661 = vunpack.c.h.b16 %v939
      %v3662 = vunpack.c.l.b16 %v940
      %v3663 = vunpack.c.h.b16 %v940
      %v3664 = vunpack.c.l.b16 %v941
      %v3665 = vunpack.c.h.b16 %v941
      %v3666 = vunpack.c.l.b16 %v942
      %v3667 = vunpack.c.h.b16 %v942
      %v3668 = vunpack.c.l.b16 %v943
      %v3669 = vunpack.c.h.b16 %v943
      %v3670 = vunpack.c.l.b16 %v944
      %v3671 = vunpack.c.h.b16 %v944
      %v3672 = vunpack.c.l.b16 %v945
      %v3673 = vunpack.c.h.b16 %v945
      %v3674 = vunpack.c.l.b16 %v946
      %v3675 = vunpack.c.h.b16 %v946
      %v3676 = vunpack.c.l.b16 %v947
      %v3677 = vunpack.c.h.b16 %v947
      %v3678 = vunpack.c.l.b16 %v948
      %v3679 = vunpack.c.h.b16 %v948
      %v3680 = vunpack.c.l.b16 %v949
      %v3681 = vunpack.c.h.b16 %v949
      %v3682 = vunpack.c.l.b16 %v950
      %v3683 = vunpack.c.h.b16 %v950
      %v3684 = vunpack.c.l.b16 %v951
      %v3685 = vunpack.c.h.b16 %v951
      %v3686 = vunpack.c.l.b16 %v952
      %v3687 = vunpack.c.h.b16 %v952
      %v3688 = vunpack.c.l.b16 %v953
      %v3689 = vunpack.c.h.b16 %v953
      %v3690 = vunpack.c.l.b16 %v954
      %v3691 = vunpack.c.h.b16 %v954
      %v3692 = vunpack.c.l.b16 %v955
      %v3693 = vunpack.c.h.b16 %v955
      %v3694 = vunpack.c.l.b16 %v956
      %v3695 = vunpack.c.h.b16 %v956
      %v3696 = vunpack.c.l.b16 %v957
      %v3697 = vunpack.c.h.b16 %v957
      %v3698 = vunpack.c.l.b16 %v958
      %v3699 = vunpack.c.h.b16 %v958
      %v3700 = vunpack.c.l.b16 %v959
      %v3701 = vunpack.c.h.b16 %v959
      %v3702 = vunpack.c.l.b16 %v960
      %v3703 = vunpack.c.h.b16 %v960
      %v3704 = vunpack.c.l.b16 %v961
      %v3705 = vunpack.c.h.b16 %v961
      %v3706 = vunpack.c.l.b16 %v962
      %v3707 = vunpack.c.h.b16 %v962
      %v3708 = vunpack.c.l.b16 %v963
      %v3709 = vunpack.c.h.b16 %v963
      %v3710 = vunpack.c.l.b16 %v964
      %v3711 = vunpack.c.h.b16 %v964
      %v3712 = vunpack.c.l.b16 %v965
      %v3713 = vunpack.c.h.b16 %v965
      %v3714 = vunpack.c.l.b16 %v966
      %v3715 = vunpack.c.h.b16 %v966
      %v3716 = vunpack.c.l.b16 %v967
      %v3717 = vunpack.c.h.b16 %v967
      %v3718 = vunpack.c.l.b16 %v968
      %v3719 = vunpack.c.h.b16 %v968
      %v3720 = vunpack.c.l.b16 %v969
      %v3721 = vunpack.c.h.b16 %v969
      %v3722 = vunpack.c.l.b16 %v970
      %v3723 = vunpack.c.h.b16 %v970
      %v3724 = vunpack.c.l.b16 %v971
      %v3725 = vunpack.c.h.b16 %v971
      %v3726 = vunpack.c.l.b16 %v972
      %v3727 = vunpack.c.h.b16 %v972
      %v3728 = vunpack.c.l.b16 %v973
      %v3729 = vunpack.c.h.b16 %v973
      %v3730 = vunpack.c.l.b16 %v974
      %v3731 = vunpack.c.h.b16 %v974
      %v3732 = vunpack.c.l.b16 %v975
      %v3733 = vunpack.c.h.b16 %v975
      %v3734 = vunpack.c.l.b16 %v976
      %v3735 = vunpack.c.h.b16 %v976
      %v3736 = vunpack.c.l.b16 %v977
      %v3737 = vunpack.c.h.b16 %v977
      %v3738 = vunpack.c.l.b16 %v978
      %v3739 = vunpack.c.h.b16 %v978
      %v3740 = vunpack.c.l.b16 %v979
      %v3741 = vunpack.c.h.b16 %v979
      %v3742 = vunpack.c.l.b16 %v980
      %v3743 = vunpack.c.h.b16 %v980
      %v3744 = vunpack.c.l.b16 %v981
      %v3745 = vunpack.c.h.b16 %v981
      %v3746 = vunpack.c.l.b16 %v982
      %v3747 = vunpack.c.h.b16 %v982
      %v3748 = vunpack.c.l.b16 %v983
      %v3749 = vunpack.c.h.b16 %v983
      %v3750 = vunpack.c.l.b16 %v984
      %v3751 = vunpack.c.h.b16 %v984
      %v3752 = vunpack.c.l.b16 %v985
      %v3753 = vunpack.c.h.b16 %v985
      %v3754 = vunpack.c.l.b16 %v986
      %v3755 = vunpack.c.h.b16 %v986
      %v3756 = vunpack.c.l.b16 %v987
      %v3757 = vunpack.c.h.b16 %v987
      %v3758 = vunpack.c.l.b16 %v988
      %v3759 = vunpack.c.h.b16 %v988
      %v3760 = vunpack.c.l.b16 %v989
      %v3761 = vunpack.c.h.b16 %v989
      %v3762 = vunpack.c.l.b16 %v990
      %v3763 = vunpack.c.h.b16 %v990
      %v3764 = vunpack.c.l.b16 %v991
      %v3765 = vunpack.c.h.b16 %v991
      %v3766 = vunpack.c.l.b16 %v992
      %v3767 = vunpack.c.h.b16 %v992
      %v3768 = vunpack.c.l.b16 %v993
      %v3769 = vunpack.c.h.b16 %v993
      %v3770 = vunpack.c.l.b16 %v994
      %v3771 = vunpack.c.h.b16 %v994
      %v3772 = vunpack.c.l.b16 %v995
      %v3773 = vunpack.c.h.b16 %v995
      %v3774 = vunpack.c.l.b16 %v996
      %v3775 = vunpack.c.h.b16 %v996
      %v3776 = vunpack.c.l.b16 %v997
      %v3777 = vunpack.c.h.b16 %v997
      %v3778 = vunpack.c.l.b16 %v998
      %v3779 = vunpack.c.h.b16 %v998
      %v3780 = vunpack.c.l.b16 %v999
      %v3781 = vunpack.c.h.b16 %v999
      %v3782 = vunpack.c.l.b16 %v1000
      %v3783 = vunpack.c.h.b16 %v1000
      %v3784 = vunpack.c.l.b16 %v1001
      %v3785 = vunpack.c.h.b16 %v1001
      %v3786 = vunpack.c.l.b16 %v1002
      %v3787 = vunpack.c.h.b16 %v1002
      %v3788 = vunpack.c.l.b16 %v1003
      %v3789 = vunpack.c.h.b16 %v1003
      %v3790 = vunpack.c.l.b16 %v1004
      %v3791 = vunpack.c.h.b16 %v1004
      %v3792 = vunpack.c.l.b16 %v1005
      %v3793 = vunpack.c.h.b16 %v1005
      %v3794 = vunpack.c.l.b16 %v1006
      %v3795 = vunpack.c.h.b16 %v1006
      %v3796 = vunpack.c.l.b16 %v1007
      %v3797 = vunpack.c.h.b16 %v1007
      %v3798 = vunpack.c.l.b16 %v1008
      %v3799 = vunpack.c.h.b16 %v1008
      %v3800 = vunpack.c.l.b16 %v1009
      %v3801 = vunpack.c.h.b16 %v1009
      %v3802 = vunpack.c.l.b16 %v1010
      %v3803 = vunpack.c.h.b16 %v1010
      %v3804 = vunpack.c.l.b16 %v1011
      %v3805 = vunpack.c.h.b16 %v1011
      %v3806 = vunpack.c.l.b16 %v1012
      %v3807 = vunpack.c.h.b16 %v1012
      %v3808 = vunpack.c.l.b16 %v1013
      %v3809 = vunpack.c.h.b16 %v1013
      %v3810 = vunpack.c.l.b16 %v1014
      %v3811 = vunpack.c.h.b16 %v1014
      %v3812 = vunpack.c.l.b16 %v1015
      %v3813 = vunpack.c.h.b16 %v1015
      %v3814 = vunpack.c.l.b16 %v1016
      %v3815 = vunpack.c.h.b16 %v1016
      %v3816 = vunpack.c.l.b16 %v1017
      %v3817 = vunpack.c.h.b16 %v1017
      %v3818 = vunpack.c.l.b16 %v1018
      %v3819 = vunpack.c.h.b16 %v1018
      %v3820 = vunpack.c.l.b16 %v1019
      %v3821 = vunpack.c.h.b16 %v1019
      %v3822 = vunpack.c.l.b16 %v1020
      %v3823 = vunpack.c.h.b16 %v1020
      %v3824 = vunpack.c.l.b16 %v1021
      %v3825 = vunpack.c.h.b16 %v1021
      %v3826 = vunpack.c.l.b16 %v1022
      %v3827 = vunpack.c.h.b16 %v1022
      %v3828 = vunpack.c.l.b16 %v1023
      %v3829 = vunpack.c.h.b16 %v1023
      %v3830 = vunpack.c.l.b16 %v1024
      %v3831 = vunpack.c.h.b16 %v1024
      %v3832 = vunpack.c.l.b16 %v1025
      %v3833 = vunpack.c.h.b16 %v1025
      %v3834 = vunpack.c.l.b16 %v1026
      %v3835 = vunpack.c.h.b16 %v1026
      %v3836 = vunpack.c.l.b16 %v1027
      %v3837 = vunpack.c.h.b16 %v1027
      %v3838 = vunpack.c.l.b16 %v1028
      %v3839 = vunpack.c.h.b16 %v1028
      %v3840 = vunpack.c.l.b16 %v1029
      %v3841 = vunpack.c.h.b16 %v1029
      %v3842 = vunpack.c.l.b16 %v1030
      %v3843 = vunpack.c.h.b16 %v1030
      %v3844 = vunpack.c.l.b16 %v1031
      %v3845 = vunpack.c.h.b16 %v1031
      %v3846 = vunpack.c.l.b16 %v1032
      %v3847 = vunpack.c.h.b16 %v1032
      %v3848 = vunpack.c.l.b16 %v1033
      %v3849 = vunpack.c.h.b16 %v1033
      %v3850 = vunpack.c.l.b16 %v1034
      %v3851 = vunpack.c.h.b16 %v1034
      %v3852 = vunpack.c.l.b16 %v1035
      %v3853 = vunpack.c.h.b16 %v1035
      %v3854 = vunpack.c.l.b16 %v1036
      %v3855 = vunpack.c.h.b16 %v1036
      %v3856 = vunpack.c.l.b16 %v1037
      %v3857 = vunpack.c.h.b16 %v1037
      %v3858 = vunpack.c.l.b16 %v1038
      %v3859 = vunpack.c.h.b16 %v1038
      %v3860 = vunpack.c.l.b16 %v1039
      %v3861 = vunpack.c.h.b16 %v1039
      %v3862 = vunpack.c.l.b16 %v1040
      %v3863 = vunpack.c.h.b16 %v1040
      %v3864 = vunpack.c.l.b16 %v1041
      %v3865 = vunpack.c.h.b16 %v1041
      %v3866 = vunpack.c.l.b16 %v1042
      %v3867 = vunpack.c.h.b16 %v1042
      %v3868 = vunpack.c.l.b16 %v1043
      %v3869 = vunpack.c.h.b16 %v1043
      %v3870 = vunpack.c.l.b16 %v1044
      %v3871 = vunpack.c.h.b16 %v1044
      %v3872 = vunpack.c.l.b16 %v1045
      %v3873 = vunpack.c.h.b16 %v1045
      %v3874 = vunpack.c.l.b16 %v1046
      %v3875 = vunpack.c.h.b16 %v1046
      %v3876 = vunpack.c.l.b16 %v1047
      %v3877 = vunpack.c.h.b16 %v1047
      %v3878 = vunpack.c.l.b16 %v1048
      %v3879 = vunpack.c.h.b16 %v1048
      %v3880 = vunpack.c.l.b16 %v1049
      %v3881 = vunpack.c.h.b16 %v1049
      %v3882 = vunpack.c.l.b16 %v1050
      %v3883 = vunpack.c.h.b16 %v1050
      %v3884 = vunpack.c.l.b16 %v1051
      %v3885 = vunpack.c.h.b16 %v1051
      %v3886 = vunpack.c.l.b16 %v1052
      %v3887 = vunpack.c.h.b16 %v1052
      %v3888 = vunpack.c.l.b16 %v1053
      %v3889 = vunpack.c.h.b16 %v1053
      %v3890 = vunpack.c.l.b16 %v1054
      %v3891 = vunpack.c.h.b16 %v1054
      %v3892 = vunpack.c.l.b16 %v1055
      %v3893 = vunpack.c.h.b16 %v1055
      %v3894 = vunpack.c.l.b16 %v1056
      %v3895 = vunpack.c.h.b16 %v1056
      %v3896 = vunpack.c.l.b16 %v1057
      %v3897 = vunpack.c.h.b16 %v1057
      %v3898 = vunpack.c.l.b16 %v1058
      %v3899 = vunpack.c.h.b16 %v1058
      %v3900 = vunpack.c.l.b16 %v1059
      %v3901 = vunpack.c.h.b16 %v1059
      %v3902 = vunpack.c.l.b16 %v1060
      %v3903 = vunpack.c.h.b16 %v1060
      %v3904 = vunpack.c.l.b16 %v1061
      %v3905 = vunpack.c.h.b16 %v1061
      %v3906 = vunpack.c.l.b16 %v1062
      %v3907 = vunpack.c.h.b16 %v1062
      %v3908 = vunpack.c.l.b16 %v1063
      %v3909 = vunpack.c.h.b16 %v1063
      %v3910 = vunpack.c.l.b16 %v1064
      %v3911 = vunpack.c.h.b16 %v1064
      %v3912 = vunpack.c.l.b16 %v1065
      %v3913 = vunpack.c.h.b16 %v1065
      %v3914 = vunpack.c.l.b16 %v1066
      %v3915 = vunpack.c.h.b16 %v1066
      %v3916 = vunpack.c.l.b16 %v1067
      %v3917 = vunpack.c.h.b16 %v1067
      %v3918 = vunpack.c.l.b16 %v1068
      %v3919 = vunpack.c.h.b16 %v1068
      %v3920 = vunpack.c.l.b16 %v1069
      %v3921 = vunpack.c.h.b16 %v1069
      %v3922 = vunpack.c.l.b16 %v1070
      %v3923 = vunpack.c.h.b16 %v1070
      %v3924 = vunpack.c.l.b16 %v1071
      %v3925 = vunpack.c.h.b16 %v1071
      %v3926 = vunpack.c.l.b16 %v1072
      %v3927 = vunpack.c.h.b16 %v1072
      %v3928 = vunpack.c.l.b16 %v1073
      %v3929 = vunpack.c.h.b16 %v1073
      %v3930 = vunpack.c.l.b16 %v1074
      %v3931 = vunpack.c.h.b16 %v1074
      %v3932 = vunpack.c.l.b16 %v1075
      %v3933 = vunpack.c.h.b16 %v1075
      %v3934 = vunpack.c.l.b16 %v1076
      %v3935 = vunpack.c.h.b16 %v1076
      %v3936 = vunpack.c.l.b16 %v1077
      %v3937 = vunpack.c.h.b16 %v1077
      %v3938 = vunpack.c.l.b16 %v1078
      %v3939 = vunpack.c.h.b16 %v1078
      %v3940 = vunpack.c.l.b16 %v1079
      %v3941 = vunpack.c.h.b16 %v1079
      %v3942 = vunpack.c.l.b16 %v1080
      %v3943 = vunpack.c.h.b16 %v1080
      %v3944 = vunpack.c.l.b16 %v1081
      %v3945 = vunpack.c.h.b16 %v1081
      %v3946 = vunpack.c.l.b16 %v1082
      %v3947 = vunpack.c.h.b16 %v1082
      %v3948 = vunpack.c.l.b16 %v1083
      %v3949 = vunpack.c.h.b16 %v1083
      %v3950 = vunpack.c.l.b16 %v1084
      %v3951 = vunpack.c.h.b16 %v1084
      %v3952 = vunpack.c.l.b16 %v1085
      %v3953 = vunpack.c.h.b16 %v1085
      %v3954 = vunpack.c.l.b16 %v1086
      %v3955 = vunpack.c.h.b16 %v1086
      %v3956 = vunpack.c.l.b16 %v1087
      %v3957 = vunpack.c.h.b16 %v1087
      %v3958 = vunpack.c.l.b16 %v1088
      %v3959 = vunpack.c.h.b16 %v1088
      %v3960 = vunpack.c.l.b16 %v1089
      %v3961 = vunpack.c.h.b16 %v1089
      %v3962 = vunpack.c.l.b16 %v1090
      %v3963 = vunpack.c.h.b16 %v1090
      %v3964 = vunpack.c.l.b16 %v1091
      %v3965 = vunpack.c.h.b16 %v1091
      %v3966 = vunpack.c.l.b16 %v1092
      %v3967 = vunpack.c.h.b16 %v1092
      %v3968 = vunpack.c.l.b16 %v1093
      %v3969 = vunpack.c.h.b16 %v1093
      %v3970 = vunpack.c.l.b16 %v1094
      %v3971 = vunpack.c.h.b16 %v1094
      %v3972 = vunpack.c.l.b16 %v1095
      %v3973 = vunpack.c.h.b16 %v1095
      %v3974 = vunpack.c.l.b16 %v1096
      %v3975 = vunpack.c.h.b16 %v1096
      %v3976 = vunpack.c.l.b16 %v1097
      %v3977 = vunpack.c.h.b16 %v1097
      %v3978 = vunpack.c.l.b16 %v1098
      %v3979 = vunpack.c.h.b16 %v1098
      %v3980 = vunpack.c.l.b16 %v1099
      %v3981 = vunpack.c.h.b16 %v1099
      %v3982 = vunpack.c.l.b16 %v1100
      %v3983 = vunpack.c.h.b16 %v1100
      %v3984 = vunpack.c.l.b16 %v1101
      %v3985 = vunpack.c.h.b16 %v1101
      %v3986 = vunpack.c.l.b16 %v1102
      %v3987 = vunpack.c.h.b16 %v1102
      %v3988 = vunpack.c.l.b16 %v1103
      %v3989 = vunpack.c.h.b16 %v1103
      %v3990 = vunpack.c.l.b16 %v1104
      %v3991 = vunpack.c.h.b16 %v1104
      %v3992 = vunpack.c.l.b16 %v1105
      %v3993 = vunpack.c.h.b16 %v1105
      %v3994 = vunpack.c.l.b16 %v1106
      %v3995 = vunpack.c.h.b16 %v1106
      %v3996 = vunpack.c.l.b16 %v1107
      %v3997 = vunpack.c.h.b16 %v1107
      %v3998 = vunpack.c.l.b16 %v1108
      %v3999 = vunpack.c.h.b16 %v1108
      %v4000 = vunpack.c.l.b16 %v1109
      %v4001 = vunpack.c.h.b16 %v1109
      %v4002 = vunpack.c.l.b16 %v1110
      %v4003 = vunpack.c.h.b16 %v1110
      %v4004 = vunpack.c.l.b16 %v1111
      %v4005 = vunpack.c.h.b16 %v1111
      %v4006 = vunpack.c.l.b16 %v1112
      %v4007 = vunpack.c.h.b16 %v1112
      %v4008 = vunpack.c.l.b16 %v1113
      %v4009 = vunpack.c.h.b16 %v1113
      %v4010 = vunpack.c.l.b16 %v1114
      %v4011 = vunpack.c.h.b16 %v1114
      %v4012 = vunpack.c.l.b16 %v1115
      %v4013 = vunpack.c.h.b16 %v1115
      %v4014 = vunpack.c.l.b16 %v1116
      %v4015 = vunpack.c.h.b16 %v1116
      %v4016 = vunpack.c.l.b16 %v1117
      %v4017 = vunpack.c.h.b16 %v1117
      %v4018 = vunpack.c.l.b16 %v1118
      %v4019 = vunpack.c.h.b16 %v1118
      %v4020 = vunpack.c.l.b16 %v1119
      %v4021 = vunpack.c.h.b16 %v1119
      %v4022 = vunpack.c.l.b16 %v1120
      %v4023 = vunpack.c.h.b16 %v1120
      %v4024 = vunpack.c.l.b16 %v1121
      %v4025 = vunpack.c.h.b16 %v1121
      %v4026 = vunpack.c.l.b16 %v1122
      %v4027 = vunpack.c.h.b16 %v1122
      %v4028 = vunpack.c.l.b16 %v1123
      %v4029 = vunpack.c.h.b16 %v1123
      %v4030 = vunpack.c.l.b16 %v1124
      %v4031 = vunpack.c.h.b16 %v1124
      %v4032 = vunpack.c.l.b16 %v1125
      %v4033 = vunpack.c.h.b16 %v1125
      %v4034 = vunpack.c.l.b16 %v1126
      %v4035 = vunpack.c.h.b16 %v1126
      %v4036 = vunpack.c.l.b16 %v1127
      %v4037 = vunpack.c.h.b16 %v1127
      %v4038 = vunpack.c.l.b16 %v1128
      %v4039 = vunpack.c.h.b16 %v1128
      %v4040 = vunpack.c.l.b16 %v1129
      %v4041 = vunpack.c.h.b16 %v1129
      %v4042 = vunpack.c.l.b16 %v1130
      %v4043 = vunpack.c.h.b16 %v1130
      %v4044 = vunpack.c.l.b16 %v1131
      %v4045 = vunpack.c.h.b16 %v1131
      %v4046 = vunpack.c.l.b16 %v1132
      %v4047 = vunpack.c.h.b16 %v1132
      %v4048 = vunpack.c.l.b16 %v1133
      %v4049 = vunpack.c.h.b16 %v1133
      %v4050 = vunpack.c.l.b16 %v1134
      %v4051 = vunpack.c.h.b16 %v1134
      %v4052 = vunpack.c.l.b16 %v1135
      %v4053 = vunpack.c.h.b16 %v1135
      %v4054 = vunpack.c.l.b16 %v1136
      %v4055 = vunpack.c.h.b16 %v1136
      %v4056 = vunpack.c.l.b16 %v1137
      %v4057 = vunpack.c.h.b16 %v1137
      %v4058 = vunpack.c.l.b16 %v1138
      %v4059 = vunpack.c.h.b16 %v1138
      %v4060 = vunpack.c.l.b16 %v1139
      %v4061 = vunpack.c.h.b16 %v1139
      %v4062 = vunpack.c.l.b16 %v1140
      %v4063 = vunpack.c.h.b16 %v1140
      %v4064 = vunpack.c.l.b16 %v1141
      %v4065 = vunpack.c.h.b16 %v1141
      %v4066 = vunpack.c.l.b16 %v1142
      %v4067 = vunpack.c.h.b16 %v1142
      %v4068 = vunpack.c.l.b16 %v1143
      %v4069 = vunpack.c.h.b16 %v1143
      %v4070 = vunpack.c.l.b16 %v1144
      %v4071 = vunpack.c.h.b16 %v1144
      %v4072 = vunpack.c.l.b16 %v1145
      %v4073 = vunpack.c.h.b16 %v1145
      %v4074 = vunpack.c.l.b16 %v1146
      %v4075 = vunpack.c.h.b16 %v1146
      %v4076 = vunpack.c.l.b16 %v1147
      %v4077 = vunpack.c.h.b16 %v1147
      %v4078 = vunpack.c.l.b16 %v1148
      %v4079 = vunpack.c.h.b16 %v1148
      %v4080 = vunpack.c.l.b16 %v1149
      %v4081 = vunpack.c.h.b16 %v1149
      %v4082 = vunpack.c.l.b16 %v1150
      %v4083 = vunpack.c.h.b16 %v1150
      %v4084 = vunpack.c.l.b16 %v1151
      %v4085 = vunpack.c.h.b16 %v1151
      %v4086 = vunpack.c.l.b16 %v1152
      %v4087 = vunpack.c.h.b16 %v1152
      %v4088 = vunpack.c.l.b16 %v1153
      %v4089 = vunpack.c.h.b16 %v1153
      %v4090 = vunpack.c.l.b16 %v1154
      %v4091 = vunpack.c.h.b16 %v1154
      %v4092 = vunpack.c.l.b16 %v1155
      %v4093 = vunpack.c.h.b16 %v1155
      %v4094 = vunpack.c.l.b16 %v1156
      %v4095 = vunpack.c.h.b16 %v1156
      %v4096 = vunpack.c.l.b16 %v1157
      %v4097 = vunpack.c.h.b16 %v1157
      %v4098 = vunpack.c.l.b16 %v1158
      %v4099 = vunpack.c.h.b16 %v1158
      %v4100 = vunpack.c.l.b16 %v1159
      %v4101 = vunpack.c.h.b16 %v1159
      %v4102 = vunpack.c.l.b16 %v1160
      %v4103 = vunpack.c.h.b16 %v1160
      %v4104 = vunpack.c.l.b16 %v1161
      %v4105 = vunpack.c.h.b16 %v1161
      %v4106 = vunpack.c.l.b16 %v1162
      %v4107 = vunpack.c.h.b16 %v1162
      %v4108 = vunpack.c.l.b16 %v1163
      %v4109 = vunpack.c.h.b16 %v1163
      %v4110 = vunpack.c.l.b16 %v1164
      %v4111 = vunpack.c.h.b16 %v1164
      %v4112 = vunpack.c.l.b16 %v1165
      %v4113 = vunpack.c.h.b16 %v1165
      %v4114 = vunpack.c.l.b16 %v1166
      %v4115 = vunpack.c.h.b16 %v1166
      %v4116 = vunpack.c.l.b16 %v1167
      %v4117 = vunpack.c.h.b16 %v1167
      %v4118 = vunpack.c.l.b16 %v1168
      %v4119 = vunpack.c.h.b16 %v1168
      %v4120 = vunpack.c.l.b16 %v1169
      %v4121 = vunpack.c.h.b16 %v1169
      %v4122 = vunpack.c.l.b16 %v1170
      %v4123 = vunpack.c.h.b16 %v1170
      %v4124 = vunpack.c.l.b16 %v1171
      %v4125 = vunpack.c.h.b16 %v1171
      %v4126 = vunpack.c.l.b16 %v1172
      %v4127 = vunpack.c.h.b16 %v1172
      %v4128 = vunpack.c.l.b16 %v1173
      %v4129 = vunpack.c.h.b16 %v1173
      %v4130 = vunpack.c.l.b16 %v1174
      %v4131 = vunpack.c.h.b16 %v1174
      %v4132 = vunpack.c.l.b16 %v1175
      %v4133 = vunpack.c.h.b16 %v1175
      %v4134 = vunpack.c.l.b16 %v1176
      %v4135 = vunpack.c.h.b16 %v1176
      %v4136 = vunpack.c.l.b16 %v1177
      %v4137 = vunpack.c.h.b16 %v1177
      %v4138 = vunpack.c.l.b16 %v1178
      %v4139 = vunpack.c.h.b16 %v1178
      %v4140 = vunpack.c.l.b16 %v1179
      %v4141 = vunpack.c.h.b16 %v1179
      %v4142 = vunpack.c.l.b16 %v1180
      %v4143 = vunpack.c.h.b16 %v1180
      %v4144 = vunpack.c.l.b16 %v1181
      %v4145 = vunpack.c.h.b16 %v1181
      %v4146 = vunpack.c.l.b16 %v1182
      %v4147 = vunpack.c.h.b16 %v1182
      %v4148 = vunpack.c.l.b16 %v1183
      %v4149 = vunpack.c.h.b16 %v1183
      %v4150 = vunpack.c.l.b16 %v1184
      %v4151 = vunpack.c.h.b16 %v1184
      %v4152 = vunpack.c.l.b16 %v1185
      %v4153 = vunpack.c.h.b16 %v1185
      %v4154 = vunpack.c.l.b16 %v1186
      %v4155 = vunpack.c.h.b16 %v1186
      %v4156 = vunpack.c.l.b16 %v1187
      %v4157 = vunpack.c.h.b16 %v1187
      %v4158 = vunpack.c.l.b16 %v1188
      %v4159 = vunpack.c.h.b16 %v1188
      %v4160 = vunpack.c.l.b16 %v1189
      %v4161 = vunpack.c.h.b16 %v1189
      %v4162 = vunpack.c.l.b16 %v1190
      %v4163 = vunpack.c.h.b16 %v1190
      %v4164 = vunpack.c.l.b16 %v1191
      %v4165 = vunpack.c.h.b16 %v1191
      %v4166 = vunpack.c.l.b16 %v1192
      %v4167 = vunpack.c.h.b16 %v1192
      %v4168 = vunpack.c.l.b16 %v1193
      %v4169 = vunpack.c.h.b16 %v1193
      %v4170 = vunpack.c.l.b16 %v1194
      %v4171 = vunpack.c.h.b16 %v1194
      %v4172 = vunpack.c.l.b16 %v1195
      %v4173 = vunpack.c.h.b16 %v1195
      %v4174 = vunpack.c.l.b16 %v1196
      %v4175 = vunpack.c.h.b16 %v1196
      %v4176 = vunpack.c.l.b16 %v1197
      %v4177 = vunpack.c.h.b16 %v1197
      %v4178 = vunpack.c.l.b16 %v1198
      %v4179 = vunpack.c.h.b16 %v1198
      %v4180 = vunpack.c.l.b16 %v1199
      %v4181 = vunpack.c.h.b16 %v1199
      %v4182 = vunpack.c.l.b16 %v1200
      %v4183 = vunpack.c.h.b16 %v1200
      %v4184 = vunpack.c.l.b16 %v1201
      %v4185 = vunpack.c.h.b16 %v1201
      %v4186 = vunpack.c.l.b16 %v1202
      %v4187 = vunpack.c.h.b16 %v1202
      %v4188 = vunpack.c.l.b16 %v1203
      %v4189 = vunpack.c.h.b16 %v1203
      %v4190 = vunpack.c.l.b16 %v1204
      %v4191 = vunpack.c.h.b16 %v1204
      %v4192 = vunpack.c.l.b16 %v1205
      %v4193 = vunpack.c.h.b16 %v1205
      %v4194 = vunpack.c.l.b16 %v1206
      %v4195 = vunpack.c.h.b16 %v1206
      %v4196 = vunpack.c.l.b16 %v1207
      %v4197 = vunpack.c.h.b16 %v1207
      %v4198 = vunpack.c.l.b16 %v1208
      %v4199 = vunpack.c.h.b16 %v1208
      %v4200 = vunpack.c.l.b16 %v1209
      %v4201 = vunpack.c.h.b16 %v1209
      %v4202 = vunpack.c.l.b16 %v1210
      %v4203 = vunpack.c.h.b16 %v1210
      %v4204 = vunpack.c.l.b16 %v1211
      %v4205 = vunpack.c.h.b16 %v1211
      %v4206 = vunpack.c.l.b16 %v1212
      %v4207 = vunpack.c.h.b16 %v1212
      %v4208 = vunpack.c.l.b16 %v1213
      %v4209 = vunpack.c.h.b16 %v1213
      %v4210 = vunpack.c.l.b16 %v1214
      %v4211 = vunpack.c.h.b16 %v1214
      %v4212 = vunpack.c.l.b16 %v1215
      %v4213 = vunpack.c.h.b16 %v1215
      %v4214 = vunpack.c.l.b16 %v1216
      %v4215 = vunpack.c.h.b16 %v1216
      %v4216 = vunpack.c.l.b16 %v1217
      %v4217 = vunpack.c.h.b16 %v1217
      %v4218 = vunpack.c.l.b16 %v1218
      %v4219 = vunpack.c.h.b16 %v1218
      %v4220 = vunpack.c.l.b16 %v1219
      %v4221 = vunpack.c.h.b16 %v1219
      %v4222 = vunpack.c.l.b16 %v1220
      %v4223 = vunpack.c.h.b16 %v1220
      %v4224 = vunpack.c.l.b16 %v1221
      %v4225 = vunpack.c.h.b16 %v1221
      %v4226 = vunpack.c.l.b16 %v1222
      %v4227 = vunpack.c.h.b16 %v1222
      %v4228 = vunpack.c.l.b16 %v1223
      %v4229 = vunpack.c.h.b16 %v1223
      %v4230 = vunpack.c.l.b16 %v1224
      %v4231 = vunpack.c.h.b16 %v1224
      %v4232 = vunpack.c.l.b16 %v1225
      %v4233 = vunpack.c.h.b16 %v1225
      %v4234 = vunpack.c.l.b16 %v1226
      %v4235 = vunpack.c.h.b16 %v1226
      %v4236 = vunpack.c.l.b16 %v1227
      %v4237 = vunpack.c.h.b16 %v1227
      %v4238 = vunpack.c.l.b16 %v1228
      %v4239 = vunpack.c.h.b16 %v1228
      %v4240 = vunpack.c.l.b16 %v1229
      %v4241 = vunpack.c.h.b16 %v1229
      %v4242 = vunpack.c.l.b16 %v1230
      %v4243 = vunpack.c.h.b16 %v1230
      %v4244 = vunpack.c.l.b16 %v1231
      %v4245 = vunpack.c.h.b16 %v1231
      %v4246 = vunpack.c.l.b16 %v1232
      %v4247 = vunpack.c.h.b16 %v1232
      %v4248 = vunpack.c.l.b16 %v1233
      %v4249 = vunpack.c.h.b16 %v1233
      %v4250 = vunpack.c.l.b16 %v1234
      %v4251 = vunpack.c.h.b16 %v1234
      %v4252 = vunpack.c.l.b16 %v1235
      %v4253 = vunpack.c.h.b16 %v1235
      %v4254 = vunpack.c.l.b16 %v1236
      %v4255 = vunpack.c.h.b16 %v1236
      %v4256 = vunpack.c.l.b16 %v1237
      %v4257 = vunpack.c.h.b16 %v1237
      %v4258 = vunpack.c.l.b16 %v1238
      %v4259 = vunpack.c.h.b16 %v1238
      %v4260 = vunpack.c.l.b16 %v1239
      %v4261 = vunpack.c.h.b16 %v1239
      %v4262 = vunpack.c.l.b16 %v1240
      %v4263 = vunpack.c.h.b16 %v1240
      %v4264 = vunpack.c.l.b16 %v1241
      %v4265 = vunpack.c.h.b16 %v1241
      %v4266 = vunpack.c.l.b16 %v1242
      %v4267 = vunpack.c.h.b16 %v1242
      %v4268 = vunpack.c.l.b16 %v1243
      %v4269 = vunpack.c.h.b16 %v1243
      %v4270 = vunpack.c.l.b16 %v1244
      %v4271 = vunpack.c.h.b16 %v1244
      %v4272 = vunpack.c.l.b16 %v1245
      %v4273 = vunpack.c.h.b16 %v1245
      %v4274 = vunpack.c.l.b16 %v1246
      %v4275 = vunpack.c.h.b16 %v1246
      %v4276 = vunpack.c.l.b16 %v1247
      %v4277 = vunpack.c.h.b16 %v1247
      %v4278 = vunpack.c.l.b16 %v1248
      %v4279 = vunpack.c.h.b16 %v1248
      %v4280 = vunpack.c.l.b16 %v1249
      %v4281 = vunpack.c.h.b16 %v1249
      %v4282 = vunpack.c.l.b16 %v1250
      %v4283 = vunpack.c.h.b16 %v1250
      %v4284 = vunpack.c.l.b16 %v1251
      %v4285 = vunpack.c.h.b16 %v1251
      %v4286 = vunpack.c.l.b16 %v1252
      %v4287 = vunpack.c.h.b16 %v1252
      %v4288 = vunpack.c.l.b16 %v1253
      %v4289 = vunpack.c.h.b16 %v1253
      %v4290 = vunpack.c.l.b16 %v1254
      %v4291 = vunpack.c.h.b16 %v1254
      %v4292 = vunpack.c.l.b16 %v1255
      %v4293 = vunpack.c.h.b16 %v1255
      %v4294 = vunpack.c.l.b16 %v1256
      %v4295 = vunpack.c.h.b16 %v1256
      %v4296 = vunpack.c.l.b16 %v1257
      %v4297 = vunpack.c.h.b16 %v1257
      %v4298 = vunpack.c.l.b16 %v1258
      %v4299 = vunpack.c.h.b16 %v1258
      %v4300 = vunpack.c.l.b16 %v1259
      %v4301 = vunpack.c.h.b16 %v1259
      %v4302 = vunpack.c.l.b16 %v1260
      %v4303 = vunpack.c.h.b16 %v1260
      %v4304 = vunpack.c.l.b16 %v1261
      %v4305 = vunpack.c.h.b16 %v1261
      %v4306 = vunpack.c.l.b16 %v1262
      %v4307 = vunpack.c.h.b16 %v1262
      %v4308 = vunpack.c.l.b16 %v1263
      %v4309 = vunpack.c.h.b16 %v1263
      %v4310 = vunpack.c.l.b16 %v1264
      %v4311 = vunpack.c.h.b16 %v1264
      %v4312 = vunpack.c.l.b16 %v1265
      %v4313 = vunpack.c.h.b16 %v1265
      %v4314 = vunpack.c.l.b16 %v1266
      %v4315 = vunpack.c.h.b16 %v1266
      %v4316 = vunpack.c.l.b16 %v1267
      %v4317 = vunpack.c.h.b16 %v1267
      %v4318 = vunpack.c.l.b16 %v1268
      %v4319 = vunpack.c.h.b16 %v1268
      %v4320 = vunpack.c.l.b16 %v1269
      %v4321 = vunpack.c.h.b16 %v1269
      %v4322 = vunpack.c.l.b16 %v1270
      %v4323 = vunpack.c.h.b16 %v1270
      %v4324 = vunpack.c.l.b16 %v1271
      %v4325 = vunpack.c.h.b16 %v1271
      %v4326 = vunpack.c.l.b16 %v1272
      %v4327 = vunpack.c.h.b16 %v1272
      %v4328 = vunpack.c.l.b16 %v1273
      %v4329 = vunpack.c.h.b16 %v1273
      %v4330 = vunpack.c.l.b16 %v1274
      %v4331 = vunpack.c.h.b16 %v1274
      %v4332 = vunpack.c.l.b16 %v1275
      %v4333 = vunpack.c.h.b16 %v1275
      %v4334 = vunpack.c.l.b16 %v1276
      %v4335 = vunpack.c.h.b16 %v1276
      %v4336 = vunpack.c.l.b16 %v1277
      %v4337 = vunpack.c.h.b16 %v1277
      %v4338 = vunpack.c.l.b16 %v1278
      %v4339 = vunpack.c.h.b16 %v1278
      %v4340 = vunpack.c.l.b16 %v1279
      %v4341 = vunpack.c.h.b16 %v1279
      %v4342 = vunpack.c.l.b16 %v1280
      %v4343 = vunpack.c.h.b16 %v1280
      %v4344 = vunpack.c.l.b16 %v1281
      %v4345 = vunpack.c.h.b16 %v1281
      %v4346 = vunpack.c.l.b16 %v1282
      %v4347 = vunpack.c.h.b16 %v1282
      %v4348 = vunpack.c.l.b16 %v1283
      %v4349 = vunpack.c.h.b16 %v1283
      %v4350 = vunpack.c.l.b16 %v1284
      %v4351 = vunpack.c.h.b16 %v1284
      %v4352 = vunpack.c.l.b16 %v1285
      %v4353 = vunpack.c.h.b16 %v1285
      %v4354 = vunpack.c.l.b16 %v1286
      %v4355 = vunpack.c.h.b16 %v1286
      %v4356 = vunpack.c.l.b16 %v1287
      %v4357 = vunpack.c.h.b16 %v1287
      %v4358 = vunpack.c.l.b16 %v1288
      %v4359 = vunpack.c.h.b16 %v1288
      %v4360 = vunpack.c.l.b16 %v1289
      %v4361 = vunpack.c.h.b16 %v1289
      %v4362 = vunpack.c.l.b16 %v1290
      %v4363 = vunpack.c.h.b16 %v1290
      %v4364 = vunpack.c.l.b16 %v1291
      %v4365 = vunpack.c.h.b16 %v1291
      %v4366 = vunpack.c.l.b16 %v1292
      %v4367 = vunpack.c.h.b16 %v1292
      %v4368 = vunpack.c.l.b16 %v1293
      %v4369 = vunpack.c.h.b16 %v1293
      %v4370 = vunpack.c.l.b16 %v1294
      %v4371 = vunpack.c.h.b16 %v1294
      %v4372 = vunpack.c.l.b16 %v1295
      %v4373 = vunpack.c.h.b16 %v1295
      %v4374 = vunpack.c.l.b16 %v1296
      %v4375 = vunpack.c.h.b16 %v1296
      %v4376 = vunpack.c.l.b16 %v1297
      %v4377 = vunpack.c.h.b16 %v1297
      %v4378 = vunpack.c.l.b16 %v1298
      %v4379 = vunpack.c.h.b16 %v1298
      %v4380 = vunpack.c.l.b16 %v1299
      %v4381 = vunpack.c.h.b16 %v1299
      %v4382 = vunpack.c.l.b16 %v1300
      %v4383 = vunpack.c.h.b16 %v1300
      %v4384 = vunpack.c.l.b16 %v1301
      %v4385 = vunpack.c.h.b16 %v1301
      %v4386 = vunpack.c.l.b16 %v1302
      %v4387 = vunpack.c.h.b16 %v1302
      %v4388 = vunpack.c.l.b16 %v1303
      %v4389 = vunpack.c.h.b16 %v1303
      %v4390 = vunpack.c.l.b16 %v1304
      %v4391 = vunpack.c.h.b16 %v1304
      %v4392 = vunpack.c.l.b16 %v1305
      %v4393 = vunpack.c.h.b16 %v1305
      %v4394 = vunpack.c.l.b16 %v1306
      %v4395 = vunpack.c.h.b16 %v1306
      %v4396 = vunpack.c.l.b16 %v1307
      %v4397 = vunpack.c.h.b16 %v1307
      %v4398 = vunpack.c.l.b16 %v1308
      %v4399 = vunpack.c.h.b16 %v1308
      %v4400 = vunpack.c.l.b16 %v1309
      %v4401 = vunpack.c.h.b16 %v1309
      %v4402 = vunpack.c.l.b16 %v1310
      %v4403 = vunpack.c.h.b16 %v1310
      %v4404 = vunpack.c.l.b16 %v1311
      %v4405 = vunpack.c.h.b16 %v1311
      %v4406 = vpack.c.b16 %v2362, %v2358
      %v4407 = vpack.c.b16 %v2363, %v2359
      %v4408 = vpack.c.b16 %v2364, %v2360
      %v4409 = vpack.c.b16 %v2365, %v2361
      %v4410 = vpack.c.b16 %v2370, %v2366
      %v4411 = vpack.c.b16 %v2371, %v2367
      %v4412 = vpack.c.b16 %v2372, %v2368
      %v4413 = vpack.c.b16 %v2373, %v2369
      %v4414 = vpack.c.b16 %v2378, %v2374
      %v4415 = vpack.c.b16 %v2379, %v2375
      %v4416 = vpack.c.b16 %v2380, %v2376
      %v4417 = vpack.c.b16 %v2381, %v2377
      %v4418 = vpack.c.b16 %v2386, %v2382
      %v4419 = vpack.c.b16 %v2387, %v2383
      %v4420 = vpack.c.b16 %v2388, %v2384
      %v4421 = vpack.c.b16 %v2389, %v2385
      %v4422 = vpack.c.b16 %v2394, %v2390
      %v4423 = vpack.c.b16 %v2395, %v2391
      %v4424 = vpack.c.b16 %v2396, %v2392
      %v4425 = vpack.c.b16 %v2397, %v2393
      %v4426 = vpack.c.b16 %v2402, %v2398
      %v4427 = vpack.c.b16 %v2403, %v2399
      %v4428 = vpack.c.b16 %v2404, %v2400
      %v4429 = vpack.c.b16 %v2405, %v2401
      %v4430 = vpack.c.b16 %v2410, %v2406
      %v4431 = vpack.c.b16 %v2411, %v2407
      %v4432 = vpack.c.b16 %v2412, %v2408
      %v4433 = vpack.c.b16 %v2413, %v2409
      %v4434 = vpack.c.b16 %v2418, %v2414
      %v4435 = vpack.c.b16 %v2419, %v2415
      %v4436 = vpack.c.b16 %v2420, %v2416
      %v4437 = vpack.c.b16 %v2421, %v2417
      %v4438 = vpack.c.b16 %v2426, %v2422
      %v4439 = vpack.c.b16 %v2427, %v2423
      %v4440 = vpack.c.b16 %v2428, %v2424
      %v4441 = vpack.c.b16 %v2429, %v2425
      %v4442 = vpack.c.b16 %v2434, %v2430
      %v4443 = vpack.c.b16 %v2435, %v2431
      %v4444 = vpack.c.b16 %v2436, %v2432
      %v4445 = vpack.c.b16 %v2437, %v2433
      %v4446 = vpack.c.b16 %v2442, %v2438
      %v4447 = vpack.c.b16 %v2443, %v2439
      %v4448 = vpack.c.b16 %v2444, %v2440
      %v4449 = vpack.c.b16 %v2445, %v2441
      %v4450 = vpack.c.b16 %v2450, %v2446
      %v4451 = vpack.c.b16 %v2451, %v2447
      %v4452 = vpack.c.b16 %v2452, %v2448
      %v4453 = vpack.c.b16 %v2453, %v2449
      %v4454 = vpack.c.b16 %v2458, %v2454
      %v4455 = vpack.c.b16 %v2459, %v2455
      %v4456 = vpack.c.b16 %v2460, %v2456
      %v4457 = vpack.c.b16 %v2461, %v2457
      %v4458 = vpack.c.b16 %v2466, %v2462
      %v4459 = vpack.c.b16 %v2467, %v2463
      %v4460 = vpack.c.b16 %v2468, %v2464
      %v4461 = vpack.c.b16 %v2469, %v2465
      %v4462 = vpack.c.b16 %v2474, %v2470
      %v4463 = vpack.c.b16 %v2475, %v2471
      %v4464 = vpack.c.b16 %v2476, %v2472
      %v4465 = vpack.c.b16 %v2477, %v2473
      %v4466 = vpack.c.b16 %v2482, %v2478
      %v4467 = vpack.c.b16 %v2483, %v2479
      %v4468 = vpack.c.b16 %v2484, %v2480
      %v4469 = vpack.c.b16 %v2485, %v2481
      %v4470 = vpack.c.b16 %v2490, %v2486
      %v4471 = vpack.c.b16 %v2491, %v2487
      %v4472 = vpack.c.b16 %v2492, %v2488
      %v4473 = vpack.c.b16 %v2493, %v2489
      %v4474 = vpack.c.b16 %v2498, %v2494
      %v4475 = vpack.c.b16 %v2499, %v2495
      %v4476 = vpack.c.b16 %v2500, %v2496
      %v4477 = vpack.c.b16 %v2501, %v2497
      %v4478 = vpack.c.b16 %v2506, %v2502
      %v4479 = vpack.c.b16 %v2507, %v2503
      %v4480 = vpack.c.b16 %v2508, %v2504
      %v4481 = vpack.c.b16 %v2509, %v2505
      %v4482 = vpack.c.b16 %v2514, %v2510
      %v4483 = vpack.c.b16 %v2515, %v2511
      %v4484 = vpack.c.b16 %v2516, %v2512
      %v4485 = vpack.c.b16 %v2517, %v2513
      %v4486 = vpack.c.b16 %v2522, %v2518
      %v4487 = vpack.c.b16 %v2523, %v2519
      %v4488 = vpack.c.b16 %v2524, %v2520
      %v4489 = vpack.c.b16 %v2525, %v2521
      %v4490 = vpack.c.b16 %v2530, %v2526
      %v4491 = vpack.c.b16 %v2531, %v2527
      %v4492 = vpack.c.b16 %v2532, %v2528
      %v4493 = vpack.c.b16 %v2533, %v2529
      %v4494 = vpack.c.b16 %v2538, %v2534
      %v4495 = vpack.c.b16 %v2539, %v2535
      %v4496 = vpack.c.b16 %v2540, %v2536
      %v4497 = vpack.c.b16 %v2541, %v2537
      %v4498 = vpack.c.b16 %v2546, %v2542
      %v4499 = vpack.c.b16 %v2547, %v2543
      %v4500 = vpack.c.b16 %v2548, %v2544
      %v4501 = vpack.c.b16 %v2549, %v2545
      %v4502 = vpack.c.b16 %v2554, %v2550
      %v4503 = vpack.c.b16 %v2555, %v2551
      %v4504 = vpack.c.b16 %v2556, %v2552
      %v4505 = vpack.c.b16 %v2557, %v2553
      %v4506 = vpack.c.b16 %v2562, %v2558
      %v4507 = vpack.c.b16 %v2563, %v2559
      %v4508 = vpack.c.b16 %v2564, %v2560
      %v4509 = vpack.c.b16 %v2565, %v2561
      %v4510 = vpack.c.b16 %v2570, %v2566
      %v4511 = vpack.c.b16 %v2571, %v2567
      %v4512 = vpack.c.b16 %v2572, %v2568
      %v4513 = vpack.c.b16 %v2573, %v2569
      %v4514 = vpack.c.b16 %v2578, %v2574
      %v4515 = vpack.c.b16 %v2579, %v2575
      %v4516 = vpack.c.b16 %v2580, %v2576
      %v4517 = vpack.c.b16 %v2581, %v2577
      %v4518 = vpack.c.b16 %v2586, %v2582
      %v4519 = vpack.c.b16 %v2587, %v2583
      %v4520 = vpack.c.b16 %v2588, %v2584
      %v4521 = vpack.c.b16 %v2589, %v2585
      %v4522 = vpack.c.b16 %v2594, %v2590
      %v4523 = vpack.c.b16 %v2595, %v2591
      %v4524 = vpack.c.b16 %v2596, %v2592
      %v4525 = vpack.c.b16 %v2597, %v2593
      %v4526 = vpack.c.b16 %v2602, %v2598
      %v4527 = vpack.c.b16 %v2603, %v2599
      %v4528 = vpack.c.b16 %v2604, %v2600
      %v4529 = vpack.c.b16 %v2605, %v2601
      %v4530 = vpack.c.b16 %v2610, %v2606
      %v4531 = vpack.c.b16 %v2611, %v2607
      %v4532 = vpack.c.b16 %v2612, %v2608
      %v4533 = vpack.c.b16 %v2613, %v2609
      %v4534 = vpack.c.b16 %v2618, %v2614
      %v4535 = vpack.c.b16 %v2619, %v2615
      %v4536 = vpack.c.b16 %v2620, %v2616
      %v4537 = vpack.c.b16 %v2621, %v2617
      %v4538 = vpack.c.b16 %v2626, %v2622
      %v4539 = vpack.c.b16 %v2627, %v2623
      %v4540 = vpack.c.b16 %v2628, %v2624
      %v4541 = vpack.c.b16 %v2629, %v2625
      %v4542 = vpack.c.b16 %v2634, %v2630
      %v4543 = vpack.c.b16 %v2635, %v2631
      %v4544 = vpack.c.b16 %v2636, %v2632
      %v4545 = vpack.c.b16 %v2637, %v2633
      %v4546 = vpack.c.b16 %v2642, %v2638
      %v4547 = vpack.c.b16 %v2643, %v2639
      %v4548 = vpack.c.b16 %v2644, %v2640
      %v4549 = vpack.c.b16 %v2645, %v2641
      %v4550 = vpack.c.b16 %v2650, %v2646
      %v4551 = vpack.c.b16 %v2651, %v2647
      %v4552 = vpack.c.b16 %v2652, %v2648
      %v4553 = vpack.c.b16 %v2653, %v2649
      %v4554 = vpack.c.b16 %v2658, %v2654
      %v4555 = vpack.c.b16 %v2659, %v2655
      %v4556 = vpack.c.b16 %v2660, %v2656
      %v4557 = vpack.c.b16 %v2661, %v2657
      %v4558 = vpack.c.b16 %v2666, %v2662
      %v4559 = vpack.c.b16 %v2667, %v2663
      %v4560 = vpack.c.b16 %v2668, %v2664
      %v4561 = vpack.c.b16 %v2669, %v2665
      %v4562 = vpack.c.b16 %v2674, %v2670
      %v4563 = vpack.c.b16 %v2675, %v2671
      %v4564 = vpack.c.b16 %v2676, %v2672
      %v4565 = vpack.c.b16 %v2677, %v2673
      %v4566 = vpack.c.b16 %v2682, %v2678
      %v4567 = vpack.c.b16 %v2683, %v2679
      %v4568 = vpack.c.b16 %v2684, %v2680
      %v4569 = vpack.c.b16 %v2685, %v2681
      %v4570 = vpack.c.b16 %v2690, %v2686
      %v4571 = vpack.c.b16 %v2691, %v2687
      %v4572 = vpack.c.b16 %v2692, %v2688
      %v4573 = vpack.c.b16 %v2693, %v2689
      %v4574 = vpack.c.b16 %v2698, %v2694
      %v4575 = vpack.c.b16 %v2699, %v2695
      %v4576 = vpack.c.b16 %v2700, %v2696
      %v4577 = vpack.c.b16 %v2701, %v2697
      %v4578 = vpack.c.b16 %v2706, %v2702
      %v4579 = vpack.c.b16 %v2707, %v2703
      %v4580 = vpack.c.b16 %v2708, %v2704
      %v4581 = vpack.c.b16 %v2709, %v2705
      %v4582 = vpack.c.b16 %v2714, %v2710
      %v4583 = vpack.c.b16 %v2715, %v2711
      %v4584 = vpack.c.b16 %v2716, %v2712
      %v4585 = vpack.c.b16 %v2717, %v2713
      %v4586 = vpack.c.b16 %v2722, %v2718
      %v4587 = vpack.c.b16 %v2723, %v2719
      %v4588 = vpack.c.b16 %v2724, %v2720
      %v4589 = vpack.c.b16 %v2725, %v2721
      %v4590 = vpack.c.b16 %v2730, %v2726
      %v4591 = vpack.c.b16 %v2731, %v2727
      %v4592 = vpack.c.b16 %v2732, %v2728
      %v4593 = vpack.c.b16 %v2733, %v2729
      %v4594 = vpack.c.b16 %v2738, %v2734
      %v4595 = vpack.c.b16 %v2739, %v2735
      %v4596 = vpack.c.b16 %v2740, %v2736
      %v4597 = vpack.c.b16 %v2741, %v2737
      %v4598 = vpack.c.b16 %v2746, %v2742
      %v4599 = vpack.c.b16 %v2747, %v2743
      %v4600 = vpack.c.b16 %v2748, %v2744
      %v4601 = vpack.c.b16 %v2749, %v2745
      %v4602 = vpack.c.b16 %v2754, %v2750
      %v4603 = vpack.c.b16 %v2755, %v2751
      %v4604 = vpack.c.b16 %v2756, %v2752
      %v4605 = vpack.c.b16 %v2757, %v2753
      %v4606 = vpack.c.b16 %v2762, %v2758
      %v4607 = vpack.c.b16 %v2763, %v2759
      %v4608 = vpack.c.b16 %v2764, %v2760
      %v4609 = vpack.c.b16 %v2765, %v2761
      %v4610 = vpack.c.b16 %v2770, %v2766
      %v4611 = vpack.c.b16 %v2771, %v2767
      %v4612 = vpack.c.b16 %v2772, %v2768
      %v4613 = vpack.c.b16 %v2773, %v2769
      %v4614 = vpack.c.b16 %v2778, %v2774
      %v4615 = vpack.c.b16 %v2779, %v2775
      %v4616 = vpack.c.b16 %v2780, %v2776
      %v4617 = vpack.c.b16 %v2781, %v2777
      %v4618 = vpack.c.b16 %v2786, %v2782
      %v4619 = vpack.c.b16 %v2787, %v2783
      %v4620 = vpack.c.b16 %v2788, %v2784
      %v4621 = vpack.c.b16 %v2789, %v2785
      %v4622 = vpack.c.b16 %v2794, %v2790
      %v4623 = vpack.c.b16 %v2795, %v2791
      %v4624 = vpack.c.b16 %v2796, %v2792
      %v4625 = vpack.c.b16 %v2797, %v2793
      %v4626 = vpack.c.b16 %v2802, %v2798
      %v4627 = vpack.c.b16 %v2803, %v2799
      %v4628 = vpack.c.b16 %v2804, %v2800
      %v4629 = vpack.c.b16 %v2805, %v2801
      %v4630 = vpack.c.b16 %v2810, %v2806
      %v4631 = vpack.c.b16 %v2811, %v2807
      %v4632 = vpack.c.b16 %v2812, %v2808
      %v4633 = vpack.c.b16 %v2813, %v2809
      %v4634 = vpack.c.b16 %v2818, %v2814
      %v4635 = vpack.c.b16 %v2819, %v2815
      %v4636 = vpack.c.b16 %v2820, %v2816
      %v4637 = vpack.c.b16 %v2821, %v2817
      %v4638 = vpack.c.b16 %v2826, %v2822
      %v4639 = vpack.c.b16 %v2827, %v2823
      %v4640 = vpack.c.b16 %v2828, %v2824
      %v4641 = vpack.c.b16 %v2829, %v2825
      %v4642 = vpack.c.b16 %v2834, %v2830
      %v4643 = vpack.c.b16 %v2835, %v2831
      %v4644 = vpack.c.b16 %v2836, %v2832
      %v4645 = vpack.c.b16 %v2837, %v2833
      %v4646 = vpack.c.b16 %v2842, %v2838
      %v4647 = vpack.c.b16 %v2843, %v2839
      %v4648 = vpack.c.b16 %v2844, %v2840
      %v4649 = vpack.c.b16 %v2845, %v2841
      %v4650 = vpack.c.b16 %v2850, %v2846
      %v4651 = vpack.c.b16 %v2851, %v2847
      %v4652 = vpack.c.b16 %v2852, %v2848
      %v4653 = vpack.c.b16 %v2853, %v2849
      %v4654 = vpack.c.b16 %v2858, %v2854
      %v4655 = vpack.c.b16 %v2859, %v2855
      %v4656 = vpack.c.b16 %v2860, %v2856
      %v4657 = vpack.c.b16 %v2861, %v2857
      %v4658 = vpack.c.b16 %v2866, %v2862
      %v4659 = vpack.c.b16 %v2867, %v2863
      %v4660 = vpack.c.b16 %v2868, %v2864
      %v4661 = vpack.c.b16 %v2869, %v2865
      %v4662 = vpack.c.b16 %v2874, %v2870
      %v4663 = vpack.c.b16 %v2875, %v2871
      %v4664 = vpack.c.b16 %v2876, %v2872
      %v4665 = vpack.c.b16 %v2877, %v2873
      %v4666 = vpack.c.b16 %v2882, %v2878
      %v4667 = vpack.c.b16 %v2883, %v2879
      %v4668 = vpack.c.b16 %v2884, %v2880
      %v4669 = vpack.c.b16 %v2885, %v2881
      %v4670 = vpack.c.b16 %v2890, %v2886
      %v4671 = vpack.c.b16 %v2891, %v2887
      %v4672 = vpack.c.b16 %v2892, %v2888
      %v4673 = vpack.c.b16 %v2893, %v2889
      %v4674 = vpack.c.b16 %v2898, %v2894
      %v4675 = vpack.c.b16 %v2899, %v2895
      %v4676 = vpack.c.b16 %v2900, %v2896
      %v4677 = vpack.c.b16 %v2901, %v2897
      %v4678 = vpack.c.b16 %v2906, %v2902
      %v4679 = vpack.c.b16 %v2907, %v2903
      %v4680 = vpack.c.b16 %v2908, %v2904
      %v4681 = vpack.c.b16 %v2909, %v2905
      %v4682 = vpack.c.b16 %v2914, %v2910
      %v4683 = vpack.c.b16 %v2915, %v2911
      %v4684 = vpack.c.b16 %v2916, %v2912
      %v4685 = vpack.c.b16 %v2917, %v2913
      %v4686 = vpack.c.b16 %v2922, %v2918
      %v4687 = vpack.c.b16 %v2923, %v2919
      %v4688 = vpack.c.b16 %v2924, %v2920
      %v4689 = vpack.c.b16 %v2925, %v2921
      %v4690 = vpack.c.b16 %v2930, %v2926
      %v4691 = vpack.c.b16 %v2931, %v2927
      %v4692 = vpack.c.b16 %v2932, %v2928
      %v4693 = vpack.c.b16 %v2933, %v2929
      %v4694 = vpack.c.b16 %v2938, %v2934
      %v4695 = vpack.c.b16 %v2939, %v2935
      %v4696 = vpack.c.b16 %v2940, %v2936
      %v4697 = vpack.c.b16 %v2941, %v2937
      %v4698 = vpack.c.b16 %v2946, %v2942
      %v4699 = vpack.c.b16 %v2947, %v2943
      %v4700 = vpack.c.b16 %v2948, %v2944
      %v4701 = vpack.c.b16 %v2949, %v2945
      %v4702 = vpack.c.b16 %v2954, %v2950
      %v4703 = vpack.c.b16 %v2955, %v2951
      %v4704 = vpack.c.b16 %v2956, %v2952
      %v4705 = vpack.c.b16 %v2957, %v2953
      %v4706 = vpack.c.b16 %v2962, %v2958
      %v4707 = vpack.c.b16 %v2963, %v2959
      %v4708 = vpack.c.b16 %v2964, %v2960
      %v4709 = vpack.c.b16 %v2965, %v2961
      %v4710 = vpack.c.b16 %v2970, %v2966
      %v4711 = vpack.c.b16 %v2971, %v2967
      %v4712 = vpack.c.b16 %v2972, %v2968
      %v4713 = vpack.c.b16 %v2973, %v2969
      %v4714 = vpack.c.b16 %v2978, %v2974
      %v4715 = vpack.c.b16 %v2979, %v2975
      %v4716 = vpack.c.b16 %v2980, %v2976
      %v4717 = vpack.c.b16 %v2981, %v2977
      %v4718 = vpack.c.b16 %v2986, %v2982
      %v4719 = vpack.c.b16 %v2987, %v2983
      %v4720 = vpack.c.b16 %v2988, %v2984
      %v4721 = vpack.c.b16 %v2989, %v2985
      %v4722 = vpack.c.b16 %v2994, %v2990
      %v4723 = vpack.c.b16 %v2995, %v2991
      %v4724 = vpack.c.b16 %v2996, %v2992
      %v4725 = vpack.c.b16 %v2997, %v2993
      %v4726 = vpack.c.b16 %v3002, %v2998
      %v4727 = vpack.c.b16 %v3003, %v2999
      %v4728 = vpack.c.b16 %v3004, %v3000
      %v4729 = vpack.c.b16 %v3005, %v3001
      %v4730 = vpack.c.b16 %v3010, %v3006
      %v4731 = vpack.c.b16 %v3011, %v3007
      %v4732 = vpack.c.b16 %v3012, %v3008
      %v4733 = vpack.c.b16 %v3013, %v3009
      %v4734 = vpack.c.b16 %v3018, %v3014
      %v4735 = vpack.c.b16 %v3019, %v3015
      %v4736 = vpack.c.b16 %v3020, %v3016
      %v4737 = vpack.c.b16 %v3021, %v3017
      %v4738 = vpack.c.b16 %v3026, %v3022
      %v4739 = vpack.c.b16 %v3027, %v3023
      %v4740 = vpack.c.b16 %v3028, %v3024
      %v4741 = vpack.c.b16 %v3029, %v3025
      %v4742 = vpack.c.b16 %v3034, %v3030
      %v4743 = vpack.c.b16 %v3035, %v3031
      %v4744 = vpack.c.b16 %v3036, %v3032
      %v4745 = vpack.c.b16 %v3037, %v3033
      %v4746 = vpack.c.b16 %v3042, %v3038
      %v4747 = vpack.c.b16 %v3043, %v3039
      %v4748 = vpack.c.b16 %v3044, %v3040
      %v4749 = vpack.c.b16 %v3045, %v3041
      %v4750 = vpack.c.b16 %v3050, %v3046
      %v4751 = vpack.c.b16 %v3051, %v3047
      %v4752 = vpack.c.b16 %v3052, %v3048
      %v4753 = vpack.c.b16 %v3053, %v3049
      %v4754 = vpack.c.b16 %v3058, %v3054
      %v4755 = vpack.c.b16 %v3059, %v3055
      %v4756 = vpack.c.b16 %v3060, %v3056
      %v4757 = vpack.c.b16 %v3061, %v3057
      %v4758 = vpack.c.b16 %v3066, %v3062
      %v4759 = vpack.c.b16 %v3067, %v3063
      %v4760 = vpack.c.b16 %v3068, %v3064
      %v4761 = vpack.c.b16 %v3069, %v3065
      %v4762 = vpack.c.b16 %v3074, %v3070
      %v4763 = vpack.c.b16 %v3075, %v3071
      %v4764 = vpack.c.b16 %v3076, %v3072
      %v4765 = vpack.c.b16 %v3077, %v3073
      %v4766 = vpack.c.b16 %v3082, %v3078
      %v4767 = vpack.c.b16 %v3083, %v3079
      %v4768 = vpack.c.b16 %v3084, %v3080
      %v4769 = vpack.c.b16 %v3085, %v3081
      %v4770 = vpack.c.b16 %v3090, %v3086
      %v4771 = vpack.c.b16 %v3091, %v3087
      %v4772 = vpack.c.b16 %v3092, %v3088
      %v4773 = vpack.c.b16 %v3093, %v3089
      %v4774 = vpack.c.b16 %v3098, %v3094
      %v4775 = vpack.c.b16 %v3099, %v3095
      %v4776 = vpack.c.b16 %v3100, %v3096
      %v4777 = vpack.c.b16 %v3101, %v3097
      %v4778 = vpack.c.b16 %v3106, %v3102
      %v4779 = vpack.c.b16 %v3107, %v3103
      %v4780 = vpack.c.b16 %v3108, %v3104
      %v4781 = vpack.c.b16 %v3109, %v3105
      %v4782 = vpack.c.b16 %v3114, %v3110
      %v4783 = vpack.c.b16 %v3115, %v3111
      %v4784 = vpack.c.b16 %v3116, %v3112
      %v4785 = vpack.c.b16 %v3117, %v3113
      %v4786 = vpack.c.b16 %v3122, %v3118
      %v4787 = vpack.c.b16 %v3123, %v3119
      %v4788 = vpack.c.b16 %v3124, %v3120
      %v4789 = vpack.c.b16 %v3125, %v3121
      %v4790 = vpack.c.b16 %v3130, %v3126
      %v4791 = vpack.c.b16 %v3131, %v3127
      %v4792 = vpack.c.b16 %v3132, %v3128
      %v4793 = vpack.c.b16 %v3133, %v3129
      %v4794 = vpack.c.b16 %v3138, %v3134
      %v4795 = vpack.c.b16 %v3139, %v3135
      %v4796 = vpack.c.b16 %v3140, %v3136
      %v4797 = vpack.c.b16 %v3141, %v3137
      %v4798 = vpack.c.b16 %v3146, %v3142
      %v4799 = vpack.c.b16 %v3147, %v3143
      %v4800 = vpack.c.b16 %v3148, %v3144
      %v4801 = vpack.c.b16 %v3149, %v3145
      %v4802 = vpack.c.b16 %v3154, %v3150
      %v4803 = vpack.c.b16 %v3155, %v3151
      %v4804 = vpack.c.b16 %v3156, %v3152
      %v4805 = vpack.c.b16 %v3157, %v3153
      %v4806 = vpack.c.b16 %v3162, %v3158
      %v4807 = vpack.c.b16 %v3163, %v3159
      %v4808 = vpack.c.b16 %v3164, %v3160
      %v4809 = vpack.c.b16 %v3165, %v3161
      %v4810 = vpack.c.b16 %v3170, %v3166
      %v4811 = vpack.c.b16 %v3171, %v3167
      %v4812 = vpack.c.b16 %v3172, %v3168
      %v4813 = vpack.c.b16 %v3173, %v3169
      %v4814 = vpack.c.b16 %v3178, %v3174
      %v4815 = vpack.c.b16 %v3179, %v3175
      %v4816 = vpack.c.b16 %v3180, %v3176
      %v4817 = vpack.c.b16 %v3181, %v3177
      %v4818 = vpack.c.b16 %v3186, %v3182
      %v4819 = vpack.c.b16 %v3187, %v3183
      %v4820 = vpack.c.b16 %v3188, %v3184
      %v4821 = vpack.c.b16 %v3189, %v3185
      %v4822 = vpack.c.b16 %v3194, %v3190
      %v4823 = vpack.c.b16 %v3195, %v3191
      %v4824 = vpack.c.b16 %v3196, %v3192
      %v4825 = vpack.c.b16 %v3197, %v3193
      %v4826 = vpack.c.b16 %v3202, %v3198
      %v4827 = vpack.c.b16 %v3203, %v3199
      %v4828 = vpack.c.b16 %v3204, %v3200
      %v4829 = vpack.c.b16 %v3205, %v3201
      %v4830 = vpack.c.b16 %v3210, %v3206
      %v4831 = vpack.c.b16 %v3211, %v3207
      %v4832 = vpack.c.b16 %v3212, %v3208
      %v4833 = vpack.c.b16 %v3213, %v3209
      %v4834 = vpack.c.b16 %v3218, %v3214
      %v4835 = vpack.c.b16 %v3219, %v3215
      %v4836 = vpack.c.b16 %v3220, %v3216
      %v4837 = vpack.c.b16 %v3221, %v3217
      %v4838 = vpack.c.b16 %v3226, %v3222
      %v4839 = vpack.c.b16 %v3227, %v3223
      %v4840 = vpack.c.b16 %v3228, %v3224
      %v4841 = vpack.c.b16 %v3229, %v3225
      %v4842 = vpack.c.b16 %v3234, %v3230
      %v4843 = vpack.c.b16 %v3235, %v3231
      %v4844 = vpack.c.b16 %v3236, %v3232
      %v4845 = vpack.c.b16 %v3237, %v3233
      %v4846 = vpack.c.b16 %v3242, %v3238
      %v4847 = vpack.c.b16 %v3243, %v3239
      %v4848 = vpack.c.b16 %v3244, %v3240
      %v4849 = vpack.c.b16 %v3245, %v3241
      %v4850 = vpack.c.b16 %v3250, %v3246
      %v4851 = vpack.c.b16 %v3251, %v3247
      %v4852 = vpack.c.b16 %v3252, %v3248
      %v4853 = vpack.c.b16 %v3253, %v3249
      %v4854 = vpack.c.b16 %v3258, %v3254
      %v4855 = vpack.c.b16 %v3259, %v3255
      %v4856 = vpack.c.b16 %v3260, %v3256
      %v4857 = vpack.c.b16 %v3261, %v3257
      %v4858 = vpack.c.b16 %v3266, %v3262
      %v4859 = vpack.c.b16 %v3267, %v3263
      %v4860 = vpack.c.b16 %v3268, %v3264
      %v4861 = vpack.c.b16 %v3269, %v3265
      %v4862 = vpack.c.b16 %v3274, %v3270
      %v4863 = vpack.c.b16 %v3275, %v3271
      %v4864 = vpack.c.b16 %v3276, %v3272
      %v4865 = vpack.c.b16 %v3277, %v3273
      %v4866 = vpack.c.b16 %v3282, %v3278
      %v4867 = vpack.c.b16 %v3283, %v3279
      %v4868 = vpack.c.b16 %v3284, %v3280
      %v4869 = vpack.c.b16 %v3285, %v3281
      %v4870 = vpack.c.b16 %v3290, %v3286
      %v4871 = vpack.c.b16 %v3291, %v3287
      %v4872 = vpack.c.b16 %v3292, %v3288
      %v4873 = vpack.c.b16 %v3293, %v3289
      %v4874 = vpack.c.b16 %v3298, %v3294
      %v4875 = vpack.c.b16 %v3299, %v3295
      %v4876 = vpack.c.b16 %v3300, %v3296
      %v4877 = vpack.c.b16 %v3301, %v3297
      %v4878 = vpack.c.b16 %v3306, %v3302
      %v4879 = vpack.c.b16 %v3307, %v3303
      %v4880 = vpack.c.b16 %v3308, %v3304
      %v4881 = vpack.c.b16 %v3309, %v3305
      %v4882 = vpack.c.b16 %v3314, %v3310
      %v4883 = vpack.c.b16 %v3315, %v3311
      %v4884 = vpack.c.b16 %v3316, %v3312
      %v4885 = vpack.c.b16 %v3317, %v3313
      %v4886 = vpack.c.b16 %v3322, %v3318
      %v4887 = vpack.c.b16 %v3323, %v3319
      %v4888 = vpack.c.b16 %v3324, %v3320
      %v4889 = vpack.c.b16 %v3325, %v3321
      %v4890 = vpack.c.b16 %v3330, %v3326
      %v4891 = vpack.c.b16 %v3331, %v3327
      %v4892 = vpack.c.b16 %v3332, %v3328
      %v4893 = vpack.c.b16 %v3333, %v3329
      %v4894 = vpack.c.b16 %v3338, %v3334
      %v4895 = vpack.c.b16 %v3339, %v3335
      %v4896 = vpack.c.b16 %v3340, %v3336
      %v4897 = vpack.c.b16 %v3341, %v3337
      %v4898 = vpack.c.b16 %v3346, %v3342
      %v4899 = vpack.c.b16 %v3347, %v3343
      %v4900 = vpack.c.b16 %v3348, %v3344
      %v4901 = vpack.c.b16 %v3349, %v3345
      %v4902 = vpack.c.b16 %v3354, %v3350
      %v4903 = vpack.c.b16 %v3355, %v3351
      %v4904 = vpack.c.b16 %v3356, %v3352
      %v4905 = vpack.c.b16 %v3357, %v3353
      %v4906 = vpack.c.b16 %v3362, %v3358
      %v4907 = vpack.c.b16 %v3363, %v3359
      %v4908 = vpack.c.b16 %v3364, %v3360
      %v4909 = vpack.c.b16 %v3365, %v3361
      %v4910 = vpack.c.b16 %v3370, %v3366
      %v4911 = vpack.c.b16 %v3371, %v3367
      %v4912 = vpack.c.b16 %v3372, %v3368
      %v4913 = vpack.c.b16 %v3373, %v3369
      %v4914 = vpack.c.b16 %v3378, %v3374
      %v4915 = vpack.c.b16 %v3379, %v3375
      %v4916 = vpack.c.b16 %v3380, %v3376
      %v4917 = vpack.c.b16 %v3381, %v3377
      %v4918 = vpack.c.b16 %v3386, %v3382
      %v4919 = vpack.c.b16 %v3387, %v3383
      %v4920 = vpack.c.b16 %v3388, %v3384
      %v4921 = vpack.c.b16 %v3389, %v3385
      %v4922 = vpack.c.b16 %v3394, %v3390
      %v4923 = vpack.c.b16 %v3395, %v3391
      %v4924 = vpack.c.b16 %v3396, %v3392
      %v4925 = vpack.c.b16 %v3397, %v3393
      %v4926 = vpack.c.b16 %v3402, %v3398
      %v4927 = vpack.c.b16 %v3403, %v3399
      %v4928 = vpack.c.b16 %v3404, %v3400
      %v4929 = vpack.c.b16 %v3405, %v3401
      %v4930 = vpack.c.b16 %v3410, %v3406
      %v4931 = vpack.c.b16 %v3411, %v3407
      %v4932 = vpack.c.b16 %v3412, %v3408
      %v4933 = vpack.c.b16 %v3413, %v3409
      %v4934 = vpack.c.b16 %v3418, %v3414
      %v4935 = vpack.c.b16 %v3419, %v3415
      %v4936 = vpack.c.b16 %v3420, %v3416
      %v4937 = vpack.c.b16 %v3421, %v3417
      %v4938 = vpack.c.b16 %v3426, %v3422
      %v4939 = vpack.c.b16 %v3427, %v3423
      %v4940 = vpack.c.b16 %v3428, %v3424
      %v4941 = vpack.c.b16 %v3429, %v3425
      %v4942 = vpack.c.b16 %v3434, %v3430
      %v4943 = vpack.c.b16 %v3435, %v3431
      %v4944 = vpack.c.b16 %v3436, %v3432
      %v4945 = vpack.c.b16 %v3437, %v3433
      %v4946 = vpack.c.b16 %v3442, %v3438
      %v4947 = vpack.c.b16 %v3443, %v3439
      %v4948 = vpack.c.b16 %v3444, %v3440
      %v4949 = vpack.c.b16 %v3445, %v3441
      %v4950 = vpack.c.b16 %v3450, %v3446
      %v4951 = vpack.c.b16 %v3451, %v3447
      %v4952 = vpack.c.b16 %v3452, %v3448
      %v4953 = vpack.c.b16 %v3453, %v3449
      %v4954 = vpack.c.b16 %v3458, %v3454
      %v4955 = vpack.c.b16 %v3459, %v3455
      %v4956 = vpack.c.b16 %v3460, %v3456
      %v4957 = vpack.c.b16 %v3461, %v3457
      %v4958 = vpack.c.b16 %v3466, %v3462
      %v4959 = vpack.c.b16 %v3467, %v3463
      %v4960 = vpack.c.b16 %v3468, %v3464
      %v4961 = vpack.c.b16 %v3469, %v3465
      %v4962 = vpack.c.b16 %v3474, %v3470
      %v4963 = vpack.c.b16 %v3475, %v3471
      %v4964 = vpack.c.b16 %v3476, %v3472
      %v4965 = vpack.c.b16 %v3477, %v3473
      %v4966 = vpack.c.b16 %v3482, %v3478
      %v4967 = vpack.c.b16 %v3483, %v3479
      %v4968 = vpack.c.b16 %v3484, %v3480
      %v4969 = vpack.c.b16 %v3485, %v3481
      %v4970 = vpack.c.b16 %v3490, %v3486
      %v4971 = vpack.c.b16 %v3491, %v3487
      %v4972 = vpack.c.b16 %v3492, %v3488
      %v4973 = vpack.c.b16 %v3493, %v3489
      %v4974 = vpack.c.b16 %v3498, %v3494
      %v4975 = vpack.c.b16 %v3499, %v3495
      %v4976 = vpack.c.b16 %v3500, %v3496
      %v4977 = vpack.c.b16 %v3501, %v3497
      %v4978 = vpack.c.b16 %v3506, %v3502
      %v4979 = vpack.c.b16 %v3507, %v3503
      %v4980 = vpack.c.b16 %v3508, %v3504
      %v4981 = vpack.c.b16 %v3509, %v3505
      %v4982 = vpack.c.b16 %v3514, %v3510
      %v4983 = vpack.c.b16 %v3515, %v3511
      %v4984 = vpack.c.b16 %v3516, %v3512
      %v4985 = vpack.c.b16 %v3517, %v3513
      %v4986 = vpack.c.b16 %v3522, %v3518
      %v4987 = vpack.c.b16 %v3523, %v3519
      %v4988 = vpack.c.b16 %v3524, %v3520
      %v4989 = vpack.c.b16 %v3525, %v3521
      %v4990 = vpack.c.b16 %v3530, %v3526
      %v4991 = vpack.c.b16 %v3531, %v3527
      %v4992 = vpack.c.b16 %v3532, %v3528
      %v4993 = vpack.c.b16 %v3533, %v3529
      %v4994 = vpack.c.b16 %v3538, %v3534
      %v4995 = vpack.c.b16 %v3539, %v3535
      %v4996 = vpack.c.b16 %v3540, %v3536
      %v4997 = vpack.c.b16 %v3541, %v3537
      %v4998 = vpack.c.b16 %v3546, %v3542
      %v4999 = vpack.c.b16 %v3547, %v3543
      %v5000 = vpack.c.b16 %v3548, %v3544
      %v5001 = vpack.c.b16 %v3549, %v3545
      %v5002 = vpack.c.b16 %v3554, %v3550
      %v5003 = vpack.c.b16 %v3555, %v3551
      %v5004 = vpack.c.b16 %v3556, %v3552
      %v5005 = vpack.c.b16 %v3557, %v3553
      %v5006 = vpack.c.b16 %v3562, %v3558
      %v5007 = vpack.c.b16 %v3563, %v3559
      %v5008 = vpack.c.b16 %v3564, %v3560
      %v5009 = vpack.c.b16 %v3565, %v3561
      %v5010 = vpack.c.b16 %v3570, %v3566
      %v5011 = vpack.c.b16 %v3571, %v3567
      %v5012 = vpack.c.b16 %v3572, %v3568
      %v5013 = vpack.c.b16 %v3573, %v3569
      %v5014 = vpack.c.b16 %v3578, %v3574
      %v5015 = vpack.c.b16 %v3579, %v3575
      %v5016 = vpack.c.b16 %v3580, %v3576
      %v5017 = vpack.c.b16 %v3581, %v3577
      %v5018 = vpack.c.b16 %v3586, %v3582
      %v5019 = vpack.c.b16 %v3587, %v3583
      %v5020 = vpack.c.b16 %v3588, %v3584
      %v5021 = vpack.c.b16 %v3589, %v3585
      %v5022 = vpack.c.b16 %v3594, %v3590
      %v5023 = vpack.c.b16 %v3595, %v3591
      %v5024 = vpack.c.b16 %v3596, %v3592
      %v5025 = vpack.c.b16 %v3597, %v3593
      %v5026 = vpack.c.b16 %v3602, %v3598
      %v5027 = vpack.c.b16 %v3603, %v3599
      %v5028 = vpack.c.b16 %v3604, %v3600
      %v5029 = vpack.c.b16 %v3605, %v3601
      %v5030 = vpack.c.b16 %v3610, %v3606
      %v5031 = vpack.c.b16 %v3611, %v3607
      %v5032 = vpack.c.b16 %v3612, %v3608
      %v5033 = vpack.c.b16 %v3613, %v3609
      %v5034 = vpack.c.b16 %v3618, %v3614
      %v5035 = vpack.c.b16 %v3619, %v3615
      %v5036 = vpack.c.b16 %v3620, %v3616
      %v5037 = vpack.c.b16 %v3621, %v3617
      %v5038 = vpack.c.b16 %v3626, %v3622
      %v5039 = vpack.c.b16 %v3627, %v3623
      %v5040 = vpack.c.b16 %v3628, %v3624
      %v5041 = vpack.c.b16 %v3629, %v3625
      %v5042 = vpack.c.b16 %v3634, %v3630
      %v5043 = vpack.c.b16 %v3635, %v3631
      %v5044 = vpack.c.b16 %v3636, %v3632
      %v5045 = vpack.c.b16 %v3637, %v3633
      %v5046 = vpack.c.b16 %v3642, %v3638
      %v5047 = vpack.c.b16 %v3643, %v3639
      %v5048 = vpack.c.b16 %v3644, %v3640
      %v5049 = vpack.c.b16 %v3645, %v3641
      %v5050 = vpack.c.b16 %v3650, %v3646
      %v5051 = vpack.c.b16 %v3651, %v3647
      %v5052 = vpack.c.b16 %v3652, %v3648
      %v5053 = vpack.c.b16 %v3653, %v3649
      %v5054 = vpack.c.b16 %v3658, %v3654
      %v5055 = vpack.c.b16 %v3659, %v3655
      %v5056 = vpack.c.b16 %v3660, %v3656
      %v5057 = vpack.c.b16 %v3661, %v3657
      %v5058 = vpack.c.b16 %v3666, %v3662
      %v5059 = vpack.c.b16 %v3667, %v3663
      %v5060 = vpack.c.b16 %v3668, %v3664
      %v5061 = vpack.c.b16 %v3669, %v3665
      %v5062 = vpack.c.b16 %v3674, %v3670
      %v5063 = vpack.c.b16 %v3675, %v3671
      %v5064 = vpack.c.b16 %v3676, %v3672
      %v5065 = vpack.c.b16 %v3677, %v3673
      %v5066 = vpack.c.b16 %v3682, %v3678
      %v5067 = vpack.c.b16 %v3683, %v3679
      %v5068 = vpack.c.b16 %v3684, %v3680
      %v5069 = vpack.c.b16 %v3685, %v3681
      %v5070 = vpack.c.b16 %v3690, %v3686
      %v5071 = vpack.c.b16 %v3691, %v3687
      %v5072 = vpack.c.b16 %v3692, %v3688
      %v5073 = vpack.c.b16 %v3693, %v3689
      %v5074 = vpack.c.b16 %v3698, %v3694
      %v5075 = vpack.c.b16 %v3699, %v3695
      %v5076 = vpack.c.b16 %v3700, %v3696
      %v5077 = vpack.c.b16 %v3701, %v3697
      %v5078 = vpack.c.b16 %v3706, %v3702
      %v5079 = vpack.c.b16 %v3707, %v3703
      %v5080 = vpack.c.b16 %v3708, %v3704
      %v5081 = vpack.c.b16 %v3709, %v3705
      %v5082 = vpack.c.b16 %v3714, %v3710
      %v5083 = vpack.c.b16 %v3715, %v3711
      %v5084 = vpack.c.b16 %v3716, %v3712
      %v5085 = vpack.c.b16 %v3717, %v3713
      %v5086 = vpack.c.b16 %v3722, %v3718
      %v5087 = vpack.c.b16 %v3723, %v3719
      %v5088 = vpack.c.b16 %v3724, %v3720
      %v5089 = vpack.c.b16 %v3725, %v3721
      %v5090 = vpack.c.b16 %v3730, %v3726
      %v5091 = vpack.c.b16 %v3731, %v3727
      %v5092 = vpack.c.b16 %v3732, %v3728
      %v5093 = vpack.c.b16 %v3733, %v3729
      %v5094 = vpack.c.b16 %v3738, %v3734
      %v5095 = vpack.c.b16 %v3739, %v3735
      %v5096 = vpack.c.b16 %v3740, %v3736
      %v5097 = vpack.c.b16 %v3741, %v3737
      %v5098 = vpack.c.b16 %v3746, %v3742
      %v5099 = vpack.c.b16 %v3747, %v3743
      %v5100 = vpack.c.b16 %v3748, %v3744
      %v5101 = vpack.c.b16 %v3749, %v3745
      %v5102 = vpack.c.b16 %v3754, %v3750
      %v5103 = vpack.c.b16 %v3755, %v3751
      %v5104 = vpack.c.b16 %v3756, %v3752
      %v5105 = vpack.c.b16 %v3757, %v3753
      %v5106 = vpack.c.b16 %v3762, %v3758
      %v5107 = vpack.c.b16 %v3763, %v3759
      %v5108 = vpack.c.b16 %v3764, %v3760
      %v5109 = vpack.c.b16 %v3765, %v3761
      %v5110 = vpack.c.b16 %v3770, %v3766
      %v5111 = vpack.c.b16 %v3771, %v3767
      %v5112 = vpack.c.b16 %v3772, %v3768
      %v5113 = vpack.c.b16 %v3773, %v3769
      %v5114 = vpack.c.b16 %v3778, %v3774
      %v5115 = vpack.c.b16 %v3779, %v3775
      %v5116 = vpack.c.b16 %v3780, %v3776
      %v5117 = vpack.c.b16 %v3781, %v3777
      %v5118 = vpack.c.b16 %v3786, %v3782
      %v5119 = vpack.c.b16 %v3787, %v3783
      %v5120 = vpack.c.b16 %v3788, %v3784
      %v5121 = vpack.c.b16 %v3789, %v3785
      %v5122 = vpack.c.b16 %v3794, %v3790
      %v5123 = vpack.c.b16 %v3795, %v3791
      %v5124 = vpack.c.b16 %v3796, %v3792
      %v5125 = vpack.c.b16 %v3797, %v3793
      %v5126 = vpack.c.b16 %v3802, %v3798
      %v5127 = vpack.c.b16 %v3803, %v3799
      %v5128 = vpack.c.b16 %v3804, %v3800
      %v5129 = vpack.c.b16 %v3805, %v3801
      %v5130 = vpack.c.b16 %v3810, %v3806
      %v5131 = vpack.c.b16 %v3811, %v3807
      %v5132 = vpack.c.b16 %v3812, %v3808
      %v5133 = vpack.c.b16 %v3813, %v3809
      %v5134 = vpack.c.b16 %v3818, %v3814
      %v5135 = vpack.c.b16 %v3819, %v3815
      %v5136 = vpack.c.b16 %v3820, %v3816
      %v5137 = vpack.c.b16 %v3821, %v3817
      %v5138 = vpack.c.b16 %v3826, %v3822
      %v5139 = vpack.c.b16 %v3827, %v3823
      %v5140 = vpack.c.b16 %v3828, %v3824
      %v5141 = vpack.c.b16 %v3829, %v3825
      %v5142 = vpack.c.b16 %v3834, %v3830
      %v5143 = vpack.c.b16 %v3835, %v3831
      %v5144 = vpack.c.b16 %v3836, %v3832
      %v5145 = vpack.c.b16 %v3837, %v3833
      %v5146 = vpack.c.b16 %v3842, %v3838
      %v5147 = vpack.c.b16 %v3843, %v3839
      %v5148 = vpack.c.b16 %v3844, %v3840
      %v5149 = vpack.c.b16 %v3845, %v3841
      %v5150 = vpack.c.b16 %v3850, %v3846
      %v5151 = vpack.c.b16 %v3851, %v3847
      %v5152 = vpack.c.b16 %v3852, %v3848
      %v5153 = vpack.c.b16 %v3853, %v3849
      %v5154 = vpack.c.b16 %v3858, %v3854
      %v5155 = vpack.c.b16 %v3859, %v3855
      %v5156 = vpack.c.b16 %v3860, %v3856
      %v5157 = vpack.c.b16 %v3861, %v3857
      %v5158 = vpack.c.b16 %v3866, %v3862
      %v5159 = vpack.c.b16 %v3867, %v3863
      %v5160 = vpack.c.b16 %v3868, %v3864
      %v5161 = vpack.c.b16 %v3869, %v3865
      %v5162 = vpack.c.b16 %v3874, %v3870
      %v5163 = vpack.c.b16 %v3875, %v3871
      %v5164 = vpack.c.b16 %v3876, %v3872
      %v5165 = vpack.c.b16 %v3877, %v3873
      %v5166 = vpack.c.b16 %v3882, %v3878
      %v5167 = vpack.c.b16 %v3883, %v3879
      %v5168 = vpack.c.b16 %v3884, %v3880
      %v5169 = vpack.c.b16 %v3885, %v3881
      %v5170 = vpack.c.b16 %v3890, %v3886
      %v5171 = vpack.c.b16 %v3891, %v3887
      %v5172 = vpack.c.b16 %v3892, %v3888
      %v5173 = vpack.c.b16 %v3893, %v3889
      %v5174 = vpack.c.b16 %v3898, %v3894
      %v5175 = vpack.c.b16 %v3899, %v3895
      %v5176 = vpack.c.b16 %v3900, %v3896
      %v5177 = vpack.c.b16 %v3901, %v3897
      %v5178 = vpack.c.b16 %v3906, %v3902
      %v5179 = vpack.c.b16 %v3907, %v3903
      %v5180 = vpack.c.b16 %v3908, %v3904
      %v5181 = vpack.c.b16 %v3909, %v3905
      %v5182 = vpack.c.b16 %v3914, %v3910
      %v5183 = vpack.c.b16 %v3915, %v3911
      %v5184 = vpack.c.b16 %v3916, %v3912
      %v5185 = vpack.c.b16 %v3917, %v3913
      %v5186 = vpack.c.b16 %v3922, %v3918
      %v5187 = vpack.c.b16 %v3923, %v3919
      %v5188 = vpack.c.b16 %v3924, %v3920
      %v5189 = vpack.c.b16 %v3925, %v3921
      %v5190 = vpack.c.b16 %v3930, %v3926
      %v5191 = vpack.c.b16 %v3931, %v3927
      %v5192 = vpack.c.b16 %v3932, %v3928
      %v5193 = vpack.c.b16 %v3933, %v3929
      %v5194 = vpack.c.b16 %v3938, %v3934
      %v5195 = vpack.c.b16 %v3939, %v3935
      %v5196 = vpack.c.b16 %v3940, %v3936
      %v5197 = vpack.c.b16 %v3941, %v3937
      %v5198 = vpack.c.b16 %v3946, %v3942
      %v5199 = vpack.c.b16 %v3947, %v3943
      %v5200 = vpack.c.b16 %v3948, %v3944
      %v5201 = vpack.c.b16 %v3949, %v3945
      %v5202 = vpack.c.b16 %v3954, %v3950
      %v5203 = vpack.c.b16 %v3955, %v3951
      %v5204 = vpack.c.b16 %v3956, %v3952
      %v5205 = vpack.c.b16 %v3957, %v3953
      %v5206 = vpack.c.b16 %v3962, %v3958
      %v5207 = vpack.c.b16 %v3963, %v3959
      %v5208 = vpack.c.b16 %v3964, %v3960
      %v5209 = vpack.c.b16 %v3965, %v3961
      %v5210 = vpack.c.b16 %v3970, %v3966
      %v5211 = vpack.c.b16 %v3971, %v3967
      %v5212 = vpack.c.b16 %v3972, %v3968
      %v5213 = vpack.c.b16 %v3973, %v3969
      %v5214 = vpack.c.b16 %v3978, %v3974
      %v5215 = vpack.c.b16 %v3979, %v3975
      %v5216 = vpack.c.b16 %v3980, %v3976
      %v5217 = vpack.c.b16 %v3981, %v3977
      %v5218 = vpack.c.b16 %v3986, %v3982
      %v5219 = vpack.c.b16 %v3987, %v3983
      %v5220 = vpack.c.b16 %v3988, %v3984
      %v5221 = vpack.c.b16 %v3989, %v3985
      %v5222 = vpack.c.b16 %v3994, %v3990
      %v5223 = vpack.c.b16 %v3995, %v3991
      %v5224 = vpack.c.b16 %v3996, %v3992
      %v5225 = vpack.c.b16 %v3997, %v3993
      %v5226 = vpack.c.b16 %v4002, %v3998
      %v5227 = vpack.c.b16 %v4003, %v3999
      %v5228 = vpack.c.b16 %v4004, %v4000
      %v5229 = vpack.c.b16 %v4005, %v4001
      %v5230 = vpack.c.b16 %v4010, %v4006
      %v5231 = vpack.c.b16 %v4011, %v4007
      %v5232 = vpack.c.b16 %v4012, %v4008
      %v5233 = vpack.c.b16 %v4013, %v4009
      %v5234 = vpack.c.b16 %v4018, %v4014
      %v5235 = vpack.c.b16 %v4019, %v4015
      %v5236 = vpack.c.b16 %v4020, %v4016
      %v5237 = vpack.c.b16 %v4021, %v4017
      %v5238 = vpack.c.b16 %v4026, %v4022
      %v5239 = vpack.c.b16 %v4027, %v4023
      %v5240 = vpack.c.b16 %v4028, %v4024
      %v5241 = vpack.c.b16 %v4029, %v4025
      %v5242 = vpack.c.b16 %v4034, %v4030
      %v5243 = vpack.c.b16 %v4035, %v4031
      %v5244 = vpack.c.b16 %v4036, %v4032
      %v5245 = vpack.c.b16 %v4037, %v4033
      %v5246 = vpack.c.b16 %v4042, %v4038
      %v5247 = vpack.c.b16 %v4043, %v4039
      %v5248 = vpack.c.b16 %v4044, %v4040
      %v5249 = vpack.c.b16 %v4045, %v4041
      %v5250 = vpack.c.b16 %v4050, %v4046
      %v5251 = vpack.c.b16 %v4051, %v4047
      %v5252 = vpack.c.b16 %v4052, %v4048
      %v5253 = vpack.c.b16 %v4053, %v4049
      %v5254 = vpack.c.b16 %v4058, %v4054
      %v5255 = vpack.c.b16 %v4059, %v4055
      %v5256 = vpack.c.b16 %v4060, %v4056
      %v5257 = vpack.c.b16 %v4061, %v4057
      %v5258 = vpack.c.b16 %v4066, %v4062
      %v5259 = vpack.c.b16 %v4067, %v4063
      %v5260 = vpack.c.b16 %v4068, %v4064
      %v5261 = vpack.c.b16 %v4069, %v4065
      %v5262 = vpack.c.b16 %v4074, %v4070
      %v5263 = vpack.c.b16 %v4075, %v4071
      %v5264 = vpack.c.b16 %v4076, %v4072
      %v5265 = vpack.c.b16 %v4077, %v4073
      %v5266 = vpack.c.b16 %v4082, %v4078
      %v5267 = vpack.c.b16 %v4083, %v4079
      %v5268 = vpack.c.b16 %v4084, %v4080
      %v5269 = vpack.c.b16 %v4085, %v4081
      %v5270 = vpack.c.b16 %v4090, %v4086
      %v5271 = vpack.c.b16 %v4091, %v4087
      %v5272 = vpack.c.b16 %v4092, %v4088
      %v5273 = vpack.c.b16 %v4093, %v4089
      %v5274 = vpack.c.b16 %v4098, %v4094
      %v5275 = vpack.c.b16 %v4099, %v4095
      %v5276 = vpack.c.b16 %v4100, %v4096
      %v5277 = vpack.c.b16 %v4101, %v4097
      %v5278 = vpack.c.b16 %v4106, %v4102
      %v5279 = vpack.c.b16 %v4107, %v4103
      %v5280 = vpack.c.b16 %v4108, %v4104
      %v5281 = vpack.c.b16 %v4109, %v4105
      %v5282 = vpack.c.b16 %v4114, %v4110
      %v5283 = vpack.c.b16 %v4115, %v4111
      %v5284 = vpack.c.b16 %v4116, %v4112
      %v5285 = vpack.c.b16 %v4117, %v4113
      %v5286 = vpack.c.b16 %v4122, %v4118
      %v5287 = vpack.c.b16 %v4123, %v4119
      %v5288 = vpack.c.b16 %v4124, %v4120
      %v5289 = vpack.c.b16 %v4125, %v4121
      %v5290 = vpack.c.b16 %v4130, %v4126
      %v5291 = vpack.c.b16 %v4131, %v4127
      %v5292 = vpack.c.b16 %v4132, %v4128
      %v5293 = vpack.c.b16 %v4133, %v4129
      %v5294 = vpack.c.b16 %v4138, %v4134
      %v5295 = vpack.c.b16 %v4139, %v4135
      %v5296 = vpack.c.b16 %v4140, %v4136
      %v5297 = vpack.c.b16 %v4141, %v4137
      %v5298 = vpack.c.b16 %v4146, %v4142
      %v5299 = vpack.c.b16 %v4147, %v4143
      %v5300 = vpack.c.b16 %v4148, %v4144
      %v5301 = vpack.c.b16 %v4149, %v4145
      %v5302 = vpack.c.b16 %v4154, %v4150
      %v5303 = vpack.c.b16 %v4155, %v4151
      %v5304 = vpack.c.b16 %v4156, %v4152
      %v5305 = vpack.c.b16 %v4157, %v4153
      %v5306 = vpack.c.b16 %v4162, %v4158
      %v5307 = vpack.c.b16 %v4163, %v4159
      %v5308 = vpack.c.b16 %v4164, %v4160
      %v5309 = vpack.c.b16 %v4165, %v4161
      %v5310 = vpack.c.b16 %v4170, %v4166
      %v5311 = vpack.c.b16 %v4171, %v4167
      %v5312 = vpack.c.b16 %v4172, %v4168
      %v5313 = vpack.c.b16 %v4173, %v4169
      %v5314 = vpack.c.b16 %v4178, %v4174
      %v5315 = vpack.c.b16 %v4179, %v4175
      %v5316 = vpack.c.b16 %v4180, %v4176
      %v5317 = vpack.c.b16 %v4181, %v4177
      %v5318 = vpack.c.b16 %v4186, %v4182
      %v5319 = vpack.c.b16 %v4187, %v4183
      %v5320 = vpack.c.b16 %v4188, %v4184
      %v5321 = vpack.c.b16 %v4189, %v4185
      %v5322 = vpack.c.b16 %v4194, %v4190
      %v5323 = vpack.c.b16 %v4195, %v4191
      %v5324 = vpack.c.b16 %v4196, %v4192
      %v5325 = vpack.c.b16 %v4197, %v4193
      %v5326 = vpack.c.b16 %v4202, %v4198
      %v5327 = vpack.c.b16 %v4203, %v4199
      %v5328 = vpack.c.b16 %v4204, %v4200
      %v5329 = vpack.c.b16 %v4205, %v4201
      %v5330 = vpack.c.b16 %v4210, %v4206
      %v5331 = vpack.c.b16 %v4211, %v4207
      %v5332 = vpack.c.b16 %v4212, %v4208
      %v5333 = vpack.c.b16 %v4213, %v4209
      %v5334 = vpack.c.b16 %v4218, %v4214
      %v5335 = vpack.c.b16 %v4219, %v4215
      %v5336 = vpack.c.b16 %v4220, %v4216
      %v5337 = vpack.c.b16 %v4221, %v4217
      %v5338 = vpack.c.b16 %v4226, %v4222
      %v5339 = vpack.c.b16 %v4227, %v4223
      %v5340 = vpack.c.b16 %v4228, %v4224
      %v5341 = vpack.c.b16 %v4229, %v4225
      %v5342 = vpack.c.b16 %v4234, %v4230
      %v5343 = vpack.c.b16 %v4235, %v4231
      %v5344 = vpack.c.b16 %v4236, %v4232
      %v5345 = vpack.c.b16 %v4237, %v4233
      %v5346 = vpack.c.b16 %v4242, %v4238
      %v5347 = vpack.c.b16 %v4243, %v4239
      %v5348 = vpack.c.b16 %v4244, %v4240
      %v5349 = vpack.c.b16 %v4245, %v4241
      %v5350 = vpack.c.b16 %v4250, %v4246
      %v5351 = vpack.c.b16 %v4251, %v4247
      %v5352 = vpack.c.b16 %v4252, %v4248
      %v5353 = vpack.c.b16 %v4253, %v4249
      %v5354 = vpack.c.b16 %v4258, %v4254
      %v5355 = vpack.c.b16 %v4259, %v4255
      %v5356 = vpack.c.b16 %v4260, %v4256
      %v5357 = vpack.c.b16 %v4261, %v4257
      %v5358 = vpack.c.b16 %v4266, %v4262
      %v5359 = vpack.c.b16 %v4267, %v4263
      %v5360 = vpack.c.b16 %v4268, %v4264
      %v5361 = vpack.c.b16 %v4269, %v4265
      %v5362 = vpack.c.b16 %v4274, %v4270
      %v5363 = vpack.c.b16 %v4275, %v4271
      %v5364 = vpack.c.b16 %v4276, %v4272
      %v5365 = vpack.c.b16 %v4277, %v4273
      %v5366 = vpack.c.b16 %v4282, %v4278
      %v5367 = vpack.c.b16 %v4283, %v4279
      %v5368 = vpack.c.b16 %v4284, %v4280
      %v5369 = vpack.c.b16 %v4285, %v4281
      %v5370 = vpack.c.b16 %v4290, %v4286
      %v5371 = vpack.c.b16 %v4291, %v4287
      %v5372 = vpack.c.b16 %v4292, %v4288
      %v5373 = vpack.c.b16 %v4293, %v4289
      %v5374 = vpack.c.b16 %v4298, %v4294
      %v5375 = vpack.c.b16 %v4299, %v4295
      %v5376 = vpack.c.b16 %v4300, %v4296
      %v5377 = vpack.c.b16 %v4301, %v4297
      %v5378 = vpack.c.b16 %v4306, %v4302
      %v5379 = vpack.c.b16 %v4307, %v4303
      %v5380 = vpack.c.b16 %v4308, %v4304
      %v5381 = vpack.c.b16 %v4309, %v4305
      %v5382 = vpack.c.b16 %v4314, %v4310
      %v5383 = vpack.c.b16 %v4315, %v4311
      %v5384 = vpack.c.b16 %v4316, %v4312
      %v5385 = vpack.c.b16 %v4317, %v4313
      %v5386 = vpack.c.b16 %v4322, %v4318
      %v5387 = vpack.c.b16 %v4323, %v4319
      %v5388 = vpack.c.b16 %v4324, %v4320
      %v5389 = vpack.c.b16 %v4325, %v4321
      %v5390 = vpack.c.b16 %v4330, %v4326
      %v5391 = vpack.c.b16 %v4331, %v4327
      %v5392 = vpack.c.b16 %v4332, %v4328
      %v5393 = vpack.c.b16 %v4333, %v4329
      %v5394 = vpack.c.b16 %v4338, %v4334
      %v5395 = vpack.c.b16 %v4339, %v4335
      %v5396 = vpack.c.b16 %v4340, %v4336
      %v5397 = vpack.c.b16 %v4341, %v4337
      %v5398 = vpack.c.b16 %v4346, %v4342
      %v5399 = vpack.c.b16 %v4347, %v4343
      %v5400 = vpack.c.b16 %v4348, %v4344
      %v5401 = vpack.c.b16 %v4349, %v4345
      %v5402 = vpack.c.b16 %v4354, %v4350
      %v5403 = vpack.c.b16 %v4355, %v4351
      %v5404 = vpack.c.b16 %v4356, %v4352
      %v5405 = vpack.c.b16 %v4357, %v4353
      %v5406 = vpack.c.b16 %v4362, %v4358
      %v5407 = vpack.c.b16 %v4363, %v4359
      %v5408 = vpack.c.b16 %v4364, %v4360
      %v5409 = vpack.c.b16 %v4365, %v4361
      %v5410 = vpack.c.b16 %v4370, %v4366
      %v5411 = vpack.c.b16 %v4371, %v4367
      %v5412 = vpack.c.b16 %v4372, %v4368
      %v5413 = vpack.c.b16 %v4373, %v4369
      %v5414 = vpack.c.b16 %v4378, %v4374
      %v5415 = vpack.c.b16 %v4379, %v4375
      %v5416 = vpack.c.b16 %v4380, %v4376
      %v5417 = vpack.c.b16 %v4381, %v4377
      %v5418 = vpack.c.b16 %v4386, %v4382
      %v5419 = vpack.c.b16 %v4387, %v4383
      %v5420 = vpack.c.b16 %v4388, %v4384
      %v5421 = vpack.c.b16 %v4389, %v4385
      %v5422 = vpack.c.b16 %v4394, %v4390
      %v5423 = vpack.c.b16 %v4395, %v4391
      %v5424 = vpack.c.b16 %v4396, %v4392
      %v5425 = vpack.c.b16 %v4397, %v4393
      %v5426 = vpack.c.b16 %v4402, %v4398
      %v5427 = vpack.c.b16 %v4403, %v4399
      %v5428 = vpack.c.b16 %v4404, %v4400
      %v5429 = vpack.c.b16 %v4405, %v4401
      %6454 = vmatprep.subr.bf16.mxu0 %v4407
      %6455 = vmatpush1.bf16.msra.mxu0 %v4406
      %6456 = vmatprep.subr.bf16.mxu0 %v4411
      %6457 = vmatpush1.bf16.msra.mxu0 %v4410
      %6458 = vmatprep.subr.bf16.mxu0 %v4415
      %6459 = vmatpush1.bf16.msra.mxu0 %v4414
      %6460 = vmatprep.subr.bf16.mxu0 %v4419
      %6461 = vmatpush1.bf16.msra.mxu0 %v4418
      %6462 = vmatprep.subr.bf16.mxu0 %v4423
      %6463 = vmatpush1.bf16.msra.mxu0 %v4422
      %6464 = vmatprep.subr.bf16.mxu0 %v4427
      %6465 = vmatpush1.bf16.msra.mxu0 %v4426
      %6466 = vmatprep.subr.bf16.mxu0 %v4431
      %6467 = vmatpush1.bf16.msra.mxu0 %v4430
      %6468 = vmatprep.subr.bf16.mxu0 %v4435
      %6469 = vmatpush1.bf16.msra.mxu0 %v4434
      %6470 = vmatprep.subr.bf16.mxu0 %v4439
      %6471 = vmatpush1.bf16.msra.mxu0 %v4438
      %6472 = vmatprep.subr.bf16.mxu0 %v4443
      %6473 = vmatpush1.bf16.msra.mxu0 %v4442
      %6474 = vmatprep.subr.bf16.mxu0 %v4447
      %6475 = vmatpush1.bf16.msra.mxu0 %v4446
      %6476 = vmatprep.subr.bf16.mxu0 %v4451
      %6477 = vmatpush1.bf16.msra.mxu0 %v4450
      %6478 = vmatprep.subr.bf16.mxu0 %v4455
      %6479 = vmatpush1.bf16.msra.mxu0 %v4454
      %6480 = vmatprep.subr.bf16.mxu0 %v4459
      %6481 = vmatpush1.bf16.msra.mxu0 %v4458
      %6482 = vmatprep.subr.bf16.mxu0 %v4463
      %6483 = vmatpush1.bf16.msra.mxu0 %v4462
      %6484 = vmatprep.subr.bf16.mxu0 %v4467
      %6485 = vmatpush1.bf16.msra.mxu0 %v4466
      %6486 = vmatprep.mubr.bf16.mxu0 %v257
      %6487 = vmatmul.mubr.bf16.gmra.mrb[0].mxu0 %v256
      %v6488 = vpop.f32.mrb[0].mxu0
      %v6489 = vadd.f32 %v1317, %v6488
      %v6490 = vpop.f32.mrb[0].mxu0
      %v6491 = vadd.f32 %v1321, %v6490
      %v6492 = vpop.f32.mrb[0].mxu0
      %v6493 = vpop.f32.mrb[0].mxu0
      %6494 = vdwg.mxu0
      %6495 = vmatprep.subr.bf16.mxu0 %v4471
      %6496 = vmatpush1.bf16.msra.mxu0 %v4470
      %6497 = vmatprep.subr.bf16.mxu0 %v4475
      %6498 = vmatpush1.bf16.msra.mxu0 %v4474
      %6499 = vmatprep.subr.bf16.mxu0 %v4479
      %6500 = vmatpush1.bf16.msra.mxu0 %v4478
      %6501 = vmatprep.subr.bf16.mxu0 %v4483
      %6502 = vmatpush1.bf16.msra.mxu0 %v4482
      %6503 = vmatprep.subr.bf16.mxu0 %v4487
      %6504 = vmatpush1.bf16.msra.mxu0 %v4486
      %6505 = vmatprep.subr.bf16.mxu0 %v4491
      %6506 = vmatpush1.bf16.msra.mxu0 %v4490
      %6507 = vmatprep.subr.bf16.mxu0 %v4495
      %6508 = vmatpush1.bf16.msra.mxu0 %v4494
      %6509 = vmatprep.subr.bf16.mxu0 %v4499
      %6510 = vmatpush1.bf16.msra.mxu0 %v4498
      %6511 = vmatprep.subr.bf16.mxu0 %v4503
      %6512 = vmatpush1.bf16.msra.mxu0 %v4502
      %6513 = vmatprep.subr.bf16.mxu0 %v4507
      %6514 = vmatpush1.bf16.msra.mxu0 %v4506
      %6515 = vmatprep.subr.bf16.mxu0 %v4511
      %6516 = vmatpush1.bf16.msra.mxu0 %v4510
      %6517 = vmatprep.subr.bf16.mxu0 %v4515
      %6518 = vmatpush1.bf16.msra.mxu0 %v4514
      %6519 = vmatprep.subr.bf16.mxu0 %v4519
      %6520 = vmatpush1.bf16.msra.mxu0 %v4518
      %6521 = vmatprep.subr.bf16.mxu0 %v4523
      %6522 = vmatpush1.bf16.msra.mxu0 %v4522
      %6523 = vmatprep.subr.bf16.mxu0 %v4527
      %6524 = vmatpush1.bf16.msra.mxu0 %v4526
      %6525 = vmatprep.subr.bf16.mxu0 %v4531
      %6526 = vmatpush1.bf16.msra.mxu0 %v4530
      %6527 = vmatprep.mubr.bf16.mxu0 %v259
      %6528 = vmatmul.mubr.bf16.gmra.mrb[0].mxu0 %v258
      %v6529 = vpop.f32.mrb[0].mxu0
      %v6530 = vadd.f32 %v6489, %v6529
      %v6531 = vpop.f32.mrb[0].mxu0
      %v6532 = vadd.f32 %v6491, %v6531
      %v6533 = vpop.f32.mrb[0].mxu0
      %v6534 = vpop.f32.mrb[0].mxu0
      %6535 = vdwg.mxu0
      %6536 = vmatprep.subr.bf16.mxu0 %v4535
      %6537 = vmatpush1.bf16.msra.mxu0 %v4534
      %6538 = vmatprep.subr.bf16.mxu0 %v4539
      %6539 = vmatpush1.bf16.msra.mxu0 %v4538
      %6540 = vmatprep.subr.bf16.mxu0 %v4543
      %6541 = vmatpush1.bf16.msra.mxu0 %v4542
      %6542 = vmatprep.subr.bf16.mxu0 %v4547
      %6543 = vmatpush1.bf16.msra.mxu0 %v4546
      %6544 = vmatprep.subr.bf16.mxu0 %v4551
      %6545 = vmatpush1.bf16.msra.mxu0 %v4550
      %6546 = vmatprep.subr.bf16.mxu0 %v4555
      %6547 = vmatpush1.bf16.msra.mxu0 %v4554
      %6548 = vmatprep.subr.bf16.mxu0 %v4559
      %6549 = vmatpush1.bf16.msra.mxu0 %v4558
      %6550 = vmatprep.subr.bf16.mxu0 %v4563
      %6551 = vmatpush1.bf16.msra.mxu0 %v4562
      %6552 = vmatprep.subr.bf16.mxu0 %v4567
      %6553 = vmatpush1.bf16.msra.mxu0 %v4566
      %6554 = vmatprep.subr.bf16.mxu0 %v4571
      %6555 = vmatpush1.bf16.msra.mxu0 %v4570
      %6556 = vmatprep.subr.bf16.mxu0 %v4575
      %6557 = vmatpush1.bf16.msra.mxu0 %v4574
      %6558 = vmatprep.subr.bf16.mxu0 %v4579
      %6559 = vmatpush1.bf16.msra.mxu0 %v4578
      %6560 = vmatprep.subr.bf16.mxu0 %v4583
      %6561 = vmatpush1.bf16.msra.mxu0 %v4582
      %6562 = vmatprep.subr.bf16.mxu0 %v4587
      %6563 = vmatpush1.bf16.msra.mxu0 %v4586
      %6564 = vmatprep.subr.bf16.mxu0 %v4591
      %6565 = vmatpush1.bf16.msra.mxu0 %v4590
      %6566 = vmatprep.subr.bf16.mxu0 %v4595
      %6567 = vmatpush1.bf16.msra.mxu0 %v4594
      %6568 = vmatprep.mubr.bf16.mxu0 %v261
      %6569 = vmatmul.mubr.bf16.gmra.mrb[0].mxu0 %v260
      %v6570 = vpop.f32.mrb[0].mxu0
      %v6571 = vadd.f32 %v6530, %v6570
      %v6572 = vpop.f32.mrb[0].mxu0
      %v6573 = vadd.f32 %v6532, %v6572
      %v6574 = vpop.f32.mrb[0].mxu0
      %v6575 = vpop.f32.mrb[0].mxu0
      %6576 = vdwg.mxu0
      %6577 = vmatprep.subr.bf16.mxu0 %v4599
      %6578 = vmatpush1.bf16.msra.mxu0 %v4598
      %6579 = vmatprep.subr.bf16.mxu0 %v4603
      %6580 = vmatpush1.bf16.msra.mxu0 %v4602
      %6581 = vmatprep.subr.bf16.mxu0 %v4607
      %6582 = vmatpush1.bf16.msra.mxu0 %v4606
      %6583 = vmatprep.subr.bf16.mxu0 %v4611
      %6584 = vmatpush1.bf16.msra.mxu0 %v4610
      %6585 = vmatprep.subr.bf16.mxu0 %v4615
      %6586 = vmatpush1.bf16.msra.mxu0 %v4614
      %6587 = vmatprep.subr.bf16.mxu0 %v4619
      %6588 = vmatpush1.bf16.msra.mxu0 %v4618
      %6589 = vmatprep.subr.bf16.mxu0 %v4623
      %6590 = vmatpush1.bf16.msra.mxu0 %v4622
      %6591 = vmatprep.subr.bf16.mxu0 %v4627
      %6592 = vmatpush1.bf16.msra.mxu0 %v4626
      %6593 = vmatprep.subr.bf16.mxu0 %v4631
      %6594 = vmatpush1.bf16.msra.mxu0 %v4630
      %6595 = vmatprep.subr.bf16.mxu0 %v4635
      %6596 = vmatpush1.bf16.msra.mxu0 %v4634
      %6597 = vmatprep.subr.bf16.mxu0 %v4639
      %6598 = vmatpush1.bf16.msra.mxu0 %v4638
      %6599 = vmatprep.subr.bf16.mxu0 %v4643
      %6600 = vmatpush1.bf16.msra.mxu0 %v4642
      %6601 = vmatprep.subr.bf16.mxu0 %v4647
      %6602 = vmatpush1.bf16.msra.mxu0 %v4646
      %6603 = vmatprep.subr.bf16.mxu0 %v4651
      %6604 = vmatpush1.bf16.msra.mxu0 %v4650
      %6605 = vmatprep.subr.bf16.mxu0 %v4655
      %6606 = vmatpush1.bf16.msra.mxu0 %v4654
      %6607 = vmatprep.subr.bf16.mxu0 %v4659
      %6608 = vmatpush1.bf16.msra.mxu0 %v4658
      %6609 = vmatprep.mubr.bf16.mxu0 %v263
      %6610 = vmatmul.mubr.bf16.gmra.mrb[0].mxu0 %v262
      %v6611 = vpop.f32.mrb[0].mxu0
      %v6612 = vadd.f32 %v6571, %v6611
      %v6613 = vpop.f32.mrb[0].mxu0
      %v6614 = vadd.f32 %v6573, %v6613
      %v6615 = vpop.f32.mrb[0].mxu0
      %v6616 = vpop.f32.mrb[0].mxu0
      %6617 = vdwg.mxu0
      %6618 = vmatprep.subr.bf16.mxu0 %v4663
      %6619 = vmatpush1.bf16.msra.mxu0 %v4662
      %6620 = vmatprep.subr.bf16.mxu0 %v4667
      %6621 = vmatpush1.bf16.msra.mxu0 %v4666
      %6622 = vmatprep.subr.bf16.mxu0 %v4671
      %6623 = vmatpush1.bf16.msra.mxu0 %v4670
      %6624 = vmatprep.subr.bf16.mxu0 %v4675
      %6625 = vmatpush1.bf16.msra.mxu0 %v4674
      %6626 = vmatprep.subr.bf16.mxu0 %v4679
      %6627 = vmatpush1.bf16.msra.mxu0 %v4678
      %6628 = vmatprep.subr.bf16.mxu0 %v4683
      %6629 = vmatpush1.bf16.msra.mxu0 %v4682
      %6630 = vmatprep.subr.bf16.mxu0 %v4687
      %6631 = vmatpush1.bf16.msra.mxu0 %v4686
      %6632 = vmatprep.subr.bf16.mxu0 %v4691
      %6633 = vmatpush1.bf16.msra.mxu0 %v4690
      %6634 = vmatprep.subr.bf16.mxu0 %v4695
      %6635 = vmatpush1.bf16.msra.mxu0 %v4694
      %6636 = vmatprep.subr.bf16.mxu0 %v4699
      %6637 = vmatpush1.bf16.msra.mxu0 %v4698
      %6638 = vmatprep.subr.bf16.mxu0 %v4703
      %6639 = vmatpush1.bf16.msra.mxu0 %v4702
      %6640 = vmatprep.subr.bf16.mxu0 %v4707
      %6641 = vmatpush1.bf16.msra.mxu0 %v4706
      %6642 = vmatprep.subr.bf16.mxu0 %v4711
      %6643 = vmatpush1.bf16.msra.mxu0 %v4710
      %6644 = vmatprep.subr.bf16.mxu0 %v4715
      %6645 = vmatpush1.bf16.msra.mxu0 %v4714
      %6646 = vmatprep.subr.bf16.mxu0 %v4719
      %6647 = vmatpush1.bf16.msra.mxu0 %v4718
      %6648 = vmatprep.subr.bf16.mxu0 %v4723
      %6649 = vmatpush1.bf16.msra.mxu0 %v4722
      %6650 = vmatprep.mubr.bf16.mxu0 %v265
      %6651 = vmatmul.mubr.bf16.gmra.mrb[0].mxu0 %v264
      %v6652 = vpop.f32.mrb[0].mxu0
      %v6653 = vadd.f32 %v6612, %v6652
      %v6654 = vpop.f32.mrb[0].mxu0
      %v6655 = vadd.f32 %v6614, %v6654
      %v6656 = vpop.f32.mrb[0].mxu0
      %v6657 = vpop.f32.mrb[0].mxu0
      %6658 = vdwg.mxu0
      %6659 = vmatprep.subr.bf16.mxu0 %v4727
      %6660 = vmatpush1.bf16.msra.mxu0 %v4726
      %6661 = vmatprep.subr.bf16.mxu0 %v4731
      %6662 = vmatpush1.bf16.msra.mxu0 %v4730
      %6663 = vmatprep.subr.bf16.mxu0 %v4735
      %6664 = vmatpush1.bf16.msra.mxu0 %v4734
      %6665 = vmatprep.subr.bf16.mxu0 %v4739
      %6666 = vmatpush1.bf16.msra.mxu0 %v4738
      %6667 = vmatprep.subr.bf16.mxu0 %v4743
      %6668 = vmatpush1.bf16.msra.mxu0 %v4742
      %6669 = vmatprep.subr.bf16.mxu0 %v4747
      %6670 = vmatpush1.bf16.msra.mxu0 %v4746
      %6671 = vmatprep.subr.bf16.mxu0 %v4751
      %6672 = vmatpush1.bf16.msra.mxu0 %v4750
      %6673 = vmatprep.subr.bf16.mxu0 %v4755
      %6674 = vmatpush1.bf16.msra.mxu0 %v4754
      %6675 = vmatprep.subr.bf16.mxu0 %v4759
      %6676 = vmatpush1.bf16.msra.mxu0 %v4758
      %6677 = vmatprep.subr.bf16.mxu0 %v4763
      %6678 = vmatpush1.bf16.msra.mxu0 %v4762
      %6679 = vmatprep.subr.bf16.mxu0 %v4767
      %6680 = vmatpush1.bf16.msra.mxu0 %v4766
      %6681 = vmatprep.subr.bf16.mxu0 %v4771
      %6682 = vmatpush1.bf16.msra.mxu0 %v4770
      %6683 = vmatprep.subr.bf16.mxu0 %v4775
      %6684 = vmatpush1.bf16.msra.mxu0 %v4774
      %6685 = vmatprep.subr.bf16.mxu0 %v4779
      %6686 = vmatpush1.bf16.msra.mxu0 %v4778
      %6687 = vmatprep.subr.bf16.mxu0 %v4783
      %6688 = vmatpush1.bf16.msra.mxu0 %v4782
      %6689 = vmatprep.subr.bf16.mxu0 %v4787
      %6690 = vmatpush1.bf16.msra.mxu0 %v4786
      %6691 = vmatprep.mubr.bf16.mxu0 %v267
      %6692 = vmatmul.mubr.bf16.gmra.mrb[0].mxu0 %v266
      %v6693 = vpop.f32.mrb[0].mxu0
      %v6694 = vadd.f32 %v6653, %v6693
      %v6695 = vpop.f32.mrb[0].mxu0
      %v6696 = vadd.f32 %v6655, %v6695
      %v6697 = vpop.f32.mrb[0].mxu0
      %v6698 = vpop.f32.mrb[0].mxu0
      %6699 = vdwg.mxu0
      %6700 = vmatprep.subr.bf16.mxu0 %v4791
      %6701 = vmatpush1.bf16.msra.mxu0 %v4790
      %6702 = vmatprep.subr.bf16.mxu0 %v4795
      %6703 = vmatpush1.bf16.msra.mxu0 %v4794
      %6704 = vmatprep.subr.bf16.mxu0 %v4799
      %6705 = vmatpush1.bf16.msra.mxu0 %v4798
      %6706 = vmatprep.subr.bf16.mxu0 %v4803
      %6707 = vmatpush1.bf16.msra.mxu0 %v4802
      %6708 = vmatprep.subr.bf16.mxu0 %v4807
      %6709 = vmatpush1.bf16.msra.mxu0 %v4806
      %6710 = vmatprep.subr.bf16.mxu0 %v4811
      %6711 = vmatpush1.bf16.msra.mxu0 %v4810
      %6712 = vmatprep.subr.bf16.mxu0 %v4815
      %6713 = vmatpush1.bf16.msra.mxu0 %v4814
      %6714 = vmatprep.subr.bf16.mxu0 %v4819
      %6715 = vmatpush1.bf16.msra.mxu0 %v4818
      %6716 = vmatprep.subr.bf16.mxu0 %v4823
      %6717 = vmatpush1.bf16.msra.mxu0 %v4822
      %6718 = vmatprep.subr.bf16.mxu0 %v4827
      %6719 = vmatpush1.bf16.msra.mxu0 %v4826
      %6720 = vmatprep.subr.bf16.mxu0 %v4831
      %6721 = vmatpush1.bf16.msra.mxu0 %v4830
      %6722 = vmatprep.subr.bf16.mxu0 %v4835
      %6723 = vmatpush1.bf16.msra.mxu0 %v4834
      %6724 = vmatprep.subr.bf16.mxu0 %v4839
      %6725 = vmatpush1.bf16.msra.mxu0 %v4838
      %6726 = vmatprep.subr.bf16.mxu0 %v4843
      %6727 = vmatpush1.bf16.msra.mxu0 %v4842
      %6728 = vmatprep.subr.bf16.mxu0 %v4847
      %6729 = vmatpush1.bf16.msra.mxu0 %v4846
      %6730 = vmatprep.subr.bf16.mxu0 %v4851
      %6731 = vmatpush1.bf16.msra.mxu0 %v4850
      %6732 = vmatprep.mubr.bf16.mxu0 %v269
      %6733 = vmatmul.mubr.bf16.gmra.mrb[0].mxu0 %v268
      %v6734 = vpop.f32.mrb[0].mxu0
      %v6735 = vadd.f32 %v6694, %v6734
      %v6736 = vpop.f32.mrb[0].mxu0
      %v6737 = vadd.f32 %v6696, %v6736
      %v6738 = vpop.f32.mrb[0].mxu0
      %v6739 = vpop.f32.mrb[0].mxu0
      %6740 = vdwg.mxu0
      %6741 = vmatprep.subr.bf16.mxu0 %v4855
      %6742 = vmatpush1.bf16.msra.mxu0 %v4854
      %6743 = vmatprep.subr.bf16.mxu0 %v4859
      %6744 = vmatpush1.bf16.msra.mxu0 %v4858
      %6745 = vmatprep.subr.bf16.mxu0 %v4863
      %6746 = vmatpush1.bf16.msra.mxu0 %v4862
      %6747 = vmatprep.subr.bf16.mxu0 %v4867
      %6748 = vmatpush1.bf16.msra.mxu0 %v4866
      %6749 = vmatprep.subr.bf16.mxu0 %v4871
      %6750 = vmatpush1.bf16.msra.mxu0 %v4870
      %6751 = vmatprep.subr.bf16.mxu0 %v4875
      %6752 = vmatpush1.bf16.msra.mxu0 %v4874
      %6753 = vmatprep.subr.bf16.mxu0 %v4879
      %6754 = vmatpush1.bf16.msra.mxu0 %v4878
      %6755 = vmatprep.subr.bf16.mxu0 %v4883
      %6756 = vmatpush1.bf16.msra.mxu0 %v4882
      %6757 = vmatprep.subr.bf16.mxu0 %v4887
      %6758 = vmatpush1.bf16.msra.mxu0 %v4886
      %6759 = vmatprep.subr.bf16.mxu0 %v4891
      %6760 = vmatpush1.bf16.msra.mxu0 %v4890
      %6761 = vmatprep.subr.bf16.mxu0 %v4895
      %6762 = vmatpush1.bf16.msra.mxu0 %v4894
      %6763 = vmatprep.subr.bf16.mxu0 %v4899
      %6764 = vmatpush1.bf16.msra.mxu0 %v4898
      %6765 = vmatprep.subr.bf16.mxu0 %v4903
      %6766 = vmatpush1.bf16.msra.mxu0 %v4902
      %6767 = vmatprep.subr.bf16.mxu0 %v4907
      %6768 = vmatpush1.bf16.msra.mxu0 %v4906
      %6769 = vmatprep.subr.bf16.mxu0 %v4911
      %6770 = vmatpush1.bf16.msra.mxu0 %v4910
      %6771 = vmatprep.subr.bf16.mxu0 %v4915
      %6772 = vmatpush1.bf16.msra.mxu0 %v4914
      %6773 = vmatprep.mubr.bf16.mxu0 %v271
      %6774 = vmatmul.mubr.bf16.gmra.mrb[0].mxu0 %v270
      %v6775 = vpop.f32.mrb[0].mxu0
      %v6776 = vadd.f32 %v6735, %v6775
      %v6777 = vpop.f32.mrb[0].mxu0
      %v6778 = vadd.f32 %v6737, %v6777
      %v6779 = vpop.f32.mrb[0].mxu0
      %v6780 = vpop.f32.mrb[0].mxu0
      %6781 = vdwg.mxu0
      %6782 = vmatprep.subr.bf16.mxu0 %v4919
      %6783 = vmatpush1.bf16.msra.mxu0 %v4918
      %6784 = vmatprep.subr.bf16.mxu0 %v4923
      %6785 = vmatpush1.bf16.msra.mxu0 %v4922
      %6786 = vmatprep.subr.bf16.mxu0 %v4927
      %6787 = vmatpush1.bf16.msra.mxu0 %v4926
      %6788 = vmatprep.subr.bf16.mxu0 %v4931
      %6789 = vmatpush1.bf16.msra.mxu0 %v4930
      %6790 = vmatprep.subr.bf16.mxu0 %v4935
      %6791 = vmatpush1.bf16.msra.mxu0 %v4934
      %6792 = vmatprep.subr.bf16.mxu0 %v4939
      %6793 = vmatpush1.bf16.msra.mxu0 %v4938
      %6794 = vmatprep.subr.bf16.mxu0 %v4943
      %6795 = vmatpush1.bf16.msra.mxu0 %v4942
      %6796 = vmatprep.subr.bf16.mxu0 %v4947
      %6797 = vmatpush1.bf16.msra.mxu0 %v4946
      %6798 = vmatprep.subr.bf16.mxu0 %v4951
      %6799 = vmatpush1.bf16.msra.mxu0 %v4950
      %6800 = vmatprep.subr.bf16.mxu0 %v4955
      %6801 = vmatpush1.bf16.msra.mxu0 %v4954
      %6802 = vmatprep.subr.bf16.mxu0 %v4959
      %6803 = vmatpush1.bf16.msra.mxu0 %v4958
      %6804 = vmatprep.subr.bf16.mxu0 %v4963
      %6805 = vmatpush1.bf16.msra.mxu0 %v4962
      %6806 = vmatprep.subr.bf16.mxu0 %v4967
      %6807 = vmatpush1.bf16.msra.mxu0 %v4966
      %6808 = vmatprep.subr.bf16.mxu0 %v4971
      %6809 = vmatpush1.bf16.msra.mxu0 %v4970
      %6810 = vmatprep.subr.bf16.mxu0 %v4975
      %6811 = vmatpush1.bf16.msra.mxu0 %v4974
      %6812 = vmatprep.subr.bf16.mxu0 %v4979
      %6813 = vmatpush1.bf16.msra.mxu0 %v4978
      %6814 = vmatprep.mubr.bf16.mxu0 %v273
      %6815 = vmatmul.mubr.bf16.gmra.mrb[0].mxu0 %v272
      %v6816 = vpop.f32.mrb[0].mxu0
      %v6817 = vadd.f32 %v6776, %v6816
      %v6818 = vpop.f32.mrb[0].mxu0
      %v6819 = vadd.f32 %v6778, %v6818
      %v6820 = vpop.f32.mrb[0].mxu0
      %v6821 = vpop.f32.mrb[0].mxu0
      %6822 = vdwg.mxu0
      %6823 = vmatprep.subr.bf16.mxu0 %v4983
      %6824 = vmatpush1.bf16.msra.mxu0 %v4982
      %6825 = vmatprep.subr.bf16.mxu0 %v4987
      %6826 = vmatpush1.bf16.msra.mxu0 %v4986
      %6827 = vmatprep.subr.bf16.mxu0 %v4991
      %6828 = vmatpush1.bf16.msra.mxu0 %v4990
      %6829 = vmatprep.subr.bf16.mxu0 %v4995
      %6830 = vmatpush1.bf16.msra.mxu0 %v4994
      %6831 = vmatprep.subr.bf16.mxu0 %v4999
      %6832 = vmatpush1.bf16.msra.mxu0 %v4998
      %6833 = vmatprep.subr.bf16.mxu0 %v5003
      %6834 = vmatpush1.bf16.msra.mxu0 %v5002
      %6835 = vmatprep.subr.bf16.mxu0 %v5007
      %6836 = vmatpush1.bf16.msra.mxu0 %v5006
      %6837 = vmatprep.subr.bf16.mxu0 %v5011
      %6838 = vmatpush1.bf16.msra.mxu0 %v5010
      %6839 = vmatprep.subr.bf16.mxu0 %v5015
      %6840 = vmatpush1.bf16.msra.mxu0 %v5014
      %6841 = vmatprep.subr.bf16.mxu0 %v5019
      %6842 = vmatpush1.bf16.msra.mxu0 %v5018
      %6843 = vmatprep.subr.bf16.mxu0 %v5023
      %6844 = vmatpush1.bf16.msra.mxu0 %v5022
      %6845 = vmatprep.subr.bf16.mxu0 %v5027
      %6846 = vmatpush1.bf16.msra.mxu0 %v5026
      %6847 = vmatprep.subr.bf16.mxu0 %v5031
      %6848 = vmatpush1.bf16.msra.mxu0 %v5030
      %6849 = vmatprep.subr.bf16.mxu0 %v5035
      %6850 = vmatpush1.bf16.msra.mxu0 %v5034
      %6851 = vmatprep.subr.bf16.mxu0 %v5039
      %6852 = vmatpush1.bf16.msra.mxu0 %v5038
      %6853 = vmatprep.subr.bf16.mxu0 %v5043
      %6854 = vmatpush1.bf16.msra.mxu0 %v5042
      %6855 = vmatprep.mubr.bf16.mxu0 %v275
      %6856 = vmatmul.mubr.bf16.gmra.mrb[0].mxu0 %v274
      %v6857 = vpop.f32.mrb[0].mxu0
      %v6858 = vadd.f32 %v6817, %v6857
      %v6859 = vpop.f32.mrb[0].mxu0
      %v6860 = vadd.f32 %v6819, %v6859
      %v6861 = vpop.f32.mrb[0].mxu0
      %v6862 = vpop.f32.mrb[0].mxu0
      %6863 = vdwg.mxu0
      %6864 = vmatprep.subr.bf16.mxu0 %v5047
      %6865 = vmatpush1.bf16.msra.mxu0 %v5046
      %6866 = vmatprep.subr.bf16.mxu0 %v5051
      %6867 = vmatpush1.bf16.msra.mxu0 %v5050
      %6868 = vmatprep.subr.bf16.mxu0 %v5055
      %6869 = vmatpush1.bf16.msra.mxu0 %v5054
      %6870 = vmatprep.subr.bf16.mxu0 %v5059
      %6871 = vmatpush1.bf16.msra.mxu0 %v5058
      %6872 = vmatprep.subr.bf16.mxu0 %v5063
      %6873 = vmatpush1.bf16.msra.mxu0 %v5062
      %6874 = vmatprep.subr.bf16.mxu0 %v5067
      %6875 = vmatpush1.bf16.msra.mxu0 %v5066
      %6876 = vmatprep.subr.bf16.mxu0 %v5071
      %6877 = vmatpush1.bf16.msra.mxu0 %v5070
      %6878 = vmatprep.subr.bf16.mxu0 %v5075
      %6879 = vmatpush1.bf16.msra.mxu0 %v5074
      %6880 = vmatprep.subr.bf16.mxu0 %v5079
      %6881 = vmatpush1.bf16.msra.mxu0 %v5078
      %6882 = vmatprep.subr.bf16.mxu0 %v5083
      %6883 = vmatpush1.bf16.msra.mxu0 %v5082
      %6884 = vmatprep.subr.bf16.mxu0 %v5087
      %6885 = vmatpush1.bf16.msra.mxu0 %v5086
      %6886 = vmatprep.subr.bf16.mxu0 %v5091
      %6887 = vmatpush1.bf16.msra.mxu0 %v5090
      %6888 = vmatprep.subr.bf16.mxu0 %v5095
      %6889 = vmatpush1.bf16.msra.mxu0 %v5094
      %6890 = vmatprep.subr.bf16.mxu0 %v5099
      %6891 = vmatpush1.bf16.msra.mxu0 %v5098
      %6892 = vmatprep.subr.bf16.mxu0 %v5103
      %6893 = vmatpush1.bf16.msra.mxu0 %v5102
      %6894 = vmatprep.subr.bf16.mxu0 %v5107
      %6895 = vmatpush1.bf16.msra.mxu0 %v5106
      %6896 = vmatprep.mubr.bf16.mxu0 %v277
      %6897 = vmatmul.mubr.bf16.gmra.mrb[0].mxu0 %v276
      %v6898 = vpop.f32.mrb[0].mxu0
      %v6899 = vadd.f32 %v6858, %v6898
      %v6900 = vpop.f32.mrb[0].mxu0
      %v6901 = vadd.f32 %v6860, %v6900
      %v6902 = vpop.f32.mrb[0].mxu0
      %v6903 = vpop.f32.mrb[0].mxu0
      %6904 = vdwg.mxu0
      %6905 = vmatprep.subr.bf16.mxu0 %v5111
      %6906 = vmatpush1.bf16.msra.mxu0 %v5110
      %6907 = vmatprep.subr.bf16.mxu0 %v5115
      %6908 = vmatpush1.bf16.msra.mxu0 %v5114
      %6909 = vmatprep.subr.bf16.mxu0 %v5119
      %6910 = vmatpush1.bf16.msra.mxu0 %v5118
      %6911 = vmatprep.subr.bf16.mxu0 %v5123
      %6912 = vmatpush1.bf16.msra.mxu0 %v5122
      %6913 = vmatprep.subr.bf16.mxu0 %v5127
      %6914 = vmatpush1.bf16.msra.mxu0 %v5126
      %6915 = vmatprep.subr.bf16.mxu0 %v5131
      %6916 = vmatpush1.bf16.msra.mxu0 %v5130
      %6917 = vmatprep.subr.bf16.mxu0 %v5135
      %6918 = vmatpush1.bf16.msra.mxu0 %v5134
      %6919 = vmatprep.subr.bf16.mxu0 %v5139
      %6920 = vmatpush1.bf16.msra.mxu0 %v5138
      %6921 = vmatprep.subr.bf16.mxu0 %v5143
      %6922 = vmatpush1.bf16.msra.mxu0 %v5142
      %6923 = vmatprep.subr.bf16.mxu0 %v5147
      %6924 = vmatpush1.bf16.msra.mxu0 %v5146
      %6925 = vmatprep.subr.bf16.mxu0 %v5151
      %6926 = vmatpush1.bf16.msra.mxu0 %v5150
      %6927 = vmatprep.subr.bf16.mxu0 %v5155
      %6928 = vmatpush1.bf16.msra.mxu0 %v5154
      %6929 = vmatprep.subr.bf16.mxu0 %v5159
      %6930 = vmatpush1.bf16.msra.mxu0 %v5158
      %6931 = vmatprep.subr.bf16.mxu0 %v5163
      %6932 = vmatpush1.bf16.msra.mxu0 %v5162
      %6933 = vmatprep.subr.bf16.mxu0 %v5167
      %6934 = vmatpush1.bf16.msra.mxu0 %v5166
      %6935 = vmatprep.subr.bf16.mxu0 %v5171
      %6936 = vmatpush1.bf16.msra.mxu0 %v5170
      %6937 = vmatprep.mubr.bf16.mxu0 %v279
      %6938 = vmatmul.mubr.bf16.gmra.mrb[0].mxu0 %v278
      %v6939 = vpop.f32.mrb[0].mxu0
      %v6940 = vadd.f32 %v6899, %v6939
      %v6941 = vpop.f32.mrb[0].mxu0
      %v6942 = vadd.f32 %v6901, %v6941
      %v6943 = vpop.f32.mrb[0].mxu0
      %v6944 = vpop.f32.mrb[0].mxu0
      %6945 = vdwg.mxu0
      %6946 = vmatprep.subr.bf16.mxu0 %v5175
      %6947 = vmatpush1.bf16.msra.mxu0 %v5174
      %6948 = vmatprep.subr.bf16.mxu0 %v5179
      %6949 = vmatpush1.bf16.msra.mxu0 %v5178
      %6950 = vmatprep.subr.bf16.mxu0 %v5183
      %6951 = vmatpush1.bf16.msra.mxu0 %v5182
      %6952 = vmatprep.subr.bf16.mxu0 %v5187
      %6953 = vmatpush1.bf16.msra.mxu0 %v5186
      %6954 = vmatprep.subr.bf16.mxu0 %v5191
      %6955 = vmatpush1.bf16.msra.mxu0 %v5190
      %6956 = vmatprep.subr.bf16.mxu0 %v5195
      %6957 = vmatpush1.bf16.msra.mxu0 %v5194
      %6958 = vmatprep.subr.bf16.mxu0 %v5199
      %6959 = vmatpush1.bf16.msra.mxu0 %v5198
      %6960 = vmatprep.subr.bf16.mxu0 %v5203
      %6961 = vmatpush1.bf16.msra.mxu0 %v5202
      %6962 = vmatprep.subr.bf16.mxu0 %v5207
      %6963 = vmatpush1.bf16.msra.mxu0 %v5206
      %6964 = vmatprep.subr.bf16.mxu0 %v5211
      %6965 = vmatpush1.bf16.msra.mxu0 %v5210
      %6966 = vmatprep.subr.bf16.mxu0 %v5215
      %6967 = vmatpush1.bf16.msra.mxu0 %v5214
      %6968 = vmatprep.subr.bf16.mxu0 %v5219
      %6969 = vmatpush1.bf16.msra.mxu0 %v5218
      %6970 = vmatprep.subr.bf16.mxu0 %v5223
      %6971 = vmatpush1.bf16.msra.mxu0 %v5222
      %6972 = vmatprep.subr.bf16.mxu0 %v5227
      %6973 = vmatpush1.bf16.msra.mxu0 %v5226
      %6974 = vmatprep.subr.bf16.mxu0 %v5231
      %6975 = vmatpush1.bf16.msra.mxu0 %v5230
      %6976 = vmatprep.subr.bf16.mxu0 %v5235
      %6977 = vmatpush1.bf16.msra.mxu0 %v5234
      %6978 = vmatprep.mubr.bf16.mxu0 %v281
      %6979 = vmatmul.mubr.bf16.gmra.mrb[0].mxu0 %v280
      %v6980 = vpop.f32.mrb[0].mxu0
      %v6981 = vadd.f32 %v6940, %v6980
      %v6982 = vpop.f32.mrb[0].mxu0
      %v6983 = vadd.f32 %v6942, %v6982
      %v6984 = vpop.f32.mrb[0].mxu0
      %v6985 = vpop.f32.mrb[0].mxu0
      %6986 = vdwg.mxu0
      %6987 = vmatprep.subr.bf16.mxu0 %v5239
      %6988 = vmatpush1.bf16.msra.mxu0 %v5238
      %6989 = vmatprep.subr.bf16.mxu0 %v5243
      %6990 = vmatpush1.bf16.msra.mxu0 %v5242
      %6991 = vmatprep.subr.bf16.mxu0 %v5247
      %6992 = vmatpush1.bf16.msra.mxu0 %v5246
      %6993 = vmatprep.subr.bf16.mxu0 %v5251
      %6994 = vmatpush1.bf16.msra.mxu0 %v5250
      %6995 = vmatprep.subr.bf16.mxu0 %v5255
      %6996 = vmatpush1.bf16.msra.mxu0 %v5254
      %6997 = vmatprep.subr.bf16.mxu0 %v5259
      %6998 = vmatpush1.bf16.msra.mxu0 %v5258
      %6999 = vmatprep.subr.bf16.mxu0 %v5263
      %7000 = vmatpush1.bf16.msra.mxu0 %v5262
      %7001 = vmatprep.subr.bf16.mxu0 %v5267
      %7002 = vmatpush1.bf16.msra.mxu0 %v5266
      %7003 = vmatprep.subr.bf16.mxu0 %v5271
      %7004 = vmatpush1.bf16.msra.mxu0 %v5270
      %7005 = vmatprep.subr.bf16.mxu0 %v5275
      %7006 = vmatpush1.bf16.msra.mxu0 %v5274
      %7007 = vmatprep.subr.bf16.mxu0 %v5279
      %7008 = vmatpush1.bf16.msra.mxu0 %v5278
      %7009 = vmatprep.subr.bf16.mxu0 %v5283
      %7010 = vmatpush1.bf16.msra.mxu0 %v5282
      %7011 = vmatprep.subr.bf16.mxu0 %v5287
      %7012 = vmatpush1.bf16.msra.mxu0 %v5286
      %7013 = vmatprep.subr.bf16.mxu0 %v5291
      %7014 = vmatpush1.bf16.msra.mxu0 %v5290
      %7015 = vmatprep.subr.bf16.mxu0 %v5295
      %7016 = vmatpush1.bf16.msra.mxu0 %v5294
      %7017 = vmatprep.subr.bf16.mxu0 %v5299
      %7018 = vmatpush1.bf16.msra.mxu0 %v5298
      %7019 = vmatprep.mubr.bf16.mxu0 %v283
      %7020 = vmatmul.mubr.bf16.gmra.mrb[0].mxu0 %v282
      %v7021 = vpop.f32.mrb[0].mxu0
      %v7022 = vadd.f32 %v6981, %v7021
      %v7023 = vpop.f32.mrb[0].mxu0
      %v7024 = vadd.f32 %v6983, %v7023
      %v7025 = vpop.f32.mrb[0].mxu0
      %v7026 = vpop.f32.mrb[0].mxu0
      %7027 = vdwg.mxu0
      %7028 = vmatprep.subr.bf16.mxu0 %v5303
      %7029 = vmatpush1.bf16.msra.mxu0 %v5302
      %7030 = vmatprep.subr.bf16.mxu0 %v5307
      %7031 = vmatpush1.bf16.msra.mxu0 %v5306
      %7032 = vmatprep.subr.bf16.mxu0 %v5311
      %7033 = vmatpush1.bf16.msra.mxu0 %v5310
      %7034 = vmatprep.subr.bf16.mxu0 %v5315
      %7035 = vmatpush1.bf16.msra.mxu0 %v5314
      %7036 = vmatprep.subr.bf16.mxu0 %v5319
      %7037 = vmatpush1.bf16.msra.mxu0 %v5318
      %7038 = vmatprep.subr.bf16.mxu0 %v5323
      %7039 = vmatpush1.bf16.msra.mxu0 %v5322
      %7040 = vmatprep.subr.bf16.mxu0 %v5327
      %7041 = vmatpush1.bf16.msra.mxu0 %v5326
      %7042 = vmatprep.subr.bf16.mxu0 %v5331
      %7043 = vmatpush1.bf16.msra.mxu0 %v5330
      %7044 = vmatprep.subr.bf16.mxu0 %v5335
      %7045 = vmatpush1.bf16.msra.mxu0 %v5334
      %7046 = vmatprep.subr.bf16.mxu0 %v5339
      %7047 = vmatpush1.bf16.msra.mxu0 %v5338
      %7048 = vmatprep.subr.bf16.mxu0 %v5343
      %7049 = vmatpush1.bf16.msra.mxu0 %v5342
      %7050 = vmatprep.subr.bf16.mxu0 %v5347
      %7051 = vmatpush1.bf16.msra.mxu0 %v5346
      %7052 = vmatprep.subr.bf16.mxu0 %v5351
      %7053 = vmatpush1.bf16.msra.mxu0 %v5350
      %7054 = vmatprep.subr.bf16.mxu0 %v5355
      %7055 = vmatpush1.bf16.msra.mxu0 %v5354
      %7056 = vmatprep.subr.bf16.mxu0 %v5359
      %7057 = vmatpush1.bf16.msra.mxu0 %v5358
      %7058 = vmatprep.subr.bf16.mxu0 %v5363
      %7059 = vmatpush1.bf16.msra.mxu0 %v5362
      %7060 = vmatprep.mubr.bf16.mxu0 %v285
      %7061 = vmatmul.mubr.bf16.gmra.mrb[0].mxu0 %v284
      %v7062 = vpop.f32.mrb[0].mxu0
      %v7063 = vadd.f32 %v7022, %v7062
      %v7064 = vpop.f32.mrb[0].mxu0
      %v7065 = vadd.f32 %v7024, %v7064
      %v7066 = vpop.f32.mrb[0].mxu0
      %v7067 = vpop.f32.mrb[0].mxu0
      %7068 = vdwg.mxu0
      %7069 = vmatprep.subr.bf16.mxu0 %v5367
      %7070 = vmatpush1.bf16.msra.mxu0 %v5366
      %7071 = vmatprep.subr.bf16.mxu0 %v5371
      %7072 = vmatpush1.bf16.msra.mxu0 %v5370
      %7073 = vmatprep.subr.bf16.mxu0 %v5375
      %7074 = vmatpush1.bf16.msra.mxu0 %v5374
      %7075 = vmatprep.subr.bf16.mxu0 %v5379
      %7076 = vmatpush1.bf16.msra.mxu0 %v5378
      %7077 = vmatprep.subr.bf16.mxu0 %v5383
      %7078 = vmatpush1.bf16.msra.mxu0 %v5382
      %7079 = vmatprep.subr.bf16.mxu0 %v5387
      %7080 = vmatpush1.bf16.msra.mxu0 %v5386
      %7081 = vmatprep.subr.bf16.mxu0 %v5391
      %7082 = vmatpush1.bf16.msra.mxu0 %v5390
      %7083 = vmatprep.subr.bf16.mxu0 %v5395
      %7084 = vmatpush1.bf16.msra.mxu0 %v5394
      %7085 = vmatprep.subr.bf16.mxu0 %v5399
      %7086 = vmatpush1.bf16.msra.mxu0 %v5398
      %7087 = vmatprep.subr.bf16.mxu0 %v5403
      %7088 = vmatpush1.bf16.msra.mxu0 %v5402
      %7089 = vmatprep.subr.bf16.mxu0 %v5407
      %7090 = vmatpush1.bf16.msra.mxu0 %v5406
      %7091 = vmatprep.subr.bf16.mxu0 %v5411
      %7092 = vmatpush1.bf16.msra.mxu0 %v5410
      %7093 = vmatprep.subr.bf16.mxu0 %v5415
      %7094 = vmatpush1.bf16.msra.mxu0 %v5414
      %7095 = vmatprep.subr.bf16.mxu0 %v5419
      %7096 = vmatpush1.bf16.msra.mxu0 %v5418
      %7097 = vmatprep.subr.bf16.mxu0 %v5423
      %7098 = vmatpush1.bf16.msra.mxu0 %v5422
      %7099 = vmatprep.subr.bf16.mxu0 %v5427
      %7100 = vmatpush1.bf16.msra.mxu0 %v5426
      %7101 = vmatprep.mubr.bf16.mxu0 %v287
      %7102 = vmatmul.mubr.bf16.gmra.mrb[0].mxu0 %v286
      %v7103 = vpop.f32.mrb[0].mxu0
      %v7104 = vadd.f32 %v7063, %v7103
      %v7105 = vpop.f32.mrb[0].mxu0
      %v7106 = vadd.f32 %v7065, %v7105
      %v7107 = vpop.f32.mrb[0].mxu0
      %v7108 = vpop.f32.mrb[0].mxu0
      %7109 = vdwg.mxu0
      %7110 = vmatprep.subr.bf16.mxu0 %v4409
      %7111 = vmatpush1.bf16.msra.mxu0 %v4408
      %7112 = vmatprep.subr.bf16.mxu0 %v4413
      %7113 = vmatpush1.bf16.msra.mxu0 %v4412
      %7114 = vmatprep.subr.bf16.mxu0 %v4417
      %7115 = vmatpush1.bf16.msra.mxu0 %v4416
      %7116 = vmatprep.subr.bf16.mxu0 %v4421
      %7117 = vmatpush1.bf16.msra.mxu0 %v4420
      %7118 = vmatprep.subr.bf16.mxu0 %v4425
      %7119 = vmatpush1.bf16.msra.mxu0 %v4424
      %7120 = vmatprep.subr.bf16.mxu0 %v4429
      %7121 = vmatpush1.bf16.msra.mxu0 %v4428
      %7122 = vmatprep.subr.bf16.mxu0 %v4433
      %7123 = vmatpush1.bf16.msra.mxu0 %v4432
      %7124 = vmatprep.subr.bf16.mxu0 %v4437
      %7125 = vmatpush1.bf16.msra.mxu0 %v4436
      %7126 = vmatprep.subr.bf16.mxu0 %v4441
      %7127 = vmatpush1.bf16.msra.mxu0 %v4440
      %7128 = vmatprep.subr.bf16.mxu0 %v4445
      %7129 = vmatpush1.bf16.msra.mxu0 %v4444
      %7130 = vmatprep.subr.bf16.mxu0 %v4449
      %7131 = vmatpush1.bf16.msra.mxu0 %v4448
      %7132 = vmatprep.subr.bf16.mxu0 %v4453
      %7133 = vmatpush1.bf16.msra.mxu0 %v4452
      %7134 = vmatprep.subr.bf16.mxu0 %v4457
      %7135 = vmatpush1.bf16.msra.mxu0 %v4456
      %7136 = vmatprep.subr.bf16.mxu0 %v4461
      %7137 = vmatpush1.bf16.msra.mxu0 %v4460
      %7138 = vmatprep.subr.bf16.mxu0 %v4465
      %7139 = vmatpush1.bf16.msra.mxu0 %v4464
      %7140 = vmatprep.subr.bf16.mxu0 %v4469
      %7141 = vmatpush1.bf16.msra.mxu0 %v4468
      %7142 = vmatprep.mubr.bf16.mxu0 %v257
      %7143 = vmatmul.mubr.bf16.gmra.mrb[0].mxu0 %v256
      %v7144 = vpop.f32.mrb[0].mxu0
      %v7145 = vadd.f32 %v1325, %v7144
      %v7146 = vpop.f32.mrb[0].mxu0
      %v7147 = vadd.f32 %v1329, %v7146
      %v7148 = vpop.f32.mrb[0].mxu0
      %v7149 = vpop.f32.mrb[0].mxu0
      %7150 = vdwg.mxu0
      %7151 = vmatprep.subr.bf16.mxu0 %v4473
      %7152 = vmatpush1.bf16.msra.mxu0 %v4472
      %7153 = vmatprep.subr.bf16.mxu0 %v4477
      %7154 = vmatpush1.bf16.msra.mxu0 %v4476
      %7155 = vmatprep.subr.bf16.mxu0 %v4481
      %7156 = vmatpush1.bf16.msra.mxu0 %v4480
      %7157 = vmatprep.subr.bf16.mxu0 %v4485
      %7158 = vmatpush1.bf16.msra.mxu0 %v4484
      %7159 = vmatprep.subr.bf16.mxu0 %v4489
      %7160 = vmatpush1.bf16.msra.mxu0 %v4488
      %7161 = vmatprep.subr.bf16.mxu0 %v4493
      %7162 = vmatpush1.bf16.msra.mxu0 %v4492
      %7163 = vmatprep.subr.bf16.mxu0 %v4497
      %7164 = vmatpush1.bf16.msra.mxu0 %v4496
      %7165 = vmatprep.subr.bf16.mxu0 %v4501
      %7166 = vmatpush1.bf16.msra.mxu0 %v4500
      %7167 = vmatprep.subr.bf16.mxu0 %v4505
      %7168 = vmatpush1.bf16.msra.mxu0 %v4504
      %7169 = vmatprep.subr.bf16.mxu0 %v4509
      %7170 = vmatpush1.bf16.msra.mxu0 %v4508
      %7171 = vmatprep.subr.bf16.mxu0 %v4513
      %7172 = vmatpush1.bf16.msra.mxu0 %v4512
      %7173 = vmatprep.subr.bf16.mxu0 %v4517
      %7174 = vmatpush1.bf16.msra.mxu0 %v4516
      %7175 = vmatprep.subr.bf16.mxu0 %v4521
      %7176 = vmatpush1.bf16.msra.mxu0 %v4520
      %7177 = vmatprep.subr.bf16.mxu0 %v4525
      %7178 = vmatpush1.bf16.msra.mxu0 %v4524
      %7179 = vmatprep.subr.bf16.mxu0 %v4529
      %7180 = vmatpush1.bf16.msra.mxu0 %v4528
      %7181 = vmatprep.subr.bf16.mxu0 %v4533
      %7182 = vmatpush1.bf16.msra.mxu0 %v4532
      %7183 = vmatprep.mubr.bf16.mxu0 %v259
      %7184 = vmatmul.mubr.bf16.gmra.mrb[0].mxu0 %v258
      %v7185 = vpop.f32.mrb[0].mxu0
      %v7186 = vadd.f32 %v7145, %v7185
      %v7187 = vpop.f32.mrb[0].mxu0
      %v7188 = vadd.f32 %v7147, %v7187
      %v7189 = vpop.f32.mrb[0].mxu0
      %v7190 = vpop.f32.mrb[0].mxu0
      %7191 = vdwg.mxu0
      %7192 = vmatprep.subr.bf16.mxu0 %v4537
      %7193 = vmatpush1.bf16.msra.mxu0 %v4536
      %7194 = vmatprep.subr.bf16.mxu0 %v4541
      %7195 = vmatpush1.bf16.msra.mxu0 %v4540
      %7196 = vmatprep.subr.bf16.mxu0 %v4545
      %7197 = vmatpush1.bf16.msra.mxu0 %v4544
      %7198 = vmatprep.subr.bf16.mxu0 %v4549
      %7199 = vmatpush1.bf16.msra.mxu0 %v4548
      %7200 = vmatprep.subr.bf16.mxu0 %v4553
      %7201 = vmatpush1.bf16.msra.mxu0 %v4552
      %7202 = vmatprep.subr.bf16.mxu0 %v4557
      %7203 = vmatpush1.bf16.msra.mxu0 %v4556
      %7204 = vmatprep.subr.bf16.mxu0 %v4561
      %7205 = vmatpush1.bf16.msra.mxu0 %v4560
      %7206 = vmatprep.subr.bf16.mxu0 %v4565
      %7207 = vmatpush1.bf16.msra.mxu0 %v4564
      %7208 = vmatprep.subr.bf16.mxu0 %v4569
      %7209 = vmatpush1.bf16.msra.mxu0 %v4568
      %7210 = vmatprep.subr.bf16.mxu0 %v4573
      %7211 = vmatpush1.bf16.msra.mxu0 %v4572
      %7212 = vmatprep.subr.bf16.mxu0 %v4577
      %7213 = vmatpush1.bf16.msra.mxu0 %v4576
      %7214 = vmatprep.subr.bf16.mxu0 %v4581
      %7215 = vmatpush1.bf16.msra.mxu0 %v4580
      %7216 = vmatprep.subr.bf16.mxu0 %v4585
      %7217 = vmatpush1.bf16.msra.mxu0 %v4584
      %7218 = vmatprep.subr.bf16.mxu0 %v4589
      %7219 = vmatpush1.bf16.msra.mxu0 %v4588
      %7220 = vmatprep.subr.bf16.mxu0 %v4593
      %7221 = vmatpush1.bf16.msra.mxu0 %v4592
      %7222 = vmatprep.subr.bf16.mxu0 %v4597
      %7223 = vmatpush1.bf16.msra.mxu0 %v4596
      %7224 = vmatprep.mubr.bf16.mxu0 %v261
      %7225 = vmatmul.mubr.bf16.gmra.mrb[0].mxu0 %v260
      %v7226 = vpop.f32.mrb[0].mxu0
      %v7227 = vadd.f32 %v7186, %v7226
      %v7228 = vpop.f32.mrb[0].mxu0
      %v7229 = vadd.f32 %v7188, %v7228
      %v7230 = vpop.f32.mrb[0].mxu0
      %v7231 = vpop.f32.mrb[0].mxu0
      %7232 = vdwg.mxu0
      %7233 = vmatprep.subr.bf16.mxu0 %v4601
      %7234 = vmatpush1.bf16.msra.mxu0 %v4600
      %7235 = vmatprep.subr.bf16.mxu0 %v4605
      %7236 = vmatpush1.bf16.msra.mxu0 %v4604
      %7237 = vmatprep.subr.bf16.mxu0 %v4609
      %7238 = vmatpush1.bf16.msra.mxu0 %v4608
      %7239 = vmatprep.subr.bf16.mxu0 %v4613
      %7240 = vmatpush1.bf16.msra.mxu0 %v4612
      %7241 = vmatprep.subr.bf16.mxu0 %v4617
      %7242 = vmatpush1.bf16.msra.mxu0 %v4616
      %7243 = vmatprep.subr.bf16.mxu0 %v4621
      %7244 = vmatpush1.bf16.msra.mxu0 %v4620
      %7245 = vmatprep.subr.bf16.mxu0 %v4625
      %7246 = vmatpush1.bf16.msra.mxu0 %v4624
      %7247 = vmatprep.subr.bf16.mxu0 %v4629
      %7248 = vmatpush1.bf16.msra.mxu0 %v4628
      %7249 = vmatprep.subr.bf16.mxu0 %v4633
      %7250 = vmatpush1.bf16.msra.mxu0 %v4632
      %7251 = vmatprep.subr.bf16.mxu0 %v4637
      %7252 = vmatpush1.bf16.msra.mxu0 %v4636
      %7253 = vmatprep.subr.bf16.mxu0 %v4641
      %7254 = vmatpush1.bf16.msra.mxu0 %v4640
      %7255 = vmatprep.subr.bf16.mxu0 %v4645
      %7256 = vmatpush1.bf16.msra.mxu0 %v4644
      %7257 = vmatprep.subr.bf16.mxu0 %v4649
      %7258 = vmatpush1.bf16.msra.mxu0 %v4648
      %7259 = vmatprep.subr.bf16.mxu0 %v4653
      %7260 = vmatpush1.bf16.msra.mxu0 %v4652
      %7261 = vmatprep.subr.bf16.mxu0 %v4657
      %7262 = vmatpush1.bf16.msra.mxu0 %v4656
      %7263 = vmatprep.subr.bf16.mxu0 %v4661
      %7264 = vmatpush1.bf16.msra.mxu0 %v4660
      %7265 = vmatprep.mubr.bf16.mxu0 %v263
      %7266 = vmatmul.mubr.bf16.gmra.mrb[0].mxu0 %v262
      %v7267 = vpop.f32.mrb[0].mxu0
      %v7268 = vadd.f32 %v7227, %v7267
      %v7269 = vpop.f32.mrb[0].mxu0
      %v7270 = vadd.f32 %v7229, %v7269
      %v7271 = vpop.f32.mrb[0].mxu0
      %v7272 = vpop.f32.mrb[0].mxu0
      %7273 = vdwg.mxu0
      %7274 = vmatprep.subr.bf16.mxu0 %v4665
      %7275 = vmatpush1.bf16.msra.mxu0 %v4664
      %7276 = vmatprep.subr.bf16.mxu0 %v4669
      %7277 = vmatpush1.bf16.msra.mxu0 %v4668
      %7278 = vmatprep.subr.bf16.mxu0 %v4673
      %7279 = vmatpush1.bf16.msra.mxu0 %v4672
      %7280 = vmatprep.subr.bf16.mxu0 %v4677
      %7281 = vmatpush1.bf16.msra.mxu0 %v4676
      %7282 = vmatprep.subr.bf16.mxu0 %v4681
      %7283 = vmatpush1.bf16.msra.mxu0 %v4680
      %7284 = vmatprep.subr.bf16.mxu0 %v4685
      %7285 = vmatpush1.bf16.msra.mxu0 %v4684
      %7286 = vmatprep.subr.bf16.mxu0 %v4689
      %7287 = vmatpush1.bf16.msra.mxu0 %v4688
      %7288 = vmatprep.subr.bf16.mxu0 %v4693
      %7289 = vmatpush1.bf16.msra.mxu0 %v4692
      %7290 = vmatprep.subr.bf16.mxu0 %v4697
      %7291 = vmatpush1.bf16.msra.mxu0 %v4696
      %7292 = vmatprep.subr.bf16.mxu0 %v4701
      %7293 = vmatpush1.bf16.msra.mxu0 %v4700
      %7294 = vmatprep.subr.bf16.mxu0 %v4705
      %7295 = vmatpush1.bf16.msra.mxu0 %v4704
      %7296 = vmatprep.subr.bf16.mxu0 %v4709
      %7297 = vmatpush1.bf16.msra.mxu0 %v4708
      %7298 = vmatprep.subr.bf16.mxu0 %v4713
      %7299 = vmatpush1.bf16.msra.mxu0 %v4712
      %7300 = vmatprep.subr.bf16.mxu0 %v4717
      %7301 = vmatpush1.bf16.msra.mxu0 %v4716
      %7302 = vmatprep.subr.bf16.mxu0 %v4721
      %7303 = vmatpush1.bf16.msra.mxu0 %v4720
      %7304 = vmatprep.subr.bf16.mxu0 %v4725
      %7305 = vmatpush1.bf16.msra.mxu0 %v4724
      %7306 = vmatprep.mubr.bf16.mxu0 %v265
      %7307 = vmatmul.mubr.bf16.gmra.mrb[0].mxu0 %v264
      %v7308 = vpop.f32.mrb[0].mxu0
      %v7309 = vadd.f32 %v7268, %v7308
      %v7310 = vpop.f32.mrb[0].mxu0
      %v7311 = vadd.f32 %v7270, %v7310
      %v7312 = vpop.f32.mrb[0].mxu0
      %v7313 = vpop.f32.mrb[0].mxu0
      %7314 = vdwg.mxu0
      %7315 = vmatprep.subr.bf16.mxu0 %v4729
      %7316 = vmatpush1.bf16.msra.mxu0 %v4728
      %7317 = vmatprep.subr.bf16.mxu0 %v4733
      %7318 = vmatpush1.bf16.msra.mxu0 %v4732
      %7319 = vmatprep.subr.bf16.mxu0 %v4737
      %7320 = vmatpush1.bf16.msra.mxu0 %v4736
      %7321 = vmatprep.subr.bf16.mxu0 %v4741
      %7322 = vmatpush1.bf16.msra.mxu0 %v4740
      %7323 = vmatprep.subr.bf16.mxu0 %v4745
      %7324 = vmatpush1.bf16.msra.mxu0 %v4744
      %7325 = vmatprep.subr.bf16.mxu0 %v4749
      %7326 = vmatpush1.bf16.msra.mxu0 %v4748
      %7327 = vmatprep.subr.bf16.mxu0 %v4753
      %7328 = vmatpush1.bf16.msra.mxu0 %v4752
      %7329 = vmatprep.subr.bf16.mxu0 %v4757
      %7330 = vmatpush1.bf16.msra.mxu0 %v4756
      %7331 = vmatprep.subr.bf16.mxu0 %v4761
      %7332 = vmatpush1.bf16.msra.mxu0 %v4760
      %7333 = vmatprep.subr.bf16.mxu0 %v4765
      %7334 = vmatpush1.bf16.msra.mxu0 %v4764
      %7335 = vmatprep.subr.bf16.mxu0 %v4769
      %7336 = vmatpush1.bf16.msra.mxu0 %v4768
      %7337 = vmatprep.subr.bf16.mxu0 %v4773
      %7338 = vmatpush1.bf16.msra.mxu0 %v4772
      %7339 = vmatprep.subr.bf16.mxu0 %v4777
      %7340 = vmatpush1.bf16.msra.mxu0 %v4776
      %7341 = vmatprep.subr.bf16.mxu0 %v4781
      %7342 = vmatpush1.bf16.msra.mxu0 %v4780
      %7343 = vmatprep.subr.bf16.mxu0 %v4785
      %7344 = vmatpush1.bf16.msra.mxu0 %v4784
      %7345 = vmatprep.subr.bf16.mxu0 %v4789
      %7346 = vmatpush1.bf16.msra.mxu0 %v4788
      %7347 = vmatprep.mubr.bf16.mxu0 %v267
      %7348 = vmatmul.mubr.bf16.gmra.mrb[0].mxu0 %v266
      %v7349 = vpop.f32.mrb[0].mxu0
      %v7350 = vadd.f32 %v7309, %v7349
      %v7351 = vpop.f32.mrb[0].mxu0
      %v7352 = vadd.f32 %v7311, %v7351
      %v7353 = vpop.f32.mrb[0].mxu0
      %v7354 = vpop.f32.mrb[0].mxu0
      %7355 = vdwg.mxu0
      %7356 = vmatprep.subr.bf16.mxu0 %v4793
      %7357 = vmatpush1.bf16.msra.mxu0 %v4792
      %7358 = vmatprep.subr.bf16.mxu0 %v4797
      %7359 = vmatpush1.bf16.msra.mxu0 %v4796
      %7360 = vmatprep.subr.bf16.mxu0 %v4801
      %7361 = vmatpush1.bf16.msra.mxu0 %v4800
      %7362 = vmatprep.subr.bf16.mxu0 %v4805
      %7363 = vmatpush1.bf16.msra.mxu0 %v4804
      %7364 = vmatprep.subr.bf16.mxu0 %v4809
      %7365 = vmatpush1.bf16.msra.mxu0 %v4808
      %7366 = vmatprep.subr.bf16.mxu0 %v4813
      %7367 = vmatpush1.bf16.msra.mxu0 %v4812
      %7368 = vmatprep.subr.bf16.mxu0 %v4817
      %7369 = vmatpush1.bf16.msra.mxu0 %v4816
      %7370 = vmatprep.subr.bf16.mxu0 %v4821
      %7371 = vmatpush1.bf16.msra.mxu0 %v4820
      %7372 = vmatprep.subr.bf16.mxu0 %v4825
      %7373 = vmatpush1.bf16.msra.mxu0 %v4824
      %7374 = vmatprep.subr.bf16.mxu0 %v4829
      %7375 = vmatpush1.bf16.msra.mxu0 %v4828
      %7376 = vmatprep.subr.bf16.mxu0 %v4833
      %7377 = vmatpush1.bf16.msra.mxu0 %v4832
      %7378 = vmatprep.subr.bf16.mxu0 %v4837
      %7379 = vmatpush1.bf16.msra.mxu0 %v4836
      %7380 = vmatprep.subr.bf16.mxu0 %v4841
      %7381 = vmatpush1.bf16.msra.mxu0 %v4840
      %7382 = vmatprep.subr.bf16.mxu0 %v4845
      %7383 = vmatpush1.bf16.msra.mxu0 %v4844
      %7384 = vmatprep.subr.bf16.mxu0 %v4849
      %7385 = vmatpush1.bf16.msra.mxu0 %v4848
      %7386 = vmatprep.subr.bf16.mxu0 %v4853
      %7387 = vmatpush1.bf16.msra.mxu0 %v4852
      %7388 = vmatprep.mubr.bf16.mxu0 %v269
      %7389 = vmatmul.mubr.bf16.gmra.mrb[0].mxu0 %v268
      %v7390 = vpop.f32.mrb[0].mxu0
      %v7391 = vadd.f32 %v7350, %v7390
      %v7392 = vpop.f32.mrb[0].mxu0
      %v7393 = vadd.f32 %v7352, %v7392
      %v7394 = vpop.f32.mrb[0].mxu0
      %v7395 = vpop.f32.mrb[0].mxu0
      %7396 = vdwg.mxu0
      %7397 = vmatprep.subr.bf16.mxu0 %v4857
      %7398 = vmatpush1.bf16.msra.mxu0 %v4856
      %7399 = vmatprep.subr.bf16.mxu0 %v4861
      %7400 = vmatpush1.bf16.msra.mxu0 %v4860
      %7401 = vmatprep.subr.bf16.mxu0 %v4865
      %7402 = vmatpush1.bf16.msra.mxu0 %v4864
      %7403 = vmatprep.subr.bf16.mxu0 %v4869
      %7404 = vmatpush1.bf16.msra.mxu0 %v4868
      %7405 = vmatprep.subr.bf16.mxu0 %v4873
      %7406 = vmatpush1.bf16.msra.mxu0 %v4872
      %7407 = vmatprep.subr.bf16.mxu0 %v4877
      %7408 = vmatpush1.bf16.msra.mxu0 %v4876
      %7409 = vmatprep.subr.bf16.mxu0 %v4881
      %7410 = vmatpush1.bf16.msra.mxu0 %v4880
      %7411 = vmatprep.subr.bf16.mxu0 %v4885
      %7412 = vmatpush1.bf16.msra.mxu0 %v4884
      %7413 = vmatprep.subr.bf16.mxu0 %v4889
      %7414 = vmatpush1.bf16.msra.mxu0 %v4888
      %7415 = vmatprep.subr.bf16.mxu0 %v4893
      %7416 = vmatpush1.bf16.msra.mxu0 %v4892
      %7417 = vmatprep.subr.bf16.mxu0 %v4897
      %7418 = vmatpush1.bf16.msra.mxu0 %v4896
      %7419 = vmatprep.subr.bf16.mxu0 %v4901
      %7420 = vmatpush1.bf16.msra.mxu0 %v4900
      %7421 = vmatprep.subr.bf16.mxu0 %v4905
      %7422 = vmatpush1.bf16.msra.mxu0 %v4904
      %7423 = vmatprep.subr.bf16.mxu0 %v4909
      %7424 = vmatpush1.bf16.msra.mxu0 %v4908
      %7425 = vmatprep.subr.bf16.mxu0 %v4913
      %7426 = vmatpush1.bf16.msra.mxu0 %v4912
      %7427 = vmatprep.subr.bf16.mxu0 %v4917
      %7428 = vmatpush1.bf16.msra.mxu0 %v4916
      %7429 = vmatprep.mubr.bf16.mxu0 %v271
      %7430 = vmatmul.mubr.bf16.gmra.mrb[0].mxu0 %v270
      %v7431 = vpop.f32.mrb[0].mxu0
      %v7432 = vadd.f32 %v7391, %v7431
      %v7433 = vpop.f32.mrb[0].mxu0
      %v7434 = vadd.f32 %v7393, %v7433
      %v7435 = vpop.f32.mrb[0].mxu0
      %v7436 = vpop.f32.mrb[0].mxu0
      %7437 = vdwg.mxu0
      %7438 = vmatprep.subr.bf16.mxu0 %v4921
      %7439 = vmatpush1.bf16.msra.mxu0 %v4920
      %7440 = vmatprep.subr.bf16.mxu0 %v4925
      %7441 = vmatpush1.bf16.msra.mxu0 %v4924
      %7442 = vmatprep.subr.bf16.mxu0 %v4929
      %7443 = vmatpush1.bf16.msra.mxu0 %v4928
      %7444 = vmatprep.subr.bf16.mxu0 %v4933
      %7445 = vmatpush1.bf16.msra.mxu0 %v4932
      %7446 = vmatprep.subr.bf16.mxu0 %v4937
      %7447 = vmatpush1.bf16.msra.mxu0 %v4936
      %7448 = vmatprep.subr.bf16.mxu0 %v4941
      %7449 = vmatpush1.bf16.msra.mxu0 %v4940
      %7450 = vmatprep.subr.bf16.mxu0 %v4945
      %7451 = vmatpush1.bf16.msra.mxu0 %v4944
      %7452 = vmatprep.subr.bf16.mxu0 %v4949
      %7453 = vmatpush1.bf16.msra.mxu0 %v4948
      %7454 = vmatprep.subr.bf16.mxu0 %v4953
      %7455 = vmatpush1.bf16.msra.mxu0 %v4952
      %7456 = vmatprep.subr.bf16.mxu0 %v4957
      %7457 = vmatpush1.bf16.msra.mxu0 %v4956
      %7458 = vmatprep.subr.bf16.mxu0 %v4961
      %7459 = vmatpush1.bf16.msra.mxu0 %v4960
      %7460 = vmatprep.subr.bf16.mxu0 %v4965
      %7461 = vmatpush1.bf16.msra.mxu0 %v4964
      %7462 = vmatprep.subr.bf16.mxu0 %v4969
      %7463 = vmatpush1.bf16.msra.mxu0 %v4968
      %7464 = vmatprep.subr.bf16.mxu0 %v4973
      %7465 = vmatpush1.bf16.msra.mxu0 %v4972
      %7466 = vmatprep.subr.bf16.mxu0 %v4977
      %7467 = vmatpush1.bf16.msra.mxu0 %v4976
      %7468 = vmatprep.subr.bf16.mxu0 %v4981
      %7469 = vmatpush1.bf16.msra.mxu0 %v4980
      %7470 = vmatprep.mubr.bf16.mxu0 %v273
      %7471 = vmatmul.mubr.bf16.gmra.mrb[0].mxu0 %v272
      %v7472 = vpop.f32.mrb[0].mxu0
      %v7473 = vadd.f32 %v7432, %v7472
      %v7474 = vpop.f32.mrb[0].mxu0
      %v7475 = vadd.f32 %v7434, %v7474
      %v7476 = vpop.f32.mrb[0].mxu0
      %v7477 = vpop.f32.mrb[0].mxu0
      %7478 = vdwg.mxu0
      %7479 = vmatprep.subr.bf16.mxu0 %v4985
      %7480 = vmatpush1.bf16.msra.mxu0 %v4984
      %7481 = vmatprep.subr.bf16.mxu0 %v4989
      %7482 = vmatpush1.bf16.msra.mxu0 %v4988
      %7483 = vmatprep.subr.bf16.mxu0 %v4993
      %7484 = vmatpush1.bf16.msra.mxu0 %v4992
      %7485 = vmatprep.subr.bf16.mxu0 %v4997
      %7486 = vmatpush1.bf16.msra.mxu0 %v4996
      %7487 = vmatprep.subr.bf16.mxu0 %v5001
      %7488 = vmatpush1.bf16.msra.mxu0 %v5000
      %7489 = vmatprep.subr.bf16.mxu0 %v5005
      %7490 = vmatpush1.bf16.msra.mxu0 %v5004
      %7491 = vmatprep.subr.bf16.mxu0 %v5009
      %7492 = vmatpush1.bf16.msra.mxu0 %v5008
      %7493 = vmatprep.subr.bf16.mxu0 %v5013
      %7494 = vmatpush1.bf16.msra.mxu0 %v5012
      %7495 = vmatprep.subr.bf16.mxu0 %v5017
      %7496 = vmatpush1.bf16.msra.mxu0 %v5016
      %7497 = vmatprep.subr.bf16.mxu0 %v5021
      %7498 = vmatpush1.bf16.msra.mxu0 %v5020
      %7499 = vmatprep.subr.bf16.mxu0 %v5025
      %7500 = vmatpush1.bf16.msra.mxu0 %v5024
      %7501 = vmatprep.subr.bf16.mxu0 %v5029
      %7502 = vmatpush1.bf16.msra.mxu0 %v5028
      %7503 = vmatprep.subr.bf16.mxu0 %v5033
      %7504 = vmatpush1.bf16.msra.mxu0 %v5032
      %7505 = vmatprep.subr.bf16.mxu0 %v5037
      %7506 = vmatpush1.bf16.msra.mxu0 %v5036
      %7507 = vmatprep.subr.bf16.mxu0 %v5041
      %7508 = vmatpush1.bf16.msra.mxu0 %v5040
      %7509 = vmatprep.subr.bf16.mxu0 %v5045
      %7510 = vmatpush1.bf16.msra.mxu0 %v5044
      %7511 = vmatprep.mubr.bf16.mxu0 %v275
      %7512 = vmatmul.mubr.bf16.gmra.mrb[0].mxu0 %v274
      %v7513 = vpop.f32.mrb[0].mxu0
      %v7514 = vadd.f32 %v7473, %v7513
      %v7515 = vpop.f32.mrb[0].mxu0
      %v7516 = vadd.f32 %v7475, %v7515
      %v7517 = vpop.f32.mrb[0].mxu0
      %v7518 = vpop.f32.mrb[0].mxu0
      %7519 = vdwg.mxu0
      %7520 = vmatprep.subr.bf16.mxu0 %v5049
      %7521 = vmatpush1.bf16.msra.mxu0 %v5048
      %7522 = vmatprep.subr.bf16.mxu0 %v5053
      %7523 = vmatpush1.bf16.msra.mxu0 %v5052
      %7524 = vmatprep.subr.bf16.mxu0 %v5057
      %7525 = vmatpush1.bf16.msra.mxu0 %v5056
      %7526 = vmatprep.subr.bf16.mxu0 %v5061
      %7527 = vmatpush1.bf16.msra.mxu0 %v5060
      %7528 = vmatprep.subr.bf16.mxu0 %v5065
      %7529 = vmatpush1.bf16.msra.mxu0 %v5064
      %7530 = vmatprep.subr.bf16.mxu0 %v5069
      %7531 = vmatpush1.bf16.msra.mxu0 %v5068
      %7532 = vmatprep.subr.bf16.mxu0 %v5073
      %7533 = vmatpush1.bf16.msra.mxu0 %v5072
      %7534 = vmatprep.subr.bf16.mxu0 %v5077
      %7535 = vmatpush1.bf16.msra.mxu0 %v5076
      %7536 = vmatprep.subr.bf16.mxu0 %v5081
      %7537 = vmatpush1.bf16.msra.mxu0 %v5080
      %7538 = vmatprep.subr.bf16.mxu0 %v5085
      %7539 = vmatpush1.bf16.msra.mxu0 %v5084
      %7540 = vmatprep.subr.bf16.mxu0 %v5089
      %7541 = vmatpush1.bf16.msra.mxu0 %v5088
      %7542 = vmatprep.subr.bf16.mxu0 %v5093
      %7543 = vmatpush1.bf16.msra.mxu0 %v5092
      %7544 = vmatprep.subr.bf16.mxu0 %v5097
      %7545 = vmatpush1.bf16.msra.mxu0 %v5096
      %7546 = vmatprep.subr.bf16.mxu0 %v5101
      %7547 = vmatpush1.bf16.msra.mxu0 %v5100
      %7548 = vmatprep.subr.bf16.mxu0 %v5105
      %7549 = vmatpush1.bf16.msra.mxu0 %v5104
      %7550 = vmatprep.subr.bf16.mxu0 %v5109
      %7551 = vmatpush1.bf16.msra.mxu0 %v5108
      %7552 = vmatprep.mubr.bf16.mxu0 %v277
      %7553 = vmatmul.mubr.bf16.gmra.mrb[0].mxu0 %v276
      %v7554 = vpop.f32.mrb[0].mxu0
      %v7555 = vadd.f32 %v7514, %v7554
      %v7556 = vpop.f32.mrb[0].mxu0
      %v7557 = vadd.f32 %v7516, %v7556
      %v7558 = vpop.f32.mrb[0].mxu0
      %v7559 = vpop.f32.mrb[0].mxu0
      %7560 = vdwg.mxu0
      %7561 = vmatprep.subr.bf16.mxu0 %v5113
      %7562 = vmatpush1.bf16.msra.mxu0 %v5112
      %7563 = vmatprep.subr.bf16.mxu0 %v5117
      %7564 = vmatpush1.bf16.msra.mxu0 %v5116
      %7565 = vmatprep.subr.bf16.mxu0 %v5121
      %7566 = vmatpush1.bf16.msra.mxu0 %v5120
      %7567 = vmatprep.subr.bf16.mxu0 %v5125
      %7568 = vmatpush1.bf16.msra.mxu0 %v5124
      %7569 = vmatprep.subr.bf16.mxu0 %v5129
      %7570 = vmatpush1.bf16.msra.mxu0 %v5128
      %7571 = vmatprep.subr.bf16.mxu0 %v5133
      %7572 = vmatpush1.bf16.msra.mxu0 %v5132
      %7573 = vmatprep.subr.bf16.mxu0 %v5137
      %7574 = vmatpush1.bf16.msra.mxu0 %v5136
      %7575 = vmatprep.subr.bf16.mxu0 %v5141
      %7576 = vmatpush1.bf16.msra.mxu0 %v5140
      %7577 = vmatprep.subr.bf16.mxu0 %v5145
      %7578 = vmatpush1.bf16.msra.mxu0 %v5144
      %7579 = vmatprep.subr.bf16.mxu0 %v5149
      %7580 = vmatpush1.bf16.msra.mxu0 %v5148
      %7581 = vmatprep.subr.bf16.mxu0 %v5153
      %7582 = vmatpush1.bf16.msra.mxu0 %v5152
      %7583 = vmatprep.subr.bf16.mxu0 %v5157
      %7584 = vmatpush1.bf16.msra.mxu0 %v5156
      %7585 = vmatprep.subr.bf16.mxu0 %v5161
      %7586 = vmatpush1.bf16.msra.mxu0 %v5160
      %7587 = vmatprep.subr.bf16.mxu0 %v5165
      %7588 = vmatpush1.bf16.msra.mxu0 %v5164
      %7589 = vmatprep.subr.bf16.mxu0 %v5169
      %7590 = vmatpush1.bf16.msra.mxu0 %v5168
      %7591 = vmatprep.subr.bf16.mxu0 %v5173
      %7592 = vmatpush1.bf16.msra.mxu0 %v5172
      %7593 = vmatprep.mubr.bf16.mxu0 %v279
      %7594 = vmatmul.mubr.bf16.gmra.mrb[0].mxu0 %v278
      %v7595 = vpop.f32.mrb[0].mxu0
      %v7596 = vadd.f32 %v7555, %v7595
      %v7597 = vpop.f32.mrb[0].mxu0
      %v7598 = vadd.f32 %v7557, %v7597
      %v7599 = vpop.f32.mrb[0].mxu0
      %v7600 = vpop.f32.mrb[0].mxu0
      %7601 = vdwg.mxu0
      %7602 = vmatprep.subr.bf16.mxu0 %v5177
      %7603 = vmatpush1.bf16.msra.mxu0 %v5176
      %7604 = vmatprep.subr.bf16.mxu0 %v5181
      %7605 = vmatpush1.bf16.msra.mxu0 %v5180
      %7606 = vmatprep.subr.bf16.mxu0 %v5185
      %7607 = vmatpush1.bf16.msra.mxu0 %v5184
      %7608 = vmatprep.subr.bf16.mxu0 %v5189
      %7609 = vmatpush1.bf16.msra.mxu0 %v5188
      %7610 = vmatprep.subr.bf16.mxu0 %v5193
      %7611 = vmatpush1.bf16.msra.mxu0 %v5192
      %7612 = vmatprep.subr.bf16.mxu0 %v5197
      %7613 = vmatpush1.bf16.msra.mxu0 %v5196
      %7614 = vmatprep.subr.bf16.mxu0 %v5201
      %7615 = vmatpush1.bf16.msra.mxu0 %v5200
      %7616 = vmatprep.subr.bf16.mxu0 %v5205
      %7617 = vmatpush1.bf16.msra.mxu0 %v5204
      %7618 = vmatprep.subr.bf16.mxu0 %v5209
      %7619 = vmatpush1.bf16.msra.mxu0 %v5208
      %7620 = vmatprep.subr.bf16.mxu0 %v5213
      %7621 = vmatpush1.bf16.msra.mxu0 %v5212
      %7622 = vmatprep.subr.bf16.mxu0 %v5217
      %7623 = vmatpush1.bf16.msra.mxu0 %v5216
      %7624 = vmatprep.subr.bf16.mxu0 %v5221
      %7625 = vmatpush1.bf16.msra.mxu0 %v5220
      %7626 = vmatprep.subr.bf16.mxu0 %v5225
      %7627 = vmatpush1.bf16.msra.mxu0 %v5224
      %7628 = vmatprep.subr.bf16.mxu0 %v5229
      %7629 = vmatpush1.bf16.msra.mxu0 %v5228
      %7630 = vmatprep.subr.bf16.mxu0 %v5233
      %7631 = vmatpush1.bf16.msra.mxu0 %v5232
      %7632 = vmatprep.subr.bf16.mxu0 %v5237
      %7633 = vmatpush1.bf16.msra.mxu0 %v5236
      %7634 = vmatprep.mubr.bf16.mxu0 %v281
      %7635 = vmatmul.mubr.bf16.gmra.mrb[0].mxu0 %v280
      %v7636 = vpop.f32.mrb[0].mxu0
      %v7637 = vadd.f32 %v7596, %v7636
      %v7638 = vpop.f32.mrb[0].mxu0
      %v7639 = vadd.f32 %v7598, %v7638
      %v7640 = vpop.f32.mrb[0].mxu0
      %v7641 = vpop.f32.mrb[0].mxu0
      %7642 = vdwg.mxu0
      %7643 = vmatprep.subr.bf16.mxu0 %v5241
      %7644 = vmatpush1.bf16.msra.mxu0 %v5240
      %7645 = vmatprep.subr.bf16.mxu0 %v5245
      %7646 = vmatpush1.bf16.msra.mxu0 %v5244
      %7647 = vmatprep.subr.bf16.mxu0 %v5249
      %7648 = vmatpush1.bf16.msra.mxu0 %v5248
      %7649 = vmatprep.subr.bf16.mxu0 %v5253
      %7650 = vmatpush1.bf16.msra.mxu0 %v5252
      %7651 = vmatprep.subr.bf16.mxu0 %v5257
      %7652 = vmatpush1.bf16.msra.mxu0 %v5256
      %7653 = vmatprep.subr.bf16.mxu0 %v5261
      %7654 = vmatpush1.bf16.msra.mxu0 %v5260
      %7655 = vmatprep.subr.bf16.mxu0 %v5265
      %7656 = vmatpush1.bf16.msra.mxu0 %v5264
      %7657 = vmatprep.subr.bf16.mxu0 %v5269
      %7658 = vmatpush1.bf16.msra.mxu0 %v5268
      %7659 = vmatprep.subr.bf16.mxu0 %v5273
      %7660 = vmatpush1.bf16.msra.mxu0 %v5272
      %7661 = vmatprep.subr.bf16.mxu0 %v5277
      %7662 = vmatpush1.bf16.msra.mxu0 %v5276
      %7663 = vmatprep.subr.bf16.mxu0 %v5281
      %7664 = vmatpush1.bf16.msra.mxu0 %v5280
      %7665 = vmatprep.subr.bf16.mxu0 %v5285
      %7666 = vmatpush1.bf16.msra.mxu0 %v5284
      %7667 = vmatprep.subr.bf16.mxu0 %v5289
      %7668 = vmatpush1.bf16.msra.mxu0 %v5288
      %7669 = vmatprep.subr.bf16.mxu0 %v5293
      %7670 = vmatpush1.bf16.msra.mxu0 %v5292
      %7671 = vmatprep.subr.bf16.mxu0 %v5297
      %7672 = vmatpush1.bf16.msra.mxu0 %v5296
      %7673 = vmatprep.subr.bf16.mxu0 %v5301
      %7674 = vmatpush1.bf16.msra.mxu0 %v5300
      %7675 = vmatprep.mubr.bf16.mxu0 %v283
      %7676 = vmatmul.mubr.bf16.gmra.mrb[0].mxu0 %v282
      %v7677 = vpop.f32.mrb[0].mxu0
      %v7678 = vadd.f32 %v7637, %v7677
      %v7679 = vpop.f32.mrb[0].mxu0
      %v7680 = vadd.f32 %v7639, %v7679
      %v7681 = vpop.f32.mrb[0].mxu0
      %v7682 = vpop.f32.mrb[0].mxu0
      %7683 = vdwg.mxu0
      %7684 = vmatprep.subr.bf16.mxu0 %v5305
      %7685 = vmatpush1.bf16.msra.mxu0 %v5304
      %7686 = vmatprep.subr.bf16.mxu0 %v5309
      %7687 = vmatpush1.bf16.msra.mxu0 %v5308
      %7688 = vmatprep.subr.bf16.mxu0 %v5313
      %7689 = vmatpush1.bf16.msra.mxu0 %v5312
      %7690 = vmatprep.subr.bf16.mxu0 %v5317
      %7691 = vmatpush1.bf16.msra.mxu0 %v5316
      %7692 = vmatprep.subr.bf16.mxu0 %v5321
      %7693 = vmatpush1.bf16.msra.mxu0 %v5320
      %7694 = vmatprep.subr.bf16.mxu0 %v5325
      %7695 = vmatpush1.bf16.msra.mxu0 %v5324
      %7696 = vmatprep.subr.bf16.mxu0 %v5329
      %7697 = vmatpush1.bf16.msra.mxu0 %v5328
      %7698 = vmatprep.subr.bf16.mxu0 %v5333
      %7699 = vmatpush1.bf16.msra.mxu0 %v5332
      %7700 = vmatprep.subr.bf16.mxu0 %v5337
      %7701 = vmatpush1.bf16.msra.mxu0 %v5336
      %7702 = vmatprep.subr.bf16.mxu0 %v5341
      %7703 = vmatpush1.bf16.msra.mxu0 %v5340
      %7704 = vmatprep.subr.bf16.mxu0 %v5345
      %7705 = vmatpush1.bf16.msra.mxu0 %v5344
      %7706 = vmatprep.subr.bf16.mxu0 %v5349
      %7707 = vmatpush1.bf16.msra.mxu0 %v5348
      %7708 = vmatprep.subr.bf16.mxu0 %v5353
      %7709 = vmatpush1.bf16.msra.mxu0 %v5352
      %7710 = vmatprep.subr.bf16.mxu0 %v5357
      %7711 = vmatpush1.bf16.msra.mxu0 %v5356
      %7712 = vmatprep.subr.bf16.mxu0 %v5361
      %7713 = vmatpush1.bf16.msra.mxu0 %v5360
      %7714 = vmatprep.subr.bf16.mxu0 %v5365
      %7715 = vmatpush1.bf16.msra.mxu0 %v5364
      %7716 = vmatprep.mubr.bf16.mxu0 %v285
      %7717 = vmatmul.mubr.bf16.gmra.mrb[0].mxu0 %v284
      %v7718 = vpop.f32.mrb[0].mxu0
      %v7719 = vadd.f32 %v7678, %v7718
      %v7720 = vpop.f32.mrb[0].mxu0
      %v7721 = vadd.f32 %v7680, %v7720
      %v7722 = vpop.f32.mrb[0].mxu0
      %v7723 = vpop.f32.mrb[0].mxu0
      %7724 = vdwg.mxu0
      %7725 = vmatprep.subr.bf16.mxu0 %v5369
      %7726 = vmatpush1.bf16.msra.mxu0 %v5368
      %7727 = vmatprep.subr.bf16.mxu0 %v5373
      %7728 = vmatpush1.bf16.msra.mxu0 %v5372
      %7729 = vmatprep.subr.bf16.mxu0 %v5377
      %7730 = vmatpush1.bf16.msra.mxu0 %v5376
      %7731 = vmatprep.subr.bf16.mxu0 %v5381
      %7732 = vmatpush1.bf16.msra.mxu0 %v5380
      %7733 = vmatprep.subr.bf16.mxu0 %v5385
      %7734 = vmatpush1.bf16.msra.mxu0 %v5384
      %7735 = vmatprep.subr.bf16.mxu0 %v5389
      %7736 = vmatpush1.bf16.msra.mxu0 %v5388
      %7737 = vmatprep.subr.bf16.mxu0 %v5393
      %7738 = vmatpush1.bf16.msra.mxu0 %v5392
      %7739 = vmatprep.subr.bf16.mxu0 %v5397
      %7740 = vmatpush1.bf16.msra.mxu0 %v5396
      %7741 = vmatprep.subr.bf16.mxu0 %v5401
      %7742 = vmatpush1.bf16.msra.mxu0 %v5400
      %7743 = vmatprep.subr.bf16.mxu0 %v5405
      %7744 = vmatpush1.bf16.msra.mxu0 %v5404
      %7745 = vmatprep.subr.bf16.mxu0 %v5409
      %7746 = vmatpush1.bf16.msra.mxu0 %v5408
      %7747 = vmatprep.subr.bf16.mxu0 %v5413
      %7748 = vmatpush1.bf16.msra.mxu0 %v5412
      %7749 = vmatprep.subr.bf16.mxu0 %v5417
      %7750 = vmatpush1.bf16.msra.mxu0 %v5416
      %7751 = vmatprep.subr.bf16.mxu0 %v5421
      %7752 = vmatpush1.bf16.msra.mxu0 %v5420
      %7753 = vmatprep.subr.bf16.mxu0 %v5425
      %7754 = vmatpush1.bf16.msra.mxu0 %v5424
      %7755 = vmatprep.subr.bf16.mxu0 %v5429
      %7756 = vmatpush1.bf16.msra.mxu0 %v5428
      %7757 = vmatprep.mubr.bf16.mxu0 %v287
      %7758 = vmatmul.mubr.bf16.gmra.mrb[0].mxu0 %v286
      %v7759 = vpop.f32.mrb[0].mxu0
      %v7760 = vadd.f32 %v7719, %v7759
      %v7761 = vpop.f32.mrb[0].mxu0
      %v7762 = vadd.f32 %v7721, %v7761
      %v7763 = vpop.f32.mrb[0].mxu0
      %v7764 = vpop.f32.mrb[0].mxu0
      %7765 = vdwg.mxu0
      %v7766 = vmax.f32 %v7104, 0.0
      %v7767 = vmax.f32 %v7106, 0.0
      %v7768 = vmax.f32 %v7760, 0.0
      %v7769 = vmax.f32 %v7762, 0.0
      %v7770 = vpack.c.bf16 %v7766, %v7766
      %v7771 = vpack.c.bf16 %v7767, %v7767
      %v7772 = vpack.c.bf16 %v7768, %v7768
      %v7773 = vpack.c.bf16 %v7769, %v7769
      %v7774 = vld [vmem:[%s3] sm:$0xf]
      %v7775 = vld [vmem:[%s3 + $0x4] sm:$0xf]
      %v7776 = vld [vmem:[%s3 + $0x8] sm:$0xf]
      %v7777 = vld [vmem:[%s3 + $0xc] sm:$0xf]
      %v7778 = vld [vmem:[%s3 + $0x10] sm:$0xf]
      %v7779 = vld [vmem:[%s3 + $0x14] sm:$0xf]
      %v7780 = vld [vmem:[%s3 + $0x18] sm:$0xf]
      %v7781 = vld [vmem:[%s3 + $0x1c] sm:$0xf]
      %v7782 = vld [vmem:[%s3 + $0x20] sm:$0xf]
      %v7783 = vld [vmem:[%s3 + $0x24] sm:$0xf]
      %v7784 = vld [vmem:[%s3 + $0x28] sm:$0xf]
      %v7785 = vld [vmem:[%s3 + $0x2c] sm:$0xf]
      %v7786 = vld [vmem:[%s3 + $0x30] sm:$0xf]
      %v7787 = vld [vmem:[%s3 + $0x34] sm:$0xf]
      %v7788 = vld [vmem:[%s3 + $0x38] sm:$0xf]
      %v7789 = vld [vmem:[%s3 + $0x3c] sm:$0xf]
      %v7790 = vld [vmem:[%s3 + $0x40] sm:$0xf]
      %v7791 = vld [vmem:[%s3 + $0x44] sm:$0xf]
      %v7792 = vld [vmem:[%s3 + $0x48] sm:$0xf]
      %v7793 = vld [vmem:[%s3 + $0x4c] sm:$0xf]
      %v7794 = vld [vmem:[%s3 + $0x50] sm:$0xf]
      %v7795 = vld [vmem:[%s3 + $0x54] sm:$0xf]
      %v7796 = vld [vmem:[%s3 + $0x58] sm:$0xf]
      %v7797 = vld [vmem:[%s3 + $0x5c] sm:$0xf]
      %v7798 = vld [vmem:[%s3 + $0x60] sm:$0xf]
      %v7799 = vld [vmem:[%s3 + $0x64] sm:$0xf]
      %v7800 = vld [vmem:[%s3 + $0x68] sm:$0xf]
      %v7801 = vld [vmem:[%s3 + $0x6c] sm:$0xf]
      %v7802 = vld [vmem:[%s3 + $0x70] sm:$0xf]
      %v7803 = vld [vmem:[%s3 + $0x74] sm:$0xf]
      %v7804 = vld [vmem:[%s3 + $0x78] sm:$0xf]
      %v7805 = vld [vmem:[%s3 + $0x7c] sm:$0xf]
      %v7806 = vld [vmem:[%s3 + $0x80] sm:$0xf]
      %v7807 = vld [vmem:[%s3 + $0x84] sm:$0xf]
      %v7808 = vld [vmem:[%s3 + $0x88] sm:$0xf]
      %v7809 = vld [vmem:[%s3 + $0x8c] sm:$0xf]
      %v7810 = vld [vmem:[%s3 + $0x90] sm:$0xf]
      %v7811 = vld [vmem:[%s3 + $0x94] sm:$0xf]
      %v7812 = vld [vmem:[%s3 + $0x98] sm:$0xf]
      %v7813 = vld [vmem:[%s3 + $0x9c] sm:$0xf]
      %v7814 = vld [vmem:[%s3 + $0xa0] sm:$0xf]
      %v7815 = vld [vmem:[%s3 + $0xa4] sm:$0xf]
      %v7816 = vld [vmem:[%s3 + $0xa8] sm:$0xf]
      %v7817 = vld [vmem:[%s3 + $0xac] sm:$0xf]
      %v7818 = vld [vmem:[%s3 + $0xb0] sm:$0xf]
      %v7819 = vld [vmem:[%s3 + $0xb4] sm:$0xf]
      %v7820 = vld [vmem:[%s3 + $0xb8] sm:$0xf]
      %v7821 = vld [vmem:[%s3 + $0xbc] sm:$0xf]
      %v7822 = vld [vmem:[%s3 + $0xc0] sm:$0xf]
      %v7823 = vld [vmem:[%s3 + $0xc4] sm:$0xf]
      %v7824 = vld [vmem:[%s3 + $0xc8] sm:$0xf]
      %v7825 = vld [vmem:[%s3 + $0xcc] sm:$0xf]
      %v7826 = vld [vmem:[%s3 + $0xd0] sm:$0xf]
      %v7827 = vld [vmem:[%s3 + $0xd4] sm:$0xf]
      %v7828 = vld [vmem:[%s3 + $0xd8] sm:$0xf]
      %v7829 = vld [vmem:[%s3 + $0xdc] sm:$0xf]
      %v7830 = vld [vmem:[%s3 + $0xe0] sm:$0xf]
      %v7831 = vld [vmem:[%s3 + $0xe4] sm:$0xf]
      %v7832 = vld [vmem:[%s3 + $0xe8] sm:$0xf]
      %v7833 = vld [vmem:[%s3 + $0xec] sm:$0xf]
      %v7834 = vld [vmem:[%s3 + $0xf0] sm:$0xf]
      %v7835 = vld [vmem:[%s3 + $0xf4] sm:$0xf]
      %v7836 = vld [vmem:[%s3 + $0xf8] sm:$0xf]
      %v7837 = vld [vmem:[%s3 + $0xfc] sm:$0xf]
      %v7838 = vld [vmem:[%s4] sm:$0x1]
      %v7840 = vlaneseq
      %v7841 = vshrl.u32 %v7840, 7
      %v7842 = vsub.s32 0, %v7841
      %v7843 = vrot.slane %v7838, %v7842
      %v7909 = vunpack.c.l.b16 %v7774
      %v7910 = vunpack.c.l.b16 %v7775
      %v7911 = vunpack.c.l.b16 %v7776
      %v7912 = vunpack.c.l.b16 %v7777
      %v7913 = vunpack.c.l.b16 %v7778
      %v7914 = vunpack.c.l.b16 %v7779
      %v7915 = vunpack.c.l.b16 %v7780
      %v7916 = vunpack.c.l.b16 %v7781
      %v7917 = vunpack.c.l.b16 %v7782
      %v7918 = vunpack.c.l.b16 %v7783
      %v7919 = vunpack.c.l.b16 %v7784
      %v7920 = vunpack.c.l.b16 %v7785
      %v7921 = vunpack.c.l.b16 %v7786
      %v7922 = vunpack.c.l.b16 %v7787
      %v7923 = vunpack.c.l.b16 %v7788
      %v7924 = vunpack.c.l.b16 %v7789
      %v7925 = vunpack.c.l.b16 %v7790
      %v7926 = vunpack.c.l.b16 %v7791
      %v7927 = vunpack.c.l.b16 %v7792
      %v7928 = vunpack.c.l.b16 %v7793
      %v7929 = vunpack.c.l.b16 %v7794
      %v7930 = vunpack.c.l.b16 %v7795
      %v7931 = vunpack.c.l.b16 %v7796
      %v7932 = vunpack.c.l.b16 %v7797
      %v7933 = vunpack.c.l.b16 %v7798
      %v7934 = vunpack.c.l.b16 %v7799
      %v7935 = vunpack.c.l.b16 %v7800
      %v7936 = vunpack.c.l.b16 %v7801
      %v7937 = vunpack.c.l.b16 %v7802
      %v7938 = vunpack.c.l.b16 %v7803
      %v7939 = vunpack.c.l.b16 %v7804
      %v7940 = vunpack.c.l.b16 %v7805
      %v7941 = vunpack.c.l.b16 %v7806
      %v7942 = vunpack.c.l.b16 %v7807
      %v7943 = vunpack.c.l.b16 %v7808
      %v7944 = vunpack.c.l.b16 %v7809
      %v7945 = vunpack.c.l.b16 %v7810
      %v7946 = vunpack.c.l.b16 %v7811
      %v7947 = vunpack.c.l.b16 %v7812
      %v7948 = vunpack.c.l.b16 %v7813
      %v7949 = vunpack.c.l.b16 %v7814
      %v7950 = vunpack.c.l.b16 %v7815
      %v7951 = vunpack.c.l.b16 %v7816
      %v7952 = vunpack.c.l.b16 %v7817
      %v7953 = vunpack.c.l.b16 %v7818
      %v7954 = vunpack.c.l.b16 %v7819
      %v7955 = vunpack.c.l.b16 %v7820
      %v7956 = vunpack.c.l.b16 %v7821
      %v7957 = vunpack.c.l.b16 %v7822
      %v7958 = vunpack.c.l.b16 %v7823
      %v7959 = vunpack.c.l.b16 %v7824
      %v7960 = vunpack.c.l.b16 %v7825
      %v7961 = vunpack.c.l.b16 %v7826
      %v7962 = vunpack.c.l.b16 %v7827
      %v7963 = vunpack.c.l.b16 %v7828
      %v7964 = vunpack.c.l.b16 %v7829
      %v7965 = vunpack.c.l.b16 %v7830
      %v7966 = vunpack.c.l.b16 %v7831
      %v7967 = vunpack.c.l.b16 %v7832
      %v7968 = vunpack.c.l.b16 %v7833
      %v7969 = vunpack.c.l.b16 %v7834
      %v7970 = vunpack.c.l.b16 %v7835
      %v7971 = vunpack.c.l.b16 %v7836
      %v7972 = vunpack.c.l.b16 %v7837
      %v7973 = vpack.c.b16 %v7910, %v7909
      %v7974 = vpack.c.b16 %v7912, %v7911
      %v7975 = vpack.c.b16 %v7914, %v7913
      %v7976 = vpack.c.b16 %v7916, %v7915
      %v7977 = vpack.c.b16 %v7918, %v7917
      %v7978 = vpack.c.b16 %v7920, %v7919
      %v7979 = vpack.c.b16 %v7922, %v7921
      %v7980 = vpack.c.b16 %v7924, %v7923
      %v7981 = vpack.c.b16 %v7926, %v7925
      %v7982 = vpack.c.b16 %v7928, %v7927
      %v7983 = vpack.c.b16 %v7930, %v7929
      %v7984 = vpack.c.b16 %v7932, %v7931
      %v7985 = vpack.c.b16 %v7934, %v7933
      %v7986 = vpack.c.b16 %v7936, %v7935
      %v7987 = vpack.c.b16 %v7938, %v7937
      %v7988 = vpack.c.b16 %v7940, %v7939
      %v7989 = vpack.c.b16 %v7942, %v7941
      %v7990 = vpack.c.b16 %v7944, %v7943
      %v7991 = vpack.c.b16 %v7946, %v7945
      %v7992 = vpack.c.b16 %v7948, %v7947
      %v7993 = vpack.c.b16 %v7950, %v7949
      %v7994 = vpack.c.b16 %v7952, %v7951
      %v7995 = vpack.c.b16 %v7954, %v7953
      %v7996 = vpack.c.b16 %v7956, %v7955
      %v7997 = vpack.c.b16 %v7958, %v7957
      %v7998 = vpack.c.b16 %v7960, %v7959
      %v7999 = vpack.c.b16 %v7962, %v7961
      %v8000 = vpack.c.b16 %v7964, %v7963
      %v8001 = vpack.c.b16 %v7966, %v7965
      %v8002 = vpack.c.b16 %v7968, %v7967
      %v8003 = vpack.c.b16 %v7970, %v7969
      %v8004 = vpack.c.b16 %v7972, %v7971
      %8037 = vmatprep.subr.bf16.mxu0 0
      %8038 = vmatpush1.bf16.msra.mxu0 %v7973
      %8039 = vmatprep.subr.bf16.mxu0 0
      %8040 = vmatpush1.bf16.msra.mxu0 %v7974
      %8041 = vmatprep.subr.bf16.mxu0 0
      %8042 = vmatpush1.bf16.msra.mxu0 %v7975
      %8043 = vmatprep.subr.bf16.mxu0 0
      %8044 = vmatpush1.bf16.msra.mxu0 %v7976
      %8045 = vmatprep.subr.bf16.mxu0 0
      %8046 = vmatpush1.bf16.msra.mxu0 %v7977
      %8047 = vmatprep.subr.bf16.mxu0 0
      %8048 = vmatpush1.bf16.msra.mxu0 %v7978
      %8049 = vmatprep.subr.bf16.mxu0 0
      %8050 = vmatpush1.bf16.msra.mxu0 %v7979
      %8051 = vmatprep.subr.bf16.mxu0 0
      %8052 = vmatpush1.bf16.msra.mxu0 %v7980
      %8053 = vmatprep.subr.bf16.mxu0 0
      %8054 = vmatpush1.bf16.msra.mxu0 %v7981
      %8055 = vmatprep.subr.bf16.mxu0 0
      %8056 = vmatpush1.bf16.msra.mxu0 %v7982
      %8057 = vmatprep.subr.bf16.mxu0 0
      %8058 = vmatpush1.bf16.msra.mxu0 %v7983
      %8059 = vmatprep.subr.bf16.mxu0 0
      %8060 = vmatpush1.bf16.msra.mxu0 %v7984
      %8061 = vmatprep.subr.bf16.mxu0 0
      %8062 = vmatpush1.bf16.msra.mxu0 %v7985
      %8063 = vmatprep.subr.bf16.mxu0 0
      %8064 = vmatpush1.bf16.msra.mxu0 %v7986
      %8065 = vmatprep.subr.bf16.mxu0 0
      %8066 = vmatpush1.bf16.msra.mxu0 %v7987
      %8067 = vmatprep.subr.bf16.mxu0 0
      %8068 = vmatpush1.bf16.msra.mxu0 %v7988
      %8069 = vmatprep.mubr.bf16.mxu0 %v7771
      %8070 = vmatmul.mubr.bf16.gmra.mrb[0].mxu0 %v7770
      %v8071 = vpop.f32.mrb[0].mxu0
      %v8072 = vadd.f32 %v7843, %v8071
      %v8073 = vpop.f32.mrb[0].mxu0
      %v8074 = vpop.f32.mrb[0].mxu0
      %v8075 = vpop.f32.mrb[0].mxu0
      %8076 = vdwg.mxu0
      %8077 = vmatprep.subr.bf16.mxu0 0
      %8078 = vmatpush1.bf16.msra.mxu0 %v7989
      %8079 = vmatprep.subr.bf16.mxu0 0
      %8080 = vmatpush1.bf16.msra.mxu0 %v7990
      %8081 = vmatprep.subr.bf16.mxu0 0
      %8082 = vmatpush1.bf16.msra.mxu0 %v7991
      %8083 = vmatprep.subr.bf16.mxu0 0
      %8084 = vmatpush1.bf16.msra.mxu0 %v7992
      %8085 = vmatprep.subr.bf16.mxu0 0
      %8086 = vmatpush1.bf16.msra.mxu0 %v7993
      %8087 = vmatprep.subr.bf16.mxu0 0
      %8088 = vmatpush1.bf16.msra.mxu0 %v7994
      %8089 = vmatprep.subr.bf16.mxu0 0
      %8090 = vmatpush1.bf16.msra.mxu0 %v7995
      %8091 = vmatprep.subr.bf16.mxu0 0
      %8092 = vmatpush1.bf16.msra.mxu0 %v7996
      %8093 = vmatprep.subr.bf16.mxu0 0
      %8094 = vmatpush1.bf16.msra.mxu0 %v7997
      %8095 = vmatprep.subr.bf16.mxu0 0
      %8096 = vmatpush1.bf16.msra.mxu0 %v7998
      %8097 = vmatprep.subr.bf16.mxu0 0
      %8098 = vmatpush1.bf16.msra.mxu0 %v7999
      %8099 = vmatprep.subr.bf16.mxu0 0
      %8100 = vmatpush1.bf16.msra.mxu0 %v8000
      %8101 = vmatprep.subr.bf16.mxu0 0
      %8102 = vmatpush1.bf16.msra.mxu0 %v8001
      %8103 = vmatprep.subr.bf16.mxu0 0
      %8104 = vmatpush1.bf16.msra.mxu0 %v8002
      %8105 = vmatprep.subr.bf16.mxu0 0
      %8106 = vmatpush1.bf16.msra.mxu0 %v8003
      %8107 = vmatprep.subr.bf16.mxu0 0
      %8108 = vmatpush1.bf16.msra.mxu0 %v8004
      %8109 = vmatprep.mubr.bf16.mxu0 %v7773
      %8110 = vmatmul.mubr.bf16.gmra.mrb[0].mxu0 %v7772
      %v8111 = vpop.f32.mrb[0].mxu0
      %v8112 = vadd.f32 %v8072, %v8111
      %v8113 = vpop.f32.mrb[0].mxu0
      %v8114 = vpop.f32.mrb[0].mxu0
      %v8115 = vpop.f32.mrb[0].mxu0
      %8116 = vdwg.mxu0
      %8117 = vmax.xlane.f32.xlu0 %v8112
      %v8118 = vpop.xlane.xlu0 %8117
      %v8119 = vsub.f32 %v8112, %v8118
      %v8120 = vmul.f32 %v8119, 1.442695
      %v8121 = vpow.pop %v8120
      %8122 = vadd.xlane.f32.xlu0 %v8121
      %v8123 = vpop.xlane.xlu0 %8122
      %v8124 = vrcp.pop %v8123
      %v8125 = vmul.f32 %v8121, %v8124
      %8126 = vst [vmem:[%s222] sm:$0xff] %v8125
      %p8127 = scmp.lt.s32.totalorder %s16, 1
      %s8128 = scalar_select %p8127, %s16, 1
      %s8129 = smul.addr %s8128, 8
      %s8130 = scalar_lea.vmem %s5, %s8129
      // Predicated region
      $region41: #{temporal_i3d_sga_std_forward.1} parent=39 // pred_check
        %p8131 = pneg %p144
      $region42: #{temporal_i3d_sga_std_forward.1} parent=39 // pred_check_branch
        %8133 = sbr.rel (%p8131) target = $region44
      $region43: #{temporal_i3d_sga_std_forward.1} parent=39 // pred_region
        _
      $region44: #{temporal_i3d_sga_std_forward.1} parent=39 // pred_fallthru
        _
    $region40: #{temporal_i3d_sga_std_forward.1} parent=5 // pred_fallthru
      _
    %p8134 = scmp.le.s32.totalorder 2, %s11
    // Predicated region
    $region45: #{temporal_i3d_sga_std_forward.1} parent=5 // pred_check
      %p8135 = pneg %p8134
    $region46: #{temporal_i3d_sga_std_forward.1} parent=5 // pred_check_branch
      %8137 = sbr.rel (%p8135) target = $region48
    $region47: #{temporal_i3d_sga_std_forward.1} parent=5 // pred_region
      %s8138 = ssub.s32 %s11, 2
      // Predicated region
      $region49: #{temporal_i3d_sga_std_forward.1} parent=47 // pred_check
        %p8139 = pneg %p150
      $region50: #{temporal_i3d_sga_std_forward.1} parent=47 // pred_check_branch
        %8141 = sbr.rel (%p8139) target = $region52
      $region51: #{temporal_i3d_sga_std_forward.1} parent=47 // pred_region
        %p8142 = scmp.lt.s32.totalorder %s17, 1
        %s8143 = scalar_select %p8142, %s17, 1
        %s8144 = smul.addr %s8143, 8
        %s8145 = scalar_lea.vmem %s5, %s8144
      $region52: #{temporal_i3d_sga_std_forward.1} parent=47 // pred_fallthru
        _
    $region48: #{temporal_i3d_sga_std_forward.1} parent=5 // pred_fallthru
      _
  $region6: #{temporal_i3d_sga_std_forward.1} parent=0 // loop_footer
    %s15 = sadd.s32 1, %s11
  $region7: #{temporal_i3d_sga_std_forward.1} parent=0 // loop_footer_branch
    %10 = sbr.rel target = $region3
  $region8: #{temporal_i3d_sga_std_forward.1} parent=0 // loop_exit
    _

</llo_original>
